<compile_context>
chip_gen: v7x
topology: tpu7x:2x2x1
jax: 0.10.0
libtpu: 0.0.40
codegen_flags: <defaults>
</compile_context>

<pallas_src>
import functools
import math

import jax
import jax.numpy as jnp
from jax.experimental import pallas as pl
from jax.experimental.pallas import tpu as pltpu


def _round_up(v, m):
    return ((v + m - 1) // m) * m


# ------------------- big weight-streaming Linear (+ReLU) kernel --------------
def _linear_kernel(x_ref, w_ref, b_ref, o_ref, *, apply_relu):
    """One (Mp, block_n) output tile; whole K resident -> single jnp.dot."""
    acc = jnp.dot(
        x_ref[...].astype(jnp.bfloat16),          # activations -> MXU-native bf16
        w_ref[...],                               # bf16 streamed weights
        preferred_element_type=jnp.float32,       # f32 accumulation
    )
    acc = acc + b_ref[...]
    if apply_relu:
        acc = jnp.maximum(acc, 0.0)
    o_ref[...] = acc


def linear_pallas(x, w, b, *, relu, block_n):
    """y = relu?(x @ w + b).

    x: (Mp, Kp) f32 zero-padded; w: (Kp, Np) bf16 pre-padded; b: (1, Np) f32.
    Np % block_n == 0.  Grid only over N (weight streaming), K fully resident.
    """
    Mp, Kp = x.shape
    Kw, Np = w.shape
    assert Kp == Kw and Np % block_n == 0

    cost = pl.CostEstimate(
        flops=2 * Mp * Kp * Np,
        transcendentals=0,
        bytes_accessed=Kp * Np * 2 + Mp * Kp * 4 + Np * 4 + Mp * Np * 4,
    )
    return pl.pallas_call(
        functools.partial(_linear_kernel, apply_relu=relu),
        out_shape=jax.ShapeDtypeStruct((Mp, Np), jnp.float32),
        grid_spec=pltpu.PrefetchScalarGridSpec(
            num_scalar_prefetch=0,
            grid=(Np // block_n,),
            in_specs=[
                pl.BlockSpec((Mp, Kp), lambda j: (0, 0)),        # x: resident
                pl.BlockSpec((Kp, block_n), lambda j: (0, j)),   # weight stream
                pl.BlockSpec((1, block_n), lambda j: (0, j)),    # bias
            ],
            out_specs=pl.BlockSpec((Mp, block_n), lambda j: (0, j)),
        ),
        compiler_params=pltpu.CompilerParams(
            dimension_semantics=("parallel",),    # lets v7x split N tiles over 2 TCs
            vmem_limit_bytes=48 * 1024 * 1024,    # explicit; fits v5e/v6e/v7x
        ),
        cost_estimate=cost,
    )(x, w, b)


# --------- fused tail: (800->100) + ReLU + (100->20) + ReLU + cat + (21->1) ---
def _tail_kernel(h_ref, xg_ref, w3_ref, b3_ref, w4_ref, b4_ref, wc_ref, bc_ref,
                 o_ref):
    h3 = jnp.dot(h_ref[...].astype(jnp.bfloat16), w3_ref[...],
                 preferred_element_type=jnp.float32) + b3_ref[...]
    h3 = jnp.maximum(h3, 0.0)
    h4 = jnp.dot(h3.astype(jnp.bfloat16), w4_ref[...],
                 preferred_element_type=jnp.float32) + b4_ref[...]
    h4 = jnp.maximum(h4, 0.0)
    # torch.cat((x, x_gboost), dim=1): h4's padded column 20 is exactly zero
    # (w4/b4 zero-padded), and xg_ref carries x_gboost at column 20.
    hc = h4 + xg_ref[...]
    out = jnp.dot(hc.astype(jnp.bfloat16), wc_ref[...],
                  preferred_element_type=jnp.float32) + bc_ref[...]
    o_ref[...] = out


def tail_pallas(h, xg, w3, b3, w4, b4, wc, bc):
    Mp = h.shape[0]
    return pl.pallas_call(
        _tail_kernel,
        out_shape=jax.ShapeDtypeStruct((Mp, 128), jnp.float32),
    )(h, xg, w3, b3, w4, b4, wc, bc)


# ----------------------------- Model definition ------------------------------
_HIDDEN_DIMS = [2855, 1500, 800, 100, 20]   # self.layers
_COMMON_IN, _COMMON_OUT = 21, 1             # self.common_layer
_BLOCK_N = 512


def init_params(key):
    """Deterministic init mimicking nn.Linear's U(-1/sqrt(fan_in), 1/sqrt(fan_in))."""
    params = {"layers": [], "common": None}
    for i in range(len(_HIDDEN_DIMS) - 1):
        fan_in, fan_out = _HIDDEN_DIMS[i], _HIDDEN_DIMS[i + 1]
        key, kw, kb = jax.random.split(key, 3)
        bound = 1.0 / math.sqrt(fan_in)
        w = jax.random.uniform(kw, (fan_in, fan_out), jnp.float32, -bound, bound)
        b = jax.random.uniform(kb, (fan_out,), jnp.float32, -bound, bound)
        params["layers"].append((w, b))
    key, kw, kb = jax.random.split(key, 3)
    bound = 1.0 / math.sqrt(_COMMON_IN)
    w = jax.random.uniform(kw, (_COMMON_IN, _COMMON_OUT), jnp.float32, -bound, bound)
    b = jax.random.uniform(kb, (_COMMON_OUT,), jnp.float32, -bound, bound)
    params["common"] = (w, b)
    return params


def prepare_params(params):
    """One-time pad + bf16 cast of the weights (no per-forward jnp.pad on 17 MB)."""
    (w1, b1), (w2, b2), (w3, b3), (w4, b4) = params["layers"]
    wc, bc = params["common"]

    k1p = _round_up(w1.shape[0], 128)            # 2855 -> 2944
    n1p = _round_up(w1.shape[1], _BLOCK_N)       # 1500 -> 1536
    n2p = _round_up(w2.shape[1], _BLOCK_N)       # 800  -> 1024
    n3p = _round_up(w3.shape[1], 128)            # 100  -> 128
    n4p = 128                                    # 20   -> 128 (col 20 left for x_gboost)

    def pad2(a, shape):
        return jnp.pad(a, [(0, s - d) for d, s in zip(a.shape, shape)])

    def padw(w, kp, np_):
        return pad2(w.astype(jnp.float32), (kp, np_)).astype(jnp.bfloat16)

    def padb(b, np_):
        return pad2(b.astype(jnp.float32).reshape(1, -1), (1, np_))

    return {
        "w1": padw(w1, k1p, n1p), "b1": padb(b1, n1p),
        "w2": padw(w2, n1p, n2p), "b2": padb(b2, n2p),
        "w3": padw(w3, n2p, n3p), "b3": padb(b3, n3p),
        "w4": padw(w4, n3p, n4p), "b4": padb(b4, n4p),
        "wc": padw(wc, 128, 128), "bc": padb(bc, 128),
    }


def net_forward(prepared, x, x_gboost):
    # x = x.to(float32); x = x.view([-1, x.shape[1]]); x_gboost.view([-1, 1])
    x = x.astype(jnp.float32).reshape(-1, x.shape[1])
    xg = x_gboost.astype(jnp.float32).reshape(-1, 1)

    M = x.shape[0]
    Mp = max(8, _round_up(M, 8))
    K1p = prepared["w1"].shape[0]

    xp = jnp.pad(x, ((0, Mp - M), (0, K1p - x.shape[1])))
    xgp = jnp.pad(xg, ((0, Mp - M), (20, 128 - 21)))   # x_gboost sits in column 20

    h1 = linear_pallas(xp, prepared["w1"], prepared["b1"], relu=True,
                       block_n=_BLOCK_N)
    h2 = linear_pallas(h1, prepared["w2"], prepared["b2"], relu=True,
                       block_n=_BLOCK_N)
    out = tail_pallas(h2, xgp,
                      prepared["w3"], prepared["b3"],
                      prepared["w4"], prepared["b4"],
                      prepared["wc"], prepared["bc"])
    return out[:M, :1]


def _reference_forward(params, x, x_gboost):
    """Pure-JAX reference mirroring the kernels' numerics
    (bf16 matmul inputs, f32 accumulation, f32 bias/ReLU)."""
    def qdot(a, w):
        return jnp.dot(a.astype(jnp.bfloat16), w.astype(jnp.bfloat16),
                       preferred_element_type=jnp.float32)

    x = x.astype(jnp.float32).reshape(-1, x.shape[1])
    xg = x_gboost.astype(jnp.float32).reshape(-1, 1)
    h = x
    for (w, b) in params["layers"]:
        h = jnp.maximum(qdot(h, w) + b, 0.0)
    h = jnp.concatenate([h, xg], axis=1)
    wc, bc = params["common"]
    return qdot(h, wc) + bc


# ----------------------------------- main ------------------------------------
if __name__ == "__main__":
    key = jax.random.PRNGKey(0)
    key, kp, kx, kg = jax.random.split(key, 4)

    params = init_params(kp)
    prepared = prepare_params(params)          # one-time pad + bf16 cast

    batch = 2
    x = jax.random.normal(kx, (batch, 2855), jnp.float32)
    x_gboost = jax.random.normal(kg, (batch, 1), jnp.float32)

    forward = jax.jit(net_forward)
    out = forward(prepared, x, x_gboost)
    out = jax.block_until_ready(out)

    ref = _reference_forward(params, x, x_gboost)
    assert out.shape == (batch, 1)
    assert jnp.allclose(out, ref, rtol=2e-3, atol=2e-3)

    print("KERNEL_OK")
</pallas_src>

<mosaic_0001>
module attributes {stable_mosaic.version = 11 : i64} {
  func.func @_linear_kernel(%arg0: i32, %arg1: memref<8x2944xf32, #tpu.memory_space<vmem>>, %arg2: memref<2944x512xbf16, #tpu.memory_space<vmem>>, %arg3: memref<1x512xf32, #tpu.memory_space<vmem>>, %arg4: memref<8x512xf32, #tpu.memory_space<vmem>>) attributes {dimension_semantics = [#tpu.dimension_semantics<parallel>], iteration_bounds = array<i64: 3>, scalar_prefetch = 0 : i64, scratch_operands = 0 : i64, tpu.core_type = #tpu.core_type<tc>, window_params = [{pipeline_mode = #tpu.pipeline_mode<synchronous>, transform_indices = @transform_0, window_bounds = array<i64: 8, 2944>}, {transform_indices = @transform_1, window_bounds = array<i64: 2944, 512>}, {transform_indices = @transform_2, window_bounds = array<i64: 1, 512>}, {transform_indices = @transform_3, window_bounds = array<i64: 8, 512>}]} {
    %c0 = arith.constant 0 : index
    %c0_0 = arith.constant 0 : index
    %0 = vector.load %arg1[%c0, %c0_0] : memref<8x2944xf32, #tpu.memory_space<vmem>>, vector<8x2944xf32>
    %1 = arith.truncf %0 : vector<8x2944xf32> to vector<8x2944xbf16>
    %c0_1 = arith.constant 0 : index
    %c0_2 = arith.constant 0 : index
    %2 = vector.load %arg2[%c0_1, %c0_2] : memref<2944x512xbf16, #tpu.memory_space<vmem>>, vector<2944x512xbf16>
    %cst = arith.constant dense<0.000000e+00> : vector<8x512xf32>
    %3 = tpu.matmul %1, %2, %cst {dimension_numbers = #tpu.dot_dimension_numbers<[1], [0], [0], [1], [0, 0, 1, 1], [], []>} : vector<8x2944xbf16>, vector<2944x512xbf16>, vector<8x512xf32> -> vector<8x512xf32>
    %c0_3 = arith.constant 0 : index
    %c0_4 = arith.constant 0 : index
    %4 = vector.load %arg3[%c0_3, %c0_4] : memref<1x512xf32, #tpu.memory_space<vmem>>, vector<1x512xf32>
    %5 = vector.broadcast %4 : vector<1x512xf32> to vector<8x512xf32>
    %6 = arith.addf %3, %5 : vector<8x512xf32>
    %cst_5 = arith.constant 0.000000e+00 : f32
    %7 = vector.broadcast %cst_5 : f32 to vector<8x512xf32>
    %8 = arith.maximumf %6, %7 : vector<8x512xf32>
    %c0_6 = arith.constant 0 : index
    %c0_7 = arith.constant 0 : index
    %9 = vector.load %arg4[%c0_6, %c0_7] : memref<8x512xf32, #tpu.memory_space<vmem>>, vector<8x512xf32>
    tpu.vector_store %arg4[%c0_6, %c0_7], %8 {strides = array<i32>} : memref<8x512xf32, #tpu.memory_space<vmem>>, vector<8x512xf32>,
    return
  }
  func.func @transform_0(%arg0: i32) -> (i32, i32) {
    %c0_i32 = arith.constant 0 : i32
    %c0_i32_0 = arith.constant 0 : i32
    %c0_i32_1 = arith.constant 0 : i32
    return %c0_i32, %c0_i32_0 : i32, i32
  }
  func.func @transform_1(%arg0: i32) -> (i32, i32) {
    %c0_i32 = arith.constant 0 : i32
    %c0_i32_0 = arith.constant 0 : i32
    return %c0_i32, %arg0 : i32, i32
  }
  func.func @transform_2(%arg0: i32) -> (i32, i32) {
    %c0_i32 = arith.constant 0 : i32
    %c0_i32_0 = arith.constant 0 : i32
    return %c0_i32, %arg0 : i32, i32
  }
  func.func @transform_3(%arg0: i32) -> (i32, i32) {
    %c0_i32 = arith.constant 0 : i32
    %c0_i32_0 = arith.constant 0 : i32
    return %c0_i32, %arg0 : i32, i32
  }
}

module attributes {stable_mosaic.version = 11 : i64} {
  func.func @_linear_kernel(%arg0: i32, %arg1: memref<8x1536xf32, #tpu.memory_space<vmem>>, %arg2: memref<1536x512xbf16, #tpu.memory_space<vmem>>, %arg3: memref<1x512xf32, #tpu.memory_space<vmem>>, %arg4: memref<8x512xf32, #tpu.memory_space<vmem>>) attributes {dimension_semantics = [#tpu.dimension_semantics<parallel>], iteration_bounds = array<i64: 2>, scalar_prefetch = 0 : i64, scratch_operands = 0 : i64, tpu.core_type = #tpu.core_type<tc>, window_params = [{pipeline_mode = #tpu.pipeline_mode<synchronous>, transform_indices = @transform_0, window_bounds = array<i64: 8, 1536>}, {transform_indices = @transform_1, window_bounds = array<i64: 1536, 512>}, {transform_indices = @transform_2, window_bounds = array<i64: 1, 512>}, {transform_indices = @transform_3, window_bounds = array<i64: 8, 512>}]} {
    %c0 = arith.constant 0 : index
    %c0_0 = arith.constant 0 : index
    %0 = vector.load %arg1[%c0, %c0_0] : memref<8x1536xf32, #tpu.memory_space<vmem>>, vector<8x1536xf32>
    %1 = arith.truncf %0 : vector<8x1536xf32> to vector<8x1536xbf16>
    %c0_1 = arith.constant 0 : index
    %c0_2 = arith.constant 0 : index
    %2 = vector.load %arg2[%c0_1, %c0_2] : memref<1536x512xbf16, #tpu.memory_space<vmem>>, vector<1536x512xbf16>
    %cst = arith.constant dense<0.000000e+00> : vector<8x512xf32>
    %3 = tpu.matmul %1, %2, %cst {dimension_numbers = #tpu.dot_dimension_numbers<[1], [0], [0], [1], [0, 0, 1, 1], [], []>} : vector<8x1536xbf16>, vector<1536x512xbf16>, vector<8x512xf32> -> vector<8x512xf32>
    %c0_3 = arith.constant 0 : index
    %c0_4 = arith.constant 0 : index
    %4 = vector.load %arg3[%c0_3, %c0_4] : memref<1x512xf32, #tpu.memory_space<vmem>>, vector<1x512xf32>
    %5 = vector.broadcast %4 : vector<1x512xf32> to vector<8x512xf32>
    %6 = arith.addf %3, %5 : vector<8x512xf32>
    %cst_5 = arith.constant 0.000000e+00 : f32
    %7 = vector.broadcast %cst_5 : f32 to vector<8x512xf32>
    %8 = arith.maximumf %6, %7 : vector<8x512xf32>
    %c0_6 = arith.constant 0 : index
    %c0_7 = arith.constant 0 : index
    %9 = vector.load %arg4[%c0_6, %c0_7] : memref<8x512xf32, #tpu.memory_space<vmem>>, vector<8x512xf32>
    tpu.vector_store %arg4[%c0_6, %c0_7], %8 {strides = array<i32>} : memref<8x512xf32, #tpu.memory_space<vmem>>, vector<8x512xf32>,
    return
  }
  func.func @transform_0(%arg0: i32) -> (i32, i32) {
    %c0_i32 = arith.constant 0 : i32
    %c0_i32_0 = arith.constant 0 : i32
    %c0_i32_1 = arith.constant 0 : i32
    return %c0_i32, %c0_i32_0 : i32, i32
  }
  func.func @transform_1(%arg0: i32) -> (i32, i32) {
    %c0_i32 = arith.constant 0 : i32
    %c0_i32_0 = arith.constant 0 : i32
    return %c0_i32, %arg0 : i32, i32
  }
  func.func @transform_2(%arg0: i32) -> (i32, i32) {
    %c0_i32 = arith.constant 0 : i32
    %c0_i32_0 = arith.constant 0 : i32
    return %c0_i32, %arg0 : i32, i32
  }
  func.func @transform_3(%arg0: i32) -> (i32, i32) {
    %c0_i32 = arith.constant 0 : i32
    %c0_i32_0 = arith.constant 0 : i32
    return %c0_i32, %arg0 : i32, i32
  }
}

module attributes {stable_mosaic.version = 11 : i64} {
  func.func @_tail_kernel(%arg0: memref<8x1024xf32, #tpu.memory_space<vmem>>, %arg1: memref<8x128xf32, #tpu.memory_space<vmem>>, %arg2: memref<1024x128xbf16, #tpu.memory_space<vmem>>, %arg3: memref<1x128xf32, #tpu.memory_space<vmem>>, %arg4: memref<128x128xbf16, #tpu.memory_space<vmem>>, %arg5: memref<1x128xf32, #tpu.memory_space<vmem>>, %arg6: memref<128x128xbf16, #tpu.memory_space<vmem>>, %arg7: memref<1x128xf32, #tpu.memory_space<vmem>>, %arg8: memref<8x128xf32, #tpu.memory_space<vmem>>) attributes {dimension_semantics = [], scalar_prefetch = 0 : i64, scratch_operands = 0 : i64, tpu.core_type = #tpu.core_type<tc>} {
    %c0 = arith.constant 0 : index
    %c0_0 = arith.constant 0 : index
    %0 = vector.load %arg0[%c0, %c0_0] : memref<8x1024xf32, #tpu.memory_space<vmem>>, vector<8x1024xf32>
    %1 = arith.truncf %0 : vector<8x1024xf32> to vector<8x1024xbf16>
    %c0_1 = arith.constant 0 : index
    %c0_2 = arith.constant 0 : index
    %2 = vector.load %arg2[%c0_1, %c0_2] : memref<1024x128xbf16, #tpu.memory_space<vmem>>, vector<1024x128xbf16>
    %cst = arith.constant dense<0.000000e+00> : vector<8x128xf32>
    %3 = tpu.matmul %1, %2, %cst {dimension_numbers = #tpu.dot_dimension_numbers<[1], [0], [0], [1], [0, 0, 1, 1], [], []>} : vector<8x1024xbf16>, vector<1024x128xbf16>, vector<8x128xf32> -> vector<8x128xf32>
    %c0_3 = arith.constant 0 : index
    %c0_4 = arith.constant 0 : index
    %4 = vector.load %arg3[%c0_3, %c0_4] : memref<1x128xf32, #tpu.memory_space<vmem>>, vector<1x128xf32>
    %5 = vector.broadcast %4 : vector<1x128xf32> to vector<8x128xf32>
    %6 = arith.addf %3, %5 : vector<8x128xf32>
    %cst_5 = arith.constant 0.000000e+00 : f32
    %7 = vector.broadcast %cst_5 : f32 to vector<8x128xf32>
    %8 = arith.maximumf %6, %7 : vector<8x128xf32>
    %9 = arith.truncf %8 : vector<8x128xf32> to vector<8x128xbf16>
    %c0_6 = arith.constant 0 : index
    %c0_7 = arith.constant 0 : index
    %10 = vector.load %arg4[%c0_6, %c0_7] : memref<128x128xbf16, #tpu.memory_space<vmem>>, vector<128x128xbf16>
    %cst_8 = arith.constant dense<0.000000e+00> : vector<8x128xf32>
    %11 = tpu.matmul %9, %10, %cst_8 {dimension_numbers = #tpu.dot_dimension_numbers<[1], [0], [0], [1], [0, 0, 1, 1], [], []>} : vector<8x128xbf16>, vector<128x128xbf16>, vector<8x128xf32> -> vector<8x128xf32>
    %c0_9 = arith.constant 0 : index
    %c0_10 = arith.constant 0 : index
    %12 = vector.load %arg5[%c0_9, %c0_10] : memref<1x128xf32, #tpu.memory_space<vmem>>, vector<1x128xf32>
    %13 = vector.broadcast %12 : vector<1x128xf32> to vector<8x128xf32>
    %14 = arith.addf %11, %13 : vector<8x128xf32>
    %cst_11 = arith.constant 0.000000e+00 : f32
    %15 = vector.broadcast %cst_11 : f32 to vector<8x128xf32>
    %16 = arith.maximumf %14, %15 : vector<8x128xf32>
    %c0_12 = arith.constant 0 : index
    %c0_13 = arith.constant 0 : index
    %17 = vector.load %arg1[%c0_12, %c0_13] : memref<8x128xf32, #tpu.memory_space<vmem>>, vector<8x128xf32>
    %18 = arith.addf %16, %17 : vector<8x128xf32>
    %19 = arith.truncf %18 : vector<8x128xf32> to vector<8x128xbf16>
    %c0_14 = arith.constant 0 : index
    %c0_15 = arith.constant 0 : index
    %20 = vector.load %arg6[%c0_14, %c0_15] : memref<128x128xbf16, #tpu.memory_space<vmem>>, vector<128x128xbf16>
    %cst_16 = arith.constant dense<0.000000e+00> : vector<8x128xf32>
    %21 = tpu.matmul %19, %20, %cst_16 {dimension_numbers = #tpu.dot_dimension_numbers<[1], [0], [0], [1], [0, 0, 1, 1], [], []>} : vector<8x128xbf16>, vector<128x128xbf16>, vector<8x128xf32> -> vector<8x128xf32>
    %c0_17 = arith.constant 0 : index
    %c0_18 = arith.constant 0 : index
    %22 = vector.load %arg7[%c0_17, %c0_18] : memref<1x128xf32, #tpu.memory_space<vmem>>, vector<1x128xf32>
    %23 = vector.broadcast %22 : vector<1x128xf32> to vector<8x128xf32>
    %24 = arith.addf %21, %23 : vector<8x128xf32>
    %c0_19 = arith.constant 0 : index
    %c0_20 = arith.constant 0 : index
    %25 = vector.load %arg8[%c0_19, %c0_20] : memref<8x128xf32, #tpu.memory_space<vmem>>, vector<8x128xf32>
    tpu.vector_store %arg8[%c0_19, %c0_20], %24 {strides = array<i32>} : memref<8x128xf32, #tpu.memory_space<vmem>>, vector<8x128xf32>,
    return
  }
}

</mosaic_0001>

<llo_original>
// kernel: net_forward.5
$region0: #{net_forward.5}
  #allocation0 [shape = 'u32[]', space=smem, size = 0x4, offset = 0x4, fixed_abs, tag = 'smem constant byte address 0x4 - core index']
  #allocation1 [shape = 'u32[144,128]{1,0:T(1,128)}', space=vmem, size = 0x12000, scoped, tag = 'internal scratch']
  %s0 = inlined_call_operand.vmem [shape: f32[8,1024], index: 0, kind: input, shape index: {}]
  %s1 = inlined_call_operand.vmem [shape: f32[8,128], index: 1, kind: input, shape index: {}]
  %s2 = inlined_call_operand.vmem [shape: bf16[1024,128], index: 2, kind: input, shape index: {}]
  %s3 = inlined_call_operand.vmem [shape: f32[1,128], index: 3, kind: input, shape index: {}]
  %s4 = inlined_call_operand.vmem [shape: bf16[128,128], index: 4, kind: input, shape index: {}]
  %s5 = inlined_call_operand.vmem [shape: f32[1,128], index: 5, kind: input, shape index: {}]
  %s6 = inlined_call_operand.vmem [shape: bf16[128,128], index: 6, kind: input, shape index: {}]
  %s7 = inlined_call_operand.vmem [shape: f32[1,128], index: 7, kind: input, shape index: {}]
  %s8 = inlined_call_operand.vmem [shape: f32[8,128], index: 8, kind: output, shape index: {}]
  %s9 = sld [smem:[#allocation0]]
  $region42: #{net_forward.5} parent=0
    _
  %s11 = ssub.s32 1, %s9
  %s12 = scalar_select 0, %s11, %s9
  // Predicated region
  $region2: #{net_forward.5} parent=0 // pred_check
    _
  $region3: #{net_forward.5} parent=0 // pred_check_branch
    %14 = sbr.rel (0) target = $region5
  $region4: #{net_forward.5} parent=0 // pred_region
    _
  $region5: #{net_forward.5} parent=0 // pred_fallthru
    _
  // Predicated region
  $region6: #{net_forward.5} parent=0 // pred_check
    _
  $region7: #{net_forward.5} parent=0 // pred_check_branch
    %16 = sbr.rel (0) target = $region9
  $region8: #{net_forward.5} parent=0 // pred_region
    _
  $region9: #{net_forward.5} parent=0 // pred_fallthru
    _
  // Predicated region
  $region10: #{net_forward.5} parent=0 // pred_check
    _
  $region11: #{net_forward.5} parent=0 // pred_check_branch
    %18 = sbr.rel (0) target = $region13
  $region12: #{net_forward.5} parent=0 // pred_region
    _
  $region13: #{net_forward.5} parent=0 // pred_fallthru
    _
  // Predicated region
  $region14: #{net_forward.5} parent=0 // pred_check
    _
  $region15: #{net_forward.5} parent=0 // pred_check_branch
    %20 = sbr.rel (0) target = $region17
  $region16: #{net_forward.5} parent=0 // pred_region
    _
  $region17: #{net_forward.5} parent=0 // pred_fallthru
    _
  // Predicated region
  $region18: #{net_forward.5} parent=0 // pred_check
    _
  $region19: #{net_forward.5} parent=0 // pred_check_branch
    %22 = sbr.rel (0) target = $region21
  $region20: #{net_forward.5} parent=0 // pred_region
    _
  $region21: #{net_forward.5} parent=0 // pred_fallthru
    _
  // Predicated region
  $region22: #{net_forward.5} parent=0 // pred_check
    _
  $region23: #{net_forward.5} parent=0 // pred_check_branch
    %24 = sbr.rel (0) target = $region25
  $region24: #{net_forward.5} parent=0 // pred_region
    _
  $region25: #{net_forward.5} parent=0 // pred_fallthru
    _
  // Predicated region
  $region26: #{net_forward.5} parent=0 // pred_check
    _
  $region27: #{net_forward.5} parent=0 // pred_check_branch
    %26 = sbr.rel (0) target = $region29
  $region28: #{net_forward.5} parent=0 // pred_region
    _
  $region29: #{net_forward.5} parent=0 // pred_fallthru
    _
  // Predicated region
  $region30: #{net_forward.5} parent=0 // pred_check
    _
  $region31: #{net_forward.5} parent=0 // pred_check_branch
    %28 = sbr.rel (0) target = $region33
  $region32: #{net_forward.5} parent=0 // pred_region
    _
  $region33: #{net_forward.5} parent=0 // pred_fallthru
    _
  %v30 = vld [vmem:[%s0] sm:$0xff]
  %v31 = vld [vmem:[%s0 + $0x8] sm:$0xff]
  %v32 = vld [vmem:[%s0 + $0x10] sm:$0xff]
  %v33 = vld [vmem:[%s0 + $0x18] sm:$0xff]
  %v34 = vld [vmem:[%s0 + $0x20] sm:$0xff]
  %v35 = vld [vmem:[%s0 + $0x28] sm:$0xff]
  %v36 = vld [vmem:[%s0 + $0x30] sm:$0xff]
  %v37 = vld [vmem:[%s0 + $0x38] sm:$0xff]
  %v38 = vpack.c.bf16 %v30, %v30
  %v39 = vpack.c.bf16 %v31, %v31
  %v40 = vpack.c.bf16 %v32, %v32
  %v41 = vpack.c.bf16 %v33, %v33
  %v42 = vpack.c.bf16 %v34, %v34
  %v43 = vpack.c.bf16 %v35, %v35
  %v44 = vpack.c.bf16 %v36, %v36
  %v45 = vpack.c.bf16 %v37, %v37
  %v46 = vld [vmem:[%s2] sm:$0xf]
  %v47 = vld [vmem:[%s2 + $0x4] sm:$0xf]
  %v48 = vld [vmem:[%s2 + $0x8] sm:$0xf]
  %v49 = vld [vmem:[%s2 + $0xc] sm:$0xf]
  %v50 = vld [vmem:[%s2 + $0x10] sm:$0xf]
  %v51 = vld [vmem:[%s2 + $0x14] sm:$0xf]
  %v52 = vld [vmem:[%s2 + $0x18] sm:$0xf]
  %v53 = vld [vmem:[%s2 + $0x1c] sm:$0xf]
  %v54 = vld [vmem:[%s2 + $0x20] sm:$0xf]
  %v55 = vld [vmem:[%s2 + $0x24] sm:$0xf]
  %v56 = vld [vmem:[%s2 + $0x28] sm:$0xf]
  %v57 = vld [vmem:[%s2 + $0x2c] sm:$0xf]
  %v58 = vld [vmem:[%s2 + $0x30] sm:$0xf]
  %v59 = vld [vmem:[%s2 + $0x34] sm:$0xf]
  %v60 = vld [vmem:[%s2 + $0x38] sm:$0xf]
  %v61 = vld [vmem:[%s2 + $0x3c] sm:$0xf]
  %v62 = vld [vmem:[%s2 + $0x40] sm:$0xf]
  %v63 = vld [vmem:[%s2 + $0x44] sm:$0xf]
  %v64 = vld [vmem:[%s2 + $0x48] sm:$0xf]
  %v65 = vld [vmem:[%s2 + $0x4c] sm:$0xf]
  %v66 = vld [vmem:[%s2 + $0x50] sm:$0xf]
  %v67 = vld [vmem:[%s2 + $0x54] sm:$0xf]
  %v68 = vld [vmem:[%s2 + $0x58] sm:$0xf]
  %v69 = vld [vmem:[%s2 + $0x5c] sm:$0xf]
  %v70 = vld [vmem:[%s2 + $0x60] sm:$0xf]
  %v71 = vld [vmem:[%s2 + $0x64] sm:$0xf]
  %v72 = vld [vmem:[%s2 + $0x68] sm:$0xf]
  %v73 = vld [vmem:[%s2 + $0x6c] sm:$0xf]
  %v74 = vld [vmem:[%s2 + $0x70] sm:$0xf]
  %v75 = vld [vmem:[%s2 + $0x74] sm:$0xf]
  %v76 = vld [vmem:[%s2 + $0x78] sm:$0xf]
  %v77 = vld [vmem:[%s2 + $0x7c] sm:$0xf]
  %v78 = vld [vmem:[%s2 + $0x80] sm:$0xf]
  %v79 = vld [vmem:[%s2 + $0x84] sm:$0xf]
  %v80 = vld [vmem:[%s2 + $0x88] sm:$0xf]
  %v81 = vld [vmem:[%s2 + $0x8c] sm:$0xf]
  %v82 = vld [vmem:[%s2 + $0x90] sm:$0xf]
  %v83 = vld [vmem:[%s2 + $0x94] sm:$0xf]
  %v84 = vld [vmem:[%s2 + $0x98] sm:$0xf]
  %v85 = vld [vmem:[%s2 + $0x9c] sm:$0xf]
  %v86 = vld [vmem:[%s2 + $0xa0] sm:$0xf]
  %v87 = vld [vmem:[%s2 + $0xa4] sm:$0xf]
  %v88 = vld [vmem:[%s2 + $0xa8] sm:$0xf]
  %v89 = vld [vmem:[%s2 + $0xac] sm:$0xf]
  %v90 = vld [vmem:[%s2 + $0xb0] sm:$0xf]
  %v91 = vld [vmem:[%s2 + $0xb4] sm:$0xf]
  %v92 = vld [vmem:[%s2 + $0xb8] sm:$0xf]
  %v93 = vld [vmem:[%s2 + $0xbc] sm:$0xf]
  %v94 = vld [vmem:[%s2 + $0xc0] sm:$0xf]
  %v95 = vld [vmem:[%s2 + $0xc4] sm:$0xf]
  %v96 = vld [vmem:[%s2 + $0xc8] sm:$0xf]
  %v97 = vld [vmem:[%s2 + $0xcc] sm:$0xf]
  %v98 = vld [vmem:[%s2 + $0xd0] sm:$0xf]
  %v99 = vld [vmem:[%s2 + $0xd4] sm:$0xf]
  %v100 = vld [vmem:[%s2 + $0xd8] sm:$0xf]
  %v101 = vld [vmem:[%s2 + $0xdc] sm:$0xf]
  %v102 = vld [vmem:[%s2 + $0xe0] sm:$0xf]
  %v103 = vld [vmem:[%s2 + $0xe4] sm:$0xf]
  %v104 = vld [vmem:[%s2 + $0xe8] sm:$0xf]
  %v105 = vld [vmem:[%s2 + $0xec] sm:$0xf]
  %v106 = vld [vmem:[%s2 + $0xf0] sm:$0xf]
  %v107 = vld [vmem:[%s2 + $0xf4] sm:$0xf]
  %v108 = vld [vmem:[%s2 + $0xf8] sm:$0xf]
  %v109 = vld [vmem:[%s2 + $0xfc] sm:$0xf]
  %v110 = vld [vmem:[%s2 + $0x100] sm:$0xf]
  %v111 = vld [vmem:[%s2 + $0x104] sm:$0xf]
  %v112 = vld [vmem:[%s2 + $0x108] sm:$0xf]
  %v113 = vld [vmem:[%s2 + $0x10c] sm:$0xf]
  %v114 = vld [vmem:[%s2 + $0x110] sm:$0xf]
  %v115 = vld [vmem:[%s2 + $0x114] sm:$0xf]
  %v116 = vld [vmem:[%s2 + $0x118] sm:$0xf]
  %v117 = vld [vmem:[%s2 + $0x11c] sm:$0xf]
  %v118 = vld [vmem:[%s2 + $0x120] sm:$0xf]
  %v119 = vld [vmem:[%s2 + $0x124] sm:$0xf]
  %v120 = vld [vmem:[%s2 + $0x128] sm:$0xf]
  %v121 = vld [vmem:[%s2 + $0x12c] sm:$0xf]
  %v122 = vld [vmem:[%s2 + $0x130] sm:$0xf]
  %v123 = vld [vmem:[%s2 + $0x134] sm:$0xf]
  %v124 = vld [vmem:[%s2 + $0x138] sm:$0xf]
  %v125 = vld [vmem:[%s2 + $0x13c] sm:$0xf]
  %v126 = vld [vmem:[%s2 + $0x140] sm:$0xf]
  %v127 = vld [vmem:[%s2 + $0x144] sm:$0xf]
  %v128 = vld [vmem:[%s2 + $0x148] sm:$0xf]
  %v129 = vld [vmem:[%s2 + $0x14c] sm:$0xf]
  %v130 = vld [vmem:[%s2 + $0x150] sm:$0xf]
  %v131 = vld [vmem:[%s2 + $0x154] sm:$0xf]
  %v132 = vld [vmem:[%s2 + $0x158] sm:$0xf]
  %v133 = vld [vmem:[%s2 + $0x15c] sm:$0xf]
  %v134 = vld [vmem:[%s2 + $0x160] sm:$0xf]
  %v135 = vld [vmem:[%s2 + $0x164] sm:$0xf]
  %v136 = vld [vmem:[%s2 + $0x168] sm:$0xf]
  %v137 = vld [vmem:[%s2 + $0x16c] sm:$0xf]
  %v138 = vld [vmem:[%s2 + $0x170] sm:$0xf]
  %v139 = vld [vmem:[%s2 + $0x174] sm:$0xf]
  %v140 = vld [vmem:[%s2 + $0x178] sm:$0xf]
  %v141 = vld [vmem:[%s2 + $0x17c] sm:$0xf]
  %v142 = vld [vmem:[%s2 + $0x180] sm:$0xf]
  %v143 = vld [vmem:[%s2 + $0x184] sm:$0xf]
  %v144 = vld [vmem:[%s2 + $0x188] sm:$0xf]
  %v145 = vld [vmem:[%s2 + $0x18c] sm:$0xf]
  %v146 = vld [vmem:[%s2 + $0x190] sm:$0xf]
  %v147 = vld [vmem:[%s2 + $0x194] sm:$0xf]
  %v148 = vld [vmem:[%s2 + $0x198] sm:$0xf]
  %v149 = vld [vmem:[%s2 + $0x19c] sm:$0xf]
  %v150 = vld [vmem:[%s2 + $0x1a0] sm:$0xf]
  %v151 = vld [vmem:[%s2 + $0x1a4] sm:$0xf]
  %v152 = vld [vmem:[%s2 + $0x1a8] sm:$0xf]
  %v153 = vld [vmem:[%s2 + $0x1ac] sm:$0xf]
  %v154 = vld [vmem:[%s2 + $0x1b0] sm:$0xf]
  %v155 = vld [vmem:[%s2 + $0x1b4] sm:$0xf]
  %v156 = vld [vmem:[%s2 + $0x1b8] sm:$0xf]
  %v157 = vld [vmem:[%s2 + $0x1bc] sm:$0xf]
  %v158 = vld [vmem:[%s2 + $0x1c0] sm:$0xf]
  %v159 = vld [vmem:[%s2 + $0x1c4] sm:$0xf]
  %v160 = vld [vmem:[%s2 + $0x1c8] sm:$0xf]
  %v161 = vld [vmem:[%s2 + $0x1cc] sm:$0xf]
  %v162 = vld [vmem:[%s2 + $0x1d0] sm:$0xf]
  %v163 = vld [vmem:[%s2 + $0x1d4] sm:$0xf]
  %v164 = vld [vmem:[%s2 + $0x1d8] sm:$0xf]
  %v165 = vld [vmem:[%s2 + $0x1dc] sm:$0xf]
  %v166 = vld [vmem:[%s2 + $0x1e0] sm:$0xf]
  %v167 = vld [vmem:[%s2 + $0x1e4] sm:$0xf]
  %v168 = vld [vmem:[%s2 + $0x1e8] sm:$0xf]
  %v169 = vld [vmem:[%s2 + $0x1ec] sm:$0xf]
  %v170 = vld [vmem:[%s2 + $0x1f0] sm:$0xf]
  %v171 = vld [vmem:[%s2 + $0x1f4] sm:$0xf]
  %v172 = vld [vmem:[%s2 + $0x1f8] sm:$0xf]
  %v173 = vld [vmem:[%s2 + $0x1fc] sm:$0xf]
  %v174 = vld [vmem:[%s3] sm:$0x1]
  %v176 = vlaneseq
  %v177 = vshrl.u32 %v176, 7
  %v178 = vsub.s32 0, %v177
  %v179 = vrot.slane %v174, %v178
  %v309 = vunpack.c.l.b16 %v46
  %v310 = vunpack.c.l.b16 %v47
  %v311 = vunpack.c.l.b16 %v48
  %v312 = vunpack.c.l.b16 %v49
  %v313 = vunpack.c.l.b16 %v50
  %v314 = vunpack.c.l.b16 %v51
  %v315 = vunpack.c.l.b16 %v52
  %v316 = vunpack.c.l.b16 %v53
  %v317 = vunpack.c.l.b16 %v54
  %v318 = vunpack.c.l.b16 %v55
  %v319 = vunpack.c.l.b16 %v56
  %v320 = vunpack.c.l.b16 %v57
  %v321 = vunpack.c.l.b16 %v58
  %v322 = vunpack.c.l.b16 %v59
  %v323 = vunpack.c.l.b16 %v60
  %v324 = vunpack.c.l.b16 %v61
  %v325 = vunpack.c.l.b16 %v62
  %v326 = vunpack.c.l.b16 %v63
  %v327 = vunpack.c.l.b16 %v64
  %v328 = vunpack.c.l.b16 %v65
  %v329 = vunpack.c.l.b16 %v66
  %v330 = vunpack.c.l.b16 %v67
  %v331 = vunpack.c.l.b16 %v68
  %v332 = vunpack.c.l.b16 %v69
  %v333 = vunpack.c.l.b16 %v70
  %v334 = vunpack.c.l.b16 %v71
  %v335 = vunpack.c.l.b16 %v72
  %v336 = vunpack.c.l.b16 %v73
  %v337 = vunpack.c.l.b16 %v74
  %v338 = vunpack.c.l.b16 %v75
  %v339 = vunpack.c.l.b16 %v76
  %v340 = vunpack.c.l.b16 %v77
  %v341 = vunpack.c.l.b16 %v78
  %v342 = vunpack.c.l.b16 %v79
  %v343 = vunpack.c.l.b16 %v80
  %v344 = vunpack.c.l.b16 %v81
  %v345 = vunpack.c.l.b16 %v82
  %v346 = vunpack.c.l.b16 %v83
  %v347 = vunpack.c.l.b16 %v84
  %v348 = vunpack.c.l.b16 %v85
  %v349 = vunpack.c.l.b16 %v86
  %v350 = vunpack.c.l.b16 %v87
  %v351 = vunpack.c.l.b16 %v88
  %v352 = vunpack.c.l.b16 %v89
  %v353 = vunpack.c.l.b16 %v90
  %v354 = vunpack.c.l.b16 %v91
  %v355 = vunpack.c.l.b16 %v92
  %v356 = vunpack.c.l.b16 %v93
  %v357 = vunpack.c.l.b16 %v94
  %v358 = vunpack.c.l.b16 %v95
  %v359 = vunpack.c.l.b16 %v96
  %v360 = vunpack.c.l.b16 %v97
  %v361 = vunpack.c.l.b16 %v98
  %v362 = vunpack.c.l.b16 %v99
  %v363 = vunpack.c.l.b16 %v100
  %v364 = vunpack.c.l.b16 %v101
  %v365 = vunpack.c.l.b16 %v102
  %v366 = vunpack.c.l.b16 %v103
  %v367 = vunpack.c.l.b16 %v104
  %v368 = vunpack.c.l.b16 %v105
  %v369 = vunpack.c.l.b16 %v106
  %v370 = vunpack.c.l.b16 %v107
  %v371 = vunpack.c.l.b16 %v108
  %v372 = vunpack.c.l.b16 %v109
  %v373 = vunpack.c.l.b16 %v110
  %v374 = vunpack.c.l.b16 %v111
  %v375 = vunpack.c.l.b16 %v112
  %v376 = vunpack.c.l.b16 %v113
  %v377 = vunpack.c.l.b16 %v114
  %v378 = vunpack.c.l.b16 %v115
  %v379 = vunpack.c.l.b16 %v116
  %v380 = vunpack.c.l.b16 %v117
  %v381 = vunpack.c.l.b16 %v118
  %v382 = vunpack.c.l.b16 %v119
  %v383 = vunpack.c.l.b16 %v120
  %v384 = vunpack.c.l.b16 %v121
  %v385 = vunpack.c.l.b16 %v122
  %v386 = vunpack.c.l.b16 %v123
  %v387 = vunpack.c.l.b16 %v124
  %v388 = vunpack.c.l.b16 %v125
  %v389 = vunpack.c.l.b16 %v126
  %v390 = vunpack.c.l.b16 %v127
  %v391 = vunpack.c.l.b16 %v128
  %v392 = vunpack.c.l.b16 %v129
  %v393 = vunpack.c.l.b16 %v130
  %v394 = vunpack.c.l.b16 %v131
  %v395 = vunpack.c.l.b16 %v132
  %v396 = vunpack.c.l.b16 %v133
  %v397 = vunpack.c.l.b16 %v134
  %v398 = vunpack.c.l.b16 %v135
  %v399 = vunpack.c.l.b16 %v136
  %v400 = vunpack.c.l.b16 %v137
  %v401 = vunpack.c.l.b16 %v138
  %v402 = vunpack.c.l.b16 %v139
  %v403 = vunpack.c.l.b16 %v140
  %v404 = vunpack.c.l.b16 %v141
  %v405 = vunpack.c.l.b16 %v142
  %v406 = vunpack.c.l.b16 %v143
  %v407 = vunpack.c.l.b16 %v144
  %v408 = vunpack.c.l.b16 %v145
  %v409 = vunpack.c.l.b16 %v146
  %v410 = vunpack.c.l.b16 %v147
  %v411 = vunpack.c.l.b16 %v148
  %v412 = vunpack.c.l.b16 %v149
  %v413 = vunpack.c.l.b16 %v150
  %v414 = vunpack.c.l.b16 %v151
  %v415 = vunpack.c.l.b16 %v152
  %v416 = vunpack.c.l.b16 %v153
  %v417 = vunpack.c.l.b16 %v154
  %v418 = vunpack.c.l.b16 %v155
  %v419 = vunpack.c.l.b16 %v156
  %v420 = vunpack.c.l.b16 %v157
  %v421 = vunpack.c.l.b16 %v158
  %v422 = vunpack.c.l.b16 %v159
  %v423 = vunpack.c.l.b16 %v160
  %v424 = vunpack.c.l.b16 %v161
  %v425 = vunpack.c.l.b16 %v162
  %v426 = vunpack.c.l.b16 %v163
  %v427 = vunpack.c.l.b16 %v164
  %v428 = vunpack.c.l.b16 %v165
  %v429 = vunpack.c.l.b16 %v166
  %v430 = vunpack.c.l.b16 %v167
  %v431 = vunpack.c.l.b16 %v168
  %v432 = vunpack.c.l.b16 %v169
  %v433 = vunpack.c.l.b16 %v170
  %v434 = vunpack.c.l.b16 %v171
  %v435 = vunpack.c.l.b16 %v172
  %v436 = vunpack.c.l.b16 %v173
  %v437 = vpack.c.b16 %v310, %v309
  %v438 = vpack.c.b16 %v312, %v311
  %v439 = vpack.c.b16 %v314, %v313
  %v440 = vpack.c.b16 %v316, %v315
  %v441 = vpack.c.b16 %v318, %v317
  %v442 = vpack.c.b16 %v320, %v319
  %v443 = vpack.c.b16 %v322, %v321
  %v444 = vpack.c.b16 %v324, %v323
  %v445 = vpack.c.b16 %v326, %v325
  %v446 = vpack.c.b16 %v328, %v327
  %v447 = vpack.c.b16 %v330, %v329
  %v448 = vpack.c.b16 %v332, %v331
  %v449 = vpack.c.b16 %v334, %v333
  %v450 = vpack.c.b16 %v336, %v335
  %v451 = vpack.c.b16 %v338, %v337
  %v452 = vpack.c.b16 %v340, %v339
  %v453 = vpack.c.b16 %v342, %v341
  %v454 = vpack.c.b16 %v344, %v343
  %v455 = vpack.c.b16 %v346, %v345
  %v456 = vpack.c.b16 %v348, %v347
  %v457 = vpack.c.b16 %v350, %v349
  %v458 = vpack.c.b16 %v352, %v351
  %v459 = vpack.c.b16 %v354, %v353
  %v460 = vpack.c.b16 %v356, %v355
  %v461 = vpack.c.b16 %v358, %v357
  %v462 = vpack.c.b16 %v360, %v359
  %v463 = vpack.c.b16 %v362, %v361
  %v464 = vpack.c.b16 %v364, %v363
  %v465 = vpack.c.b16 %v366, %v365
  %v466 = vpack.c.b16 %v368, %v367
  %v467 = vpack.c.b16 %v370, %v369
  %v468 = vpack.c.b16 %v372, %v371
  %v469 = vpack.c.b16 %v374, %v373
  %v470 = vpack.c.b16 %v376, %v375
  %v471 = vpack.c.b16 %v378, %v377
  %v472 = vpack.c.b16 %v380, %v379
  %v473 = vpack.c.b16 %v382, %v381
  %v474 = vpack.c.b16 %v384, %v383
  %v475 = vpack.c.b16 %v386, %v385
  %v476 = vpack.c.b16 %v388, %v387
  %v477 = vpack.c.b16 %v390, %v389
  %v478 = vpack.c.b16 %v392, %v391
  %v479 = vpack.c.b16 %v394, %v393
  %v480 = vpack.c.b16 %v396, %v395
  %v481 = vpack.c.b16 %v398, %v397
  %v482 = vpack.c.b16 %v400, %v399
  %v483 = vpack.c.b16 %v402, %v401
  %v484 = vpack.c.b16 %v404, %v403
  %v485 = vpack.c.b16 %v406, %v405
  %v486 = vpack.c.b16 %v408, %v407
  %v487 = vpack.c.b16 %v410, %v409
  %v488 = vpack.c.b16 %v412, %v411
  %v489 = vpack.c.b16 %v414, %v413
  %v490 = vpack.c.b16 %v416, %v415
  %v491 = vpack.c.b16 %v418, %v417
  %v492 = vpack.c.b16 %v420, %v419
  %v493 = vpack.c.b16 %v422, %v421
  %v494 = vpack.c.b16 %v424, %v423
  %v495 = vpack.c.b16 %v426, %v425
  %v496 = vpack.c.b16 %v428, %v427
  %v497 = vpack.c.b16 %v430, %v429
  %v498 = vpack.c.b16 %v432, %v431
  %v499 = vpack.c.b16 %v434, %v433
  %v500 = vpack.c.b16 %v436, %v435
  %565 = vmatprep.subr.bf16.mxu0 0
  %566 = vmatpush1.bf16.msra.mxu0 %v437
  %567 = vmatprep.subr.bf16.mxu0 0
  %568 = vmatpush1.bf16.msra.mxu0 %v438
  %569 = vmatprep.subr.bf16.mxu0 0
  %570 = vmatpush1.bf16.msra.mxu0 %v439
  %571 = vmatprep.subr.bf16.mxu0 0
  %572 = vmatpush1.bf16.msra.mxu0 %v440
  %573 = vmatprep.subr.bf16.mxu0 0
  %574 = vmatpush1.bf16.msra.mxu0 %v441
  %575 = vmatprep.subr.bf16.mxu0 0
  %576 = vmatpush1.bf16.msra.mxu0 %v442
  %577 = vmatprep.subr.bf16.mxu0 0
  %578 = vmatpush1.bf16.msra.mxu0 %v443
  %579 = vmatprep.subr.bf16.mxu0 0
  %580 = vmatpush1.bf16.msra.mxu0 %v444
  %581 = vmatprep.subr.bf16.mxu0 0
  %582 = vmatpush1.bf16.msra.mxu0 %v445
  %583 = vmatprep.subr.bf16.mxu0 0
  %584 = vmatpush1.bf16.msra.mxu0 %v446
  %585 = vmatprep.subr.bf16.mxu0 0
  %586 = vmatpush1.bf16.msra.mxu0 %v447
  %587 = vmatprep.subr.bf16.mxu0 0
  %588 = vmatpush1.bf16.msra.mxu0 %v448
  %589 = vmatprep.subr.bf16.mxu0 0
  %590 = vmatpush1.bf16.msra.mxu0 %v449
  %591 = vmatprep.subr.bf16.mxu0 0
  %592 = vmatpush1.bf16.msra.mxu0 %v450
  %593 = vmatprep.subr.bf16.mxu0 0
  %594 = vmatpush1.bf16.msra.mxu0 %v451
  %595 = vmatprep.subr.bf16.mxu0 0
  %596 = vmatpush1.bf16.msra.mxu0 %v452
  %597 = vmatprep.mubr.bf16.mxu0 %v39
  %598 = vmatmul.mubr.bf16.gmra.mrb[0].mxu0 %v38
  %v599 = vpop.f32.mrb[0].mxu0
  %v600 = vadd.f32 %v179, %v599
  %v601 = vpop.f32.mrb[0].mxu0
  %v602 = vpop.f32.mrb[0].mxu0
  %v603 = vpop.f32.mrb[0].mxu0
  %604 = vdwg.mxu0
  %605 = vmatprep.subr.bf16.mxu0 0
  %606 = vmatpush1.bf16.msra.mxu0 %v453
  %607 = vmatprep.subr.bf16.mxu0 0
  %608 = vmatpush1.bf16.msra.mxu0 %v454
  %609 = vmatprep.subr.bf16.mxu0 0
  %610 = vmatpush1.bf16.msra.mxu0 %v455
  %611 = vmatprep.subr.bf16.mxu0 0
  %612 = vmatpush1.bf16.msra.mxu0 %v456
  %613 = vmatprep.subr.bf16.mxu0 0
  %614 = vmatpush1.bf16.msra.mxu0 %v457
  %615 = vmatprep.subr.bf16.mxu0 0
  %616 = vmatpush1.bf16.msra.mxu0 %v458
  %617 = vmatprep.subr.bf16.mxu0 0
  %618 = vmatpush1.bf16.msra.mxu0 %v459
  %619 = vmatprep.subr.bf16.mxu0 0
  %620 = vmatpush1.bf16.msra.mxu0 %v460
  %621 = vmatprep.subr.bf16.mxu0 0
  %622 = vmatpush1.bf16.msra.mxu0 %v461
  %623 = vmatprep.subr.bf16.mxu0 0
  %624 = vmatpush1.bf16.msra.mxu0 %v462
  %625 = vmatprep.subr.bf16.mxu0 0
  %626 = vmatpush1.bf16.msra.mxu0 %v463
  %627 = vmatprep.subr.bf16.mxu0 0
  %628 = vmatpush1.bf16.msra.mxu0 %v464
  %629 = vmatprep.subr.bf16.mxu0 0
  %630 = vmatpush1.bf16.msra.mxu0 %v465
  %631 = vmatprep.subr.bf16.mxu0 0
  %632 = vmatpush1.bf16.msra.mxu0 %v466
  %633 = vmatprep.subr.bf16.mxu0 0
  %634 = vmatpush1.bf16.msra.mxu0 %v467
  %635 = vmatprep.subr.bf16.mxu0 0
  %636 = vmatpush1.bf16.msra.mxu0 %v468
  %637 = vmatprep.mubr.bf16.mxu0 %v41
  %638 = vmatmul.mubr.bf16.gmra.mrb[0].mxu0 %v40
  %v639 = vpop.f32.mrb[0].mxu0
  %v640 = vadd.f32 %v600, %v639
  %v641 = vpop.f32.mrb[0].mxu0
  %v642 = vpop.f32.mrb[0].mxu0
  %v643 = vpop.f32.mrb[0].mxu0
  %644 = vdwg.mxu0
  %645 = vmatprep.subr.bf16.mxu0 0
  %646 = vmatpush1.bf16.msra.mxu0 %v469
  %647 = vmatprep.subr.bf16.mxu0 0
  %648 = vmatpush1.bf16.msra.mxu0 %v470
  %649 = vmatprep.subr.bf16.mxu0 0
  %650 = vmatpush1.bf16.msra.mxu0 %v471
  %651 = vmatprep.subr.bf16.mxu0 0
  %652 = vmatpush1.bf16.msra.mxu0 %v472
  %653 = vmatprep.subr.bf16.mxu0 0
  %654 = vmatpush1.bf16.msra.mxu0 %v473
  %655 = vmatprep.subr.bf16.mxu0 0
  %656 = vmatpush1.bf16.msra.mxu0 %v474
  %657 = vmatprep.subr.bf16.mxu0 0
  %658 = vmatpush1.bf16.msra.mxu0 %v475
  %659 = vmatprep.subr.bf16.mxu0 0
  %660 = vmatpush1.bf16.msra.mxu0 %v476
  %661 = vmatprep.subr.bf16.mxu0 0
  %662 = vmatpush1.bf16.msra.mxu0 %v477
  %663 = vmatprep.subr.bf16.mxu0 0
  %664 = vmatpush1.bf16.msra.mxu0 %v478
  %665 = vmatprep.subr.bf16.mxu0 0
  %666 = vmatpush1.bf16.msra.mxu0 %v479
  %667 = vmatprep.subr.bf16.mxu0 0
  %668 = vmatpush1.bf16.msra.mxu0 %v480
  %669 = vmatprep.subr.bf16.mxu0 0
  %670 = vmatpush1.bf16.msra.mxu0 %v481
  %671 = vmatprep.subr.bf16.mxu0 0
  %672 = vmatpush1.bf16.msra.mxu0 %v482
  %673 = vmatprep.subr.bf16.mxu0 0
  %674 = vmatpush1.bf16.msra.mxu0 %v483
  %675 = vmatprep.subr.bf16.mxu0 0
  %676 = vmatpush1.bf16.msra.mxu0 %v484
  %677 = vmatprep.mubr.bf16.mxu0 %v43
  %678 = vmatmul.mubr.bf16.gmra.mrb[0].mxu0 %v42
  %v679 = vpop.f32.mrb[0].mxu0
  %v680 = vadd.f32 %v640, %v679
  %v681 = vpop.f32.mrb[0].mxu0
  %v682 = vpop.f32.mrb[0].mxu0
  %v683 = vpop.f32.mrb[0].mxu0
  %684 = vdwg.mxu0
  %685 = vmatprep.subr.bf16.mxu0 0
  %686 = vmatpush1.bf16.msra.mxu0 %v485
  %687 = vmatprep.subr.bf16.mxu0 0
  %688 = vmatpush1.bf16.msra.mxu0 %v486
  %689 = vmatprep.subr.bf16.mxu0 0
  %690 = vmatpush1.bf16.msra.mxu0 %v487
  %691 = vmatprep.subr.bf16.mxu0 0
  %692 = vmatpush1.bf16.msra.mxu0 %v488
  %693 = vmatprep.subr.bf16.mxu0 0
  %694 = vmatpush1.bf16.msra.mxu0 %v489
  %695 = vmatprep.subr.bf16.mxu0 0
  %696 = vmatpush1.bf16.msra.mxu0 %v490
  %697 = vmatprep.subr.bf16.mxu0 0
  %698 = vmatpush1.bf16.msra.mxu0 %v491
  %699 = vmatprep.subr.bf16.mxu0 0
  %700 = vmatpush1.bf16.msra.mxu0 %v492
  %701 = vmatprep.subr.bf16.mxu0 0
  %702 = vmatpush1.bf16.msra.mxu0 %v493
  %703 = vmatprep.subr.bf16.mxu0 0
  %704 = vmatpush1.bf16.msra.mxu0 %v494
  %705 = vmatprep.subr.bf16.mxu0 0
  %706 = vmatpush1.bf16.msra.mxu0 %v495
  %707 = vmatprep.subr.bf16.mxu0 0
  %708 = vmatpush1.bf16.msra.mxu0 %v496
  %709 = vmatprep.subr.bf16.mxu0 0
  %710 = vmatpush1.bf16.msra.mxu0 %v497
  %711 = vmatprep.subr.bf16.mxu0 0
  %712 = vmatpush1.bf16.msra.mxu0 %v498
  %713 = vmatprep.subr.bf16.mxu0 0
  %714 = vmatpush1.bf16.msra.mxu0 %v499
  %715 = vmatprep.subr.bf16.mxu0 0
  %716 = vmatpush1.bf16.msra.mxu0 %v500
  %717 = vmatprep.mubr.bf16.mxu0 %v45
  %718 = vmatmul.mubr.bf16.gmra.mrb[0].mxu0 %v44
  %v719 = vpop.f32.mrb[0].mxu0
  %v720 = vadd.f32 %v680, %v719
  %v721 = vpop.f32.mrb[0].mxu0
  %v722 = vpop.f32.mrb[0].mxu0
  %v723 = vpop.f32.mrb[0].mxu0
  %724 = vdwg.mxu0
  %v725 = vmax.f32 %v720, 0.0
  %v726 = vpack.c.bf16 %v725, %v725
  %v727 = vld [vmem:[%s4] sm:$0xf]
  %v728 = vld [vmem:[%s4 + $0x4] sm:$0xf]
  %v729 = vld [vmem:[%s4 + $0x8] sm:$0xf]
  %v730 = vld [vmem:[%s4 + $0xc] sm:$0xf]
  %v731 = vld [vmem:[%s4 + $0x10] sm:$0xf]
  %v732 = vld [vmem:[%s4 + $0x14] sm:$0xf]
  %v733 = vld [vmem:[%s4 + $0x18] sm:$0xf]
  %v734 = vld [vmem:[%s4 + $0x1c] sm:$0xf]
  %v735 = vld [vmem:[%s4 + $0x20] sm:$0xf]
  %v736 = vld [vmem:[%s4 + $0x24] sm:$0xf]
  %v737 = vld [vmem:[%s4 + $0x28] sm:$0xf]
  %v738 = vld [vmem:[%s4 + $0x2c] sm:$0xf]
  %v739 = vld [vmem:[%s4 + $0x30] sm:$0xf]
  %v740 = vld [vmem:[%s4 + $0x34] sm:$0xf]
  %v741 = vld [vmem:[%s4 + $0x38] sm:$0xf]
  %v742 = vld [vmem:[%s4 + $0x3c] sm:$0xf]
  %v743 = vld [vmem:[%s5] sm:$0x1]
  %v745 = vlaneseq
  %v746 = vshrl.u32 %v745, 7
  %v747 = vsub.s32 0, %v746
  %v748 = vrot.slane %v743, %v747
  %v766 = vunpack.c.l.b16 %v727
  %v767 = vunpack.c.l.b16 %v728
  %v768 = vunpack.c.l.b16 %v729
  %v769 = vunpack.c.l.b16 %v730
  %v770 = vunpack.c.l.b16 %v731
  %v771 = vunpack.c.l.b16 %v732
  %v772 = vunpack.c.l.b16 %v733
  %v773 = vunpack.c.l.b16 %v734
  %v774 = vunpack.c.l.b16 %v735
  %v775 = vunpack.c.l.b16 %v736
  %v776 = vunpack.c.l.b16 %v737
  %v777 = vunpack.c.l.b16 %v738
  %v778 = vunpack.c.l.b16 %v739
  %v779 = vunpack.c.l.b16 %v740
  %v780 = vunpack.c.l.b16 %v741
  %v781 = vunpack.c.l.b16 %v742
  %v782 = vpack.c.b16 %v767, %v766
  %v783 = vpack.c.b16 %v769, %v768
  %v784 = vpack.c.b16 %v771, %v770
  %v785 = vpack.c.b16 %v773, %v772
  %v786 = vpack.c.b16 %v775, %v774
  %v787 = vpack.c.b16 %v777, %v776
  %v788 = vpack.c.b16 %v779, %v778
  %v789 = vpack.c.b16 %v781, %v780
  %798 = vmatprep.subr.bf16.mxu0 0
  %799 = vmatpush1.bf16.msra.mxu0 %v782
  %800 = vmatprep.subr.bf16.mxu0 0
  %801 = vmatpush1.bf16.msra.mxu0 %v783
  %802 = vmatprep.subr.bf16.mxu0 0
  %803 = vmatpush1.bf16.msra.mxu0 %v784
  %804 = vmatprep.subr.bf16.mxu0 0
  %805 = vmatpush1.bf16.msra.mxu0 %v785
  %806 = vmatprep.subr.bf16.mxu0 0
  %807 = vmatpush1.bf16.msra.mxu0 %v786
  %808 = vmatprep.subr.bf16.mxu0 0
  %809 = vmatpush1.bf16.msra.mxu0 %v787
  %810 = vmatprep.subr.bf16.mxu0 0
  %811 = vmatpush1.bf16.msra.mxu0 %v788
  %812 = vmatprep.subr.bf16.mxu0 0
  %813 = vmatpush1.bf16.msra.mxu0 %v789
  %814 = vmatprep.subr.bf16.mxu0 0
  %815 = vmatpush1.bf16.msra.mxu0 0
  %816 = vmatprep.subr.bf16.mxu0 0
  %817 = vmatpush1.bf16.msra.mxu0 0
  %818 = vmatprep.subr.bf16.mxu0 0
  %819 = vmatpush1.bf16.msra.mxu0 0
  %820 = vmatprep.subr.bf16.mxu0 0
  %821 = vmatpush1.bf16.msra.mxu0 0
  %822 = vmatprep.subr.bf16.mxu0 0
  %823 = vmatpush1.bf16.msra.mxu0 0
  %824 = vmatprep.subr.bf16.mxu0 0
  %825 = vmatpush1.bf16.msra.mxu0 0
  %826 = vmatprep.subr.bf16.mxu0 0
  %827 = vmatpush1.bf16.msra.mxu0 0
  %828 = vmatprep.subr.bf16.mxu0 0
  %829 = vmatpush1.bf16.msra.mxu0 0
  %830 = vmatprep.mubr.bf16.mxu0 0
  %831 = vmatmul.mubr.bf16.gmra.mrb[0].mxu0 %v726
  %v832 = vpop.f32.mrb[0].mxu0
  %v833 = vadd.f32 %v748, %v832
  %v834 = vpop.f32.mrb[0].mxu0
  %v835 = vpop.f32.mrb[0].mxu0
  %v836 = vpop.f32.mrb[0].mxu0
  %837 = vdwg.mxu0
  %v838 = vmax.f32 %v833, 0.0
  %v839 = vld [vmem:[%s1] sm:$0xff]
  %v840 = vadd.f32 %v838, %v839
  %v841 = vpack.c.bf16 %v840, %v840
  %v842 = vld [vmem:[%s6] sm:$0xf]
  %v843 = vld [vmem:[%s6 + $0x4] sm:$0xf]
  %v844 = vld [vmem:[%s6 + $0x8] sm:$0xf]
  %v845 = vld [vmem:[%s6 + $0xc] sm:$0xf]
  %v846 = vld [vmem:[%s6 + $0x10] sm:$0xf]
  %v847 = vld [vmem:[%s6 + $0x14] sm:$0xf]
  %v848 = vld [vmem:[%s6 + $0x18] sm:$0xf]
  %v849 = vld [vmem:[%s6 + $0x1c] sm:$0xf]
  %v850 = vld [vmem:[%s6 + $0x20] sm:$0xf]
  %v851 = vld [vmem:[%s6 + $0x24] sm:$0xf]
  %v852 = vld [vmem:[%s6 + $0x28] sm:$0xf]
  %v853 = vld [vmem:[%s6 + $0x2c] sm:$0xf]
  %v854 = vld [vmem:[%s6 + $0x30] sm:$0xf]
  %v855 = vld [vmem:[%s6 + $0x34] sm:$0xf]
  %v856 = vld [vmem:[%s6 + $0x38] sm:$0xf]
  %v857 = vld [vmem:[%s6 + $0x3c] sm:$0xf]
  %v858 = vld [vmem:[%s7] sm:$0x1]
  %v860 = vlaneseq
  %v861 = vshrl.u32 %v860, 7
  %v862 = vsub.s32 0, %v861
  %v863 = vrot.slane %v858, %v862
  %v881 = vunpack.c.l.b16 %v842
  %v882 = vunpack.c.l.b16 %v843
  %v883 = vunpack.c.l.b16 %v844
  %v884 = vunpack.c.l.b16 %v845
  %v885 = vunpack.c.l.b16 %v846
  %v886 = vunpack.c.l.b16 %v847
  %v887 = vunpack.c.l.b16 %v848
  %v888 = vunpack.c.l.b16 %v849
  %v889 = vunpack.c.l.b16 %v850
  %v890 = vunpack.c.l.b16 %v851
  %v891 = vunpack.c.l.b16 %v852
  %v892 = vunpack.c.l.b16 %v853
  %v893 = vunpack.c.l.b16 %v854
  %v894 = vunpack.c.l.b16 %v855
  %v895 = vunpack.c.l.b16 %v856
  %v896 = vunpack.c.l.b16 %v857
  %v897 = vpack.c.b16 %v882, %v881
  %v898 = vpack.c.b16 %v884, %v883
  %v899 = vpack.c.b16 %v886, %v885
  %v900 = vpack.c.b16 %v888, %v887
  %v901 = vpack.c.b16 %v890, %v889
  %v902 = vpack.c.b16 %v892, %v891
  %v903 = vpack.c.b16 %v894, %v893
  %v904 = vpack.c.b16 %v896, %v895
  %913 = vmatprep.subr.bf16.mxu0 0
  %914 = vmatpush1.bf16.msra.mxu0 %v897
  %915 = vmatprep.subr.bf16.mxu0 0
  %916 = vmatpush1.bf16.msra.mxu0 %v898
  %917 = vmatprep.subr.bf16.mxu0 0
  %918 = vmatpush1.bf16.msra.mxu0 %v899
  %919 = vmatprep.subr.bf16.mxu0 0
  %920 = vmatpush1.bf16.msra.mxu0 %v900
  %921 = vmatprep.subr.bf16.mxu0 0
  %922 = vmatpush1.bf16.msra.mxu0 %v901
  %923 = vmatprep.subr.bf16.mxu0 0
  %924 = vmatpush1.bf16.msra.mxu0 %v902
  %925 = vmatprep.subr.bf16.mxu0 0
  %926 = vmatpush1.bf16.msra.mxu0 %v903
  %927 = vmatprep.subr.bf16.mxu0 0
  %928 = vmatpush1.bf16.msra.mxu0 %v904
  %929 = vmatprep.subr.bf16.mxu0 0
  %930 = vmatpush1.bf16.msra.mxu0 0
  %931 = vmatprep.subr.bf16.mxu0 0
  %932 = vmatpush1.bf16.msra.mxu0 0
  %933 = vmatprep.subr.bf16.mxu0 0
  %934 = vmatpush1.bf16.msra.mxu0 0
  %935 = vmatprep.subr.bf16.mxu0 0
  %936 = vmatpush1.bf16.msra.mxu0 0
  %937 = vmatprep.subr.bf16.mxu0 0
  %938 = vmatpush1.bf16.msra.mxu0 0
  %939 = vmatprep.subr.bf16.mxu0 0
  %940 = vmatpush1.bf16.msra.mxu0 0
  %941 = vmatprep.subr.bf16.mxu0 0
  %942 = vmatpush1.bf16.msra.mxu0 0
  %943 = vmatprep.subr.bf16.mxu0 0
  %944 = vmatpush1.bf16.msra.mxu0 0
  %945 = vmatprep.mubr.bf16.mxu0 0
  %946 = vmatmul.mubr.bf16.gmra.mrb[0].mxu0 %v841
  %v947 = vpop.f32.mrb[0].mxu0
  %v948 = vadd.f32 %v863, %v947
  %v949 = vpop.f32.mrb[0].mxu0
  %v950 = vpop.f32.mrb[0].mxu0
  %v951 = vpop.f32.mrb[0].mxu0
  %952 = vdwg.mxu0
  %953 = vst [vmem:[%s8] sm:$0xff] %v948
  // Predicated region
  $region34: #{net_forward.5} parent=0 // pred_check
    _
  $region35: #{net_forward.5} parent=0 // pred_check_branch
    %955 = sbr.rel (0) target = $region37
  $region36: #{net_forward.5} parent=0 // pred_region
    _
  $region37: #{net_forward.5} parent=0 // pred_fallthru
    _
  // Predicated region
  $region38: #{net_forward.5} parent=0 // pred_check
    _
  $region39: #{net_forward.5} parent=0 // pred_check_branch
    %957 = sbr.rel (0) target = $region41
  $region40: #{net_forward.5} parent=0 // pred_region
    _
  $region41: #{net_forward.5} parent=0 // pred_fallthru
    _

// kernel: net_forward.4
$region0: #{net_forward.4}
  #allocation0 [shape = 'u32[]', space=smem, size = 0x4, offset = 0x4, fixed_abs, tag = 'smem constant byte address 0x4 - core index']
  #allocation1 [shape = 'u32[144,128]{1,0:T(1,128)}', space=vmem, size = 0x12000, scoped, tag = 'internal scratch']
  %s0 = inlined_call_operand.vmem [shape: f32[8,1536], index: 0, kind: input, shape index: {}]
  %s1 = inlined_call_operand.vmem [shape: bf16[1536,1024], index: 1, kind: input, shape index: {}]
  %s2 = inlined_call_operand.vmem [shape: f32[1,1024], index: 2, kind: input, shape index: {}]
  %s3 = inlined_call_operand.vmem [shape: f32[8,1024], index: 3, kind: output, shape index: {}]
  %s4 = sld [smem:[#allocation0]]
  $region68: #{net_forward.4} parent=0
    _
  %s6 = ssub.s32 1, %s4
  %s7 = scalar_select 0, %s6, %s4
  $region1: #{net_forward.4} parent=0
    #allocation2 [shape = 'u8[3145728]{0}', space=vmem, size = 0x300000, scoped, tag = 'input window, operand 1']
    loop: start=0, step=1, limit=4
    $region2: #{net_forward.4} parent=1 // loop_pre_header
      _
    $region3: #{net_forward.4} parent=1 // loop_header
      %s9 = sphi 0, %s13
      %p10 = scmp.ge.s32.totalorder %s9, 4
      %s17 = sphi 0, %s17
      %s19 = sphi 0, %s17
      %s20 = sphi 0, %s19
      %s34 = sphi 0, %s20
      %s40 = sphi 0, %s42
      %s43 = sphi 0, %s40
      %s44 = sphi 0, %s43
      %s60 = sphi 0, %s44
      %s66 = sphi 0, %s68
      %s69 = sphi 0, %s66
      %s70 = sphi 0, %s69
      %s86 = sphi 0, %s70
      %s92 = sphi 0, %s94
      %s95 = sphi 0, %s92
      %s96 = sphi 0, %s95
      %s112 = sphi 0, %s96
    $region4: #{net_forward.4} parent=1 // loop_header_branch
      %12 = sbr.rel (%p10) target = $region8
    $region5: #{net_forward.4} parent=1 // loop_body
      %s14 = ssub.s32 %s9, 1
      %s15 = ssub.s32 %s9, 2
      %s16 = sadd.s32 %s9, 1
      %s18 = sadd.s32 %s17, 1
      %p21 = scmp.eq.s32.totalorder %s9, 1
      %p22 = scmp.ne.s32.totalorder %s17, %s19
      %p23 = scmp.eq.s32.totalorder %s9, 0
      %p24 = por %p22, %p23
      %p25 = scmp.ne.s32.totalorder %s17, %s19
      %p26 = scmp.eq.s32.totalorder %s14, 1
      %p27 = por %p25, %p26
      %p28 = scmp.ne.s32.totalorder %s19, %s20
      %p29 = scmp.eq.s32.totalorder %s14, 0
      %p30 = por %p28, %p29
      %p31 = scmp.ne.s32.totalorder %s19, %s20
      %p32 = scmp.eq.s32.totalorder %s15, 1
      %p33 = por %p31, %p32
      %p35 = scmp.ne.s32.totalorder %s20, %s34
      %p36 = scmp.eq.s32.totalorder %s15, 0
      %p37 = por %p35, %p36
      %s38 = ssub.s32 %s9, %s16
      %p39 = scmp.eq.s32.totalorder %s38, 0
      %s41 = sadd.s32 %s40, 1
      %s42 = scalar_select %p39, %s40, %s41
      %p45 = pneg %p39
      %p46 = scmp.eq.s32.totalorder %s9, 1
      %p47 = por %p45, %p46
      %p48 = scmp.ne.s32.totalorder %s40, %s43
      %p49 = scmp.eq.s32.totalorder %s9, 0
      %p50 = por %p48, %p49
      %p51 = scmp.ne.s32.totalorder %s40, %s43
      %p52 = scmp.eq.s32.totalorder %s14, 1
      %p53 = por %p51, %p52
      %p54 = scmp.ne.s32.totalorder %s43, %s44
      %p55 = scmp.eq.s32.totalorder %s14, 0
      %p56 = por %p54, %p55
      %p57 = scmp.ne.s32.totalorder %s43, %s44
      %p58 = scmp.eq.s32.totalorder %s15, 1
      %p59 = por %p57, %p58
      %p61 = scmp.ne.s32.totalorder %s44, %s60
      %p62 = scmp.eq.s32.totalorder %s15, 0
      %p63 = por %p61, %p62
      %s64 = ssub.s32 %s9, %s16
      %p65 = scmp.eq.s32.totalorder %s64, 0
      %s67 = sadd.s32 %s66, 1
      %s68 = scalar_select %p65, %s66, %s67
      %p71 = pneg %p65
      %p72 = scmp.eq.s32.totalorder %s9, 1
      %p73 = por %p71, %p72
      %p74 = scmp.ne.s32.totalorder %s66, %s69
      %p75 = scmp.eq.s32.totalorder %s9, 0
      %p76 = por %p74, %p75
      %p77 = scmp.ne.s32.totalorder %s66, %s69
      %p78 = scmp.eq.s32.totalorder %s14, 1
      %p79 = por %p77, %p78
      %p80 = scmp.ne.s32.totalorder %s69, %s70
      %p81 = scmp.eq.s32.totalorder %s14, 0
      %p82 = por %p80, %p81
      %p83 = scmp.ne.s32.totalorder %s69, %s70
      %p84 = scmp.eq.s32.totalorder %s15, 1
      %p85 = por %p83, %p84
      %p87 = scmp.ne.s32.totalorder %s70, %s86
      %p88 = scmp.eq.s32.totalorder %s15, 0
      %p89 = por %p87, %p88
      %s90 = ssub.s32 %s9, %s16
      %p91 = scmp.eq.s32.totalorder %s90, 0
      %s93 = sadd.s32 %s92, 1
      %s94 = scalar_select %p91, %s92, %s93
      %p97 = pneg %p91
      %p98 = scmp.eq.s32.totalorder %s9, 1
      %p99 = por %p97, %p98
      %p100 = scmp.ne.s32.totalorder %s92, %s95
      %p101 = scmp.eq.s32.totalorder %s9, 0
      %p102 = por %p100, %p101
      %p103 = scmp.ne.s32.totalorder %s92, %s95
      %p104 = scmp.eq.s32.totalorder %s14, 1
      %p105 = por %p103, %p104
      %p106 = scmp.ne.s32.totalorder %s95, %s96
      %p107 = scmp.eq.s32.totalorder %s14, 0
      %p108 = por %p106, %p107
      %p109 = scmp.ne.s32.totalorder %s95, %s96
      %p110 = scmp.eq.s32.totalorder %s15, 1
      %p111 = por %p109, %p110
      %p113 = scmp.ne.s32.totalorder %s96, %s112
      %p114 = scmp.eq.s32.totalorder %s15, 0
      %p115 = por %p113, %p114
      %p116 = scmp.le.s32.totalorder 1, %s9
      %p117 = scmp.lt.s32.totalorder %s9, 3
      %p118 = pnand %p116, %p117
      %p119 = pneg %p118
      // Predicated region
      $region9: #{net_forward.4} parent=5 // pred_check
        _
      $region10: #{net_forward.4} parent=5 // pred_check_branch
        %121 = sbr.rel (%p118) target = $region12
      $region11: #{net_forward.4} parent=5 // pred_region
        %s122 = ssub.s32 %s9, 1
        // Predicated region
        $region13: #{net_forward.4} parent=11 // pred_check
          %p123 = pneg %p30
        $region14: #{net_forward.4} parent=11 // pred_check_branch
          %125 = sbr.rel (%p123) target = $region16
        $region15: #{net_forward.4} parent=11 // pred_region
          _
        $region16: #{net_forward.4} parent=11 // pred_fallthru
          _
      $region12: #{net_forward.4} parent=5 // pred_fallthru
        _
      %p126 = scmp.lt.s32.totalorder %s9, 2
      // Predicated region
      $region17: #{net_forward.4} parent=5 // pred_check
        %p127 = pneg %p126
      $region18: #{net_forward.4} parent=5 // pred_check_branch
        %129 = sbr.rel (%p127) target = $region20
      $region19: #{net_forward.4} parent=5 // pred_region
        // Predicated region
        $region21: #{net_forward.4} parent=19 // pred_check
          %p130 = pneg %p50
        $region22: #{net_forward.4} parent=19 // pred_check_branch
          %132 = sbr.rel (%p130) target = $region24
        $region23: #{net_forward.4} parent=19 // pred_region
          %s133 = sand.u32 %s40, 1
          %s134 = sand.u32 %s40, 1
          %s135 = smul.addr %s134, 3072
          %s136 = scalar_lea.vmem [#allocation2], %s135
          %s137 = smul.u32 4, %s9
          %s138 = smul.addr %s137, 4
          %s139 = scalar_lea.vmem %s1, %s138
          // Predicated region
          $region25: #{net_forward.4} parent=23 // pred_check
            _
          $region26: #{net_forward.4} parent=23 // pred_check_branch
            %141 = sbr.rel (0) target = $region28
          $region27: #{net_forward.4} parent=23 // pred_region
            // Predicated region
            $region29: #{net_forward.4} parent=27 // pred_check
              _
            $region30: #{net_forward.4} parent=27 // pred_check_branch
              %143 = sbr.rel (0) target = $region32
            $region31: #{net_forward.4} parent=27 // pred_region
              loop: start=0, step=1, limit=1
              $region33: #{net_forward.4} parent=31 // loop_pre_header
                _
              $region34: #{net_forward.4} parent=31 // loop_header
                %s145 = sphi 0, %s149
                %p146 = scmp.ge.s32.totalorder %s145, 1
                %s150 = sphi %s139, %s139
                %s151 = sphi %s136, %s136
              $region35: #{net_forward.4} parent=31 // loop_header_branch
                %148 = sbr.rel (%p146) target = $region39
              $region36: #{net_forward.4} parent=31 // loop_body
                %v152 = vld [vmem:[%s150] sm:$0xff]
                %153 = vst [vmem:[%s151] sm:$0xff] %v152
                %v154 = vld [vmem:[%s150 + $0x8] sm:$0xff]
                %155 = vst [vmem:[%s151 + $0x8] sm:$0xff] %v154
                %v156 = vld [vmem:[%s150 + $0x20] sm:$0xff]
                %157 = vst [vmem:[%s151 + $0x10] sm:$0xff] %v156
                %v158 = vld [vmem:[%s150 + $0x28] sm:$0xff]
                %159 = vst [vmem:[%s151 + $0x18] sm:$0xff] %v158
                %v160 = vld [vmem:[%s150 + $0x40] sm:$0xff]
                %161 = vst [vmem:[%s151 + $0x20] sm:$0xff] %v160
                %v162 = vld [vmem:[%s150 + $0x48] sm:$0xff]
                %163 = vst [vmem:[%s151 + $0x28] sm:$0xff] %v162
                %v164 = vld [vmem:[%s150 + $0x60] sm:$0xff]
                %165 = vst [vmem:[%s151 + $0x30] sm:$0xff] %v164
                %v166 = vld [vmem:[%s150 + $0x68] sm:$0xff]
                %167 = vst [vmem:[%s151 + $0x38] sm:$0xff] %v166
                %v168 = vld [vmem:[%s150 + $0x80] sm:$0xff]
                %169 = vst [vmem:[%s151 + $0x40] sm:$0xff] %v168
                %v170 = vld [vmem:[%s150 + $0x88] sm:$0xff]
                %171 = vst [vmem:[%s151 + $0x48] sm:$0xff] %v170
                %v172 = vld [vmem:[%s150 + $0xa0] sm:$0xff]
                %173 = vst [vmem:[%s151 + $0x50] sm:$0xff] %v172
                %v174 = vld [vmem:[%s150 + $0xa8] sm:$0xff]
                %175 = vst [vmem:[%s151 + $0x58] sm:$0xff] %v174
                %v176 = vld [vmem:[%s150 + $0xc0] sm:$0xff]
                %177 = vst [vmem:[%s151 + $0x60] sm:$0xff] %v176
                %v178 = vld [vmem:[%s150 + $0xc8] sm:$0xff]
                %179 = vst [vmem:[%s151 + $0x68] sm:$0xff] %v178
                %v180 = vld [vmem:[%s150 + $0xe0] sm:$0xff]
                %181 = vst [vmem:[%s151 + $0x70] sm:$0xff] %v180
                %v182 = vld [vmem:[%s150 + $0xe8] sm:$0xff]
                %183 = vst [vmem:[%s151 + $0x78] sm:$0xff] %v182
                %v184 = vld [vmem:[%s150 + $0x100] sm:$0xff]
                %185 = vst [vmem:[%s151 + $0x80] sm:$0xff] %v184
                %v186 = vld [vmem:[%s150 + $0x108] sm:$0xff]
                %187 = vst [vmem:[%s151 + $0x88] sm:$0xff] %v186
                %v188 = vld [vmem:[%s150 + $0x120] sm:$0xff]
                %189 = vst [vmem:[%s151 + $0x90] sm:$0xff] %v188
                %v190 = vld [vmem:[%s150 + $0x128] sm:$0xff]
                %191 = vst [vmem:[%s151 + $0x98] sm:$0xff] %v190
                %v192 = vld [vmem:[%s150 + $0x140] sm:$0xff]
                %193 = vst [vmem:[%s151 + $0xa0] sm:$0xff] %v192
                %v194 = vld [vmem:[%s150 + $0x148] sm:$0xff]
                %195 = vst [vmem:[%s151 + $0xa8] sm:$0xff] %v194
                %v196 = vld [vmem:[%s150 + $0x160] sm:$0xff]
                %197 = vst [vmem:[%s151 + $0xb0] sm:$0xff] %v196
                %v198 = vld [vmem:[%s150 + $0x168] sm:$0xff]
                %199 = vst [vmem:[%s151 + $0xb8] sm:$0xff] %v198
                %v200 = vld [vmem:[%s150 + $0x180] sm:$0xff]
                %201 = vst [vmem:[%s151 + $0xc0] sm:$0xff] %v200
                %v202 = vld [vmem:[%s150 + $0x188] sm:$0xff]
                %203 = vst [vmem:[%s151 + $0xc8] sm:$0xff] %v202
                %v204 = vld [vmem:[%s150 + $0x1a0] sm:$0xff]
                %205 = vst [vmem:[%s151 + $0xd0] sm:$0xff] %v204
                %v206 = vld [vmem:[%s150 + $0x1a8] sm:$0xff]
                %207 = vst [vmem:[%s151 + $0xd8] sm:$0xff] %v206
                %v208 = vld [vmem:[%s150 + $0x1c0] sm:$0xff]
                %209 = vst [vmem:[%s151 + $0xe0] sm:$0xff] %v208
                %v210 = vld [vmem:[%s150 + $0x1c8] sm:$0xff]
                %211 = vst [vmem:[%s151 + $0xe8] sm:$0xff] %v210
                %v212 = vld [vmem:[%s150 + $0x1e0] sm:$0xff]
                %213 = vst [vmem:[%s151 + $0xf0] sm:$0xff] %v212
                %v214 = vld [vmem:[%s150 + $0x1e8] sm:$0xff]
                %215 = vst [vmem:[%s151 + $0xf8] sm:$0xff] %v214
                %v216 = vld [vmem:[%s150 + $0x200] sm:$0xff]
                %217 = vst [vmem:[%s151 + $0x100] sm:$0xff] %v216
                %v218 = vld [vmem:[%s150 + $0x208] sm:$0xff]
                %219 = vst [vmem:[%s151 + $0x108] sm:$0xff] %v218
                %v220 = vld [vmem:[%s150 + $0x220] sm:$0xff]
                %221 = vst [vmem:[%s151 + $0x110] sm:$0xff] %v220
                %v222 = vld [vmem:[%s150 + $0x228] sm:$0xff]
                %223 = vst [vmem:[%s151 + $0x118] sm:$0xff] %v222
                %v224 = vld [vmem:[%s150 + $0x240] sm:$0xff]
                %225 = vst [vmem:[%s151 + $0x120] sm:$0xff] %v224
                %v226 = vld [vmem:[%s150 + $0x248] sm:$0xff]
                %227 = vst [vmem:[%s151 + $0x128] sm:$0xff] %v226
                %v228 = vld [vmem:[%s150 + $0x260] sm:$0xff]
                %229 = vst [vmem:[%s151 + $0x130] sm:$0xff] %v228
                %v230 = vld [vmem:[%s150 + $0x268] sm:$0xff]
                %231 = vst [vmem:[%s151 + $0x138] sm:$0xff] %v230
                %v232 = vld [vmem:[%s150 + $0x280] sm:$0xff]
                %233 = vst [vmem:[%s151 + $0x140] sm:$0xff] %v232
                %v234 = vld [vmem:[%s150 + $0x288] sm:$0xff]
                %235 = vst [vmem:[%s151 + $0x148] sm:$0xff] %v234
                %v236 = vld [vmem:[%s150 + $0x2a0] sm:$0xff]
                %237 = vst [vmem:[%s151 + $0x150] sm:$0xff] %v236
                %v238 = vld [vmem:[%s150 + $0x2a8] sm:$0xff]
                %239 = vst [vmem:[%s151 + $0x158] sm:$0xff] %v238
                %v240 = vld [vmem:[%s150 + $0x2c0] sm:$0xff]
                %241 = vst [vmem:[%s151 + $0x160] sm:$0xff] %v240
                %v242 = vld [vmem:[%s150 + $0x2c8] sm:$0xff]
                %243 = vst [vmem:[%s151 + $0x168] sm:$0xff] %v242
                %v244 = vld [vmem:[%s150 + $0x2e0] sm:$0xff]
                %245 = vst [vmem:[%s151 + $0x170] sm:$0xff] %v244
                %v246 = vld [vmem:[%s150 + $0x2e8] sm:$0xff]
                %247 = vst [vmem:[%s151 + $0x178] sm:$0xff] %v246
                %v248 = vld [vmem:[%s150 + $0x300] sm:$0xff]
                %249 = vst [vmem:[%s151 + $0x180] sm:$0xff] %v248
                %v250 = vld [vmem:[%s150 + $0x308] sm:$0xff]
                %251 = vst [vmem:[%s151 + $0x188] sm:$0xff] %v250
                %v252 = vld [vmem:[%s150 + $0x320] sm:$0xff]
                %253 = vst [vmem:[%s151 + $0x190] sm:$0xff] %v252
                %v254 = vld [vmem:[%s150 + $0x328] sm:$0xff]
                %255 = vst [vmem:[%s151 + $0x198] sm:$0xff] %v254
                %v256 = vld [vmem:[%s150 + $0x340] sm:$0xff]
                %257 = vst [vmem:[%s151 + $0x1a0] sm:$0xff] %v256
                %v258 = vld [vmem:[%s150 + $0x348] sm:$0xff]
                %259 = vst [vmem:[%s151 + $0x1a8] sm:$0xff] %v258
                %v260 = vld [vmem:[%s150 + $0x360] sm:$0xff]
                %261 = vst [vmem:[%s151 + $0x1b0] sm:$0xff] %v260
                %v262 = vld [vmem:[%s150 + $0x368] sm:$0xff]
                %263 = vst [vmem:[%s151 + $0x1b8] sm:$0xff] %v262
                %v264 = vld [vmem:[%s150 + $0x380] sm:$0xff]
                %265 = vst [vmem:[%s151 + $0x1c0] sm:$0xff] %v264
                %v266 = vld [vmem:[%s150 + $0x388] sm:$0xff]
                %267 = vst [vmem:[%s151 + $0x1c8] sm:$0xff] %v266
                %v268 = vld [vmem:[%s150 + $0x3a0] sm:$0xff]
                %269 = vst [vmem:[%s151 + $0x1d0] sm:$0xff] %v268
                %v270 = vld [vmem:[%s150 + $0x3a8] sm:$0xff]
                %271 = vst [vmem:[%s151 + $0x1d8] sm:$0xff] %v270
                %v272 = vld [vmem:[%s150 + $0x3c0] sm:$0xff]
                %273 = vst [vmem:[%s151 + $0x1e0] sm:$0xff] %v272
                %v274 = vld [vmem:[%s150 + $0x3c8] sm:$0xff]
                %275 = vst [vmem:[%s151 + $0x1e8] sm:$0xff] %v274
                %v276 = vld [vmem:[%s150 + $0x3e0] sm:$0xff]
                %277 = vst [vmem:[%s151 + $0x1f0] sm:$0xff] %v276
                %v278 = vld [vmem:[%s150 + $0x3e8] sm:$0xff]
                %279 = vst [vmem:[%s151 + $0x1f8] sm:$0xff] %v278
                %v280 = vld [vmem:[%s150 + $0x400] sm:$0xff]
                %281 = vst [vmem:[%s151 + $0x200] sm:$0xff] %v280
                %v282 = vld [vmem:[%s150 + $0x408] sm:$0xff]
                %283 = vst [vmem:[%s151 + $0x208] sm:$0xff] %v282
                %v284 = vld [vmem:[%s150 + $0x420] sm:$0xff]
                %285 = vst [vmem:[%s151 + $0x210] sm:$0xff] %v284
                %v286 = vld [vmem:[%s150 + $0x428] sm:$0xff]
                %287 = vst [vmem:[%s151 + $0x218] sm:$0xff] %v286
                %v288 = vld [vmem:[%s150 + $0x440] sm:$0xff]
                %289 = vst [vmem:[%s151 + $0x220] sm:$0xff] %v288
                %v290 = vld [vmem:[%s150 + $0x448] sm:$0xff]
                %291 = vst [vmem:[%s151 + $0x228] sm:$0xff] %v290
                %v292 = vld [vmem:[%s150 + $0x460] sm:$0xff]
                %293 = vst [vmem:[%s151 + $0x230] sm:$0xff] %v292
                %v294 = vld [vmem:[%s150 + $0x468] sm:$0xff]
                %295 = vst [vmem:[%s151 + $0x238] sm:$0xff] %v294
                %v296 = vld [vmem:[%s150 + $0x480] sm:$0xff]
                %297 = vst [vmem:[%s151 + $0x240] sm:$0xff] %v296
                %v298 = vld [vmem:[%s150 + $0x488] sm:$0xff]
                %299 = vst [vmem:[%s151 + $0x248] sm:$0xff] %v298
                %v300 = vld [vmem:[%s150 + $0x4a0] sm:$0xff]
                %301 = vst [vmem:[%s151 + $0x250] sm:$0xff] %v300
                %v302 = vld [vmem:[%s150 + $0x4a8] sm:$0xff]
                %303 = vst [vmem:[%s151 + $0x258] sm:$0xff] %v302
                %v304 = vld [vmem:[%s150 + $0x4c0] sm:$0xff]
                %305 = vst [vmem:[%s151 + $0x260] sm:$0xff] %v304
                %v306 = vld [vmem:[%s150 + $0x4c8] sm:$0xff]
                %307 = vst [vmem:[%s151 + $0x268] sm:$0xff] %v306
                %v308 = vld [vmem:[%s150 + $0x4e0] sm:$0xff]
                %309 = vst [vmem:[%s151 + $0x270] sm:$0xff] %v308
                %v310 = vld [vmem:[%s150 + $0x4e8] sm:$0xff]
                %311 = vst [vmem:[%s151 + $0x278] sm:$0xff] %v310
                %v312 = vld [vmem:[%s150 + $0x500] sm:$0xff]
                %313 = vst [vmem:[%s151 + $0x280] sm:$0xff] %v312
                %v314 = vld [vmem:[%s150 + $0x508] sm:$0xff]
                %315 = vst [vmem:[%s151 + $0x288] sm:$0xff] %v314
                %v316 = vld [vmem:[%s150 + $0x520] sm:$0xff]
                %317 = vst [vmem:[%s151 + $0x290] sm:$0xff] %v316
                %v318 = vld [vmem:[%s150 + $0x528] sm:$0xff]
                %319 = vst [vmem:[%s151 + $0x298] sm:$0xff] %v318
                %v320 = vld [vmem:[%s150 + $0x540] sm:$0xff]
                %321 = vst [vmem:[%s151 + $0x2a0] sm:$0xff] %v320
                %v322 = vld [vmem:[%s150 + $0x548] sm:$0xff]
                %323 = vst [vmem:[%s151 + $0x2a8] sm:$0xff] %v322
                %v324 = vld [vmem:[%s150 + $0x560] sm:$0xff]
                %325 = vst [vmem:[%s151 + $0x2b0] sm:$0xff] %v324
                %v326 = vld [vmem:[%s150 + $0x568] sm:$0xff]
                %327 = vst [vmem:[%s151 + $0x2b8] sm:$0xff] %v326
                %v328 = vld [vmem:[%s150 + $0x580] sm:$0xff]
                %329 = vst [vmem:[%s151 + $0x2c0] sm:$0xff] %v328
                %v330 = vld [vmem:[%s150 + $0x588] sm:$0xff]
                %331 = vst [vmem:[%s151 + $0x2c8] sm:$0xff] %v330
                %v332 = vld [vmem:[%s150 + $0x5a0] sm:$0xff]
                %333 = vst [vmem:[%s151 + $0x2d0] sm:$0xff] %v332
                %v334 = vld [vmem:[%s150 + $0x5a8] sm:$0xff]
                %335 = vst [vmem:[%s151 + $0x2d8] sm:$0xff] %v334
                %v336 = vld [vmem:[%s150 + $0x5c0] sm:$0xff]
                %337 = vst [vmem:[%s151 + $0x2e0] sm:$0xff] %v336
                %v338 = vld [vmem:[%s150 + $0x5c8] sm:$0xff]
                %339 = vst [vmem:[%s151 + $0x2e8] sm:$0xff] %v338
                %v340 = vld [vmem:[%s150 + $0x5e0] sm:$0xff]
                %341 = vst [vmem:[%s151 + $0x2f0] sm:$0xff] %v340
                %v342 = vld [vmem:[%s150 + $0x5e8] sm:$0xff]
                %343 = vst [vmem:[%s151 + $0x2f8] sm:$0xff] %v342
                %v344 = vld [vmem:[%s150 + $0x600] sm:$0xff]
                %345 = vst [vmem:[%s151 + $0x300] sm:$0xff] %v344
                %v346 = vld [vmem:[%s150 + $0x608] sm:$0xff]
                %347 = vst [vmem:[%s151 + $0x308] sm:$0xff] %v346
                %v348 = vld [vmem:[%s150 + $0x620] sm:$0xff]
                %349 = vst [vmem:[%s151 + $0x310] sm:$0xff] %v348
                %v350 = vld [vmem:[%s150 + $0x628] sm:$0xff]
                %351 = vst [vmem:[%s151 + $0x318] sm:$0xff] %v350
                %v352 = vld [vmem:[%s150 + $0x640] sm:$0xff]
                %353 = vst [vmem:[%s151 + $0x320] sm:$0xff] %v352
                %v354 = vld [vmem:[%s150 + $0x648] sm:$0xff]
                %355 = vst [vmem:[%s151 + $0x328] sm:$0xff] %v354
                %v356 = vld [vmem:[%s150 + $0x660] sm:$0xff]
                %357 = vst [vmem:[%s151 + $0x330] sm:$0xff] %v356
                %v358 = vld [vmem:[%s150 + $0x668] sm:$0xff]
                %359 = vst [vmem:[%s151 + $0x338] sm:$0xff] %v358
                %v360 = vld [vmem:[%s150 + $0x680] sm:$0xff]
                %361 = vst [vmem:[%s151 + $0x340] sm:$0xff] %v360
                %v362 = vld [vmem:[%s150 + $0x688] sm:$0xff]
                %363 = vst [vmem:[%s151 + $0x348] sm:$0xff] %v362
                %v364 = vld [vmem:[%s150 + $0x6a0] sm:$0xff]
                %365 = vst [vmem:[%s151 + $0x350] sm:$0xff] %v364
                %v366 = vld [vmem:[%s150 + $0x6a8] sm:$0xff]
                %367 = vst [vmem:[%s151 + $0x358] sm:$0xff] %v366
                %v368 = vld [vmem:[%s150 + $0x6c0] sm:$0xff]
                %369 = vst [vmem:[%s151 + $0x360] sm:$0xff] %v368
                %v370 = vld [vmem:[%s150 + $0x6c8] sm:$0xff]
                %371 = vst [vmem:[%s151 + $0x368] sm:$0xff] %v370
                %v372 = vld [vmem:[%s150 + $0x6e0] sm:$0xff]
                %373 = vst [vmem:[%s151 + $0x370] sm:$0xff] %v372
                %v374 = vld [vmem:[%s150 + $0x6e8] sm:$0xff]
                %375 = vst [vmem:[%s151 + $0x378] sm:$0xff] %v374
                %v376 = vld [vmem:[%s150 + $0x700] sm:$0xff]
                %377 = vst [vmem:[%s151 + $0x380] sm:$0xff] %v376
                %v378 = vld [vmem:[%s150 + $0x708] sm:$0xff]
                %379 = vst [vmem:[%s151 + $0x388] sm:$0xff] %v378
                %v380 = vld [vmem:[%s150 + $0x720] sm:$0xff]
                %381 = vst [vmem:[%s151 + $0x390] sm:$0xff] %v380
                %v382 = vld [vmem:[%s150 + $0x728] sm:$0xff]
                %383 = vst [vmem:[%s151 + $0x398] sm:$0xff] %v382
                %v384 = vld [vmem:[%s150 + $0x740] sm:$0xff]
                %385 = vst [vmem:[%s151 + $0x3a0] sm:$0xff] %v384
                %v386 = vld [vmem:[%s150 + $0x748] sm:$0xff]
                %387 = vst [vmem:[%s151 + $0x3a8] sm:$0xff] %v386
                %v388 = vld [vmem:[%s150 + $0x760] sm:$0xff]
                %389 = vst [vmem:[%s151 + $0x3b0] sm:$0xff] %v388
                %v390 = vld [vmem:[%s150 + $0x768] sm:$0xff]
                %391 = vst [vmem:[%s151 + $0x3b8] sm:$0xff] %v390
                %v392 = vld [vmem:[%s150 + $0x780] sm:$0xff]
                %393 = vst [vmem:[%s151 + $0x3c0] sm:$0xff] %v392
                %v394 = vld [vmem:[%s150 + $0x788] sm:$0xff]
                %395 = vst [vmem:[%s151 + $0x3c8] sm:$0xff] %v394
                %v396 = vld [vmem:[%s150 + $0x7a0] sm:$0xff]
                %397 = vst [vmem:[%s151 + $0x3d0] sm:$0xff] %v396
                %v398 = vld [vmem:[%s150 + $0x7a8] sm:$0xff]
                %399 = vst [vmem:[%s151 + $0x3d8] sm:$0xff] %v398
                %v400 = vld [vmem:[%s150 + $0x7c0] sm:$0xff]
                %401 = vst [vmem:[%s151 + $0x3e0] sm:$0xff] %v400
                %v402 = vld [vmem:[%s150 + $0x7c8] sm:$0xff]
                %403 = vst [vmem:[%s151 + $0x3e8] sm:$0xff] %v402
                %v404 = vld [vmem:[%s150 + $0x7e0] sm:$0xff]
                %405 = vst [vmem:[%s151 + $0x3f0] sm:$0xff] %v404
                %v406 = vld [vmem:[%s150 + $0x7e8] sm:$0xff]
                %407 = vst [vmem:[%s151 + $0x3f8] sm:$0xff] %v406
                %v408 = vld [vmem:[%s150 + $0x800] sm:$0xff]
                %409 = vst [vmem:[%s151 + $0x400] sm:$0xff] %v408
                %v410 = vld [vmem:[%s150 + $0x808] sm:$0xff]
                %411 = vst [vmem:[%s151 + $0x408] sm:$0xff] %v410
                %v412 = vld [vmem:[%s150 + $0x820] sm:$0xff]
                %413 = vst [vmem:[%s151 + $0x410] sm:$0xff] %v412
                %v414 = vld [vmem:[%s150 + $0x828] sm:$0xff]
                %415 = vst [vmem:[%s151 + $0x418] sm:$0xff] %v414
                %v416 = vld [vmem:[%s150 + $0x840] sm:$0xff]
                %417 = vst [vmem:[%s151 + $0x420] sm:$0xff] %v416
                %v418 = vld [vmem:[%s150 + $0x848] sm:$0xff]
                %419 = vst [vmem:[%s151 + $0x428] sm:$0xff] %v418
                %v420 = vld [vmem:[%s150 + $0x860] sm:$0xff]
                %421 = vst [vmem:[%s151 + $0x430] sm:$0xff] %v420
                %v422 = vld [vmem:[%s150 + $0x868] sm:$0xff]
                %423 = vst [vmem:[%s151 + $0x438] sm:$0xff] %v422
                %v424 = vld [vmem:[%s150 + $0x880] sm:$0xff]
                %425 = vst [vmem:[%s151 + $0x440] sm:$0xff] %v424
                %v426 = vld [vmem:[%s150 + $0x888] sm:$0xff]
                %427 = vst [vmem:[%s151 + $0x448] sm:$0xff] %v426
                %v428 = vld [vmem:[%s150 + $0x8a0] sm:$0xff]
                %429 = vst [vmem:[%s151 + $0x450] sm:$0xff] %v428
                %v430 = vld [vmem:[%s150 + $0x8a8] sm:$0xff]
                %431 = vst [vmem:[%s151 + $0x458] sm:$0xff] %v430
                %v432 = vld [vmem:[%s150 + $0x8c0] sm:$0xff]
                %433 = vst [vmem:[%s151 + $0x460] sm:$0xff] %v432
                %v434 = vld [vmem:[%s150 + $0x8c8] sm:$0xff]
                %435 = vst [vmem:[%s151 + $0x468] sm:$0xff] %v434
                %v436 = vld [vmem:[%s150 + $0x8e0] sm:$0xff]
                %437 = vst [vmem:[%s151 + $0x470] sm:$0xff] %v436
                %v438 = vld [vmem:[%s150 + $0x8e8] sm:$0xff]
                %439 = vst [vmem:[%s151 + $0x478] sm:$0xff] %v438
                %v440 = vld [vmem:[%s150 + $0x900] sm:$0xff]
                %441 = vst [vmem:[%s151 + $0x480] sm:$0xff] %v440
                %v442 = vld [vmem:[%s150 + $0x908] sm:$0xff]
                %443 = vst [vmem:[%s151 + $0x488] sm:$0xff] %v442
                %v444 = vld [vmem:[%s150 + $0x920] sm:$0xff]
                %445 = vst [vmem:[%s151 + $0x490] sm:$0xff] %v444
                %v446 = vld [vmem:[%s150 + $0x928] sm:$0xff]
                %447 = vst [vmem:[%s151 + $0x498] sm:$0xff] %v446
                %v448 = vld [vmem:[%s150 + $0x940] sm:$0xff]
                %449 = vst [vmem:[%s151 + $0x4a0] sm:$0xff] %v448
                %v450 = vld [vmem:[%s150 + $0x948] sm:$0xff]
                %451 = vst [vmem:[%s151 + $0x4a8] sm:$0xff] %v450
                %v452 = vld [vmem:[%s150 + $0x960] sm:$0xff]
                %453 = vst [vmem:[%s151 + $0x4b0] sm:$0xff] %v452
                %v454 = vld [vmem:[%s150 + $0x968] sm:$0xff]
                %455 = vst [vmem:[%s151 + $0x4b8] sm:$0xff] %v454
                %v456 = vld [vmem:[%s150 + $0x980] sm:$0xff]
                %457 = vst [vmem:[%s151 + $0x4c0] sm:$0xff] %v456
                %v458 = vld [vmem:[%s150 + $0x988] sm:$0xff]
                %459 = vst [vmem:[%s151 + $0x4c8] sm:$0xff] %v458
                %v460 = vld [vmem:[%s150 + $0x9a0] sm:$0xff]
                %461 = vst [vmem:[%s151 + $0x4d0] sm:$0xff] %v460
                %v462 = vld [vmem:[%s150 + $0x9a8] sm:$0xff]
                %463 = vst [vmem:[%s151 + $0x4d8] sm:$0xff] %v462
                %v464 = vld [vmem:[%s150 + $0x9c0] sm:$0xff]
                %465 = vst [vmem:[%s151 + $0x4e0] sm:$0xff] %v464
                %v466 = vld [vmem:[%s150 + $0x9c8] sm:$0xff]
                %467 = vst [vmem:[%s151 + $0x4e8] sm:$0xff] %v466
                %v468 = vld [vmem:[%s150 + $0x9e0] sm:$0xff]
                %469 = vst [vmem:[%s151 + $0x4f0] sm:$0xff] %v468
                %v470 = vld [vmem:[%s150 + $0x9e8] sm:$0xff]
                %471 = vst [vmem:[%s151 + $0x4f8] sm:$0xff] %v470
                %v472 = vld [vmem:[%s150 + $0xa00] sm:$0xff]
                %473 = vst [vmem:[%s151 + $0x500] sm:$0xff] %v472
                %v474 = vld [vmem:[%s150 + $0xa08] sm:$0xff]
                %475 = vst [vmem:[%s151 + $0x508] sm:$0xff] %v474
                %v476 = vld [vmem:[%s150 + $0xa20] sm:$0xff]
                %477 = vst [vmem:[%s151 + $0x510] sm:$0xff] %v476
                %v478 = vld [vmem:[%s150 + $0xa28] sm:$0xff]
                %479 = vst [vmem:[%s151 + $0x518] sm:$0xff] %v478
                %v480 = vld [vmem:[%s150 + $0xa40] sm:$0xff]
                %481 = vst [vmem:[%s151 + $0x520] sm:$0xff] %v480
                %v482 = vld [vmem:[%s150 + $0xa48] sm:$0xff]
                %483 = vst [vmem:[%s151 + $0x528] sm:$0xff] %v482
                %v484 = vld [vmem:[%s150 + $0xa60] sm:$0xff]
                %485 = vst [vmem:[%s151 + $0x530] sm:$0xff] %v484
                %v486 = vld [vmem:[%s150 + $0xa68] sm:$0xff]
                %487 = vst [vmem:[%s151 + $0x538] sm:$0xff] %v486
                %v488 = vld [vmem:[%s150 + $0xa80] sm:$0xff]
                %489 = vst [vmem:[%s151 + $0x540] sm:$0xff] %v488
                %v490 = vld [vmem:[%s150 + $0xa88] sm:$0xff]
                %491 = vst [vmem:[%s151 + $0x548] sm:$0xff] %v490
                %v492 = vld [vmem:[%s150 + $0xaa0] sm:$0xff]
                %493 = vst [vmem:[%s151 + $0x550] sm:$0xff] %v492
                %v494 = vld [vmem:[%s150 + $0xaa8] sm:$0xff]
                %495 = vst [vmem:[%s151 + $0x558] sm:$0xff] %v494
                %v496 = vld [vmem:[%s150 + $0xac0] sm:$0xff]
                %497 = vst [vmem:[%s151 + $0x560] sm:$0xff] %v496
                %v498 = vld [vmem:[%s150 + $0xac8] sm:$0xff]
                %499 = vst [vmem:[%s151 + $0x568] sm:$0xff] %v498
                %v500 = vld [vmem:[%s150 + $0xae0] sm:$0xff]
                %501 = vst [vmem:[%s151 + $0x570] sm:$0xff] %v500
                %v502 = vld [vmem:[%s150 + $0xae8] sm:$0xff]
                %503 = vst [vmem:[%s151 + $0x578] sm:$0xff] %v502
                %v504 = vld [vmem:[%s150 + $0xb00] sm:$0xff]
                %505 = vst [vmem:[%s151 + $0x580] sm:$0xff] %v504
                %v506 = vld [vmem:[%s150 + $0xb08] sm:$0xff]
                %507 = vst [vmem:[%s151 + $0x588] sm:$0xff] %v506
                %v508 = vld [vmem:[%s150 + $0xb20] sm:$0xff]
                %509 = vst [vmem:[%s151 + $0x590] sm:$0xff] %v508
                %v510 = vld [vmem:[%s150 + $0xb28] sm:$0xff]
                %511 = vst [vmem:[%s151 + $0x598] sm:$0xff] %v510
                %v512 = vld [vmem:[%s150 + $0xb40] sm:$0xff]
                %513 = vst [vmem:[%s151 + $0x5a0] sm:$0xff] %v512
                %v514 = vld [vmem:[%s150 + $0xb48] sm:$0xff]
                %515 = vst [vmem:[%s151 + $0x5a8] sm:$0xff] %v514
                %v516 = vld [vmem:[%s150 + $0xb60] sm:$0xff]
                %517 = vst [vmem:[%s151 + $0x5b0] sm:$0xff] %v516
                %v518 = vld [vmem:[%s150 + $0xb68] sm:$0xff]
                %519 = vst [vmem:[%s151 + $0x5b8] sm:$0xff] %v518
                %v520 = vld [vmem:[%s150 + $0xb80] sm:$0xff]
                %521 = vst [vmem:[%s151 + $0x5c0] sm:$0xff] %v520
                %v522 = vld [vmem:[%s150 + $0xb88] sm:$0xff]
                %523 = vst [vmem:[%s151 + $0x5c8] sm:$0xff] %v522
                %v524 = vld [vmem:[%s150 + $0xba0] sm:$0xff]
                %525 = vst [vmem:[%s151 + $0x5d0] sm:$0xff] %v524
                %v526 = vld [vmem:[%s150 + $0xba8] sm:$0xff]
                %527 = vst [vmem:[%s151 + $0x5d8] sm:$0xff] %v526
                %v528 = vld [vmem:[%s150 + $0xbc0] sm:$0xff]
                %529 = vst [vmem:[%s151 + $0x5e0] sm:$0xff] %v528
                %v530 = vld [vmem:[%s150 + $0xbc8] sm:$0xff]
                %531 = vst [vmem:[%s151 + $0x5e8] sm:$0xff] %v530
                %v532 = vld [vmem:[%s150 + $0xbe0] sm:$0xff]
                %533 = vst [vmem:[%s151 + $0x5f0] sm:$0xff] %v532
                %v534 = vld [vmem:[%s150 + $0xbe8] sm:$0xff]
                %535 = vst [vmem:[%s151 + $0x5f8] sm:$0xff] %v534
                %v536 = vld [vmem:[%s150 + $0xc00] sm:$0xff]
                %537 = vst [vmem:[%s151 + $0x600] sm:$0xff] %v536
                %v538 = vld [vmem:[%s150 + $0xc08] sm:$0xff]
                %539 = vst [vmem:[%s151 + $0x608] sm:$0xff] %v538
                %v540 = vld [vmem:[%s150 + $0xc20] sm:$0xff]
                %541 = vst [vmem:[%s151 + $0x610] sm:$0xff] %v540
                %v542 = vld [vmem:[%s150 + $0xc28] sm:$0xff]
                %543 = vst [vmem:[%s151 + $0x618] sm:$0xff] %v542
                %v544 = vld [vmem:[%s150 + $0xc40] sm:$0xff]
                %545 = vst [vmem:[%s151 + $0x620] sm:$0xff] %v544
                %v546 = vld [vmem:[%s150 + $0xc48] sm:$0xff]
                %547 = vst [vmem:[%s151 + $0x628] sm:$0xff] %v546
                %v548 = vld [vmem:[%s150 + $0xc60] sm:$0xff]
                %549 = vst [vmem:[%s151 + $0x630] sm:$0xff] %v548
                %v550 = vld [vmem:[%s150 + $0xc68] sm:$0xff]
                %551 = vst [vmem:[%s151 + $0x638] sm:$0xff] %v550
                %v552 = vld [vmem:[%s150 + $0xc80] sm:$0xff]
                %553 = vst [vmem:[%s151 + $0x640] sm:$0xff] %v552
                %v554 = vld [vmem:[%s150 + $0xc88] sm:$0xff]
                %555 = vst [vmem:[%s151 + $0x648] sm:$0xff] %v554
                %v556 = vld [vmem:[%s150 + $0xca0] sm:$0xff]
                %557 = vst [vmem:[%s151 + $0x650] sm:$0xff] %v556
                %v558 = vld [vmem:[%s150 + $0xca8] sm:$0xff]
                %559 = vst [vmem:[%s151 + $0x658] sm:$0xff] %v558
                %v560 = vld [vmem:[%s150 + $0xcc0] sm:$0xff]
                %561 = vst [vmem:[%s151 + $0x660] sm:$0xff] %v560
                %v562 = vld [vmem:[%s150 + $0xcc8] sm:$0xff]
                %563 = vst [vmem:[%s151 + $0x668] sm:$0xff] %v562
                %v564 = vld [vmem:[%s150 + $0xce0] sm:$0xff]
                %565 = vst [vmem:[%s151 + $0x670] sm:$0xff] %v564
                %v566 = vld [vmem:[%s150 + $0xce8] sm:$0xff]
                %567 = vst [vmem:[%s151 + $0x678] sm:$0xff] %v566
                %v568 = vld [vmem:[%s150 + $0xd00] sm:$0xff]
                %569 = vst [vmem:[%s151 + $0x680] sm:$0xff] %v568
                %v570 = vld [vmem:[%s150 + $0xd08] sm:$0xff]
                %571 = vst [vmem:[%s151 + $0x688] sm:$0xff] %v570
                %v572 = vld [vmem:[%s150 + $0xd20] sm:$0xff]
                %573 = vst [vmem:[%s151 + $0x690] sm:$0xff] %v572
                %v574 = vld [vmem:[%s150 + $0xd28] sm:$0xff]
                %575 = vst [vmem:[%s151 + $0x698] sm:$0xff] %v574
                %v576 = vld [vmem:[%s150 + $0xd40] sm:$0xff]
                %577 = vst [vmem:[%s151 + $0x6a0] sm:$0xff] %v576
                %v578 = vld [vmem:[%s150 + $0xd48] sm:$0xff]
                %579 = vst [vmem:[%s151 + $0x6a8] sm:$0xff] %v578
                %v580 = vld [vmem:[%s150 + $0xd60] sm:$0xff]
                %581 = vst [vmem:[%s151 + $0x6b0] sm:$0xff] %v580
                %v582 = vld [vmem:[%s150 + $0xd68] sm:$0xff]
                %583 = vst [vmem:[%s151 + $0x6b8] sm:$0xff] %v582
                %v584 = vld [vmem:[%s150 + $0xd80] sm:$0xff]
                %585 = vst [vmem:[%s151 + $0x6c0] sm:$0xff] %v584
                %v586 = vld [vmem:[%s150 + $0xd88] sm:$0xff]
                %587 = vst [vmem:[%s151 + $0x6c8] sm:$0xff] %v586
                %v588 = vld [vmem:[%s150 + $0xda0] sm:$0xff]
                %589 = vst [vmem:[%s151 + $0x6d0] sm:$0xff] %v588
                %v590 = vld [vmem:[%s150 + $0xda8] sm:$0xff]
                %591 = vst [vmem:[%s151 + $0x6d8] sm:$0xff] %v590
                %v592 = vld [vmem:[%s150 + $0xdc0] sm:$0xff]
                %593 = vst [vmem:[%s151 + $0x6e0] sm:$0xff] %v592
                %v594 = vld [vmem:[%s150 + $0xdc8] sm:$0xff]
                %595 = vst [vmem:[%s151 + $0x6e8] sm:$0xff] %v594
                %v596 = vld [vmem:[%s150 + $0xde0] sm:$0xff]
                %597 = vst [vmem:[%s151 + $0x6f0] sm:$0xff] %v596
                %v598 = vld [vmem:[%s150 + $0xde8] sm:$0xff]
                %599 = vst [vmem:[%s151 + $0x6f8] sm:$0xff] %v598
                %v600 = vld [vmem:[%s150 + $0xe00] sm:$0xff]
                %601 = vst [vmem:[%s151 + $0x700] sm:$0xff] %v600
                %v602 = vld [vmem:[%s150 + $0xe08] sm:$0xff]
                %603 = vst [vmem:[%s151 + $0x708] sm:$0xff] %v602
                %v604 = vld [vmem:[%s150 + $0xe20] sm:$0xff]
                %605 = vst [vmem:[%s151 + $0x710] sm:$0xff] %v604
                %v606 = vld [vmem:[%s150 + $0xe28] sm:$0xff]
                %607 = vst [vmem:[%s151 + $0x718] sm:$0xff] %v606
                %v608 = vld [vmem:[%s150 + $0xe40] sm:$0xff]
                %609 = vst [vmem:[%s151 + $0x720] sm:$0xff] %v608
                %v610 = vld [vmem:[%s150 + $0xe48] sm:$0xff]
                %611 = vst [vmem:[%s151 + $0x728] sm:$0xff] %v610
                %v612 = vld [vmem:[%s150 + $0xe60] sm:$0xff]
                %613 = vst [vmem:[%s151 + $0x730] sm:$0xff] %v612
                %v614 = vld [vmem:[%s150 + $0xe68] sm:$0xff]
                %615 = vst [vmem:[%s151 + $0x738] sm:$0xff] %v614
                %v616 = vld [vmem:[%s150 + $0xe80] sm:$0xff]
                %617 = vst [vmem:[%s151 + $0x740] sm:$0xff] %v616
                %v618 = vld [vmem:[%s150 + $0xe88] sm:$0xff]
                %619 = vst [vmem:[%s151 + $0x748] sm:$0xff] %v618
                %v620 = vld [vmem:[%s150 + $0xea0] sm:$0xff]
                %621 = vst [vmem:[%s151 + $0x750] sm:$0xff] %v620
                %v622 = vld [vmem:[%s150 + $0xea8] sm:$0xff]
                %623 = vst [vmem:[%s151 + $0x758] sm:$0xff] %v622
                %v624 = vld [vmem:[%s150 + $0xec0] sm:$0xff]
                %625 = vst [vmem:[%s151 + $0x760] sm:$0xff] %v624
                %v626 = vld [vmem:[%s150 + $0xec8] sm:$0xff]
                %627 = vst [vmem:[%s151 + $0x768] sm:$0xff] %v626
                %v628 = vld [vmem:[%s150 + $0xee0] sm:$0xff]
                %629 = vst [vmem:[%s151 + $0x770] sm:$0xff] %v628
                %v630 = vld [vmem:[%s150 + $0xee8] sm:$0xff]
                %631 = vst [vmem:[%s151 + $0x778] sm:$0xff] %v630
                %v632 = vld [vmem:[%s150 + $0xf00] sm:$0xff]
                %633 = vst [vmem:[%s151 + $0x780] sm:$0xff] %v632
                %v634 = vld [vmem:[%s150 + $0xf08] sm:$0xff]
                %635 = vst [vmem:[%s151 + $0x788] sm:$0xff] %v634
                %v636 = vld [vmem:[%s150 + $0xf20] sm:$0xff]
                %637 = vst [vmem:[%s151 + $0x790] sm:$0xff] %v636
                %v638 = vld [vmem:[%s150 + $0xf28] sm:$0xff]
                %639 = vst [vmem:[%s151 + $0x798] sm:$0xff] %v638
                %v640 = vld [vmem:[%s150 + $0xf40] sm:$0xff]
                %641 = vst [vmem:[%s151 + $0x7a0] sm:$0xff] %v640
                %v642 = vld [vmem:[%s150 + $0xf48] sm:$0xff]
                %643 = vst [vmem:[%s151 + $0x7a8] sm:$0xff] %v642
                %v644 = vld [vmem:[%s150 + $0xf60] sm:$0xff]
                %645 = vst [vmem:[%s151 + $0x7b0] sm:$0xff] %v644
                %v646 = vld [vmem:[%s150 + $0xf68] sm:$0xff]
                %647 = vst [vmem:[%s151 + $0x7b8] sm:$0xff] %v646
                %v648 = vld [vmem:[%s150 + $0xf80] sm:$0xff]
                %649 = vst [vmem:[%s151 + $0x7c0] sm:$0xff] %v648
                %v650 = vld [vmem:[%s150 + $0xf88] sm:$0xff]
                %651 = vst [vmem:[%s151 + $0x7c8] sm:$0xff] %v650
                %v652 = vld [vmem:[%s150 + $0xfa0] sm:$0xff]
                %653 = vst [vmem:[%s151 + $0x7d0] sm:$0xff] %v652
                %v654 = vld [vmem:[%s150 + $0xfa8] sm:$0xff]
                %655 = vst [vmem:[%s151 + $0x7d8] sm:$0xff] %v654
                %v656 = vld [vmem:[%s150 + $0xfc0] sm:$0xff]
                %657 = vst [vmem:[%s151 + $0x7e0] sm:$0xff] %v656
                %v658 = vld [vmem:[%s150 + $0xfc8] sm:$0xff]
                %659 = vst [vmem:[%s151 + $0x7e8] sm:$0xff] %v658
                %v660 = vld [vmem:[%s150 + $0xfe0] sm:$0xff]
                %661 = vst [vmem:[%s151 + $0x7f0] sm:$0xff] %v660
                %v662 = vld [vmem:[%s150 + $0xfe8] sm:$0xff]
                %663 = vst [vmem:[%s151 + $0x7f8] sm:$0xff] %v662
                %v664 = vld [vmem:[%s150 + $0x1000] sm:$0xff]
                %665 = vst [vmem:[%s151 + $0x800] sm:$0xff] %v664
                %v666 = vld [vmem:[%s150 + $0x1008] sm:$0xff]
                %667 = vst [vmem:[%s151 + $0x808] sm:$0xff] %v666
                %v668 = vld [vmem:[%s150 + $0x1020] sm:$0xff]
                %669 = vst [vmem:[%s151 + $0x810] sm:$0xff] %v668
                %v670 = vld [vmem:[%s150 + $0x1028] sm:$0xff]
                %671 = vst [vmem:[%s151 + $0x818] sm:$0xff] %v670
                %v672 = vld [vmem:[%s150 + $0x1040] sm:$0xff]
                %673 = vst [vmem:[%s151 + $0x820] sm:$0xff] %v672
                %v674 = vld [vmem:[%s150 + $0x1048] sm:$0xff]
                %675 = vst [vmem:[%s151 + $0x828] sm:$0xff] %v674
                %v676 = vld [vmem:[%s150 + $0x1060] sm:$0xff]
                %677 = vst [vmem:[%s151 + $0x830] sm:$0xff] %v676
                %v678 = vld [vmem:[%s150 + $0x1068] sm:$0xff]
                %679 = vst [vmem:[%s151 + $0x838] sm:$0xff] %v678
                %v680 = vld [vmem:[%s150 + $0x1080] sm:$0xff]
                %681 = vst [vmem:[%s151 + $0x840] sm:$0xff] %v680
                %v682 = vld [vmem:[%s150 + $0x1088] sm:$0xff]
                %683 = vst [vmem:[%s151 + $0x848] sm:$0xff] %v682
                %v684 = vld [vmem:[%s150 + $0x10a0] sm:$0xff]
                %685 = vst [vmem:[%s151 + $0x850] sm:$0xff] %v684
                %v686 = vld [vmem:[%s150 + $0x10a8] sm:$0xff]
                %687 = vst [vmem:[%s151 + $0x858] sm:$0xff] %v686
                %v688 = vld [vmem:[%s150 + $0x10c0] sm:$0xff]
                %689 = vst [vmem:[%s151 + $0x860] sm:$0xff] %v688
                %v690 = vld [vmem:[%s150 + $0x10c8] sm:$0xff]
                %691 = vst [vmem:[%s151 + $0x868] sm:$0xff] %v690
                %v692 = vld [vmem:[%s150 + $0x10e0] sm:$0xff]
                %693 = vst [vmem:[%s151 + $0x870] sm:$0xff] %v692
                %v694 = vld [vmem:[%s150 + $0x10e8] sm:$0xff]
                %695 = vst [vmem:[%s151 + $0x878] sm:$0xff] %v694
                %v696 = vld [vmem:[%s150 + $0x1100] sm:$0xff]
                %697 = vst [vmem:[%s151 + $0x880] sm:$0xff] %v696
                %v698 = vld [vmem:[%s150 + $0x1108] sm:$0xff]
                %699 = vst [vmem:[%s151 + $0x888] sm:$0xff] %v698
                %v700 = vld [vmem:[%s150 + $0x1120] sm:$0xff]
                %701 = vst [vmem:[%s151 + $0x890] sm:$0xff] %v700
                %v702 = vld [vmem:[%s150 + $0x1128] sm:$0xff]
                %703 = vst [vmem:[%s151 + $0x898] sm:$0xff] %v702
                %v704 = vld [vmem:[%s150 + $0x1140] sm:$0xff]
                %705 = vst [vmem:[%s151 + $0x8a0] sm:$0xff] %v704
                %v706 = vld [vmem:[%s150 + $0x1148] sm:$0xff]
                %707 = vst [vmem:[%s151 + $0x8a8] sm:$0xff] %v706
                %v708 = vld [vmem:[%s150 + $0x1160] sm:$0xff]
                %709 = vst [vmem:[%s151 + $0x8b0] sm:$0xff] %v708
                %v710 = vld [vmem:[%s150 + $0x1168] sm:$0xff]
                %711 = vst [vmem:[%s151 + $0x8b8] sm:$0xff] %v710
                %v712 = vld [vmem:[%s150 + $0x1180] sm:$0xff]
                %713 = vst [vmem:[%s151 + $0x8c0] sm:$0xff] %v712
                %v714 = vld [vmem:[%s150 + $0x1188] sm:$0xff]
                %715 = vst [vmem:[%s151 + $0x8c8] sm:$0xff] %v714
                %v716 = vld [vmem:[%s150 + $0x11a0] sm:$0xff]
                %717 = vst [vmem:[%s151 + $0x8d0] sm:$0xff] %v716
                %v718 = vld [vmem:[%s150 + $0x11a8] sm:$0xff]
                %719 = vst [vmem:[%s151 + $0x8d8] sm:$0xff] %v718
                %v720 = vld [vmem:[%s150 + $0x11c0] sm:$0xff]
                %721 = vst [vmem:[%s151 + $0x8e0] sm:$0xff] %v720
                %v722 = vld [vmem:[%s150 + $0x11c8] sm:$0xff]
                %723 = vst [vmem:[%s151 + $0x8e8] sm:$0xff] %v722
                %v724 = vld [vmem:[%s150 + $0x11e0] sm:$0xff]
                %725 = vst [vmem:[%s151 + $0x8f0] sm:$0xff] %v724
                %v726 = vld [vmem:[%s150 + $0x11e8] sm:$0xff]
                %727 = vst [vmem:[%s151 + $0x8f8] sm:$0xff] %v726
                %v728 = vld [vmem:[%s150 + $0x1200] sm:$0xff]
                %729 = vst [vmem:[%s151 + $0x900] sm:$0xff] %v728
                %v730 = vld [vmem:[%s150 + $0x1208] sm:$0xff]
                %731 = vst [vmem:[%s151 + $0x908] sm:$0xff] %v730
                %v732 = vld [vmem:[%s150 + $0x1220] sm:$0xff]
                %733 = vst [vmem:[%s151 + $0x910] sm:$0xff] %v732
                %v734 = vld [vmem:[%s150 + $0x1228] sm:$0xff]
                %735 = vst [vmem:[%s151 + $0x918] sm:$0xff] %v734
                %v736 = vld [vmem:[%s150 + $0x1240] sm:$0xff]
                %737 = vst [vmem:[%s151 + $0x920] sm:$0xff] %v736
                %v738 = vld [vmem:[%s150 + $0x1248] sm:$0xff]
                %739 = vst [vmem:[%s151 + $0x928] sm:$0xff] %v738
                %v740 = vld [vmem:[%s150 + $0x1260] sm:$0xff]
                %741 = vst [vmem:[%s151 + $0x930] sm:$0xff] %v740
                %v742 = vld [vmem:[%s150 + $0x1268] sm:$0xff]
                %743 = vst [vmem:[%s151 + $0x938] sm:$0xff] %v742
                %v744 = vld [vmem:[%s150 + $0x1280] sm:$0xff]
                %745 = vst [vmem:[%s151 + $0x940] sm:$0xff] %v744
                %v746 = vld [vmem:[%s150 + $0x1288] sm:$0xff]
                %747 = vst [vmem:[%s151 + $0x948] sm:$0xff] %v746
                %v748 = vld [vmem:[%s150 + $0x12a0] sm:$0xff]
                %749 = vst [vmem:[%s151 + $0x950] sm:$0xff] %v748
                %v750 = vld [vmem:[%s150 + $0x12a8] sm:$0xff]
                %751 = vst [vmem:[%s151 + $0x958] sm:$0xff] %v750
                %v752 = vld [vmem:[%s150 + $0x12c0] sm:$0xff]
                %753 = vst [vmem:[%s151 + $0x960] sm:$0xff] %v752
                %v754 = vld [vmem:[%s150 + $0x12c8] sm:$0xff]
                %755 = vst [vmem:[%s151 + $0x968] sm:$0xff] %v754
                %v756 = vld [vmem:[%s150 + $0x12e0] sm:$0xff]
                %757 = vst [vmem:[%s151 + $0x970] sm:$0xff] %v756
                %v758 = vld [vmem:[%s150 + $0x12e8] sm:$0xff]
                %759 = vst [vmem:[%s151 + $0x978] sm:$0xff] %v758
                %v760 = vld [vmem:[%s150 + $0x1300] sm:$0xff]
                %761 = vst [vmem:[%s151 + $0x980] sm:$0xff] %v760
                %v762 = vld [vmem:[%s150 + $0x1308] sm:$0xff]
                %763 = vst [vmem:[%s151 + $0x988] sm:$0xff] %v762
                %v764 = vld [vmem:[%s150 + $0x1320] sm:$0xff]
                %765 = vst [vmem:[%s151 + $0x990] sm:$0xff] %v764
                %v766 = vld [vmem:[%s150 + $0x1328] sm:$0xff]
                %767 = vst [vmem:[%s151 + $0x998] sm:$0xff] %v766
                %v768 = vld [vmem:[%s150 + $0x1340] sm:$0xff]
                %769 = vst [vmem:[%s151 + $0x9a0] sm:$0xff] %v768
                %v770 = vld [vmem:[%s150 + $0x1348] sm:$0xff]
                %771 = vst [vmem:[%s151 + $0x9a8] sm:$0xff] %v770
                %v772 = vld [vmem:[%s150 + $0x1360] sm:$0xff]
                %773 = vst [vmem:[%s151 + $0x9b0] sm:$0xff] %v772
                %v774 = vld [vmem:[%s150 + $0x1368] sm:$0xff]
                %775 = vst [vmem:[%s151 + $0x9b8] sm:$0xff] %v774
                %v776 = vld [vmem:[%s150 + $0x1380] sm:$0xff]
                %777 = vst [vmem:[%s151 + $0x9c0] sm:$0xff] %v776
                %v778 = vld [vmem:[%s150 + $0x1388] sm:$0xff]
                %779 = vst [vmem:[%s151 + $0x9c8] sm:$0xff] %v778
                %v780 = vld [vmem:[%s150 + $0x13a0] sm:$0xff]
                %781 = vst [vmem:[%s151 + $0x9d0] sm:$0xff] %v780
                %v782 = vld [vmem:[%s150 + $0x13a8] sm:$0xff]
                %783 = vst [vmem:[%s151 + $0x9d8] sm:$0xff] %v782
                %v784 = vld [vmem:[%s150 + $0x13c0] sm:$0xff]
                %785 = vst [vmem:[%s151 + $0x9e0] sm:$0xff] %v784
                %v786 = vld [vmem:[%s150 + $0x13c8] sm:$0xff]
                %787 = vst [vmem:[%s151 + $0x9e8] sm:$0xff] %v786
                %v788 = vld [vmem:[%s150 + $0x13e0] sm:$0xff]
                %789 = vst [vmem:[%s151 + $0x9f0] sm:$0xff] %v788
                %v790 = vld [vmem:[%s150 + $0x13e8] sm:$0xff]
                %791 = vst [vmem:[%s151 + $0x9f8] sm:$0xff] %v790
                %v792 = vld [vmem:[%s150 + $0x1400] sm:$0xff]
                %793 = vst [vmem:[%s151 + $0xa00] sm:$0xff] %v792
                %v794 = vld [vmem:[%s150 + $0x1408] sm:$0xff]
                %795 = vst [vmem:[%s151 + $0xa08] sm:$0xff] %v794
                %v796 = vld [vmem:[%s150 + $0x1420] sm:$0xff]
                %797 = vst [vmem:[%s151 + $0xa10] sm:$0xff] %v796
                %v798 = vld [vmem:[%s150 + $0x1428] sm:$0xff]
                %799 = vst [vmem:[%s151 + $0xa18] sm:$0xff] %v798
                %v800 = vld [vmem:[%s150 + $0x1440] sm:$0xff]
                %801 = vst [vmem:[%s151 + $0xa20] sm:$0xff] %v800
                %v802 = vld [vmem:[%s150 + $0x1448] sm:$0xff]
                %803 = vst [vmem:[%s151 + $0xa28] sm:$0xff] %v802
                %v804 = vld [vmem:[%s150 + $0x1460] sm:$0xff]
                %805 = vst [vmem:[%s151 + $0xa30] sm:$0xff] %v804
                %v806 = vld [vmem:[%s150 + $0x1468] sm:$0xff]
                %807 = vst [vmem:[%s151 + $0xa38] sm:$0xff] %v806
                %v808 = vld [vmem:[%s150 + $0x1480] sm:$0xff]
                %809 = vst [vmem:[%s151 + $0xa40] sm:$0xff] %v808
                %v810 = vld [vmem:[%s150 + $0x1488] sm:$0xff]
                %811 = vst [vmem:[%s151 + $0xa48] sm:$0xff] %v810
                %v812 = vld [vmem:[%s150 + $0x14a0] sm:$0xff]
                %813 = vst [vmem:[%s151 + $0xa50] sm:$0xff] %v812
                %v814 = vld [vmem:[%s150 + $0x14a8] sm:$0xff]
                %815 = vst [vmem:[%s151 + $0xa58] sm:$0xff] %v814
                %v816 = vld [vmem:[%s150 + $0x14c0] sm:$0xff]
                %817 = vst [vmem:[%s151 + $0xa60] sm:$0xff] %v816
                %v818 = vld [vmem:[%s150 + $0x14c8] sm:$0xff]
                %819 = vst [vmem:[%s151 + $0xa68] sm:$0xff] %v818
                %v820 = vld [vmem:[%s150 + $0x14e0] sm:$0xff]
                %821 = vst [vmem:[%s151 + $0xa70] sm:$0xff] %v820
                %v822 = vld [vmem:[%s150 + $0x14e8] sm:$0xff]
                %823 = vst [vmem:[%s151 + $0xa78] sm:$0xff] %v822
                %v824 = vld [vmem:[%s150 + $0x1500] sm:$0xff]
                %825 = vst [vmem:[%s151 + $0xa80] sm:$0xff] %v824
                %v826 = vld [vmem:[%s150 + $0x1508] sm:$0xff]
                %827 = vst [vmem:[%s151 + $0xa88] sm:$0xff] %v826
                %v828 = vld [vmem:[%s150 + $0x1520] sm:$0xff]
                %829 = vst [vmem:[%s151 + $0xa90] sm:$0xff] %v828
                %v830 = vld [vmem:[%s150 + $0x1528] sm:$0xff]
                %831 = vst [vmem:[%s151 + $0xa98] sm:$0xff] %v830
                %v832 = vld [vmem:[%s150 + $0x1540] sm:$0xff]
                %833 = vst [vmem:[%s151 + $0xaa0] sm:$0xff] %v832
                %v834 = vld [vmem:[%s150 + $0x1548] sm:$0xff]
                %835 = vst [vmem:[%s151 + $0xaa8] sm:$0xff] %v834
                %v836 = vld [vmem:[%s150 + $0x1560] sm:$0xff]
                %837 = vst [vmem:[%s151 + $0xab0] sm:$0xff] %v836
                %v838 = vld [vmem:[%s150 + $0x1568] sm:$0xff]
                %839 = vst [vmem:[%s151 + $0xab8] sm:$0xff] %v838
                %v840 = vld [vmem:[%s150 + $0x1580] sm:$0xff]
                %841 = vst [vmem:[%s151 + $0xac0] sm:$0xff] %v840
                %v842 = vld [vmem:[%s150 + $0x1588] sm:$0xff]
                %843 = vst [vmem:[%s151 + $0xac8] sm:$0xff] %v842
                %v844 = vld [vmem:[%s150 + $0x15a0] sm:$0xff]
                %845 = vst [vmem:[%s151 + $0xad0] sm:$0xff] %v844
                %v846 = vld [vmem:[%s150 + $0x15a8] sm:$0xff]
                %847 = vst [vmem:[%s151 + $0xad8] sm:$0xff] %v846
                %v848 = vld [vmem:[%s150 + $0x15c0] sm:$0xff]
                %849 = vst [vmem:[%s151 + $0xae0] sm:$0xff] %v848
                %v850 = vld [vmem:[%s150 + $0x15c8] sm:$0xff]
                %851 = vst [vmem:[%s151 + $0xae8] sm:$0xff] %v850
                %v852 = vld [vmem:[%s150 + $0x15e0] sm:$0xff]
                %853 = vst [vmem:[%s151 + $0xaf0] sm:$0xff] %v852
                %v854 = vld [vmem:[%s150 + $0x15e8] sm:$0xff]
                %855 = vst [vmem:[%s151 + $0xaf8] sm:$0xff] %v854
                %v856 = vld [vmem:[%s150 + $0x1600] sm:$0xff]
                %857 = vst [vmem:[%s151 + $0xb00] sm:$0xff] %v856
                %v858 = vld [vmem:[%s150 + $0x1608] sm:$0xff]
                %859 = vst [vmem:[%s151 + $0xb08] sm:$0xff] %v858
                %v860 = vld [vmem:[%s150 + $0x1620] sm:$0xff]
                %861 = vst [vmem:[%s151 + $0xb10] sm:$0xff] %v860
                %v862 = vld [vmem:[%s150 + $0x1628] sm:$0xff]
                %863 = vst [vmem:[%s151 + $0xb18] sm:$0xff] %v862
                %v864 = vld [vmem:[%s150 + $0x1640] sm:$0xff]
                %865 = vst [vmem:[%s151 + $0xb20] sm:$0xff] %v864
                %v866 = vld [vmem:[%s150 + $0x1648] sm:$0xff]
                %867 = vst [vmem:[%s151 + $0xb28] sm:$0xff] %v866
                %v868 = vld [vmem:[%s150 + $0x1660] sm:$0xff]
                %869 = vst [vmem:[%s151 + $0xb30] sm:$0xff] %v868
                %v870 = vld [vmem:[%s150 + $0x1668] sm:$0xff]
                %871 = vst [vmem:[%s151 + $0xb38] sm:$0xff] %v870
                %v872 = vld [vmem:[%s150 + $0x1680] sm:$0xff]
                %873 = vst [vmem:[%s151 + $0xb40] sm:$0xff] %v872
                %v874 = vld [vmem:[%s150 + $0x1688] sm:$0xff]
                %875 = vst [vmem:[%s151 + $0xb48] sm:$0xff] %v874
                %v876 = vld [vmem:[%s150 + $0x16a0] sm:$0xff]
                %877 = vst [vmem:[%s151 + $0xb50] sm:$0xff] %v876
                %v878 = vld [vmem:[%s150 + $0x16a8] sm:$0xff]
                %879 = vst [vmem:[%s151 + $0xb58] sm:$0xff] %v878
                %v880 = vld [vmem:[%s150 + $0x16c0] sm:$0xff]
                %881 = vst [vmem:[%s151 + $0xb60] sm:$0xff] %v880
                %v882 = vld [vmem:[%s150 + $0x16c8] sm:$0xff]
                %883 = vst [vmem:[%s151 + $0xb68] sm:$0xff] %v882
                %v884 = vld [vmem:[%s150 + $0x16e0] sm:$0xff]
                %885 = vst [vmem:[%s151 + $0xb70] sm:$0xff] %v884
                %v886 = vld [vmem:[%s150 + $0x16e8] sm:$0xff]
                %887 = vst [vmem:[%s151 + $0xb78] sm:$0xff] %v886
                %v888 = vld [vmem:[%s150 + $0x1700] sm:$0xff]
                %889 = vst [vmem:[%s151 + $0xb80] sm:$0xff] %v888
                %v890 = vld [vmem:[%s150 + $0x1708] sm:$0xff]
                %891 = vst [vmem:[%s151 + $0xb88] sm:$0xff] %v890
                %v892 = vld [vmem:[%s150 + $0x1720] sm:$0xff]
                %893 = vst [vmem:[%s151 + $0xb90] sm:$0xff] %v892
                %v894 = vld [vmem:[%s150 + $0x1728] sm:$0xff]
                %895 = vst [vmem:[%s151 + $0xb98] sm:$0xff] %v894
                %v896 = vld [vmem:[%s150 + $0x1740] sm:$0xff]
                %897 = vst [vmem:[%s151 + $0xba0] sm:$0xff] %v896
                %v898 = vld [vmem:[%s150 + $0x1748] sm:$0xff]
                %899 = vst [vmem:[%s151 + $0xba8] sm:$0xff] %v898
                %v900 = vld [vmem:[%s150 + $0x1760] sm:$0xff]
                %901 = vst [vmem:[%s151 + $0xbb0] sm:$0xff] %v900
                %v902 = vld [vmem:[%s150 + $0x1768] sm:$0xff]
                %903 = vst [vmem:[%s151 + $0xbb8] sm:$0xff] %v902
                %v904 = vld [vmem:[%s150 + $0x1780] sm:$0xff]
                %905 = vst [vmem:[%s151 + $0xbc0] sm:$0xff] %v904
                %v906 = vld [vmem:[%s150 + $0x1788] sm:$0xff]
                %907 = vst [vmem:[%s151 + $0xbc8] sm:$0xff] %v906
                %v908 = vld [vmem:[%s150 + $0x17a0] sm:$0xff]
                %909 = vst [vmem:[%s151 + $0xbd0] sm:$0xff] %v908
                %v910 = vld [vmem:[%s150 + $0x17a8] sm:$0xff]
                %911 = vst [vmem:[%s151 + $0xbd8] sm:$0xff] %v910
                %v912 = vld [vmem:[%s150 + $0x17c0] sm:$0xff]
                %913 = vst [vmem:[%s151 + $0xbe0] sm:$0xff] %v912
                %v914 = vld [vmem:[%s150 + $0x17c8] sm:$0xff]
                %915 = vst [vmem:[%s151 + $0xbe8] sm:$0xff] %v914
                %v916 = vld [vmem:[%s150 + $0x17e0] sm:$0xff]
                %917 = vst [vmem:[%s151 + $0xbf0] sm:$0xff] %v916
                %v918 = vld [vmem:[%s150 + $0x17e8] sm:$0xff]
                %919 = vst [vmem:[%s151 + $0xbf8] sm:$0xff] %v918
              $region37: #{net_forward.4} parent=31 // loop_footer
                %s149 = sadd.s32 1, %s145
              $region38: #{net_forward.4} parent=31 // loop_footer_branch
                %144 = sbr.rel target = $region34
              $region39: #{net_forward.4} parent=31 // loop_exit
                _
            $region32: #{net_forward.4} parent=27 // pred_fallthru
              _
            // Predicated region
            $region40: #{net_forward.4} parent=27 // pred_check
              _
            $region41: #{net_forward.4} parent=27 // pred_check_branch
              %921 = sbr.rel target = $region43
            $region42: #{net_forward.4} parent=27 // pred_region
              _
            $region43: #{net_forward.4} parent=27 // pred_fallthru
              _
          $region28: #{net_forward.4} parent=23 // pred_fallthru
            _
          %922 = vnop
        $region24: #{net_forward.4} parent=19 // pred_fallthru
          _
        // Predicated region
        $region44: #{net_forward.4} parent=19 // pred_check
          %p923 = pneg %p76
        $region45: #{net_forward.4} parent=19 // pred_check_branch
          %925 = sbr.rel (%p923) target = $region47
        $region46: #{net_forward.4} parent=19 // pred_region
          %s926 = smul.u32 4, %s9
          %p927 = scmp.lt.s32.totalorder %s926, 7
          %s928 = scalar_select %p927, %s926, 7
          %s929 = scalar_lea.vmem %s2, %s928
          %s930 = smul.u32 4, %s9
        $region47: #{net_forward.4} parent=19 // pred_fallthru
          _
      $region20: #{net_forward.4} parent=5 // pred_fallthru
        _
      %p931 = scmp.le.s32.totalorder 1, %s9
      %p932 = scmp.lt.s32.totalorder %s9, 3
      %p933 = pnand %p931, %p932
      %p934 = pneg %p933
      // Predicated region
      $region48: #{net_forward.4} parent=5 // pred_check
        _
      $region49: #{net_forward.4} parent=5 // pred_check_branch
        %936 = sbr.rel (%p933) target = $region51
      $region50: #{net_forward.4} parent=5 // pred_region
        %s937 = ssub.s32 %s9, 1
        %s938 = sand.u32 %s43, 1
        %s939 = sand.u32 %s43, 1
        %s940 = smul.addr %s939, 3072
        %s941 = scalar_lea.vmem [#allocation2], %s940
        // Predicated region
        $region52: #{net_forward.4} parent=50 // pred_check
          %p942 = pneg %p56
        $region53: #{net_forward.4} parent=50 // pred_check_branch
          %944 = sbr.rel (%p942) target = $region55
        $region54: #{net_forward.4} parent=50 // pred_region
          _
        $region55: #{net_forward.4} parent=50 // pred_fallthru
          _
        %p945 = pneg %p30
        %p946 = pneg %p27
        %s947 = sand.u32 %s43, 1
        %s948 = sand.u32 %s43, 1
        %s949 = smul.addr %s948, 3072
        %s950 = scalar_lea.vmem [#allocation2], %s949
        %p951 = pneg %p56
        %p952 = pneg %p53
        %s953 = smul.u32 4, %s14
        %p954 = scmp.lt.s32.totalorder %s953, 7
        %s955 = scalar_select %p954, %s953, 7
        %s956 = scalar_lea.vmem %s2, %s955
        %p957 = pneg %p82
        %p958 = pneg %p79
        %p959 = pneg %p108
        %p960 = pneg %p105
        %s961 = smul.u32 4, %s14
        %p962 = scmp.lt.s32.totalorder %s961, 7
        %s963 = scalar_select %p962, %s961, 7
        %s964 = smul.addr %s963, 8
        %s965 = scalar_lea.vmem %s3, %s964
        %s966 = smul.u32 4, %s14
        %s967 = smul.u32 4, %s14
        %p968 = scmp.lt.s32.totalorder %s967, 7
        %s969 = scalar_select %p968, %s967, 7
        %s970 = scalar_lea.vmem %s2, %s969
        %s971 = smul.u32 4, %s14
        %s972 = smul.u32 4, %s14
        %p973 = scmp.lt.s32.totalorder %s972, 7
        %s974 = scalar_select %p973, %s972, 7
        %s975 = smul.addr %s974, 8
        %s976 = scalar_lea.vmem %s3, %s975
        %s977 = smul.u32 4, %s14
        %v978 = vld [vmem:[%s0] sm:$0xff]
        %v979 = vld [vmem:[%s0 + $0x8] sm:$0xff]
        %v980 = vld [vmem:[%s0 + $0x10] sm:$0xff]
        %v981 = vld [vmem:[%s0 + $0x18] sm:$0xff]
        %v982 = vld [vmem:[%s0 + $0x20] sm:$0xff]
        %v983 = vld [vmem:[%s0 + $0x28] sm:$0xff]
        %v984 = vld [vmem:[%s0 + $0x30] sm:$0xff]
        %v985 = vld [vmem:[%s0 + $0x38] sm:$0xff]
        %v986 = vld [vmem:[%s0 + $0x40] sm:$0xff]
        %v987 = vld [vmem:[%s0 + $0x48] sm:$0xff]
        %v988 = vld [vmem:[%s0 + $0x50] sm:$0xff]
        %v989 = vld [vmem:[%s0 + $0x58] sm:$0xff]
        %v990 = vpack.c.bf16 %v978, %v978
        %v991 = vpack.c.bf16 %v979, %v979
        %v992 = vpack.c.bf16 %v980, %v980
        %v993 = vpack.c.bf16 %v981, %v981
        %v994 = vpack.c.bf16 %v982, %v982
        %v995 = vpack.c.bf16 %v983, %v983
        %v996 = vpack.c.bf16 %v984, %v984
        %v997 = vpack.c.bf16 %v985, %v985
        %v998 = vpack.c.bf16 %v986, %v986
        %v999 = vpack.c.bf16 %v987, %v987
        %v1000 = vpack.c.bf16 %v988, %v988
        %v1001 = vpack.c.bf16 %v989, %v989
        %v1002 = vld [vmem:[%s941] sm:$0xff]
        %v1003 = vld [vmem:[%s941 + $0x8] sm:$0xff]
        %v1004 = vld [vmem:[%s941 + $0x10] sm:$0xff]
        %v1005 = vld [vmem:[%s941 + $0x18] sm:$0xff]
        %v1006 = vld [vmem:[%s941 + $0x20] sm:$0xff]
        %v1007 = vld [vmem:[%s941 + $0x28] sm:$0xff]
        %v1008 = vld [vmem:[%s941 + $0x30] sm:$0xff]
        %v1009 = vld [vmem:[%s941 + $0x38] sm:$0xff]
        %v1010 = vld [vmem:[%s941 + $0x40] sm:$0xff]
        %v1011 = vld [vmem:[%s941 + $0x48] sm:$0xff]
        %v1012 = vld [vmem:[%s941 + $0x50] sm:$0xff]
        %v1013 = vld [vmem:[%s941 + $0x58] sm:$0xff]
        %v1014 = vld [vmem:[%s941 + $0x60] sm:$0xff]
        %v1015 = vld [vmem:[%s941 + $0x68] sm:$0xff]
        %v1016 = vld [vmem:[%s941 + $0x70] sm:$0xff]
        %v1017 = vld [vmem:[%s941 + $0x78] sm:$0xff]
        %v1018 = vld [vmem:[%s941 + $0x80] sm:$0xff]
        %v1019 = vld [vmem:[%s941 + $0x88] sm:$0xff]
        %v1020 = vld [vmem:[%s941 + $0x90] sm:$0xff]
        %v1021 = vld [vmem:[%s941 + $0x98] sm:$0xff]
        %v1022 = vld [vmem:[%s941 + $0xa0] sm:$0xff]
        %v1023 = vld [vmem:[%s941 + $0xa8] sm:$0xff]
        %v1024 = vld [vmem:[%s941 + $0xb0] sm:$0xff]
        %v1025 = vld [vmem:[%s941 + $0xb8] sm:$0xff]
        %v1026 = vld [vmem:[%s941 + $0xc0] sm:$0xff]
        %v1027 = vld [vmem:[%s941 + $0xc8] sm:$0xff]
        %v1028 = vld [vmem:[%s941 + $0xd0] sm:$0xff]
        %v1029 = vld [vmem:[%s941 + $0xd8] sm:$0xff]
        %v1030 = vld [vmem:[%s941 + $0xe0] sm:$0xff]
        %v1031 = vld [vmem:[%s941 + $0xe8] sm:$0xff]
        %v1032 = vld [vmem:[%s941 + $0xf0] sm:$0xff]
        %v1033 = vld [vmem:[%s941 + $0xf8] sm:$0xff]
        %v1034 = vld [vmem:[%s941 + $0x100] sm:$0xff]
        %v1035 = vld [vmem:[%s941 + $0x108] sm:$0xff]
        %v1036 = vld [vmem:[%s941 + $0x110] sm:$0xff]
        %v1037 = vld [vmem:[%s941 + $0x118] sm:$0xff]
        %v1038 = vld [vmem:[%s941 + $0x120] sm:$0xff]
        %v1039 = vld [vmem:[%s941 + $0x128] sm:$0xff]
        %v1040 = vld [vmem:[%s941 + $0x130] sm:$0xff]
        %v1041 = vld [vmem:[%s941 + $0x138] sm:$0xff]
        %v1042 = vld [vmem:[%s941 + $0x140] sm:$0xff]
        %v1043 = vld [vmem:[%s941 + $0x148] sm:$0xff]
        %v1044 = vld [vmem:[%s941 + $0x150] sm:$0xff]
        %v1045 = vld [vmem:[%s941 + $0x158] sm:$0xff]
        %v1046 = vld [vmem:[%s941 + $0x160] sm:$0xff]
        %v1047 = vld [vmem:[%s941 + $0x168] sm:$0xff]
        %v1048 = vld [vmem:[%s941 + $0x170] sm:$0xff]
        %v1049 = vld [vmem:[%s941 + $0x178] sm:$0xff]
        %v1050 = vld [vmem:[%s941 + $0x180] sm:$0xff]
        %v1051 = vld [vmem:[%s941 + $0x188] sm:$0xff]
        %v1052 = vld [vmem:[%s941 + $0x190] sm:$0xff]
        %v1053 = vld [vmem:[%s941 + $0x198] sm:$0xff]
        %v1054 = vld [vmem:[%s941 + $0x1a0] sm:$0xff]
        %v1055 = vld [vmem:[%s941 + $0x1a8] sm:$0xff]
        %v1056 = vld [vmem:[%s941 + $0x1b0] sm:$0xff]
        %v1057 = vld [vmem:[%s941 + $0x1b8] sm:$0xff]
        %v1058 = vld [vmem:[%s941 + $0x1c0] sm:$0xff]
        %v1059 = vld [vmem:[%s941 + $0x1c8] sm:$0xff]
        %v1060 = vld [vmem:[%s941 + $0x1d0] sm:$0xff]
        %v1061 = vld [vmem:[%s941 + $0x1d8] sm:$0xff]
        %v1062 = vld [vmem:[%s941 + $0x1e0] sm:$0xff]
        %v1063 = vld [vmem:[%s941 + $0x1e8] sm:$0xff]
        %v1064 = vld [vmem:[%s941 + $0x1f0] sm:$0xff]
        %v1065 = vld [vmem:[%s941 + $0x1f8] sm:$0xff]
        %v1066 = vld [vmem:[%s941 + $0x200] sm:$0xff]
        %v1067 = vld [vmem:[%s941 + $0x208] sm:$0xff]
        %v1068 = vld [vmem:[%s941 + $0x210] sm:$0xff]
        %v1069 = vld [vmem:[%s941 + $0x218] sm:$0xff]
        %v1070 = vld [vmem:[%s941 + $0x220] sm:$0xff]
        %v1071 = vld [vmem:[%s941 + $0x228] sm:$0xff]
        %v1072 = vld [vmem:[%s941 + $0x230] sm:$0xff]
        %v1073 = vld [vmem:[%s941 + $0x238] sm:$0xff]
        %v1074 = vld [vmem:[%s941 + $0x240] sm:$0xff]
        %v1075 = vld [vmem:[%s941 + $0x248] sm:$0xff]
        %v1076 = vld [vmem:[%s941 + $0x250] sm:$0xff]
        %v1077 = vld [vmem:[%s941 + $0x258] sm:$0xff]
        %v1078 = vld [vmem:[%s941 + $0x260] sm:$0xff]
        %v1079 = vld [vmem:[%s941 + $0x268] sm:$0xff]
        %v1080 = vld [vmem:[%s941 + $0x270] sm:$0xff]
        %v1081 = vld [vmem:[%s941 + $0x278] sm:$0xff]
        %v1082 = vld [vmem:[%s941 + $0x280] sm:$0xff]
        %v1083 = vld [vmem:[%s941 + $0x288] sm:$0xff]
        %v1084 = vld [vmem:[%s941 + $0x290] sm:$0xff]
        %v1085 = vld [vmem:[%s941 + $0x298] sm:$0xff]
        %v1086 = vld [vmem:[%s941 + $0x2a0] sm:$0xff]
        %v1087 = vld [vmem:[%s941 + $0x2a8] sm:$0xff]
        %v1088 = vld [vmem:[%s941 + $0x2b0] sm:$0xff]
        %v1089 = vld [vmem:[%s941 + $0x2b8] sm:$0xff]
        %v1090 = vld [vmem:[%s941 + $0x2c0] sm:$0xff]
        %v1091 = vld [vmem:[%s941 + $0x2c8] sm:$0xff]
        %v1092 = vld [vmem:[%s941 + $0x2d0] sm:$0xff]
        %v1093 = vld [vmem:[%s941 + $0x2d8] sm:$0xff]
        %v1094 = vld [vmem:[%s941 + $0x2e0] sm:$0xff]
        %v1095 = vld [vmem:[%s941 + $0x2e8] sm:$0xff]
        %v1096 = vld [vmem:[%s941 + $0x2f0] sm:$0xff]
        %v1097 = vld [vmem:[%s941 + $0x2f8] sm:$0xff]
        %v1098 = vld [vmem:[%s941 + $0x300] sm:$0xff]
        %v1099 = vld [vmem:[%s941 + $0x308] sm:$0xff]
        %v1100 = vld [vmem:[%s941 + $0x310] sm:$0xff]
        %v1101 = vld [vmem:[%s941 + $0x318] sm:$0xff]
        %v1102 = vld [vmem:[%s941 + $0x320] sm:$0xff]
        %v1103 = vld [vmem:[%s941 + $0x328] sm:$0xff]
        %v1104 = vld [vmem:[%s941 + $0x330] sm:$0xff]
        %v1105 = vld [vmem:[%s941 + $0x338] sm:$0xff]
        %v1106 = vld [vmem:[%s941 + $0x340] sm:$0xff]
        %v1107 = vld [vmem:[%s941 + $0x348] sm:$0xff]
        %v1108 = vld [vmem:[%s941 + $0x350] sm:$0xff]
        %v1109 = vld [vmem:[%s941 + $0x358] sm:$0xff]
        %v1110 = vld [vmem:[%s941 + $0x360] sm:$0xff]
        %v1111 = vld [vmem:[%s941 + $0x368] sm:$0xff]
        %v1112 = vld [vmem:[%s941 + $0x370] sm:$0xff]
        %v1113 = vld [vmem:[%s941 + $0x378] sm:$0xff]
        %v1114 = vld [vmem:[%s941 + $0x380] sm:$0xff]
        %v1115 = vld [vmem:[%s941 + $0x388] sm:$0xff]
        %v1116 = vld [vmem:[%s941 + $0x390] sm:$0xff]
        %v1117 = vld [vmem:[%s941 + $0x398] sm:$0xff]
        %v1118 = vld [vmem:[%s941 + $0x3a0] sm:$0xff]
        %v1119 = vld [vmem:[%s941 + $0x3a8] sm:$0xff]
        %v1120 = vld [vmem:[%s941 + $0x3b0] sm:$0xff]
        %v1121 = vld [vmem:[%s941 + $0x3b8] sm:$0xff]
        %v1122 = vld [vmem:[%s941 + $0x3c0] sm:$0xff]
        %v1123 = vld [vmem:[%s941 + $0x3c8] sm:$0xff]
        %v1124 = vld [vmem:[%s941 + $0x3d0] sm:$0xff]
        %v1125 = vld [vmem:[%s941 + $0x3d8] sm:$0xff]
        %v1126 = vld [vmem:[%s941 + $0x3e0] sm:$0xff]
        %v1127 = vld [vmem:[%s941 + $0x3e8] sm:$0xff]
        %v1128 = vld [vmem:[%s941 + $0x3f0] sm:$0xff]
        %v1129 = vld [vmem:[%s941 + $0x3f8] sm:$0xff]
        %v1130 = vld [vmem:[%s941 + $0x400] sm:$0xff]
        %v1131 = vld [vmem:[%s941 + $0x408] sm:$0xff]
        %v1132 = vld [vmem:[%s941 + $0x410] sm:$0xff]
        %v1133 = vld [vmem:[%s941 + $0x418] sm:$0xff]
        %v1134 = vld [vmem:[%s941 + $0x420] sm:$0xff]
        %v1135 = vld [vmem:[%s941 + $0x428] sm:$0xff]
        %v1136 = vld [vmem:[%s941 + $0x430] sm:$0xff]
        %v1137 = vld [vmem:[%s941 + $0x438] sm:$0xff]
        %v1138 = vld [vmem:[%s941 + $0x440] sm:$0xff]
        %v1139 = vld [vmem:[%s941 + $0x448] sm:$0xff]
        %v1140 = vld [vmem:[%s941 + $0x450] sm:$0xff]
        %v1141 = vld [vmem:[%s941 + $0x458] sm:$0xff]
        %v1142 = vld [vmem:[%s941 + $0x460] sm:$0xff]
        %v1143 = vld [vmem:[%s941 + $0x468] sm:$0xff]
        %v1144 = vld [vmem:[%s941 + $0x470] sm:$0xff]
        %v1145 = vld [vmem:[%s941 + $0x478] sm:$0xff]
        %v1146 = vld [vmem:[%s941 + $0x480] sm:$0xff]
        %v1147 = vld [vmem:[%s941 + $0x488] sm:$0xff]
        %v1148 = vld [vmem:[%s941 + $0x490] sm:$0xff]
        %v1149 = vld [vmem:[%s941 + $0x498] sm:$0xff]
        %v1150 = vld [vmem:[%s941 + $0x4a0] sm:$0xff]
        %v1151 = vld [vmem:[%s941 + $0x4a8] sm:$0xff]
        %v1152 = vld [vmem:[%s941 + $0x4b0] sm:$0xff]
        %v1153 = vld [vmem:[%s941 + $0x4b8] sm:$0xff]
        %v1154 = vld [vmem:[%s941 + $0x4c0] sm:$0xff]
        %v1155 = vld [vmem:[%s941 + $0x4c8] sm:$0xff]
        %v1156 = vld [vmem:[%s941 + $0x4d0] sm:$0xff]
        %v1157 = vld [vmem:[%s941 + $0x4d8] sm:$0xff]
        %v1158 = vld [vmem:[%s941 + $0x4e0] sm:$0xff]
        %v1159 = vld [vmem:[%s941 + $0x4e8] sm:$0xff]
        %v1160 = vld [vmem:[%s941 + $0x4f0] sm:$0xff]
        %v1161 = vld [vmem:[%s941 + $0x4f8] sm:$0xff]
        %v1162 = vld [vmem:[%s941 + $0x500] sm:$0xff]
        %v1163 = vld [vmem:[%s941 + $0x508] sm:$0xff]
        %v1164 = vld [vmem:[%s941 + $0x510] sm:$0xff]
        %v1165 = vld [vmem:[%s941 + $0x518] sm:$0xff]
        %v1166 = vld [vmem:[%s941 + $0x520] sm:$0xff]
        %v1167 = vld [vmem:[%s941 + $0x528] sm:$0xff]
        %v1168 = vld [vmem:[%s941 + $0x530] sm:$0xff]
        %v1169 = vld [vmem:[%s941 + $0x538] sm:$0xff]
        %v1170 = vld [vmem:[%s941 + $0x540] sm:$0xff]
        %v1171 = vld [vmem:[%s941 + $0x548] sm:$0xff]
        %v1172 = vld [vmem:[%s941 + $0x550] sm:$0xff]
        %v1173 = vld [vmem:[%s941 + $0x558] sm:$0xff]
        %v1174 = vld [vmem:[%s941 + $0x560] sm:$0xff]
        %v1175 = vld [vmem:[%s941 + $0x568] sm:$0xff]
        %v1176 = vld [vmem:[%s941 + $0x570] sm:$0xff]
        %v1177 = vld [vmem:[%s941 + $0x578] sm:$0xff]
        %v1178 = vld [vmem:[%s941 + $0x580] sm:$0xff]
        %v1179 = vld [vmem:[%s941 + $0x588] sm:$0xff]
        %v1180 = vld [vmem:[%s941 + $0x590] sm:$0xff]
        %v1181 = vld [vmem:[%s941 + $0x598] sm:$0xff]
        %v1182 = vld [vmem:[%s941 + $0x5a0] sm:$0xff]
        %v1183 = vld [vmem:[%s941 + $0x5a8] sm:$0xff]
        %v1184 = vld [vmem:[%s941 + $0x5b0] sm:$0xff]
        %v1185 = vld [vmem:[%s941 + $0x5b8] sm:$0xff]
        %v1186 = vld [vmem:[%s941 + $0x5c0] sm:$0xff]
        %v1187 = vld [vmem:[%s941 + $0x5c8] sm:$0xff]
        %v1188 = vld [vmem:[%s941 + $0x5d0] sm:$0xff]
        %v1189 = vld [vmem:[%s941 + $0x5d8] sm:$0xff]
        %v1190 = vld [vmem:[%s941 + $0x5e0] sm:$0xff]
        %v1191 = vld [vmem:[%s941 + $0x5e8] sm:$0xff]
        %v1192 = vld [vmem:[%s941 + $0x5f0] sm:$0xff]
        %v1193 = vld [vmem:[%s941 + $0x5f8] sm:$0xff]
        %v1194 = vld [vmem:[%s941 + $0x600] sm:$0xff]
        %v1195 = vld [vmem:[%s941 + $0x608] sm:$0xff]
        %v1196 = vld [vmem:[%s941 + $0x610] sm:$0xff]
        %v1197 = vld [vmem:[%s941 + $0x618] sm:$0xff]
        %v1198 = vld [vmem:[%s941 + $0x620] sm:$0xff]
        %v1199 = vld [vmem:[%s941 + $0x628] sm:$0xff]
        %v1200 = vld [vmem:[%s941 + $0x630] sm:$0xff]
        %v1201 = vld [vmem:[%s941 + $0x638] sm:$0xff]
        %v1202 = vld [vmem:[%s941 + $0x640] sm:$0xff]
        %v1203 = vld [vmem:[%s941 + $0x648] sm:$0xff]
        %v1204 = vld [vmem:[%s941 + $0x650] sm:$0xff]
        %v1205 = vld [vmem:[%s941 + $0x658] sm:$0xff]
        %v1206 = vld [vmem:[%s941 + $0x660] sm:$0xff]
        %v1207 = vld [vmem:[%s941 + $0x668] sm:$0xff]
        %v1208 = vld [vmem:[%s941 + $0x670] sm:$0xff]
        %v1209 = vld [vmem:[%s941 + $0x678] sm:$0xff]
        %v1210 = vld [vmem:[%s941 + $0x680] sm:$0xff]
        %v1211 = vld [vmem:[%s941 + $0x688] sm:$0xff]
        %v1212 = vld [vmem:[%s941 + $0x690] sm:$0xff]
        %v1213 = vld [vmem:[%s941 + $0x698] sm:$0xff]
        %v1214 = vld [vmem:[%s941 + $0x6a0] sm:$0xff]
        %v1215 = vld [vmem:[%s941 + $0x6a8] sm:$0xff]
        %v1216 = vld [vmem:[%s941 + $0x6b0] sm:$0xff]
        %v1217 = vld [vmem:[%s941 + $0x6b8] sm:$0xff]
        %v1218 = vld [vmem:[%s941 + $0x6c0] sm:$0xff]
        %v1219 = vld [vmem:[%s941 + $0x6c8] sm:$0xff]
        %v1220 = vld [vmem:[%s941 + $0x6d0] sm:$0xff]
        %v1221 = vld [vmem:[%s941 + $0x6d8] sm:$0xff]
        %v1222 = vld [vmem:[%s941 + $0x6e0] sm:$0xff]
        %v1223 = vld [vmem:[%s941 + $0x6e8] sm:$0xff]
        %v1224 = vld [vmem:[%s941 + $0x6f0] sm:$0xff]
        %v1225 = vld [vmem:[%s941 + $0x6f8] sm:$0xff]
        %v1226 = vld [vmem:[%s941 + $0x700] sm:$0xff]
        %v1227 = vld [vmem:[%s941 + $0x708] sm:$0xff]
        %v1228 = vld [vmem:[%s941 + $0x710] sm:$0xff]
        %v1229 = vld [vmem:[%s941 + $0x718] sm:$0xff]
        %v1230 = vld [vmem:[%s941 + $0x720] sm:$0xff]
        %v1231 = vld [vmem:[%s941 + $0x728] sm:$0xff]
        %v1232 = vld [vmem:[%s941 + $0x730] sm:$0xff]
        %v1233 = vld [vmem:[%s941 + $0x738] sm:$0xff]
        %v1234 = vld [vmem:[%s941 + $0x740] sm:$0xff]
        %v1235 = vld [vmem:[%s941 + $0x748] sm:$0xff]
        %v1236 = vld [vmem:[%s941 + $0x750] sm:$0xff]
        %v1237 = vld [vmem:[%s941 + $0x758] sm:$0xff]
        %v1238 = vld [vmem:[%s941 + $0x760] sm:$0xff]
        %v1239 = vld [vmem:[%s941 + $0x768] sm:$0xff]
        %v1240 = vld [vmem:[%s941 + $0x770] sm:$0xff]
        %v1241 = vld [vmem:[%s941 + $0x778] sm:$0xff]
        %v1242 = vld [vmem:[%s941 + $0x780] sm:$0xff]
        %v1243 = vld [vmem:[%s941 + $0x788] sm:$0xff]
        %v1244 = vld [vmem:[%s941 + $0x790] sm:$0xff]
        %v1245 = vld [vmem:[%s941 + $0x798] sm:$0xff]
        %v1246 = vld [vmem:[%s941 + $0x7a0] sm:$0xff]
        %v1247 = vld [vmem:[%s941 + $0x7a8] sm:$0xff]
        %v1248 = vld [vmem:[%s941 + $0x7b0] sm:$0xff]
        %v1249 = vld [vmem:[%s941 + $0x7b8] sm:$0xff]
        %v1250 = vld [vmem:[%s941 + $0x7c0] sm:$0xff]
        %v1251 = vld [vmem:[%s941 + $0x7c8] sm:$0xff]
        %v1252 = vld [vmem:[%s941 + $0x7d0] sm:$0xff]
        %v1253 = vld [vmem:[%s941 + $0x7d8] sm:$0xff]
        %v1254 = vld [vmem:[%s941 + $0x7e0] sm:$0xff]
        %v1255 = vld [vmem:[%s941 + $0x7e8] sm:$0xff]
        %v1256 = vld [vmem:[%s941 + $0x7f0] sm:$0xff]
        %v1257 = vld [vmem:[%s941 + $0x7f8] sm:$0xff]
        %v1258 = vld [vmem:[%s941 + $0x800] sm:$0xff]
        %v1259 = vld [vmem:[%s941 + $0x808] sm:$0xff]
        %v1260 = vld [vmem:[%s941 + $0x810] sm:$0xff]
        %v1261 = vld [vmem:[%s941 + $0x818] sm:$0xff]
        %v1262 = vld [vmem:[%s941 + $0x820] sm:$0xff]
        %v1263 = vld [vmem:[%s941 + $0x828] sm:$0xff]
        %v1264 = vld [vmem:[%s941 + $0x830] sm:$0xff]
        %v1265 = vld [vmem:[%s941 + $0x838] sm:$0xff]
        %v1266 = vld [vmem:[%s941 + $0x840] sm:$0xff]
        %v1267 = vld [vmem:[%s941 + $0x848] sm:$0xff]
        %v1268 = vld [vmem:[%s941 + $0x850] sm:$0xff]
        %v1269 = vld [vmem:[%s941 + $0x858] sm:$0xff]
        %v1270 = vld [vmem:[%s941 + $0x860] sm:$0xff]
        %v1271 = vld [vmem:[%s941 + $0x868] sm:$0xff]
        %v1272 = vld [vmem:[%s941 + $0x870] sm:$0xff]
        %v1273 = vld [vmem:[%s941 + $0x878] sm:$0xff]
        %v1274 = vld [vmem:[%s941 + $0x880] sm:$0xff]
        %v1275 = vld [vmem:[%s941 + $0x888] sm:$0xff]
        %v1276 = vld [vmem:[%s941 + $0x890] sm:$0xff]
        %v1277 = vld [vmem:[%s941 + $0x898] sm:$0xff]
        %v1278 = vld [vmem:[%s941 + $0x8a0] sm:$0xff]
        %v1279 = vld [vmem:[%s941 + $0x8a8] sm:$0xff]
        %v1280 = vld [vmem:[%s941 + $0x8b0] sm:$0xff]
        %v1281 = vld [vmem:[%s941 + $0x8b8] sm:$0xff]
        %v1282 = vld [vmem:[%s941 + $0x8c0] sm:$0xff]
        %v1283 = vld [vmem:[%s941 + $0x8c8] sm:$0xff]
        %v1284 = vld [vmem:[%s941 + $0x8d0] sm:$0xff]
        %v1285 = vld [vmem:[%s941 + $0x8d8] sm:$0xff]
        %v1286 = vld [vmem:[%s941 + $0x8e0] sm:$0xff]
        %v1287 = vld [vmem:[%s941 + $0x8e8] sm:$0xff]
        %v1288 = vld [vmem:[%s941 + $0x8f0] sm:$0xff]
        %v1289 = vld [vmem:[%s941 + $0x8f8] sm:$0xff]
        %v1290 = vld [vmem:[%s941 + $0x900] sm:$0xff]
        %v1291 = vld [vmem:[%s941 + $0x908] sm:$0xff]
        %v1292 = vld [vmem:[%s941 + $0x910] sm:$0xff]
        %v1293 = vld [vmem:[%s941 + $0x918] sm:$0xff]
        %v1294 = vld [vmem:[%s941 + $0x920] sm:$0xff]
        %v1295 = vld [vmem:[%s941 + $0x928] sm:$0xff]
        %v1296 = vld [vmem:[%s941 + $0x930] sm:$0xff]
        %v1297 = vld [vmem:[%s941 + $0x938] sm:$0xff]
        %v1298 = vld [vmem:[%s941 + $0x940] sm:$0xff]
        %v1299 = vld [vmem:[%s941 + $0x948] sm:$0xff]
        %v1300 = vld [vmem:[%s941 + $0x950] sm:$0xff]
        %v1301 = vld [vmem:[%s941 + $0x958] sm:$0xff]
        %v1302 = vld [vmem:[%s941 + $0x960] sm:$0xff]
        %v1303 = vld [vmem:[%s941 + $0x968] sm:$0xff]
        %v1304 = vld [vmem:[%s941 + $0x970] sm:$0xff]
        %v1305 = vld [vmem:[%s941 + $0x978] sm:$0xff]
        %v1306 = vld [vmem:[%s941 + $0x980] sm:$0xff]
        %v1307 = vld [vmem:[%s941 + $0x988] sm:$0xff]
        %v1308 = vld [vmem:[%s941 + $0x990] sm:$0xff]
        %v1309 = vld [vmem:[%s941 + $0x998] sm:$0xff]
        %v1310 = vld [vmem:[%s941 + $0x9a0] sm:$0xff]
        %v1311 = vld [vmem:[%s941 + $0x9a8] sm:$0xff]
        %v1312 = vld [vmem:[%s941 + $0x9b0] sm:$0xff]
        %v1313 = vld [vmem:[%s941 + $0x9b8] sm:$0xff]
        %v1314 = vld [vmem:[%s941 + $0x9c0] sm:$0xff]
        %v1315 = vld [vmem:[%s941 + $0x9c8] sm:$0xff]
        %v1316 = vld [vmem:[%s941 + $0x9d0] sm:$0xff]
        %v1317 = vld [vmem:[%s941 + $0x9d8] sm:$0xff]
        %v1318 = vld [vmem:[%s941 + $0x9e0] sm:$0xff]
        %v1319 = vld [vmem:[%s941 + $0x9e8] sm:$0xff]
        %v1320 = vld [vmem:[%s941 + $0x9f0] sm:$0xff]
        %v1321 = vld [vmem:[%s941 + $0x9f8] sm:$0xff]
        %v1322 = vld [vmem:[%s941 + $0xa00] sm:$0xff]
        %v1323 = vld [vmem:[%s941 + $0xa08] sm:$0xff]
        %v1324 = vld [vmem:[%s941 + $0xa10] sm:$0xff]
        %v1325 = vld [vmem:[%s941 + $0xa18] sm:$0xff]
        %v1326 = vld [vmem:[%s941 + $0xa20] sm:$0xff]
        %v1327 = vld [vmem:[%s941 + $0xa28] sm:$0xff]
        %v1328 = vld [vmem:[%s941 + $0xa30] sm:$0xff]
        %v1329 = vld [vmem:[%s941 + $0xa38] sm:$0xff]
        %v1330 = vld [vmem:[%s941 + $0xa40] sm:$0xff]
        %v1331 = vld [vmem:[%s941 + $0xa48] sm:$0xff]
        %v1332 = vld [vmem:[%s941 + $0xa50] sm:$0xff]
        %v1333 = vld [vmem:[%s941 + $0xa58] sm:$0xff]
        %v1334 = vld [vmem:[%s941 + $0xa60] sm:$0xff]
        %v1335 = vld [vmem:[%s941 + $0xa68] sm:$0xff]
        %v1336 = vld [vmem:[%s941 + $0xa70] sm:$0xff]
        %v1337 = vld [vmem:[%s941 + $0xa78] sm:$0xff]
        %v1338 = vld [vmem:[%s941 + $0xa80] sm:$0xff]
        %v1339 = vld [vmem:[%s941 + $0xa88] sm:$0xff]
        %v1340 = vld [vmem:[%s941 + $0xa90] sm:$0xff]
        %v1341 = vld [vmem:[%s941 + $0xa98] sm:$0xff]
        %v1342 = vld [vmem:[%s941 + $0xaa0] sm:$0xff]
        %v1343 = vld [vmem:[%s941 + $0xaa8] sm:$0xff]
        %v1344 = vld [vmem:[%s941 + $0xab0] sm:$0xff]
        %v1345 = vld [vmem:[%s941 + $0xab8] sm:$0xff]
        %v1346 = vld [vmem:[%s941 + $0xac0] sm:$0xff]
        %v1347 = vld [vmem:[%s941 + $0xac8] sm:$0xff]
        %v1348 = vld [vmem:[%s941 + $0xad0] sm:$0xff]
        %v1349 = vld [vmem:[%s941 + $0xad8] sm:$0xff]
        %v1350 = vld [vmem:[%s941 + $0xae0] sm:$0xff]
        %v1351 = vld [vmem:[%s941 + $0xae8] sm:$0xff]
        %v1352 = vld [vmem:[%s941 + $0xaf0] sm:$0xff]
        %v1353 = vld [vmem:[%s941 + $0xaf8] sm:$0xff]
        %v1354 = vld [vmem:[%s941 + $0xb00] sm:$0xff]
        %v1355 = vld [vmem:[%s941 + $0xb08] sm:$0xff]
        %v1356 = vld [vmem:[%s941 + $0xb10] sm:$0xff]
        %v1357 = vld [vmem:[%s941 + $0xb18] sm:$0xff]
        %v1358 = vld [vmem:[%s941 + $0xb20] sm:$0xff]
        %v1359 = vld [vmem:[%s941 + $0xb28] sm:$0xff]
        %v1360 = vld [vmem:[%s941 + $0xb30] sm:$0xff]
        %v1361 = vld [vmem:[%s941 + $0xb38] sm:$0xff]
        %v1362 = vld [vmem:[%s941 + $0xb40] sm:$0xff]
        %v1363 = vld [vmem:[%s941 + $0xb48] sm:$0xff]
        %v1364 = vld [vmem:[%s941 + $0xb50] sm:$0xff]
        %v1365 = vld [vmem:[%s941 + $0xb58] sm:$0xff]
        %v1366 = vld [vmem:[%s941 + $0xb60] sm:$0xff]
        %v1367 = vld [vmem:[%s941 + $0xb68] sm:$0xff]
        %v1368 = vld [vmem:[%s941 + $0xb70] sm:$0xff]
        %v1369 = vld [vmem:[%s941 + $0xb78] sm:$0xff]
        %v1370 = vld [vmem:[%s941 + $0xb80] sm:$0xff]
        %v1371 = vld [vmem:[%s941 + $0xb88] sm:$0xff]
        %v1372 = vld [vmem:[%s941 + $0xb90] sm:$0xff]
        %v1373 = vld [vmem:[%s941 + $0xb98] sm:$0xff]
        %v1374 = vld [vmem:[%s941 + $0xba0] sm:$0xff]
        %v1375 = vld [vmem:[%s941 + $0xba8] sm:$0xff]
        %v1376 = vld [vmem:[%s941 + $0xbb0] sm:$0xff]
        %v1377 = vld [vmem:[%s941 + $0xbb8] sm:$0xff]
        %v1378 = vld [vmem:[%s941 + $0xbc0] sm:$0xff]
        %v1379 = vld [vmem:[%s941 + $0xbc8] sm:$0xff]
        %v1380 = vld [vmem:[%s941 + $0xbd0] sm:$0xff]
        %v1381 = vld [vmem:[%s941 + $0xbd8] sm:$0xff]
        %v1382 = vld [vmem:[%s941 + $0xbe0] sm:$0xff]
        %v1383 = vld [vmem:[%s941 + $0xbe8] sm:$0xff]
        %v1384 = vld [vmem:[%s941 + $0xbf0] sm:$0xff]
        %v1385 = vld [vmem:[%s941 + $0xbf8] sm:$0xff]
        %v1386 = vld [vmem:[%s970] sm:$0xf]
        %v1388 = vlaneseq
        %v1389 = vshrl.u32 %v1388, 7
        %v1390 = vsub.s32 0, %v1389
        %v1391 = vrot.slane %v1386, %v1390
        %v1392 = vlaneseq
        %v1393 = vshrl.u32 %v1392, 7
        %v1394 = vsub.s32 1, %v1393
        %v1395 = vrot.slane %v1386, %v1394
        %v1396 = vlaneseq
        %v1397 = vshrl.u32 %v1396, 7
        %v1398 = vsub.s32 2, %v1397
        %v1399 = vrot.slane %v1386, %v1398
        %v1400 = vlaneseq
        %v1401 = vshrl.u32 %v1400, 7
        %v1402 = vsub.s32 3, %v1401
        %v1403 = vrot.slane %v1386, %v1402
        %v1792 = vunpack.c.l.b16 %v1002
        %v1793 = vunpack.c.h.b16 %v1002
        %v1794 = vunpack.c.l.b16 %v1003
        %v1795 = vunpack.c.h.b16 %v1003
        %v1796 = vunpack.c.l.b16 %v1004
        %v1797 = vunpack.c.h.b16 %v1004
        %v1798 = vunpack.c.l.b16 %v1005
        %v1799 = vunpack.c.h.b16 %v1005
        %v1800 = vunpack.c.l.b16 %v1006
        %v1801 = vunpack.c.h.b16 %v1006
        %v1802 = vunpack.c.l.b16 %v1007
        %v1803 = vunpack.c.h.b16 %v1007
        %v1804 = vunpack.c.l.b16 %v1008
        %v1805 = vunpack.c.h.b16 %v1008
        %v1806 = vunpack.c.l.b16 %v1009
        %v1807 = vunpack.c.h.b16 %v1009
        %v1808 = vunpack.c.l.b16 %v1010
        %v1809 = vunpack.c.h.b16 %v1010
        %v1810 = vunpack.c.l.b16 %v1011
        %v1811 = vunpack.c.h.b16 %v1011
        %v1812 = vunpack.c.l.b16 %v1012
        %v1813 = vunpack.c.h.b16 %v1012
        %v1814 = vunpack.c.l.b16 %v1013
        %v1815 = vunpack.c.h.b16 %v1013
        %v1816 = vunpack.c.l.b16 %v1014
        %v1817 = vunpack.c.h.b16 %v1014
        %v1818 = vunpack.c.l.b16 %v1015
        %v1819 = vunpack.c.h.b16 %v1015
        %v1820 = vunpack.c.l.b16 %v1016
        %v1821 = vunpack.c.h.b16 %v1016
        %v1822 = vunpack.c.l.b16 %v1017
        %v1823 = vunpack.c.h.b16 %v1017
        %v1824 = vunpack.c.l.b16 %v1018
        %v1825 = vunpack.c.h.b16 %v1018
        %v1826 = vunpack.c.l.b16 %v1019
        %v1827 = vunpack.c.h.b16 %v1019
        %v1828 = vunpack.c.l.b16 %v1020
        %v1829 = vunpack.c.h.b16 %v1020
        %v1830 = vunpack.c.l.b16 %v1021
        %v1831 = vunpack.c.h.b16 %v1021
        %v1832 = vunpack.c.l.b16 %v1022
        %v1833 = vunpack.c.h.b16 %v1022
        %v1834 = vunpack.c.l.b16 %v1023
        %v1835 = vunpack.c.h.b16 %v1023
        %v1836 = vunpack.c.l.b16 %v1024
        %v1837 = vunpack.c.h.b16 %v1024
        %v1838 = vunpack.c.l.b16 %v1025
        %v1839 = vunpack.c.h.b16 %v1025
        %v1840 = vunpack.c.l.b16 %v1026
        %v1841 = vunpack.c.h.b16 %v1026
        %v1842 = vunpack.c.l.b16 %v1027
        %v1843 = vunpack.c.h.b16 %v1027
        %v1844 = vunpack.c.l.b16 %v1028
        %v1845 = vunpack.c.h.b16 %v1028
        %v1846 = vunpack.c.l.b16 %v1029
        %v1847 = vunpack.c.h.b16 %v1029
        %v1848 = vunpack.c.l.b16 %v1030
        %v1849 = vunpack.c.h.b16 %v1030
        %v1850 = vunpack.c.l.b16 %v1031
        %v1851 = vunpack.c.h.b16 %v1031
        %v1852 = vunpack.c.l.b16 %v1032
        %v1853 = vunpack.c.h.b16 %v1032
        %v1854 = vunpack.c.l.b16 %v1033
        %v1855 = vunpack.c.h.b16 %v1033
        %v1856 = vunpack.c.l.b16 %v1034
        %v1857 = vunpack.c.h.b16 %v1034
        %v1858 = vunpack.c.l.b16 %v1035
        %v1859 = vunpack.c.h.b16 %v1035
        %v1860 = vunpack.c.l.b16 %v1036
        %v1861 = vunpack.c.h.b16 %v1036
        %v1862 = vunpack.c.l.b16 %v1037
        %v1863 = vunpack.c.h.b16 %v1037
        %v1864 = vunpack.c.l.b16 %v1038
        %v1865 = vunpack.c.h.b16 %v1038
        %v1866 = vunpack.c.l.b16 %v1039
        %v1867 = vunpack.c.h.b16 %v1039
        %v1868 = vunpack.c.l.b16 %v1040
        %v1869 = vunpack.c.h.b16 %v1040
        %v1870 = vunpack.c.l.b16 %v1041
        %v1871 = vunpack.c.h.b16 %v1041
        %v1872 = vunpack.c.l.b16 %v1042
        %v1873 = vunpack.c.h.b16 %v1042
        %v1874 = vunpack.c.l.b16 %v1043
        %v1875 = vunpack.c.h.b16 %v1043
        %v1876 = vunpack.c.l.b16 %v1044
        %v1877 = vunpack.c.h.b16 %v1044
        %v1878 = vunpack.c.l.b16 %v1045
        %v1879 = vunpack.c.h.b16 %v1045
        %v1880 = vunpack.c.l.b16 %v1046
        %v1881 = vunpack.c.h.b16 %v1046
        %v1882 = vunpack.c.l.b16 %v1047
        %v1883 = vunpack.c.h.b16 %v1047
        %v1884 = vunpack.c.l.b16 %v1048
        %v1885 = vunpack.c.h.b16 %v1048
        %v1886 = vunpack.c.l.b16 %v1049
        %v1887 = vunpack.c.h.b16 %v1049
        %v1888 = vunpack.c.l.b16 %v1050
        %v1889 = vunpack.c.h.b16 %v1050
        %v1890 = vunpack.c.l.b16 %v1051
        %v1891 = vunpack.c.h.b16 %v1051
        %v1892 = vunpack.c.l.b16 %v1052
        %v1893 = vunpack.c.h.b16 %v1052
        %v1894 = vunpack.c.l.b16 %v1053
        %v1895 = vunpack.c.h.b16 %v1053
        %v1896 = vunpack.c.l.b16 %v1054
        %v1897 = vunpack.c.h.b16 %v1054
        %v1898 = vunpack.c.l.b16 %v1055
        %v1899 = vunpack.c.h.b16 %v1055
        %v1900 = vunpack.c.l.b16 %v1056
        %v1901 = vunpack.c.h.b16 %v1056
        %v1902 = vunpack.c.l.b16 %v1057
        %v1903 = vunpack.c.h.b16 %v1057
        %v1904 = vunpack.c.l.b16 %v1058
        %v1905 = vunpack.c.h.b16 %v1058
        %v1906 = vunpack.c.l.b16 %v1059
        %v1907 = vunpack.c.h.b16 %v1059
        %v1908 = vunpack.c.l.b16 %v1060
        %v1909 = vunpack.c.h.b16 %v1060
        %v1910 = vunpack.c.l.b16 %v1061
        %v1911 = vunpack.c.h.b16 %v1061
        %v1912 = vunpack.c.l.b16 %v1062
        %v1913 = vunpack.c.h.b16 %v1062
        %v1914 = vunpack.c.l.b16 %v1063
        %v1915 = vunpack.c.h.b16 %v1063
        %v1916 = vunpack.c.l.b16 %v1064
        %v1917 = vunpack.c.h.b16 %v1064
        %v1918 = vunpack.c.l.b16 %v1065
        %v1919 = vunpack.c.h.b16 %v1065
        %v1920 = vunpack.c.l.b16 %v1066
        %v1921 = vunpack.c.h.b16 %v1066
        %v1922 = vunpack.c.l.b16 %v1067
        %v1923 = vunpack.c.h.b16 %v1067
        %v1924 = vunpack.c.l.b16 %v1068
        %v1925 = vunpack.c.h.b16 %v1068
        %v1926 = vunpack.c.l.b16 %v1069
        %v1927 = vunpack.c.h.b16 %v1069
        %v1928 = vunpack.c.l.b16 %v1070
        %v1929 = vunpack.c.h.b16 %v1070
        %v1930 = vunpack.c.l.b16 %v1071
        %v1931 = vunpack.c.h.b16 %v1071
        %v1932 = vunpack.c.l.b16 %v1072
        %v1933 = vunpack.c.h.b16 %v1072
        %v1934 = vunpack.c.l.b16 %v1073
        %v1935 = vunpack.c.h.b16 %v1073
        %v1936 = vunpack.c.l.b16 %v1074
        %v1937 = vunpack.c.h.b16 %v1074
        %v1938 = vunpack.c.l.b16 %v1075
        %v1939 = vunpack.c.h.b16 %v1075
        %v1940 = vunpack.c.l.b16 %v1076
        %v1941 = vunpack.c.h.b16 %v1076
        %v1942 = vunpack.c.l.b16 %v1077
        %v1943 = vunpack.c.h.b16 %v1077
        %v1944 = vunpack.c.l.b16 %v1078
        %v1945 = vunpack.c.h.b16 %v1078
        %v1946 = vunpack.c.l.b16 %v1079
        %v1947 = vunpack.c.h.b16 %v1079
        %v1948 = vunpack.c.l.b16 %v1080
        %v1949 = vunpack.c.h.b16 %v1080
        %v1950 = vunpack.c.l.b16 %v1081
        %v1951 = vunpack.c.h.b16 %v1081
        %v1952 = vunpack.c.l.b16 %v1082
        %v1953 = vunpack.c.h.b16 %v1082
        %v1954 = vunpack.c.l.b16 %v1083
        %v1955 = vunpack.c.h.b16 %v1083
        %v1956 = vunpack.c.l.b16 %v1084
        %v1957 = vunpack.c.h.b16 %v1084
        %v1958 = vunpack.c.l.b16 %v1085
        %v1959 = vunpack.c.h.b16 %v1085
        %v1960 = vunpack.c.l.b16 %v1086
        %v1961 = vunpack.c.h.b16 %v1086
        %v1962 = vunpack.c.l.b16 %v1087
        %v1963 = vunpack.c.h.b16 %v1087
        %v1964 = vunpack.c.l.b16 %v1088
        %v1965 = vunpack.c.h.b16 %v1088
        %v1966 = vunpack.c.l.b16 %v1089
        %v1967 = vunpack.c.h.b16 %v1089
        %v1968 = vunpack.c.l.b16 %v1090
        %v1969 = vunpack.c.h.b16 %v1090
        %v1970 = vunpack.c.l.b16 %v1091
        %v1971 = vunpack.c.h.b16 %v1091
        %v1972 = vunpack.c.l.b16 %v1092
        %v1973 = vunpack.c.h.b16 %v1092
        %v1974 = vunpack.c.l.b16 %v1093
        %v1975 = vunpack.c.h.b16 %v1093
        %v1976 = vunpack.c.l.b16 %v1094
        %v1977 = vunpack.c.h.b16 %v1094
        %v1978 = vunpack.c.l.b16 %v1095
        %v1979 = vunpack.c.h.b16 %v1095
        %v1980 = vunpack.c.l.b16 %v1096
        %v1981 = vunpack.c.h.b16 %v1096
        %v1982 = vunpack.c.l.b16 %v1097
        %v1983 = vunpack.c.h.b16 %v1097
        %v1984 = vunpack.c.l.b16 %v1098
        %v1985 = vunpack.c.h.b16 %v1098
        %v1986 = vunpack.c.l.b16 %v1099
        %v1987 = vunpack.c.h.b16 %v1099
        %v1988 = vunpack.c.l.b16 %v1100
        %v1989 = vunpack.c.h.b16 %v1100
        %v1990 = vunpack.c.l.b16 %v1101
        %v1991 = vunpack.c.h.b16 %v1101
        %v1992 = vunpack.c.l.b16 %v1102
        %v1993 = vunpack.c.h.b16 %v1102
        %v1994 = vunpack.c.l.b16 %v1103
        %v1995 = vunpack.c.h.b16 %v1103
        %v1996 = vunpack.c.l.b16 %v1104
        %v1997 = vunpack.c.h.b16 %v1104
        %v1998 = vunpack.c.l.b16 %v1105
        %v1999 = vunpack.c.h.b16 %v1105
        %v2000 = vunpack.c.l.b16 %v1106
        %v2001 = vunpack.c.h.b16 %v1106
        %v2002 = vunpack.c.l.b16 %v1107
        %v2003 = vunpack.c.h.b16 %v1107
        %v2004 = vunpack.c.l.b16 %v1108
        %v2005 = vunpack.c.h.b16 %v1108
        %v2006 = vunpack.c.l.b16 %v1109
        %v2007 = vunpack.c.h.b16 %v1109
        %v2008 = vunpack.c.l.b16 %v1110
        %v2009 = vunpack.c.h.b16 %v1110
        %v2010 = vunpack.c.l.b16 %v1111
        %v2011 = vunpack.c.h.b16 %v1111
        %v2012 = vunpack.c.l.b16 %v1112
        %v2013 = vunpack.c.h.b16 %v1112
        %v2014 = vunpack.c.l.b16 %v1113
        %v2015 = vunpack.c.h.b16 %v1113
        %v2016 = vunpack.c.l.b16 %v1114
        %v2017 = vunpack.c.h.b16 %v1114
        %v2018 = vunpack.c.l.b16 %v1115
        %v2019 = vunpack.c.h.b16 %v1115
        %v2020 = vunpack.c.l.b16 %v1116
        %v2021 = vunpack.c.h.b16 %v1116
        %v2022 = vunpack.c.l.b16 %v1117
        %v2023 = vunpack.c.h.b16 %v1117
        %v2024 = vunpack.c.l.b16 %v1118
        %v2025 = vunpack.c.h.b16 %v1118
        %v2026 = vunpack.c.l.b16 %v1119
        %v2027 = vunpack.c.h.b16 %v1119
        %v2028 = vunpack.c.l.b16 %v1120
        %v2029 = vunpack.c.h.b16 %v1120
        %v2030 = vunpack.c.l.b16 %v1121
        %v2031 = vunpack.c.h.b16 %v1121
        %v2032 = vunpack.c.l.b16 %v1122
        %v2033 = vunpack.c.h.b16 %v1122
        %v2034 = vunpack.c.l.b16 %v1123
        %v2035 = vunpack.c.h.b16 %v1123
        %v2036 = vunpack.c.l.b16 %v1124
        %v2037 = vunpack.c.h.b16 %v1124
        %v2038 = vunpack.c.l.b16 %v1125
        %v2039 = vunpack.c.h.b16 %v1125
        %v2040 = vunpack.c.l.b16 %v1126
        %v2041 = vunpack.c.h.b16 %v1126
        %v2042 = vunpack.c.l.b16 %v1127
        %v2043 = vunpack.c.h.b16 %v1127
        %v2044 = vunpack.c.l.b16 %v1128
        %v2045 = vunpack.c.h.b16 %v1128
        %v2046 = vunpack.c.l.b16 %v1129
        %v2047 = vunpack.c.h.b16 %v1129
        %v2048 = vunpack.c.l.b16 %v1130
        %v2049 = vunpack.c.h.b16 %v1130
        %v2050 = vunpack.c.l.b16 %v1131
        %v2051 = vunpack.c.h.b16 %v1131
        %v2052 = vunpack.c.l.b16 %v1132
        %v2053 = vunpack.c.h.b16 %v1132
        %v2054 = vunpack.c.l.b16 %v1133
        %v2055 = vunpack.c.h.b16 %v1133
        %v2056 = vunpack.c.l.b16 %v1134
        %v2057 = vunpack.c.h.b16 %v1134
        %v2058 = vunpack.c.l.b16 %v1135
        %v2059 = vunpack.c.h.b16 %v1135
        %v2060 = vunpack.c.l.b16 %v1136
        %v2061 = vunpack.c.h.b16 %v1136
        %v2062 = vunpack.c.l.b16 %v1137
        %v2063 = vunpack.c.h.b16 %v1137
        %v2064 = vunpack.c.l.b16 %v1138
        %v2065 = vunpack.c.h.b16 %v1138
        %v2066 = vunpack.c.l.b16 %v1139
        %v2067 = vunpack.c.h.b16 %v1139
        %v2068 = vunpack.c.l.b16 %v1140
        %v2069 = vunpack.c.h.b16 %v1140
        %v2070 = vunpack.c.l.b16 %v1141
        %v2071 = vunpack.c.h.b16 %v1141
        %v2072 = vunpack.c.l.b16 %v1142
        %v2073 = vunpack.c.h.b16 %v1142
        %v2074 = vunpack.c.l.b16 %v1143
        %v2075 = vunpack.c.h.b16 %v1143
        %v2076 = vunpack.c.l.b16 %v1144
        %v2077 = vunpack.c.h.b16 %v1144
        %v2078 = vunpack.c.l.b16 %v1145
        %v2079 = vunpack.c.h.b16 %v1145
        %v2080 = vunpack.c.l.b16 %v1146
        %v2081 = vunpack.c.h.b16 %v1146
        %v2082 = vunpack.c.l.b16 %v1147
        %v2083 = vunpack.c.h.b16 %v1147
        %v2084 = vunpack.c.l.b16 %v1148
        %v2085 = vunpack.c.h.b16 %v1148
        %v2086 = vunpack.c.l.b16 %v1149
        %v2087 = vunpack.c.h.b16 %v1149
        %v2088 = vunpack.c.l.b16 %v1150
        %v2089 = vunpack.c.h.b16 %v1150
        %v2090 = vunpack.c.l.b16 %v1151
        %v2091 = vunpack.c.h.b16 %v1151
        %v2092 = vunpack.c.l.b16 %v1152
        %v2093 = vunpack.c.h.b16 %v1152
        %v2094 = vunpack.c.l.b16 %v1153
        %v2095 = vunpack.c.h.b16 %v1153
        %v2096 = vunpack.c.l.b16 %v1154
        %v2097 = vunpack.c.h.b16 %v1154
        %v2098 = vunpack.c.l.b16 %v1155
        %v2099 = vunpack.c.h.b16 %v1155
        %v2100 = vunpack.c.l.b16 %v1156
        %v2101 = vunpack.c.h.b16 %v1156
        %v2102 = vunpack.c.l.b16 %v1157
        %v2103 = vunpack.c.h.b16 %v1157
        %v2104 = vunpack.c.l.b16 %v1158
        %v2105 = vunpack.c.h.b16 %v1158
        %v2106 = vunpack.c.l.b16 %v1159
        %v2107 = vunpack.c.h.b16 %v1159
        %v2108 = vunpack.c.l.b16 %v1160
        %v2109 = vunpack.c.h.b16 %v1160
        %v2110 = vunpack.c.l.b16 %v1161
        %v2111 = vunpack.c.h.b16 %v1161
        %v2112 = vunpack.c.l.b16 %v1162
        %v2113 = vunpack.c.h.b16 %v1162
        %v2114 = vunpack.c.l.b16 %v1163
        %v2115 = vunpack.c.h.b16 %v1163
        %v2116 = vunpack.c.l.b16 %v1164
        %v2117 = vunpack.c.h.b16 %v1164
        %v2118 = vunpack.c.l.b16 %v1165
        %v2119 = vunpack.c.h.b16 %v1165
        %v2120 = vunpack.c.l.b16 %v1166
        %v2121 = vunpack.c.h.b16 %v1166
        %v2122 = vunpack.c.l.b16 %v1167
        %v2123 = vunpack.c.h.b16 %v1167
        %v2124 = vunpack.c.l.b16 %v1168
        %v2125 = vunpack.c.h.b16 %v1168
        %v2126 = vunpack.c.l.b16 %v1169
        %v2127 = vunpack.c.h.b16 %v1169
        %v2128 = vunpack.c.l.b16 %v1170
        %v2129 = vunpack.c.h.b16 %v1170
        %v2130 = vunpack.c.l.b16 %v1171
        %v2131 = vunpack.c.h.b16 %v1171
        %v2132 = vunpack.c.l.b16 %v1172
        %v2133 = vunpack.c.h.b16 %v1172
        %v2134 = vunpack.c.l.b16 %v1173
        %v2135 = vunpack.c.h.b16 %v1173
        %v2136 = vunpack.c.l.b16 %v1174
        %v2137 = vunpack.c.h.b16 %v1174
        %v2138 = vunpack.c.l.b16 %v1175
        %v2139 = vunpack.c.h.b16 %v1175
        %v2140 = vunpack.c.l.b16 %v1176
        %v2141 = vunpack.c.h.b16 %v1176
        %v2142 = vunpack.c.l.b16 %v1177
        %v2143 = vunpack.c.h.b16 %v1177
        %v2144 = vunpack.c.l.b16 %v1178
        %v2145 = vunpack.c.h.b16 %v1178
        %v2146 = vunpack.c.l.b16 %v1179
        %v2147 = vunpack.c.h.b16 %v1179
        %v2148 = vunpack.c.l.b16 %v1180
        %v2149 = vunpack.c.h.b16 %v1180
        %v2150 = vunpack.c.l.b16 %v1181
        %v2151 = vunpack.c.h.b16 %v1181
        %v2152 = vunpack.c.l.b16 %v1182
        %v2153 = vunpack.c.h.b16 %v1182
        %v2154 = vunpack.c.l.b16 %v1183
        %v2155 = vunpack.c.h.b16 %v1183
        %v2156 = vunpack.c.l.b16 %v1184
        %v2157 = vunpack.c.h.b16 %v1184
        %v2158 = vunpack.c.l.b16 %v1185
        %v2159 = vunpack.c.h.b16 %v1185
        %v2160 = vunpack.c.l.b16 %v1186
        %v2161 = vunpack.c.h.b16 %v1186
        %v2162 = vunpack.c.l.b16 %v1187
        %v2163 = vunpack.c.h.b16 %v1187
        %v2164 = vunpack.c.l.b16 %v1188
        %v2165 = vunpack.c.h.b16 %v1188
        %v2166 = vunpack.c.l.b16 %v1189
        %v2167 = vunpack.c.h.b16 %v1189
        %v2168 = vunpack.c.l.b16 %v1190
        %v2169 = vunpack.c.h.b16 %v1190
        %v2170 = vunpack.c.l.b16 %v1191
        %v2171 = vunpack.c.h.b16 %v1191
        %v2172 = vunpack.c.l.b16 %v1192
        %v2173 = vunpack.c.h.b16 %v1192
        %v2174 = vunpack.c.l.b16 %v1193
        %v2175 = vunpack.c.h.b16 %v1193
        %v2176 = vunpack.c.l.b16 %v1194
        %v2177 = vunpack.c.h.b16 %v1194
        %v2178 = vunpack.c.l.b16 %v1195
        %v2179 = vunpack.c.h.b16 %v1195
        %v2180 = vunpack.c.l.b16 %v1196
        %v2181 = vunpack.c.h.b16 %v1196
        %v2182 = vunpack.c.l.b16 %v1197
        %v2183 = vunpack.c.h.b16 %v1197
        %v2184 = vunpack.c.l.b16 %v1198
        %v2185 = vunpack.c.h.b16 %v1198
        %v2186 = vunpack.c.l.b16 %v1199
        %v2187 = vunpack.c.h.b16 %v1199
        %v2188 = vunpack.c.l.b16 %v1200
        %v2189 = vunpack.c.h.b16 %v1200
        %v2190 = vunpack.c.l.b16 %v1201
        %v2191 = vunpack.c.h.b16 %v1201
        %v2192 = vunpack.c.l.b16 %v1202
        %v2193 = vunpack.c.h.b16 %v1202
        %v2194 = vunpack.c.l.b16 %v1203
        %v2195 = vunpack.c.h.b16 %v1203
        %v2196 = vunpack.c.l.b16 %v1204
        %v2197 = vunpack.c.h.b16 %v1204
        %v2198 = vunpack.c.l.b16 %v1205
        %v2199 = vunpack.c.h.b16 %v1205
        %v2200 = vunpack.c.l.b16 %v1206
        %v2201 = vunpack.c.h.b16 %v1206
        %v2202 = vunpack.c.l.b16 %v1207
        %v2203 = vunpack.c.h.b16 %v1207
        %v2204 = vunpack.c.l.b16 %v1208
        %v2205 = vunpack.c.h.b16 %v1208
        %v2206 = vunpack.c.l.b16 %v1209
        %v2207 = vunpack.c.h.b16 %v1209
        %v2208 = vunpack.c.l.b16 %v1210
        %v2209 = vunpack.c.h.b16 %v1210
        %v2210 = vunpack.c.l.b16 %v1211
        %v2211 = vunpack.c.h.b16 %v1211
        %v2212 = vunpack.c.l.b16 %v1212
        %v2213 = vunpack.c.h.b16 %v1212
        %v2214 = vunpack.c.l.b16 %v1213
        %v2215 = vunpack.c.h.b16 %v1213
        %v2216 = vunpack.c.l.b16 %v1214
        %v2217 = vunpack.c.h.b16 %v1214
        %v2218 = vunpack.c.l.b16 %v1215
        %v2219 = vunpack.c.h.b16 %v1215
        %v2220 = vunpack.c.l.b16 %v1216
        %v2221 = vunpack.c.h.b16 %v1216
        %v2222 = vunpack.c.l.b16 %v1217
        %v2223 = vunpack.c.h.b16 %v1217
        %v2224 = vunpack.c.l.b16 %v1218
        %v2225 = vunpack.c.h.b16 %v1218
        %v2226 = vunpack.c.l.b16 %v1219
        %v2227 = vunpack.c.h.b16 %v1219
        %v2228 = vunpack.c.l.b16 %v1220
        %v2229 = vunpack.c.h.b16 %v1220
        %v2230 = vunpack.c.l.b16 %v1221
        %v2231 = vunpack.c.h.b16 %v1221
        %v2232 = vunpack.c.l.b16 %v1222
        %v2233 = vunpack.c.h.b16 %v1222
        %v2234 = vunpack.c.l.b16 %v1223
        %v2235 = vunpack.c.h.b16 %v1223
        %v2236 = vunpack.c.l.b16 %v1224
        %v2237 = vunpack.c.h.b16 %v1224
        %v2238 = vunpack.c.l.b16 %v1225
        %v2239 = vunpack.c.h.b16 %v1225
        %v2240 = vunpack.c.l.b16 %v1226
        %v2241 = vunpack.c.h.b16 %v1226
        %v2242 = vunpack.c.l.b16 %v1227
        %v2243 = vunpack.c.h.b16 %v1227
        %v2244 = vunpack.c.l.b16 %v1228
        %v2245 = vunpack.c.h.b16 %v1228
        %v2246 = vunpack.c.l.b16 %v1229
        %v2247 = vunpack.c.h.b16 %v1229
        %v2248 = vunpack.c.l.b16 %v1230
        %v2249 = vunpack.c.h.b16 %v1230
        %v2250 = vunpack.c.l.b16 %v1231
        %v2251 = vunpack.c.h.b16 %v1231
        %v2252 = vunpack.c.l.b16 %v1232
        %v2253 = vunpack.c.h.b16 %v1232
        %v2254 = vunpack.c.l.b16 %v1233
        %v2255 = vunpack.c.h.b16 %v1233
        %v2256 = vunpack.c.l.b16 %v1234
        %v2257 = vunpack.c.h.b16 %v1234
        %v2258 = vunpack.c.l.b16 %v1235
        %v2259 = vunpack.c.h.b16 %v1235
        %v2260 = vunpack.c.l.b16 %v1236
        %v2261 = vunpack.c.h.b16 %v1236
        %v2262 = vunpack.c.l.b16 %v1237
        %v2263 = vunpack.c.h.b16 %v1237
        %v2264 = vunpack.c.l.b16 %v1238
        %v2265 = vunpack.c.h.b16 %v1238
        %v2266 = vunpack.c.l.b16 %v1239
        %v2267 = vunpack.c.h.b16 %v1239
        %v2268 = vunpack.c.l.b16 %v1240
        %v2269 = vunpack.c.h.b16 %v1240
        %v2270 = vunpack.c.l.b16 %v1241
        %v2271 = vunpack.c.h.b16 %v1241
        %v2272 = vunpack.c.l.b16 %v1242
        %v2273 = vunpack.c.h.b16 %v1242
        %v2274 = vunpack.c.l.b16 %v1243
        %v2275 = vunpack.c.h.b16 %v1243
        %v2276 = vunpack.c.l.b16 %v1244
        %v2277 = vunpack.c.h.b16 %v1244
        %v2278 = vunpack.c.l.b16 %v1245
        %v2279 = vunpack.c.h.b16 %v1245
        %v2280 = vunpack.c.l.b16 %v1246
        %v2281 = vunpack.c.h.b16 %v1246
        %v2282 = vunpack.c.l.b16 %v1247
        %v2283 = vunpack.c.h.b16 %v1247
        %v2284 = vunpack.c.l.b16 %v1248
        %v2285 = vunpack.c.h.b16 %v1248
        %v2286 = vunpack.c.l.b16 %v1249
        %v2287 = vunpack.c.h.b16 %v1249
        %v2288 = vunpack.c.l.b16 %v1250
        %v2289 = vunpack.c.h.b16 %v1250
        %v2290 = vunpack.c.l.b16 %v1251
        %v2291 = vunpack.c.h.b16 %v1251
        %v2292 = vunpack.c.l.b16 %v1252
        %v2293 = vunpack.c.h.b16 %v1252
        %v2294 = vunpack.c.l.b16 %v1253
        %v2295 = vunpack.c.h.b16 %v1253
        %v2296 = vunpack.c.l.b16 %v1254
        %v2297 = vunpack.c.h.b16 %v1254
        %v2298 = vunpack.c.l.b16 %v1255
        %v2299 = vunpack.c.h.b16 %v1255
        %v2300 = vunpack.c.l.b16 %v1256
        %v2301 = vunpack.c.h.b16 %v1256
        %v2302 = vunpack.c.l.b16 %v1257
        %v2303 = vunpack.c.h.b16 %v1257
        %v2304 = vunpack.c.l.b16 %v1258
        %v2305 = vunpack.c.h.b16 %v1258
        %v2306 = vunpack.c.l.b16 %v1259
        %v2307 = vunpack.c.h.b16 %v1259
        %v2308 = vunpack.c.l.b16 %v1260
        %v2309 = vunpack.c.h.b16 %v1260
        %v2310 = vunpack.c.l.b16 %v1261
        %v2311 = vunpack.c.h.b16 %v1261
        %v2312 = vunpack.c.l.b16 %v1262
        %v2313 = vunpack.c.h.b16 %v1262
        %v2314 = vunpack.c.l.b16 %v1263
        %v2315 = vunpack.c.h.b16 %v1263
        %v2316 = vunpack.c.l.b16 %v1264
        %v2317 = vunpack.c.h.b16 %v1264
        %v2318 = vunpack.c.l.b16 %v1265
        %v2319 = vunpack.c.h.b16 %v1265
        %v2320 = vunpack.c.l.b16 %v1266
        %v2321 = vunpack.c.h.b16 %v1266
        %v2322 = vunpack.c.l.b16 %v1267
        %v2323 = vunpack.c.h.b16 %v1267
        %v2324 = vunpack.c.l.b16 %v1268
        %v2325 = vunpack.c.h.b16 %v1268
        %v2326 = vunpack.c.l.b16 %v1269
        %v2327 = vunpack.c.h.b16 %v1269
        %v2328 = vunpack.c.l.b16 %v1270
        %v2329 = vunpack.c.h.b16 %v1270
        %v2330 = vunpack.c.l.b16 %v1271
        %v2331 = vunpack.c.h.b16 %v1271
        %v2332 = vunpack.c.l.b16 %v1272
        %v2333 = vunpack.c.h.b16 %v1272
        %v2334 = vunpack.c.l.b16 %v1273
        %v2335 = vunpack.c.h.b16 %v1273
        %v2336 = vunpack.c.l.b16 %v1274
        %v2337 = vunpack.c.h.b16 %v1274
        %v2338 = vunpack.c.l.b16 %v1275
        %v2339 = vunpack.c.h.b16 %v1275
        %v2340 = vunpack.c.l.b16 %v1276
        %v2341 = vunpack.c.h.b16 %v1276
        %v2342 = vunpack.c.l.b16 %v1277
        %v2343 = vunpack.c.h.b16 %v1277
        %v2344 = vunpack.c.l.b16 %v1278
        %v2345 = vunpack.c.h.b16 %v1278
        %v2346 = vunpack.c.l.b16 %v1279
        %v2347 = vunpack.c.h.b16 %v1279
        %v2348 = vunpack.c.l.b16 %v1280
        %v2349 = vunpack.c.h.b16 %v1280
        %v2350 = vunpack.c.l.b16 %v1281
        %v2351 = vunpack.c.h.b16 %v1281
        %v2352 = vunpack.c.l.b16 %v1282
        %v2353 = vunpack.c.h.b16 %v1282
        %v2354 = vunpack.c.l.b16 %v1283
        %v2355 = vunpack.c.h.b16 %v1283
        %v2356 = vunpack.c.l.b16 %v1284
        %v2357 = vunpack.c.h.b16 %v1284
        %v2358 = vunpack.c.l.b16 %v1285
        %v2359 = vunpack.c.h.b16 %v1285
        %v2360 = vunpack.c.l.b16 %v1286
        %v2361 = vunpack.c.h.b16 %v1286
        %v2362 = vunpack.c.l.b16 %v1287
        %v2363 = vunpack.c.h.b16 %v1287
        %v2364 = vunpack.c.l.b16 %v1288
        %v2365 = vunpack.c.h.b16 %v1288
        %v2366 = vunpack.c.l.b16 %v1289
        %v2367 = vunpack.c.h.b16 %v1289
        %v2368 = vunpack.c.l.b16 %v1290
        %v2369 = vunpack.c.h.b16 %v1290
        %v2370 = vunpack.c.l.b16 %v1291
        %v2371 = vunpack.c.h.b16 %v1291
        %v2372 = vunpack.c.l.b16 %v1292
        %v2373 = vunpack.c.h.b16 %v1292
        %v2374 = vunpack.c.l.b16 %v1293
        %v2375 = vunpack.c.h.b16 %v1293
        %v2376 = vunpack.c.l.b16 %v1294
        %v2377 = vunpack.c.h.b16 %v1294
        %v2378 = vunpack.c.l.b16 %v1295
        %v2379 = vunpack.c.h.b16 %v1295
        %v2380 = vunpack.c.l.b16 %v1296
        %v2381 = vunpack.c.h.b16 %v1296
        %v2382 = vunpack.c.l.b16 %v1297
        %v2383 = vunpack.c.h.b16 %v1297
        %v2384 = vunpack.c.l.b16 %v1298
        %v2385 = vunpack.c.h.b16 %v1298
        %v2386 = vunpack.c.l.b16 %v1299
        %v2387 = vunpack.c.h.b16 %v1299
        %v2388 = vunpack.c.l.b16 %v1300
        %v2389 = vunpack.c.h.b16 %v1300
        %v2390 = vunpack.c.l.b16 %v1301
        %v2391 = vunpack.c.h.b16 %v1301
        %v2392 = vunpack.c.l.b16 %v1302
        %v2393 = vunpack.c.h.b16 %v1302
        %v2394 = vunpack.c.l.b16 %v1303
        %v2395 = vunpack.c.h.b16 %v1303
        %v2396 = vunpack.c.l.b16 %v1304
        %v2397 = vunpack.c.h.b16 %v1304
        %v2398 = vunpack.c.l.b16 %v1305
        %v2399 = vunpack.c.h.b16 %v1305
        %v2400 = vunpack.c.l.b16 %v1306
        %v2401 = vunpack.c.h.b16 %v1306
        %v2402 = vunpack.c.l.b16 %v1307
        %v2403 = vunpack.c.h.b16 %v1307
        %v2404 = vunpack.c.l.b16 %v1308
        %v2405 = vunpack.c.h.b16 %v1308
        %v2406 = vunpack.c.l.b16 %v1309
        %v2407 = vunpack.c.h.b16 %v1309
        %v2408 = vunpack.c.l.b16 %v1310
        %v2409 = vunpack.c.h.b16 %v1310
        %v2410 = vunpack.c.l.b16 %v1311
        %v2411 = vunpack.c.h.b16 %v1311
        %v2412 = vunpack.c.l.b16 %v1312
        %v2413 = vunpack.c.h.b16 %v1312
        %v2414 = vunpack.c.l.b16 %v1313
        %v2415 = vunpack.c.h.b16 %v1313
        %v2416 = vunpack.c.l.b16 %v1314
        %v2417 = vunpack.c.h.b16 %v1314
        %v2418 = vunpack.c.l.b16 %v1315
        %v2419 = vunpack.c.h.b16 %v1315
        %v2420 = vunpack.c.l.b16 %v1316
        %v2421 = vunpack.c.h.b16 %v1316
        %v2422 = vunpack.c.l.b16 %v1317
        %v2423 = vunpack.c.h.b16 %v1317
        %v2424 = vunpack.c.l.b16 %v1318
        %v2425 = vunpack.c.h.b16 %v1318
        %v2426 = vunpack.c.l.b16 %v1319
        %v2427 = vunpack.c.h.b16 %v1319
        %v2428 = vunpack.c.l.b16 %v1320
        %v2429 = vunpack.c.h.b16 %v1320
        %v2430 = vunpack.c.l.b16 %v1321
        %v2431 = vunpack.c.h.b16 %v1321
        %v2432 = vunpack.c.l.b16 %v1322
        %v2433 = vunpack.c.h.b16 %v1322
        %v2434 = vunpack.c.l.b16 %v1323
        %v2435 = vunpack.c.h.b16 %v1323
        %v2436 = vunpack.c.l.b16 %v1324
        %v2437 = vunpack.c.h.b16 %v1324
        %v2438 = vunpack.c.l.b16 %v1325
        %v2439 = vunpack.c.h.b16 %v1325
        %v2440 = vunpack.c.l.b16 %v1326
        %v2441 = vunpack.c.h.b16 %v1326
        %v2442 = vunpack.c.l.b16 %v1327
        %v2443 = vunpack.c.h.b16 %v1327
        %v2444 = vunpack.c.l.b16 %v1328
        %v2445 = vunpack.c.h.b16 %v1328
        %v2446 = vunpack.c.l.b16 %v1329
        %v2447 = vunpack.c.h.b16 %v1329
        %v2448 = vunpack.c.l.b16 %v1330
        %v2449 = vunpack.c.h.b16 %v1330
        %v2450 = vunpack.c.l.b16 %v1331
        %v2451 = vunpack.c.h.b16 %v1331
        %v2452 = vunpack.c.l.b16 %v1332
        %v2453 = vunpack.c.h.b16 %v1332
        %v2454 = vunpack.c.l.b16 %v1333
        %v2455 = vunpack.c.h.b16 %v1333
        %v2456 = vunpack.c.l.b16 %v1334
        %v2457 = vunpack.c.h.b16 %v1334
        %v2458 = vunpack.c.l.b16 %v1335
        %v2459 = vunpack.c.h.b16 %v1335
        %v2460 = vunpack.c.l.b16 %v1336
        %v2461 = vunpack.c.h.b16 %v1336
        %v2462 = vunpack.c.l.b16 %v1337
        %v2463 = vunpack.c.h.b16 %v1337
        %v2464 = vunpack.c.l.b16 %v1338
        %v2465 = vunpack.c.h.b16 %v1338
        %v2466 = vunpack.c.l.b16 %v1339
        %v2467 = vunpack.c.h.b16 %v1339
        %v2468 = vunpack.c.l.b16 %v1340
        %v2469 = vunpack.c.h.b16 %v1340
        %v2470 = vunpack.c.l.b16 %v1341
        %v2471 = vunpack.c.h.b16 %v1341
        %v2472 = vunpack.c.l.b16 %v1342
        %v2473 = vunpack.c.h.b16 %v1342
        %v2474 = vunpack.c.l.b16 %v1343
        %v2475 = vunpack.c.h.b16 %v1343
        %v2476 = vunpack.c.l.b16 %v1344
        %v2477 = vunpack.c.h.b16 %v1344
        %v2478 = vunpack.c.l.b16 %v1345
        %v2479 = vunpack.c.h.b16 %v1345
        %v2480 = vunpack.c.l.b16 %v1346
        %v2481 = vunpack.c.h.b16 %v1346
        %v2482 = vunpack.c.l.b16 %v1347
        %v2483 = vunpack.c.h.b16 %v1347
        %v2484 = vunpack.c.l.b16 %v1348
        %v2485 = vunpack.c.h.b16 %v1348
        %v2486 = vunpack.c.l.b16 %v1349
        %v2487 = vunpack.c.h.b16 %v1349
        %v2488 = vunpack.c.l.b16 %v1350
        %v2489 = vunpack.c.h.b16 %v1350
        %v2490 = vunpack.c.l.b16 %v1351
        %v2491 = vunpack.c.h.b16 %v1351
        %v2492 = vunpack.c.l.b16 %v1352
        %v2493 = vunpack.c.h.b16 %v1352
        %v2494 = vunpack.c.l.b16 %v1353
        %v2495 = vunpack.c.h.b16 %v1353
        %v2496 = vunpack.c.l.b16 %v1354
        %v2497 = vunpack.c.h.b16 %v1354
        %v2498 = vunpack.c.l.b16 %v1355
        %v2499 = vunpack.c.h.b16 %v1355
        %v2500 = vunpack.c.l.b16 %v1356
        %v2501 = vunpack.c.h.b16 %v1356
        %v2502 = vunpack.c.l.b16 %v1357
        %v2503 = vunpack.c.h.b16 %v1357
        %v2504 = vunpack.c.l.b16 %v1358
        %v2505 = vunpack.c.h.b16 %v1358
        %v2506 = vunpack.c.l.b16 %v1359
        %v2507 = vunpack.c.h.b16 %v1359
        %v2508 = vunpack.c.l.b16 %v1360
        %v2509 = vunpack.c.h.b16 %v1360
        %v2510 = vunpack.c.l.b16 %v1361
        %v2511 = vunpack.c.h.b16 %v1361
        %v2512 = vunpack.c.l.b16 %v1362
        %v2513 = vunpack.c.h.b16 %v1362
        %v2514 = vunpack.c.l.b16 %v1363
        %v2515 = vunpack.c.h.b16 %v1363
        %v2516 = vunpack.c.l.b16 %v1364
        %v2517 = vunpack.c.h.b16 %v1364
        %v2518 = vunpack.c.l.b16 %v1365
        %v2519 = vunpack.c.h.b16 %v1365
        %v2520 = vunpack.c.l.b16 %v1366
        %v2521 = vunpack.c.h.b16 %v1366
        %v2522 = vunpack.c.l.b16 %v1367
        %v2523 = vunpack.c.h.b16 %v1367
        %v2524 = vunpack.c.l.b16 %v1368
        %v2525 = vunpack.c.h.b16 %v1368
        %v2526 = vunpack.c.l.b16 %v1369
        %v2527 = vunpack.c.h.b16 %v1369
        %v2528 = vunpack.c.l.b16 %v1370
        %v2529 = vunpack.c.h.b16 %v1370
        %v2530 = vunpack.c.l.b16 %v1371
        %v2531 = vunpack.c.h.b16 %v1371
        %v2532 = vunpack.c.l.b16 %v1372
        %v2533 = vunpack.c.h.b16 %v1372
        %v2534 = vunpack.c.l.b16 %v1373
        %v2535 = vunpack.c.h.b16 %v1373
        %v2536 = vunpack.c.l.b16 %v1374
        %v2537 = vunpack.c.h.b16 %v1374
        %v2538 = vunpack.c.l.b16 %v1375
        %v2539 = vunpack.c.h.b16 %v1375
        %v2540 = vunpack.c.l.b16 %v1376
        %v2541 = vunpack.c.h.b16 %v1376
        %v2542 = vunpack.c.l.b16 %v1377
        %v2543 = vunpack.c.h.b16 %v1377
        %v2544 = vunpack.c.l.b16 %v1378
        %v2545 = vunpack.c.h.b16 %v1378
        %v2546 = vunpack.c.l.b16 %v1379
        %v2547 = vunpack.c.h.b16 %v1379
        %v2548 = vunpack.c.l.b16 %v1380
        %v2549 = vunpack.c.h.b16 %v1380
        %v2550 = vunpack.c.l.b16 %v1381
        %v2551 = vunpack.c.h.b16 %v1381
        %v2552 = vunpack.c.l.b16 %v1382
        %v2553 = vunpack.c.h.b16 %v1382
        %v2554 = vunpack.c.l.b16 %v1383
        %v2555 = vunpack.c.h.b16 %v1383
        %v2556 = vunpack.c.l.b16 %v1384
        %v2557 = vunpack.c.h.b16 %v1384
        %v2558 = vunpack.c.l.b16 %v1385
        %v2559 = vunpack.c.h.b16 %v1385
        %v2560 = vpack.c.b16 %v1796, %v1792
        %v2561 = vpack.c.b16 %v1797, %v1793
        %v2562 = vpack.c.b16 %v1798, %v1794
        %v2563 = vpack.c.b16 %v1799, %v1795
        %v2564 = vpack.c.b16 %v1804, %v1800
        %v2565 = vpack.c.b16 %v1805, %v1801
        %v2566 = vpack.c.b16 %v1806, %v1802
        %v2567 = vpack.c.b16 %v1807, %v1803
        %v2568 = vpack.c.b16 %v1812, %v1808
        %v2569 = vpack.c.b16 %v1813, %v1809
        %v2570 = vpack.c.b16 %v1814, %v1810
        %v2571 = vpack.c.b16 %v1815, %v1811
        %v2572 = vpack.c.b16 %v1820, %v1816
        %v2573 = vpack.c.b16 %v1821, %v1817
        %v2574 = vpack.c.b16 %v1822, %v1818
        %v2575 = vpack.c.b16 %v1823, %v1819
        %v2576 = vpack.c.b16 %v1828, %v1824
        %v2577 = vpack.c.b16 %v1829, %v1825
        %v2578 = vpack.c.b16 %v1830, %v1826
        %v2579 = vpack.c.b16 %v1831, %v1827
        %v2580 = vpack.c.b16 %v1836, %v1832
        %v2581 = vpack.c.b16 %v1837, %v1833
        %v2582 = vpack.c.b16 %v1838, %v1834
        %v2583 = vpack.c.b16 %v1839, %v1835
        %v2584 = vpack.c.b16 %v1844, %v1840
        %v2585 = vpack.c.b16 %v1845, %v1841
        %v2586 = vpack.c.b16 %v1846, %v1842
        %v2587 = vpack.c.b16 %v1847, %v1843
        %v2588 = vpack.c.b16 %v1852, %v1848
        %v2589 = vpack.c.b16 %v1853, %v1849
        %v2590 = vpack.c.b16 %v1854, %v1850
        %v2591 = vpack.c.b16 %v1855, %v1851
        %v2592 = vpack.c.b16 %v1860, %v1856
        %v2593 = vpack.c.b16 %v1861, %v1857
        %v2594 = vpack.c.b16 %v1862, %v1858
        %v2595 = vpack.c.b16 %v1863, %v1859
        %v2596 = vpack.c.b16 %v1868, %v1864
        %v2597 = vpack.c.b16 %v1869, %v1865
        %v2598 = vpack.c.b16 %v1870, %v1866
        %v2599 = vpack.c.b16 %v1871, %v1867
        %v2600 = vpack.c.b16 %v1876, %v1872
        %v2601 = vpack.c.b16 %v1877, %v1873
        %v2602 = vpack.c.b16 %v1878, %v1874
        %v2603 = vpack.c.b16 %v1879, %v1875
        %v2604 = vpack.c.b16 %v1884, %v1880
        %v2605 = vpack.c.b16 %v1885, %v1881
        %v2606 = vpack.c.b16 %v1886, %v1882
        %v2607 = vpack.c.b16 %v1887, %v1883
        %v2608 = vpack.c.b16 %v1892, %v1888
        %v2609 = vpack.c.b16 %v1893, %v1889
        %v2610 = vpack.c.b16 %v1894, %v1890
        %v2611 = vpack.c.b16 %v1895, %v1891
        %v2612 = vpack.c.b16 %v1900, %v1896
        %v2613 = vpack.c.b16 %v1901, %v1897
        %v2614 = vpack.c.b16 %v1902, %v1898
        %v2615 = vpack.c.b16 %v1903, %v1899
        %v2616 = vpack.c.b16 %v1908, %v1904
        %v2617 = vpack.c.b16 %v1909, %v1905
        %v2618 = vpack.c.b16 %v1910, %v1906
        %v2619 = vpack.c.b16 %v1911, %v1907
        %v2620 = vpack.c.b16 %v1916, %v1912
        %v2621 = vpack.c.b16 %v1917, %v1913
        %v2622 = vpack.c.b16 %v1918, %v1914
        %v2623 = vpack.c.b16 %v1919, %v1915
        %v2624 = vpack.c.b16 %v1924, %v1920
        %v2625 = vpack.c.b16 %v1925, %v1921
        %v2626 = vpack.c.b16 %v1926, %v1922
        %v2627 = vpack.c.b16 %v1927, %v1923
        %v2628 = vpack.c.b16 %v1932, %v1928
        %v2629 = vpack.c.b16 %v1933, %v1929
        %v2630 = vpack.c.b16 %v1934, %v1930
        %v2631 = vpack.c.b16 %v1935, %v1931
        %v2632 = vpack.c.b16 %v1940, %v1936
        %v2633 = vpack.c.b16 %v1941, %v1937
        %v2634 = vpack.c.b16 %v1942, %v1938
        %v2635 = vpack.c.b16 %v1943, %v1939
        %v2636 = vpack.c.b16 %v1948, %v1944
        %v2637 = vpack.c.b16 %v1949, %v1945
        %v2638 = vpack.c.b16 %v1950, %v1946
        %v2639 = vpack.c.b16 %v1951, %v1947
        %v2640 = vpack.c.b16 %v1956, %v1952
        %v2641 = vpack.c.b16 %v1957, %v1953
        %v2642 = vpack.c.b16 %v1958, %v1954
        %v2643 = vpack.c.b16 %v1959, %v1955
        %v2644 = vpack.c.b16 %v1964, %v1960
        %v2645 = vpack.c.b16 %v1965, %v1961
        %v2646 = vpack.c.b16 %v1966, %v1962
        %v2647 = vpack.c.b16 %v1967, %v1963
        %v2648 = vpack.c.b16 %v1972, %v1968
        %v2649 = vpack.c.b16 %v1973, %v1969
        %v2650 = vpack.c.b16 %v1974, %v1970
        %v2651 = vpack.c.b16 %v1975, %v1971
        %v2652 = vpack.c.b16 %v1980, %v1976
        %v2653 = vpack.c.b16 %v1981, %v1977
        %v2654 = vpack.c.b16 %v1982, %v1978
        %v2655 = vpack.c.b16 %v1983, %v1979
        %v2656 = vpack.c.b16 %v1988, %v1984
        %v2657 = vpack.c.b16 %v1989, %v1985
        %v2658 = vpack.c.b16 %v1990, %v1986
        %v2659 = vpack.c.b16 %v1991, %v1987
        %v2660 = vpack.c.b16 %v1996, %v1992
        %v2661 = vpack.c.b16 %v1997, %v1993
        %v2662 = vpack.c.b16 %v1998, %v1994
        %v2663 = vpack.c.b16 %v1999, %v1995
        %v2664 = vpack.c.b16 %v2004, %v2000
        %v2665 = vpack.c.b16 %v2005, %v2001
        %v2666 = vpack.c.b16 %v2006, %v2002
        %v2667 = vpack.c.b16 %v2007, %v2003
        %v2668 = vpack.c.b16 %v2012, %v2008
        %v2669 = vpack.c.b16 %v2013, %v2009
        %v2670 = vpack.c.b16 %v2014, %v2010
        %v2671 = vpack.c.b16 %v2015, %v2011
        %v2672 = vpack.c.b16 %v2020, %v2016
        %v2673 = vpack.c.b16 %v2021, %v2017
        %v2674 = vpack.c.b16 %v2022, %v2018
        %v2675 = vpack.c.b16 %v2023, %v2019
        %v2676 = vpack.c.b16 %v2028, %v2024
        %v2677 = vpack.c.b16 %v2029, %v2025
        %v2678 = vpack.c.b16 %v2030, %v2026
        %v2679 = vpack.c.b16 %v2031, %v2027
        %v2680 = vpack.c.b16 %v2036, %v2032
        %v2681 = vpack.c.b16 %v2037, %v2033
        %v2682 = vpack.c.b16 %v2038, %v2034
        %v2683 = vpack.c.b16 %v2039, %v2035
        %v2684 = vpack.c.b16 %v2044, %v2040
        %v2685 = vpack.c.b16 %v2045, %v2041
        %v2686 = vpack.c.b16 %v2046, %v2042
        %v2687 = vpack.c.b16 %v2047, %v2043
        %v2688 = vpack.c.b16 %v2052, %v2048
        %v2689 = vpack.c.b16 %v2053, %v2049
        %v2690 = vpack.c.b16 %v2054, %v2050
        %v2691 = vpack.c.b16 %v2055, %v2051
        %v2692 = vpack.c.b16 %v2060, %v2056
        %v2693 = vpack.c.b16 %v2061, %v2057
        %v2694 = vpack.c.b16 %v2062, %v2058
        %v2695 = vpack.c.b16 %v2063, %v2059
        %v2696 = vpack.c.b16 %v2068, %v2064
        %v2697 = vpack.c.b16 %v2069, %v2065
        %v2698 = vpack.c.b16 %v2070, %v2066
        %v2699 = vpack.c.b16 %v2071, %v2067
        %v2700 = vpack.c.b16 %v2076, %v2072
        %v2701 = vpack.c.b16 %v2077, %v2073
        %v2702 = vpack.c.b16 %v2078, %v2074
        %v2703 = vpack.c.b16 %v2079, %v2075
        %v2704 = vpack.c.b16 %v2084, %v2080
        %v2705 = vpack.c.b16 %v2085, %v2081
        %v2706 = vpack.c.b16 %v2086, %v2082
        %v2707 = vpack.c.b16 %v2087, %v2083
        %v2708 = vpack.c.b16 %v2092, %v2088
        %v2709 = vpack.c.b16 %v2093, %v2089
        %v2710 = vpack.c.b16 %v2094, %v2090
        %v2711 = vpack.c.b16 %v2095, %v2091
        %v2712 = vpack.c.b16 %v2100, %v2096
        %v2713 = vpack.c.b16 %v2101, %v2097
        %v2714 = vpack.c.b16 %v2102, %v2098
        %v2715 = vpack.c.b16 %v2103, %v2099
        %v2716 = vpack.c.b16 %v2108, %v2104
        %v2717 = vpack.c.b16 %v2109, %v2105
        %v2718 = vpack.c.b16 %v2110, %v2106
        %v2719 = vpack.c.b16 %v2111, %v2107
        %v2720 = vpack.c.b16 %v2116, %v2112
        %v2721 = vpack.c.b16 %v2117, %v2113
        %v2722 = vpack.c.b16 %v2118, %v2114
        %v2723 = vpack.c.b16 %v2119, %v2115
        %v2724 = vpack.c.b16 %v2124, %v2120
        %v2725 = vpack.c.b16 %v2125, %v2121
        %v2726 = vpack.c.b16 %v2126, %v2122
        %v2727 = vpack.c.b16 %v2127, %v2123
        %v2728 = vpack.c.b16 %v2132, %v2128
        %v2729 = vpack.c.b16 %v2133, %v2129
        %v2730 = vpack.c.b16 %v2134, %v2130
        %v2731 = vpack.c.b16 %v2135, %v2131
        %v2732 = vpack.c.b16 %v2140, %v2136
        %v2733 = vpack.c.b16 %v2141, %v2137
        %v2734 = vpack.c.b16 %v2142, %v2138
        %v2735 = vpack.c.b16 %v2143, %v2139
        %v2736 = vpack.c.b16 %v2148, %v2144
        %v2737 = vpack.c.b16 %v2149, %v2145
        %v2738 = vpack.c.b16 %v2150, %v2146
        %v2739 = vpack.c.b16 %v2151, %v2147
        %v2740 = vpack.c.b16 %v2156, %v2152
        %v2741 = vpack.c.b16 %v2157, %v2153
        %v2742 = vpack.c.b16 %v2158, %v2154
        %v2743 = vpack.c.b16 %v2159, %v2155
        %v2744 = vpack.c.b16 %v2164, %v2160
        %v2745 = vpack.c.b16 %v2165, %v2161
        %v2746 = vpack.c.b16 %v2166, %v2162
        %v2747 = vpack.c.b16 %v2167, %v2163
        %v2748 = vpack.c.b16 %v2172, %v2168
        %v2749 = vpack.c.b16 %v2173, %v2169
        %v2750 = vpack.c.b16 %v2174, %v2170
        %v2751 = vpack.c.b16 %v2175, %v2171
        %v2752 = vpack.c.b16 %v2180, %v2176
        %v2753 = vpack.c.b16 %v2181, %v2177
        %v2754 = vpack.c.b16 %v2182, %v2178
        %v2755 = vpack.c.b16 %v2183, %v2179
        %v2756 = vpack.c.b16 %v2188, %v2184
        %v2757 = vpack.c.b16 %v2189, %v2185
        %v2758 = vpack.c.b16 %v2190, %v2186
        %v2759 = vpack.c.b16 %v2191, %v2187
        %v2760 = vpack.c.b16 %v2196, %v2192
        %v2761 = vpack.c.b16 %v2197, %v2193
        %v2762 = vpack.c.b16 %v2198, %v2194
        %v2763 = vpack.c.b16 %v2199, %v2195
        %v2764 = vpack.c.b16 %v2204, %v2200
        %v2765 = vpack.c.b16 %v2205, %v2201
        %v2766 = vpack.c.b16 %v2206, %v2202
        %v2767 = vpack.c.b16 %v2207, %v2203
        %v2768 = vpack.c.b16 %v2212, %v2208
        %v2769 = vpack.c.b16 %v2213, %v2209
        %v2770 = vpack.c.b16 %v2214, %v2210
        %v2771 = vpack.c.b16 %v2215, %v2211
        %v2772 = vpack.c.b16 %v2220, %v2216
        %v2773 = vpack.c.b16 %v2221, %v2217
        %v2774 = vpack.c.b16 %v2222, %v2218
        %v2775 = vpack.c.b16 %v2223, %v2219
        %v2776 = vpack.c.b16 %v2228, %v2224
        %v2777 = vpack.c.b16 %v2229, %v2225
        %v2778 = vpack.c.b16 %v2230, %v2226
        %v2779 = vpack.c.b16 %v2231, %v2227
        %v2780 = vpack.c.b16 %v2236, %v2232
        %v2781 = vpack.c.b16 %v2237, %v2233
        %v2782 = vpack.c.b16 %v2238, %v2234
        %v2783 = vpack.c.b16 %v2239, %v2235
        %v2784 = vpack.c.b16 %v2244, %v2240
        %v2785 = vpack.c.b16 %v2245, %v2241
        %v2786 = vpack.c.b16 %v2246, %v2242
        %v2787 = vpack.c.b16 %v2247, %v2243
        %v2788 = vpack.c.b16 %v2252, %v2248
        %v2789 = vpack.c.b16 %v2253, %v2249
        %v2790 = vpack.c.b16 %v2254, %v2250
        %v2791 = vpack.c.b16 %v2255, %v2251
        %v2792 = vpack.c.b16 %v2260, %v2256
        %v2793 = vpack.c.b16 %v2261, %v2257
        %v2794 = vpack.c.b16 %v2262, %v2258
        %v2795 = vpack.c.b16 %v2263, %v2259
        %v2796 = vpack.c.b16 %v2268, %v2264
        %v2797 = vpack.c.b16 %v2269, %v2265
        %v2798 = vpack.c.b16 %v2270, %v2266
        %v2799 = vpack.c.b16 %v2271, %v2267
        %v2800 = vpack.c.b16 %v2276, %v2272
        %v2801 = vpack.c.b16 %v2277, %v2273
        %v2802 = vpack.c.b16 %v2278, %v2274
        %v2803 = vpack.c.b16 %v2279, %v2275
        %v2804 = vpack.c.b16 %v2284, %v2280
        %v2805 = vpack.c.b16 %v2285, %v2281
        %v2806 = vpack.c.b16 %v2286, %v2282
        %v2807 = vpack.c.b16 %v2287, %v2283
        %v2808 = vpack.c.b16 %v2292, %v2288
        %v2809 = vpack.c.b16 %v2293, %v2289
        %v2810 = vpack.c.b16 %v2294, %v2290
        %v2811 = vpack.c.b16 %v2295, %v2291
        %v2812 = vpack.c.b16 %v2300, %v2296
        %v2813 = vpack.c.b16 %v2301, %v2297
        %v2814 = vpack.c.b16 %v2302, %v2298
        %v2815 = vpack.c.b16 %v2303, %v2299
        %v2816 = vpack.c.b16 %v2308, %v2304
        %v2817 = vpack.c.b16 %v2309, %v2305
        %v2818 = vpack.c.b16 %v2310, %v2306
        %v2819 = vpack.c.b16 %v2311, %v2307
        %v2820 = vpack.c.b16 %v2316, %v2312
        %v2821 = vpack.c.b16 %v2317, %v2313
        %v2822 = vpack.c.b16 %v2318, %v2314
        %v2823 = vpack.c.b16 %v2319, %v2315
        %v2824 = vpack.c.b16 %v2324, %v2320
        %v2825 = vpack.c.b16 %v2325, %v2321
        %v2826 = vpack.c.b16 %v2326, %v2322
        %v2827 = vpack.c.b16 %v2327, %v2323
        %v2828 = vpack.c.b16 %v2332, %v2328
        %v2829 = vpack.c.b16 %v2333, %v2329
        %v2830 = vpack.c.b16 %v2334, %v2330
        %v2831 = vpack.c.b16 %v2335, %v2331
        %v2832 = vpack.c.b16 %v2340, %v2336
        %v2833 = vpack.c.b16 %v2341, %v2337
        %v2834 = vpack.c.b16 %v2342, %v2338
        %v2835 = vpack.c.b16 %v2343, %v2339
        %v2836 = vpack.c.b16 %v2348, %v2344
        %v2837 = vpack.c.b16 %v2349, %v2345
        %v2838 = vpack.c.b16 %v2350, %v2346
        %v2839 = vpack.c.b16 %v2351, %v2347
        %v2840 = vpack.c.b16 %v2356, %v2352
        %v2841 = vpack.c.b16 %v2357, %v2353
        %v2842 = vpack.c.b16 %v2358, %v2354
        %v2843 = vpack.c.b16 %v2359, %v2355
        %v2844 = vpack.c.b16 %v2364, %v2360
        %v2845 = vpack.c.b16 %v2365, %v2361
        %v2846 = vpack.c.b16 %v2366, %v2362
        %v2847 = vpack.c.b16 %v2367, %v2363
        %v2848 = vpack.c.b16 %v2372, %v2368
        %v2849 = vpack.c.b16 %v2373, %v2369
        %v2850 = vpack.c.b16 %v2374, %v2370
        %v2851 = vpack.c.b16 %v2375, %v2371
        %v2852 = vpack.c.b16 %v2380, %v2376
        %v2853 = vpack.c.b16 %v2381, %v2377
        %v2854 = vpack.c.b16 %v2382, %v2378
        %v2855 = vpack.c.b16 %v2383, %v2379
        %v2856 = vpack.c.b16 %v2388, %v2384
        %v2857 = vpack.c.b16 %v2389, %v2385
        %v2858 = vpack.c.b16 %v2390, %v2386
        %v2859 = vpack.c.b16 %v2391, %v2387
        %v2860 = vpack.c.b16 %v2396, %v2392
        %v2861 = vpack.c.b16 %v2397, %v2393
        %v2862 = vpack.c.b16 %v2398, %v2394
        %v2863 = vpack.c.b16 %v2399, %v2395
        %v2864 = vpack.c.b16 %v2404, %v2400
        %v2865 = vpack.c.b16 %v2405, %v2401
        %v2866 = vpack.c.b16 %v2406, %v2402
        %v2867 = vpack.c.b16 %v2407, %v2403
        %v2868 = vpack.c.b16 %v2412, %v2408
        %v2869 = vpack.c.b16 %v2413, %v2409
        %v2870 = vpack.c.b16 %v2414, %v2410
        %v2871 = vpack.c.b16 %v2415, %v2411
        %v2872 = vpack.c.b16 %v2420, %v2416
        %v2873 = vpack.c.b16 %v2421, %v2417
        %v2874 = vpack.c.b16 %v2422, %v2418
        %v2875 = vpack.c.b16 %v2423, %v2419
        %v2876 = vpack.c.b16 %v2428, %v2424
        %v2877 = vpack.c.b16 %v2429, %v2425
        %v2878 = vpack.c.b16 %v2430, %v2426
        %v2879 = vpack.c.b16 %v2431, %v2427
        %v2880 = vpack.c.b16 %v2436, %v2432
        %v2881 = vpack.c.b16 %v2437, %v2433
        %v2882 = vpack.c.b16 %v2438, %v2434
        %v2883 = vpack.c.b16 %v2439, %v2435
        %v2884 = vpack.c.b16 %v2444, %v2440
        %v2885 = vpack.c.b16 %v2445, %v2441
        %v2886 = vpack.c.b16 %v2446, %v2442
        %v2887 = vpack.c.b16 %v2447, %v2443
        %v2888 = vpack.c.b16 %v2452, %v2448
        %v2889 = vpack.c.b16 %v2453, %v2449
        %v2890 = vpack.c.b16 %v2454, %v2450
        %v2891 = vpack.c.b16 %v2455, %v2451
        %v2892 = vpack.c.b16 %v2460, %v2456
        %v2893 = vpack.c.b16 %v2461, %v2457
        %v2894 = vpack.c.b16 %v2462, %v2458
        %v2895 = vpack.c.b16 %v2463, %v2459
        %v2896 = vpack.c.b16 %v2468, %v2464
        %v2897 = vpack.c.b16 %v2469, %v2465
        %v2898 = vpack.c.b16 %v2470, %v2466
        %v2899 = vpack.c.b16 %v2471, %v2467
        %v2900 = vpack.c.b16 %v2476, %v2472
        %v2901 = vpack.c.b16 %v2477, %v2473
        %v2902 = vpack.c.b16 %v2478, %v2474
        %v2903 = vpack.c.b16 %v2479, %v2475
        %v2904 = vpack.c.b16 %v2484, %v2480
        %v2905 = vpack.c.b16 %v2485, %v2481
        %v2906 = vpack.c.b16 %v2486, %v2482
        %v2907 = vpack.c.b16 %v2487, %v2483
        %v2908 = vpack.c.b16 %v2492, %v2488
        %v2909 = vpack.c.b16 %v2493, %v2489
        %v2910 = vpack.c.b16 %v2494, %v2490
        %v2911 = vpack.c.b16 %v2495, %v2491
        %v2912 = vpack.c.b16 %v2500, %v2496
        %v2913 = vpack.c.b16 %v2501, %v2497
        %v2914 = vpack.c.b16 %v2502, %v2498
        %v2915 = vpack.c.b16 %v2503, %v2499
        %v2916 = vpack.c.b16 %v2508, %v2504
        %v2917 = vpack.c.b16 %v2509, %v2505
        %v2918 = vpack.c.b16 %v2510, %v2506
        %v2919 = vpack.c.b16 %v2511, %v2507
        %v2920 = vpack.c.b16 %v2516, %v2512
        %v2921 = vpack.c.b16 %v2517, %v2513
        %v2922 = vpack.c.b16 %v2518, %v2514
        %v2923 = vpack.c.b16 %v2519, %v2515
        %v2924 = vpack.c.b16 %v2524, %v2520
        %v2925 = vpack.c.b16 %v2525, %v2521
        %v2926 = vpack.c.b16 %v2526, %v2522
        %v2927 = vpack.c.b16 %v2527, %v2523
        %v2928 = vpack.c.b16 %v2532, %v2528
        %v2929 = vpack.c.b16 %v2533, %v2529
        %v2930 = vpack.c.b16 %v2534, %v2530
        %v2931 = vpack.c.b16 %v2535, %v2531
        %v2932 = vpack.c.b16 %v2540, %v2536
        %v2933 = vpack.c.b16 %v2541, %v2537
        %v2934 = vpack.c.b16 %v2542, %v2538
        %v2935 = vpack.c.b16 %v2543, %v2539
        %v2936 = vpack.c.b16 %v2548, %v2544
        %v2937 = vpack.c.b16 %v2549, %v2545
        %v2938 = vpack.c.b16 %v2550, %v2546
        %v2939 = vpack.c.b16 %v2551, %v2547
        %v2940 = vpack.c.b16 %v2556, %v2552
        %v2941 = vpack.c.b16 %v2557, %v2553
        %v2942 = vpack.c.b16 %v2558, %v2554
        %v2943 = vpack.c.b16 %v2559, %v2555
        %3328 = vmatprep.subr.bf16.mxu0 %v2561
        %3329 = vmatpush1.bf16.msra.mxu0 %v2560
        %3330 = vmatprep.subr.bf16.mxu0 %v2565
        %3331 = vmatpush1.bf16.msra.mxu0 %v2564
        %3332 = vmatprep.subr.bf16.mxu0 %v2569
        %3333 = vmatpush1.bf16.msra.mxu0 %v2568
        %3334 = vmatprep.subr.bf16.mxu0 %v2573
        %3335 = vmatpush1.bf16.msra.mxu0 %v2572
        %3336 = vmatprep.subr.bf16.mxu0 %v2577
        %3337 = vmatpush1.bf16.msra.mxu0 %v2576
        %3338 = vmatprep.subr.bf16.mxu0 %v2581
        %3339 = vmatpush1.bf16.msra.mxu0 %v2580
        %3340 = vmatprep.subr.bf16.mxu0 %v2585
        %3341 = vmatpush1.bf16.msra.mxu0 %v2584
        %3342 = vmatprep.subr.bf16.mxu0 %v2589
        %3343 = vmatpush1.bf16.msra.mxu0 %v2588
        %3344 = vmatprep.subr.bf16.mxu0 %v2593
        %3345 = vmatpush1.bf16.msra.mxu0 %v2592
        %3346 = vmatprep.subr.bf16.mxu0 %v2597
        %3347 = vmatpush1.bf16.msra.mxu0 %v2596
        %3348 = vmatprep.subr.bf16.mxu0 %v2601
        %3349 = vmatpush1.bf16.msra.mxu0 %v2600
        %3350 = vmatprep.subr.bf16.mxu0 %v2605
        %3351 = vmatpush1.bf16.msra.mxu0 %v2604
        %3352 = vmatprep.subr.bf16.mxu0 %v2609
        %3353 = vmatpush1.bf16.msra.mxu0 %v2608
        %3354 = vmatprep.subr.bf16.mxu0 %v2613
        %3355 = vmatpush1.bf16.msra.mxu0 %v2612
        %3356 = vmatprep.subr.bf16.mxu0 %v2617
        %3357 = vmatpush1.bf16.msra.mxu0 %v2616
        %3358 = vmatprep.subr.bf16.mxu0 %v2621
        %3359 = vmatpush1.bf16.msra.mxu0 %v2620
        %3360 = vmatprep.mubr.bf16.mxu0 %v991
        %3361 = vmatmul.mubr.bf16.gmra.mrb[0].mxu0 %v990
        %v3362 = vpop.f32.mrb[0].mxu0
        %v3363 = vadd.f32 %v1391, %v3362
        %v3364 = vpop.f32.mrb[0].mxu0
        %v3365 = vadd.f32 %v1395, %v3364
        %v3366 = vpop.f32.mrb[0].mxu0
        %v3367 = vpop.f32.mrb[0].mxu0
        %3368 = vdwg.mxu0
        %3369 = vmatprep.subr.bf16.mxu0 %v2625
        %3370 = vmatpush1.bf16.msra.mxu0 %v2624
        %3371 = vmatprep.subr.bf16.mxu0 %v2629
        %3372 = vmatpush1.bf16.msra.mxu0 %v2628
        %3373 = vmatprep.subr.bf16.mxu0 %v2633
        %3374 = vmatpush1.bf16.msra.mxu0 %v2632
        %3375 = vmatprep.subr.bf16.mxu0 %v2637
        %3376 = vmatpush1.bf16.msra.mxu0 %v2636
        %3377 = vmatprep.subr.bf16.mxu0 %v2641
        %3378 = vmatpush1.bf16.msra.mxu0 %v2640
        %3379 = vmatprep.subr.bf16.mxu0 %v2645
        %3380 = vmatpush1.bf16.msra.mxu0 %v2644
        %3381 = vmatprep.subr.bf16.mxu0 %v2649
        %3382 = vmatpush1.bf16.msra.mxu0 %v2648
        %3383 = vmatprep.subr.bf16.mxu0 %v2653
        %3384 = vmatpush1.bf16.msra.mxu0 %v2652
        %3385 = vmatprep.subr.bf16.mxu0 %v2657
        %3386 = vmatpush1.bf16.msra.mxu0 %v2656
        %3387 = vmatprep.subr.bf16.mxu0 %v2661
        %3388 = vmatpush1.bf16.msra.mxu0 %v2660
        %3389 = vmatprep.subr.bf16.mxu0 %v2665
        %3390 = vmatpush1.bf16.msra.mxu0 %v2664
        %3391 = vmatprep.subr.bf16.mxu0 %v2669
        %3392 = vmatpush1.bf16.msra.mxu0 %v2668
        %3393 = vmatprep.subr.bf16.mxu0 %v2673
        %3394 = vmatpush1.bf16.msra.mxu0 %v2672
        %3395 = vmatprep.subr.bf16.mxu0 %v2677
        %3396 = vmatpush1.bf16.msra.mxu0 %v2676
        %3397 = vmatprep.subr.bf16.mxu0 %v2681
        %3398 = vmatpush1.bf16.msra.mxu0 %v2680
        %3399 = vmatprep.subr.bf16.mxu0 %v2685
        %3400 = vmatpush1.bf16.msra.mxu0 %v2684
        %3401 = vmatprep.mubr.bf16.mxu0 %v993
        %3402 = vmatmul.mubr.bf16.gmra.mrb[0].mxu0 %v992
        %v3403 = vpop.f32.mrb[0].mxu0
        %v3404 = vadd.f32 %v3363, %v3403
        %v3405 = vpop.f32.mrb[0].mxu0
        %v3406 = vadd.f32 %v3365, %v3405
        %v3407 = vpop.f32.mrb[0].mxu0
        %v3408 = vpop.f32.mrb[0].mxu0
        %3409 = vdwg.mxu0
        %3410 = vmatprep.subr.bf16.mxu0 %v2689
        %3411 = vmatpush1.bf16.msra.mxu0 %v2688
        %3412 = vmatprep.subr.bf16.mxu0 %v2693
        %3413 = vmatpush1.bf16.msra.mxu0 %v2692
        %3414 = vmatprep.subr.bf16.mxu0 %v2697
        %3415 = vmatpush1.bf16.msra.mxu0 %v2696
        %3416 = vmatprep.subr.bf16.mxu0 %v2701
        %3417 = vmatpush1.bf16.msra.mxu0 %v2700
        %3418 = vmatprep.subr.bf16.mxu0 %v2705
        %3419 = vmatpush1.bf16.msra.mxu0 %v2704
        %3420 = vmatprep.subr.bf16.mxu0 %v2709
        %3421 = vmatpush1.bf16.msra.mxu0 %v2708
        %3422 = vmatprep.subr.bf16.mxu0 %v2713
        %3423 = vmatpush1.bf16.msra.mxu0 %v2712
        %3424 = vmatprep.subr.bf16.mxu0 %v2717
        %3425 = vmatpush1.bf16.msra.mxu0 %v2716
        %3426 = vmatprep.subr.bf16.mxu0 %v2721
        %3427 = vmatpush1.bf16.msra.mxu0 %v2720
        %3428 = vmatprep.subr.bf16.mxu0 %v2725
        %3429 = vmatpush1.bf16.msra.mxu0 %v2724
        %3430 = vmatprep.subr.bf16.mxu0 %v2729
        %3431 = vmatpush1.bf16.msra.mxu0 %v2728
        %3432 = vmatprep.subr.bf16.mxu0 %v2733
        %3433 = vmatpush1.bf16.msra.mxu0 %v2732
        %3434 = vmatprep.subr.bf16.mxu0 %v2737
        %3435 = vmatpush1.bf16.msra.mxu0 %v2736
        %3436 = vmatprep.subr.bf16.mxu0 %v2741
        %3437 = vmatpush1.bf16.msra.mxu0 %v2740
        %3438 = vmatprep.subr.bf16.mxu0 %v2745
        %3439 = vmatpush1.bf16.msra.mxu0 %v2744
        %3440 = vmatprep.subr.bf16.mxu0 %v2749
        %3441 = vmatpush1.bf16.msra.mxu0 %v2748
        %3442 = vmatprep.mubr.bf16.mxu0 %v995
        %3443 = vmatmul.mubr.bf16.gmra.mrb[0].mxu0 %v994
        %v3444 = vpop.f32.mrb[0].mxu0
        %v3445 = vadd.f32 %v3404, %v3444
        %v3446 = vpop.f32.mrb[0].mxu0
        %v3447 = vadd.f32 %v3406, %v3446
        %v3448 = vpop.f32.mrb[0].mxu0
        %v3449 = vpop.f32.mrb[0].mxu0
        %3450 = vdwg.mxu0
        %3451 = vmatprep.subr.bf16.mxu0 %v2753
        %3452 = vmatpush1.bf16.msra.mxu0 %v2752
        %3453 = vmatprep.subr.bf16.mxu0 %v2757
        %3454 = vmatpush1.bf16.msra.mxu0 %v2756
        %3455 = vmatprep.subr.bf16.mxu0 %v2761
        %3456 = vmatpush1.bf16.msra.mxu0 %v2760
        %3457 = vmatprep.subr.bf16.mxu0 %v2765
        %3458 = vmatpush1.bf16.msra.mxu0 %v2764
        %3459 = vmatprep.subr.bf16.mxu0 %v2769
        %3460 = vmatpush1.bf16.msra.mxu0 %v2768
        %3461 = vmatprep.subr.bf16.mxu0 %v2773
        %3462 = vmatpush1.bf16.msra.mxu0 %v2772
        %3463 = vmatprep.subr.bf16.mxu0 %v2777
        %3464 = vmatpush1.bf16.msra.mxu0 %v2776
        %3465 = vmatprep.subr.bf16.mxu0 %v2781
        %3466 = vmatpush1.bf16.msra.mxu0 %v2780
        %3467 = vmatprep.subr.bf16.mxu0 %v2785
        %3468 = vmatpush1.bf16.msra.mxu0 %v2784
        %3469 = vmatprep.subr.bf16.mxu0 %v2789
        %3470 = vmatpush1.bf16.msra.mxu0 %v2788
        %3471 = vmatprep.subr.bf16.mxu0 %v2793
        %3472 = vmatpush1.bf16.msra.mxu0 %v2792
        %3473 = vmatprep.subr.bf16.mxu0 %v2797
        %3474 = vmatpush1.bf16.msra.mxu0 %v2796
        %3475 = vmatprep.subr.bf16.mxu0 %v2801
        %3476 = vmatpush1.bf16.msra.mxu0 %v2800
        %3477 = vmatprep.subr.bf16.mxu0 %v2805
        %3478 = vmatpush1.bf16.msra.mxu0 %v2804
        %3479 = vmatprep.subr.bf16.mxu0 %v2809
        %3480 = vmatpush1.bf16.msra.mxu0 %v2808
        %3481 = vmatprep.subr.bf16.mxu0 %v2813
        %3482 = vmatpush1.bf16.msra.mxu0 %v2812
        %3483 = vmatprep.mubr.bf16.mxu0 %v997
        %3484 = vmatmul.mubr.bf16.gmra.mrb[0].mxu0 %v996
        %v3485 = vpop.f32.mrb[0].mxu0
        %v3486 = vadd.f32 %v3445, %v3485
        %v3487 = vpop.f32.mrb[0].mxu0
        %v3488 = vadd.f32 %v3447, %v3487
        %v3489 = vpop.f32.mrb[0].mxu0
        %v3490 = vpop.f32.mrb[0].mxu0
        %3491 = vdwg.mxu0
        %3492 = vmatprep.subr.bf16.mxu0 %v2817
        %3493 = vmatpush1.bf16.msra.mxu0 %v2816
        %3494 = vmatprep.subr.bf16.mxu0 %v2821
        %3495 = vmatpush1.bf16.msra.mxu0 %v2820
        %3496 = vmatprep.subr.bf16.mxu0 %v2825
        %3497 = vmatpush1.bf16.msra.mxu0 %v2824
        %3498 = vmatprep.subr.bf16.mxu0 %v2829
        %3499 = vmatpush1.bf16.msra.mxu0 %v2828
        %3500 = vmatprep.subr.bf16.mxu0 %v2833
        %3501 = vmatpush1.bf16.msra.mxu0 %v2832
        %3502 = vmatprep.subr.bf16.mxu0 %v2837
        %3503 = vmatpush1.bf16.msra.mxu0 %v2836
        %3504 = vmatprep.subr.bf16.mxu0 %v2841
        %3505 = vmatpush1.bf16.msra.mxu0 %v2840
        %3506 = vmatprep.subr.bf16.mxu0 %v2845
        %3507 = vmatpush1.bf16.msra.mxu0 %v2844
        %3508 = vmatprep.subr.bf16.mxu0 %v2849
        %3509 = vmatpush1.bf16.msra.mxu0 %v2848
        %3510 = vmatprep.subr.bf16.mxu0 %v2853
        %3511 = vmatpush1.bf16.msra.mxu0 %v2852
        %3512 = vmatprep.subr.bf16.mxu0 %v2857
        %3513 = vmatpush1.bf16.msra.mxu0 %v2856
        %3514 = vmatprep.subr.bf16.mxu0 %v2861
        %3515 = vmatpush1.bf16.msra.mxu0 %v2860
        %3516 = vmatprep.subr.bf16.mxu0 %v2865
        %3517 = vmatpush1.bf16.msra.mxu0 %v2864
        %3518 = vmatprep.subr.bf16.mxu0 %v2869
        %3519 = vmatpush1.bf16.msra.mxu0 %v2868
        %3520 = vmatprep.subr.bf16.mxu0 %v2873
        %3521 = vmatpush1.bf16.msra.mxu0 %v2872
        %3522 = vmatprep.subr.bf16.mxu0 %v2877
        %3523 = vmatpush1.bf16.msra.mxu0 %v2876
        %3524 = vmatprep.mubr.bf16.mxu0 %v999
        %3525 = vmatmul.mubr.bf16.gmra.mrb[0].mxu0 %v998
        %v3526 = vpop.f32.mrb[0].mxu0
        %v3527 = vadd.f32 %v3486, %v3526
        %v3528 = vpop.f32.mrb[0].mxu0
        %v3529 = vadd.f32 %v3488, %v3528
        %v3530 = vpop.f32.mrb[0].mxu0
        %v3531 = vpop.f32.mrb[0].mxu0
        %3532 = vdwg.mxu0
        %3533 = vmatprep.subr.bf16.mxu0 %v2881
        %3534 = vmatpush1.bf16.msra.mxu0 %v2880
        %3535 = vmatprep.subr.bf16.mxu0 %v2885
        %3536 = vmatpush1.bf16.msra.mxu0 %v2884
        %3537 = vmatprep.subr.bf16.mxu0 %v2889
        %3538 = vmatpush1.bf16.msra.mxu0 %v2888
        %3539 = vmatprep.subr.bf16.mxu0 %v2893
        %3540 = vmatpush1.bf16.msra.mxu0 %v2892
        %3541 = vmatprep.subr.bf16.mxu0 %v2897
        %3542 = vmatpush1.bf16.msra.mxu0 %v2896
        %3543 = vmatprep.subr.bf16.mxu0 %v2901
        %3544 = vmatpush1.bf16.msra.mxu0 %v2900
        %3545 = vmatprep.subr.bf16.mxu0 %v2905
        %3546 = vmatpush1.bf16.msra.mxu0 %v2904
        %3547 = vmatprep.subr.bf16.mxu0 %v2909
        %3548 = vmatpush1.bf16.msra.mxu0 %v2908
        %3549 = vmatprep.subr.bf16.mxu0 %v2913
        %3550 = vmatpush1.bf16.msra.mxu0 %v2912
        %3551 = vmatprep.subr.bf16.mxu0 %v2917
        %3552 = vmatpush1.bf16.msra.mxu0 %v2916
        %3553 = vmatprep.subr.bf16.mxu0 %v2921
        %3554 = vmatpush1.bf16.msra.mxu0 %v2920
        %3555 = vmatprep.subr.bf16.mxu0 %v2925
        %3556 = vmatpush1.bf16.msra.mxu0 %v2924
        %3557 = vmatprep.subr.bf16.mxu0 %v2929
        %3558 = vmatpush1.bf16.msra.mxu0 %v2928
        %3559 = vmatprep.subr.bf16.mxu0 %v2933
        %3560 = vmatpush1.bf16.msra.mxu0 %v2932
        %3561 = vmatprep.subr.bf16.mxu0 %v2937
        %3562 = vmatpush1.bf16.msra.mxu0 %v2936
        %3563 = vmatprep.subr.bf16.mxu0 %v2941
        %3564 = vmatpush1.bf16.msra.mxu0 %v2940
        %3565 = vmatprep.mubr.bf16.mxu0 %v1001
        %3566 = vmatmul.mubr.bf16.gmra.mrb[0].mxu0 %v1000
        %v3567 = vpop.f32.mrb[0].mxu0
        %v3568 = vadd.f32 %v3527, %v3567
        %v3569 = vpop.f32.mrb[0].mxu0
        %v3570 = vadd.f32 %v3529, %v3569
        %v3571 = vpop.f32.mrb[0].mxu0
        %v3572 = vpop.f32.mrb[0].mxu0
        %3573 = vdwg.mxu0
        %3574 = vmatprep.subr.bf16.mxu0 %v2563
        %3575 = vmatpush1.bf16.msra.mxu0 %v2562
        %3576 = vmatprep.subr.bf16.mxu0 %v2567
        %3577 = vmatpush1.bf16.msra.mxu0 %v2566
        %3578 = vmatprep.subr.bf16.mxu0 %v2571
        %3579 = vmatpush1.bf16.msra.mxu0 %v2570
        %3580 = vmatprep.subr.bf16.mxu0 %v2575
        %3581 = vmatpush1.bf16.msra.mxu0 %v2574
        %3582 = vmatprep.subr.bf16.mxu0 %v2579
        %3583 = vmatpush1.bf16.msra.mxu0 %v2578
        %3584 = vmatprep.subr.bf16.mxu0 %v2583
        %3585 = vmatpush1.bf16.msra.mxu0 %v2582
        %3586 = vmatprep.subr.bf16.mxu0 %v2587
        %3587 = vmatpush1.bf16.msra.mxu0 %v2586
        %3588 = vmatprep.subr.bf16.mxu0 %v2591
        %3589 = vmatpush1.bf16.msra.mxu0 %v2590
        %3590 = vmatprep.subr.bf16.mxu0 %v2595
        %3591 = vmatpush1.bf16.msra.mxu0 %v2594
        %3592 = vmatprep.subr.bf16.mxu0 %v2599
        %3593 = vmatpush1.bf16.msra.mxu0 %v2598
        %3594 = vmatprep.subr.bf16.mxu0 %v2603
        %3595 = vmatpush1.bf16.msra.mxu0 %v2602
        %3596 = vmatprep.subr.bf16.mxu0 %v2607
        %3597 = vmatpush1.bf16.msra.mxu0 %v2606
        %3598 = vmatprep.subr.bf16.mxu0 %v2611
        %3599 = vmatpush1.bf16.msra.mxu0 %v2610
        %3600 = vmatprep.subr.bf16.mxu0 %v2615
        %3601 = vmatpush1.bf16.msra.mxu0 %v2614
        %3602 = vmatprep.subr.bf16.mxu0 %v2619
        %3603 = vmatpush1.bf16.msra.mxu0 %v2618
        %3604 = vmatprep.subr.bf16.mxu0 %v2623
        %3605 = vmatpush1.bf16.msra.mxu0 %v2622
        %3606 = vmatprep.mubr.bf16.mxu0 %v991
        %3607 = vmatmul.mubr.bf16.gmra.mrb[0].mxu0 %v990
        %v3608 = vpop.f32.mrb[0].mxu0
        %v3609 = vadd.f32 %v1399, %v3608
        %v3610 = vpop.f32.mrb[0].mxu0
        %v3611 = vadd.f32 %v1403, %v3610
        %v3612 = vpop.f32.mrb[0].mxu0
        %v3613 = vpop.f32.mrb[0].mxu0
        %3614 = vdwg.mxu0
        %3615 = vmatprep.subr.bf16.mxu0 %v2627
        %3616 = vmatpush1.bf16.msra.mxu0 %v2626
        %3617 = vmatprep.subr.bf16.mxu0 %v2631
        %3618 = vmatpush1.bf16.msra.mxu0 %v2630
        %3619 = vmatprep.subr.bf16.mxu0 %v2635
        %3620 = vmatpush1.bf16.msra.mxu0 %v2634
        %3621 = vmatprep.subr.bf16.mxu0 %v2639
        %3622 = vmatpush1.bf16.msra.mxu0 %v2638
        %3623 = vmatprep.subr.bf16.mxu0 %v2643
        %3624 = vmatpush1.bf16.msra.mxu0 %v2642
        %3625 = vmatprep.subr.bf16.mxu0 %v2647
        %3626 = vmatpush1.bf16.msra.mxu0 %v2646
        %3627 = vmatprep.subr.bf16.mxu0 %v2651
        %3628 = vmatpush1.bf16.msra.mxu0 %v2650
        %3629 = vmatprep.subr.bf16.mxu0 %v2655
        %3630 = vmatpush1.bf16.msra.mxu0 %v2654
        %3631 = vmatprep.subr.bf16.mxu0 %v2659
        %3632 = vmatpush1.bf16.msra.mxu0 %v2658
        %3633 = vmatprep.subr.bf16.mxu0 %v2663
        %3634 = vmatpush1.bf16.msra.mxu0 %v2662
        %3635 = vmatprep.subr.bf16.mxu0 %v2667
        %3636 = vmatpush1.bf16.msra.mxu0 %v2666
        %3637 = vmatprep.subr.bf16.mxu0 %v2671
        %3638 = vmatpush1.bf16.msra.mxu0 %v2670
        %3639 = vmatprep.subr.bf16.mxu0 %v2675
        %3640 = vmatpush1.bf16.msra.mxu0 %v2674
        %3641 = vmatprep.subr.bf16.mxu0 %v2679
        %3642 = vmatpush1.bf16.msra.mxu0 %v2678
        %3643 = vmatprep.subr.bf16.mxu0 %v2683
        %3644 = vmatpush1.bf16.msra.mxu0 %v2682
        %3645 = vmatprep.subr.bf16.mxu0 %v2687
        %3646 = vmatpush1.bf16.msra.mxu0 %v2686
        %3647 = vmatprep.mubr.bf16.mxu0 %v993
        %3648 = vmatmul.mubr.bf16.gmra.mrb[0].mxu0 %v992
        %v3649 = vpop.f32.mrb[0].mxu0
        %v3650 = vadd.f32 %v3609, %v3649
        %v3651 = vpop.f32.mrb[0].mxu0
        %v3652 = vadd.f32 %v3611, %v3651
        %v3653 = vpop.f32.mrb[0].mxu0
        %v3654 = vpop.f32.mrb[0].mxu0
        %3655 = vdwg.mxu0
        %3656 = vmatprep.subr.bf16.mxu0 %v2691
        %3657 = vmatpush1.bf16.msra.mxu0 %v2690
        %3658 = vmatprep.subr.bf16.mxu0 %v2695
        %3659 = vmatpush1.bf16.msra.mxu0 %v2694
        %3660 = vmatprep.subr.bf16.mxu0 %v2699
        %3661 = vmatpush1.bf16.msra.mxu0 %v2698
        %3662 = vmatprep.subr.bf16.mxu0 %v2703
        %3663 = vmatpush1.bf16.msra.mxu0 %v2702
        %3664 = vmatprep.subr.bf16.mxu0 %v2707
        %3665 = vmatpush1.bf16.msra.mxu0 %v2706
        %3666 = vmatprep.subr.bf16.mxu0 %v2711
        %3667 = vmatpush1.bf16.msra.mxu0 %v2710
        %3668 = vmatprep.subr.bf16.mxu0 %v2715
        %3669 = vmatpush1.bf16.msra.mxu0 %v2714
        %3670 = vmatprep.subr.bf16.mxu0 %v2719
        %3671 = vmatpush1.bf16.msra.mxu0 %v2718
        %3672 = vmatprep.subr.bf16.mxu0 %v2723
        %3673 = vmatpush1.bf16.msra.mxu0 %v2722
        %3674 = vmatprep.subr.bf16.mxu0 %v2727
        %3675 = vmatpush1.bf16.msra.mxu0 %v2726
        %3676 = vmatprep.subr.bf16.mxu0 %v2731
        %3677 = vmatpush1.bf16.msra.mxu0 %v2730
        %3678 = vmatprep.subr.bf16.mxu0 %v2735
        %3679 = vmatpush1.bf16.msra.mxu0 %v2734
        %3680 = vmatprep.subr.bf16.mxu0 %v2739
        %3681 = vmatpush1.bf16.msra.mxu0 %v2738
        %3682 = vmatprep.subr.bf16.mxu0 %v2743
        %3683 = vmatpush1.bf16.msra.mxu0 %v2742
        %3684 = vmatprep.subr.bf16.mxu0 %v2747
        %3685 = vmatpush1.bf16.msra.mxu0 %v2746
        %3686 = vmatprep.subr.bf16.mxu0 %v2751
        %3687 = vmatpush1.bf16.msra.mxu0 %v2750
        %3688 = vmatprep.mubr.bf16.mxu0 %v995
        %3689 = vmatmul.mubr.bf16.gmra.mrb[0].mxu0 %v994
        %v3690 = vpop.f32.mrb[0].mxu0
        %v3691 = vadd.f32 %v3650, %v3690
        %v3692 = vpop.f32.mrb[0].mxu0
        %v3693 = vadd.f32 %v3652, %v3692
        %v3694 = vpop.f32.mrb[0].mxu0
        %v3695 = vpop.f32.mrb[0].mxu0
        %3696 = vdwg.mxu0
        %3697 = vmatprep.subr.bf16.mxu0 %v2755
        %3698 = vmatpush1.bf16.msra.mxu0 %v2754
        %3699 = vmatprep.subr.bf16.mxu0 %v2759
        %3700 = vmatpush1.bf16.msra.mxu0 %v2758
        %3701 = vmatprep.subr.bf16.mxu0 %v2763
        %3702 = vmatpush1.bf16.msra.mxu0 %v2762
        %3703 = vmatprep.subr.bf16.mxu0 %v2767
        %3704 = vmatpush1.bf16.msra.mxu0 %v2766
        %3705 = vmatprep.subr.bf16.mxu0 %v2771
        %3706 = vmatpush1.bf16.msra.mxu0 %v2770
        %3707 = vmatprep.subr.bf16.mxu0 %v2775
        %3708 = vmatpush1.bf16.msra.mxu0 %v2774
        %3709 = vmatprep.subr.bf16.mxu0 %v2779
        %3710 = vmatpush1.bf16.msra.mxu0 %v2778
        %3711 = vmatprep.subr.bf16.mxu0 %v2783
        %3712 = vmatpush1.bf16.msra.mxu0 %v2782
        %3713 = vmatprep.subr.bf16.mxu0 %v2787
        %3714 = vmatpush1.bf16.msra.mxu0 %v2786
        %3715 = vmatprep.subr.bf16.mxu0 %v2791
        %3716 = vmatpush1.bf16.msra.mxu0 %v2790
        %3717 = vmatprep.subr.bf16.mxu0 %v2795
        %3718 = vmatpush1.bf16.msra.mxu0 %v2794
        %3719 = vmatprep.subr.bf16.mxu0 %v2799
        %3720 = vmatpush1.bf16.msra.mxu0 %v2798
        %3721 = vmatprep.subr.bf16.mxu0 %v2803
        %3722 = vmatpush1.bf16.msra.mxu0 %v2802
        %3723 = vmatprep.subr.bf16.mxu0 %v2807
        %3724 = vmatpush1.bf16.msra.mxu0 %v2806
        %3725 = vmatprep.subr.bf16.mxu0 %v2811
        %3726 = vmatpush1.bf16.msra.mxu0 %v2810
        %3727 = vmatprep.subr.bf16.mxu0 %v2815
        %3728 = vmatpush1.bf16.msra.mxu0 %v2814
        %3729 = vmatprep.mubr.bf16.mxu0 %v997
        %3730 = vmatmul.mubr.bf16.gmra.mrb[0].mxu0 %v996
        %v3731 = vpop.f32.mrb[0].mxu0
        %v3732 = vadd.f32 %v3691, %v3731
        %v3733 = vpop.f32.mrb[0].mxu0
        %v3734 = vadd.f32 %v3693, %v3733
        %v3735 = vpop.f32.mrb[0].mxu0
        %v3736 = vpop.f32.mrb[0].mxu0
        %3737 = vdwg.mxu0
        %3738 = vmatprep.subr.bf16.mxu0 %v2819
        %3739 = vmatpush1.bf16.msra.mxu0 %v2818
        %3740 = vmatprep.subr.bf16.mxu0 %v2823
        %3741 = vmatpush1.bf16.msra.mxu0 %v2822
        %3742 = vmatprep.subr.bf16.mxu0 %v2827
        %3743 = vmatpush1.bf16.msra.mxu0 %v2826
        %3744 = vmatprep.subr.bf16.mxu0 %v2831
        %3745 = vmatpush1.bf16.msra.mxu0 %v2830
        %3746 = vmatprep.subr.bf16.mxu0 %v2835
        %3747 = vmatpush1.bf16.msra.mxu0 %v2834
        %3748 = vmatprep.subr.bf16.mxu0 %v2839
        %3749 = vmatpush1.bf16.msra.mxu0 %v2838
        %3750 = vmatprep.subr.bf16.mxu0 %v2843
        %3751 = vmatpush1.bf16.msra.mxu0 %v2842
        %3752 = vmatprep.subr.bf16.mxu0 %v2847
        %3753 = vmatpush1.bf16.msra.mxu0 %v2846
        %3754 = vmatprep.subr.bf16.mxu0 %v2851
        %3755 = vmatpush1.bf16.msra.mxu0 %v2850
        %3756 = vmatprep.subr.bf16.mxu0 %v2855
        %3757 = vmatpush1.bf16.msra.mxu0 %v2854
        %3758 = vmatprep.subr.bf16.mxu0 %v2859
        %3759 = vmatpush1.bf16.msra.mxu0 %v2858
        %3760 = vmatprep.subr.bf16.mxu0 %v2863
        %3761 = vmatpush1.bf16.msra.mxu0 %v2862
        %3762 = vmatprep.subr.bf16.mxu0 %v2867
        %3763 = vmatpush1.bf16.msra.mxu0 %v2866
        %3764 = vmatprep.subr.bf16.mxu0 %v2871
        %3765 = vmatpush1.bf16.msra.mxu0 %v2870
        %3766 = vmatprep.subr.bf16.mxu0 %v2875
        %3767 = vmatpush1.bf16.msra.mxu0 %v2874
        %3768 = vmatprep.subr.bf16.mxu0 %v2879
        %3769 = vmatpush1.bf16.msra.mxu0 %v2878
        %3770 = vmatprep.mubr.bf16.mxu0 %v999
        %3771 = vmatmul.mubr.bf16.gmra.mrb[0].mxu0 %v998
        %v3772 = vpop.f32.mrb[0].mxu0
        %v3773 = vadd.f32 %v3732, %v3772
        %v3774 = vpop.f32.mrb[0].mxu0
        %v3775 = vadd.f32 %v3734, %v3774
        %v3776 = vpop.f32.mrb[0].mxu0
        %v3777 = vpop.f32.mrb[0].mxu0
        %3778 = vdwg.mxu0
        %3779 = vmatprep.subr.bf16.mxu0 %v2883
        %3780 = vmatpush1.bf16.msra.mxu0 %v2882
        %3781 = vmatprep.subr.bf16.mxu0 %v2887
        %3782 = vmatpush1.bf16.msra.mxu0 %v2886
        %3783 = vmatprep.subr.bf16.mxu0 %v2891
        %3784 = vmatpush1.bf16.msra.mxu0 %v2890
        %3785 = vmatprep.subr.bf16.mxu0 %v2895
        %3786 = vmatpush1.bf16.msra.mxu0 %v2894
        %3787 = vmatprep.subr.bf16.mxu0 %v2899
        %3788 = vmatpush1.bf16.msra.mxu0 %v2898
        %3789 = vmatprep.subr.bf16.mxu0 %v2903
        %3790 = vmatpush1.bf16.msra.mxu0 %v2902
        %3791 = vmatprep.subr.bf16.mxu0 %v2907
        %3792 = vmatpush1.bf16.msra.mxu0 %v2906
        %3793 = vmatprep.subr.bf16.mxu0 %v2911
        %3794 = vmatpush1.bf16.msra.mxu0 %v2910
        %3795 = vmatprep.subr.bf16.mxu0 %v2915
        %3796 = vmatpush1.bf16.msra.mxu0 %v2914
        %3797 = vmatprep.subr.bf16.mxu0 %v2919
        %3798 = vmatpush1.bf16.msra.mxu0 %v2918
        %3799 = vmatprep.subr.bf16.mxu0 %v2923
        %3800 = vmatpush1.bf16.msra.mxu0 %v2922
        %3801 = vmatprep.subr.bf16.mxu0 %v2927
        %3802 = vmatpush1.bf16.msra.mxu0 %v2926
        %3803 = vmatprep.subr.bf16.mxu0 %v2931
        %3804 = vmatpush1.bf16.msra.mxu0 %v2930
        %3805 = vmatprep.subr.bf16.mxu0 %v2935
        %3806 = vmatpush1.bf16.msra.mxu0 %v2934
        %3807 = vmatprep.subr.bf16.mxu0 %v2939
        %3808 = vmatpush1.bf16.msra.mxu0 %v2938
        %3809 = vmatprep.subr.bf16.mxu0 %v2943
        %3810 = vmatpush1.bf16.msra.mxu0 %v2942
        %3811 = vmatprep.mubr.bf16.mxu0 %v1001
        %3812 = vmatmul.mubr.bf16.gmra.mrb[0].mxu0 %v1000
        %v3813 = vpop.f32.mrb[0].mxu0
        %v3814 = vadd.f32 %v3773, %v3813
        %v3815 = vpop.f32.mrb[0].mxu0
        %v3816 = vadd.f32 %v3775, %v3815
        %v3817 = vpop.f32.mrb[0].mxu0
        %v3818 = vpop.f32.mrb[0].mxu0
        %3819 = vdwg.mxu0
        %v3820 = vmax.f32 %v3568, 0.0
        %v3821 = vmax.f32 %v3570, 0.0
        %v3822 = vmax.f32 %v3814, 0.0
        %v3823 = vmax.f32 %v3816, 0.0
        %3824 = vst [vmem:[%s976] sm:$0xff] %v3820
        %3825 = vst [vmem:[%s976 + $0x8] sm:$0xff] %v3821
        %3826 = vst [vmem:[%s976 + $0x10] sm:$0xff] %v3822
        %3827 = vst [vmem:[%s976 + $0x18] sm:$0xff] %v3823
        %s3828 = smul.u32 4, %s14
        %p3829 = scmp.lt.s32.totalorder %s3828, 7
        %s3830 = scalar_select %p3829, %s3828, 7
        %s3831 = smul.addr %s3830, 8
        %s3832 = scalar_lea.vmem %s3, %s3831
        // Predicated region
        $region56: #{net_forward.4} parent=50 // pred_check
          %p3833 = pneg %p105
        $region57: #{net_forward.4} parent=50 // pred_check_branch
          %3835 = sbr.rel (%p3833) target = $region59
        $region58: #{net_forward.4} parent=50 // pred_region
          %s3836 = smul.u32 4, %s14
        $region59: #{net_forward.4} parent=50 // pred_fallthru
          _
      $region51: #{net_forward.4} parent=5 // pred_fallthru
        _
      %p3837 = scmp.le.s32.totalorder 2, %s9
      // Predicated region
      $region60: #{net_forward.4} parent=5 // pred_check
        %p3838 = pneg %p3837
      $region61: #{net_forward.4} parent=5 // pred_check_branch
        %3840 = sbr.rel (%p3838) target = $region63
      $region62: #{net_forward.4} parent=5 // pred_region
        %s3841 = ssub.s32 %s9, 2
        // Predicated region
        $region64: #{net_forward.4} parent=62 // pred_check
          %p3842 = pneg %p111
        $region65: #{net_forward.4} parent=62 // pred_check_branch
          %3844 = sbr.rel (%p3842) target = $region67
        $region66: #{net_forward.4} parent=62 // pred_region
          %s3845 = smul.u32 4, %s15
          %p3846 = scmp.lt.s32.totalorder %s3845, 7
          %s3847 = scalar_select %p3846, %s3845, 7
          %s3848 = smul.addr %s3847, 8
          %s3849 = scalar_lea.vmem %s3, %s3848
        $region67: #{net_forward.4} parent=62 // pred_fallthru
          _
      $region63: #{net_forward.4} parent=5 // pred_fallthru
        _
    $region6: #{net_forward.4} parent=1 // loop_footer
      %s13 = sadd.s32 1, %s9
    $region7: #{net_forward.4} parent=1 // loop_footer_branch
      %8 = sbr.rel target = $region3
    $region8: #{net_forward.4} parent=1 // loop_exit
      _

// kernel: net_forward.3
$region0: #{net_forward.3}
  #allocation0 [shape = 'u32[]', space=smem, size = 0x4, offset = 0x4, fixed_abs, tag = 'smem constant byte address 0x4 - core index']
  #allocation1 [shape = 'u32[144,128]{1,0:T(1,128)}', space=vmem, size = 0x12000, scoped, tag = 'internal scratch']
  %s0 = inlined_call_operand.vmem [shape: f32[8,2944], index: 0, kind: input, shape index: {}]
  %s1 = inlined_call_operand.hbm [shape: bf16[2944,1536], index: 1, kind: input, shape index: {}]
  %s2 = inlined_call_operand.hbm [shape: f32[1,1536], index: 2, kind: input, shape index: {}]
  %s3 = inlined_call_operand.vmem [shape: f32[8,1536], index: 3, kind: output, shape index: {}]
  %s4 = sld [smem:[#allocation0]]
  $region53: #{net_forward.3} parent=0
    _
  %s6 = ssub.s32 1, %s4
  %s7 = scalar_select 0, %s6, %s4
  $region1: #{net_forward.3} parent=0
    #allocation2 [shape = 'u8[6029312]{0}', space=vmem, size = 0x5c0000, scoped, tag = 'input window, operand 1']
    #allocation3 [shape = 's32[2]{0}', space=sflag, size = 0x8, scoped, tag = 'scoped memory for net_forward.3']
    #allocation4 [shape = 'u8[4096]{0}', space=vmem, size = 0x1000, scoped, tag = 'input window, operand 2']
    #allocation5 [shape = 's32[2]{0}', space=sflag, size = 0x8, scoped, tag = 'scoped memory for net_forward.3']
    %8 = vsyncpa [#allocation3], 0
    %s9 = scalar_lea.sflag [#allocation3], 1
    %10 = vsyncpa %s9, 0
    %11 = vsyncpa [#allocation5], 0
    %s12 = scalar_lea.sflag [#allocation5], 1
    %13 = vsyncpa %s12, 0
    loop: start=0, step=1, limit=5
    $region2: #{net_forward.3} parent=1 // loop_pre_header
      _
    $region3: #{net_forward.3} parent=1 // loop_header
      %s15 = sphi 0, %s19
      %p16 = scmp.ge.s32.totalorder %s15, 5
      %s23 = sphi 0, %s23
      %s25 = sphi 0, %s23
      %s26 = sphi 0, %s25
      %s40 = sphi 0, %s26
      %s46 = sphi 0, %s48
      %s49 = sphi 0, %s46
      %s50 = sphi 0, %s49
      %s66 = sphi 0, %s50
      %s72 = sphi 0, %s74
      %s75 = sphi 0, %s72
      %s76 = sphi 0, %s75
      %s92 = sphi 0, %s76
      %s98 = sphi 0, %s100
      %s101 = sphi 0, %s98
      %s102 = sphi 0, %s101
      %s118 = sphi 0, %s102
    $region4: #{net_forward.3} parent=1 // loop_header_branch
      %18 = sbr.rel (%p16) target = $region8
    $region5: #{net_forward.3} parent=1 // loop_body
      %s20 = ssub.s32 %s15, 1
      %s21 = ssub.s32 %s15, 2
      %s22 = sadd.s32 %s15, 1
      %s24 = sadd.s32 %s23, 1
      %p27 = scmp.eq.s32.totalorder %s15, 2
      %p28 = scmp.ne.s32.totalorder %s23, %s25
      %p29 = scmp.eq.s32.totalorder %s15, 0
      %p30 = por %p28, %p29
      %p31 = scmp.ne.s32.totalorder %s23, %s25
      %p32 = scmp.eq.s32.totalorder %s20, 2
      %p33 = por %p31, %p32
      %p34 = scmp.ne.s32.totalorder %s25, %s26
      %p35 = scmp.eq.s32.totalorder %s20, 0
      %p36 = por %p34, %p35
      %p37 = scmp.ne.s32.totalorder %s25, %s26
      %p38 = scmp.eq.s32.totalorder %s21, 2
      %p39 = por %p37, %p38
      %p41 = scmp.ne.s32.totalorder %s26, %s40
      %p42 = scmp.eq.s32.totalorder %s21, 0
      %p43 = por %p41, %p42
      %s44 = ssub.s32 %s15, %s22
      %p45 = scmp.eq.s32.totalorder %s44, 0
      %s47 = sadd.s32 %s46, 1
      %s48 = scalar_select %p45, %s46, %s47
      %p51 = pneg %p45
      %p52 = scmp.eq.s32.totalorder %s15, 2
      %p53 = por %p51, %p52
      %p54 = scmp.ne.s32.totalorder %s46, %s49
      %p55 = scmp.eq.s32.totalorder %s15, 0
      %p56 = por %p54, %p55
      %p57 = scmp.ne.s32.totalorder %s46, %s49
      %p58 = scmp.eq.s32.totalorder %s20, 2
      %p59 = por %p57, %p58
      %p60 = scmp.ne.s32.totalorder %s49, %s50
      %p61 = scmp.eq.s32.totalorder %s20, 0
      %p62 = por %p60, %p61
      %p63 = scmp.ne.s32.totalorder %s49, %s50
      %p64 = scmp.eq.s32.totalorder %s21, 2
      %p65 = por %p63, %p64
      %p67 = scmp.ne.s32.totalorder %s50, %s66
      %p68 = scmp.eq.s32.totalorder %s21, 0
      %p69 = por %p67, %p68
      %s70 = ssub.s32 %s15, %s22
      %p71 = scmp.eq.s32.totalorder %s70, 0
      %s73 = sadd.s32 %s72, 1
      %s74 = scalar_select %p71, %s72, %s73
      %p77 = pneg %p71
      %p78 = scmp.eq.s32.totalorder %s15, 2
      %p79 = por %p77, %p78
      %p80 = scmp.ne.s32.totalorder %s72, %s75
      %p81 = scmp.eq.s32.totalorder %s15, 0
      %p82 = por %p80, %p81
      %p83 = scmp.ne.s32.totalorder %s72, %s75
      %p84 = scmp.eq.s32.totalorder %s20, 2
      %p85 = por %p83, %p84
      %p86 = scmp.ne.s32.totalorder %s75, %s76
      %p87 = scmp.eq.s32.totalorder %s20, 0
      %p88 = por %p86, %p87
      %p89 = scmp.ne.s32.totalorder %s75, %s76
      %p90 = scmp.eq.s32.totalorder %s21, 2
      %p91 = por %p89, %p90
      %p93 = scmp.ne.s32.totalorder %s76, %s92
      %p94 = scmp.eq.s32.totalorder %s21, 0
      %p95 = por %p93, %p94
      %s96 = ssub.s32 %s15, %s22
      %p97 = scmp.eq.s32.totalorder %s96, 0
      %s99 = sadd.s32 %s98, 1
      %s100 = scalar_select %p97, %s98, %s99
      %p103 = pneg %p97
      %p104 = scmp.eq.s32.totalorder %s15, 2
      %p105 = por %p103, %p104
      %p106 = scmp.ne.s32.totalorder %s98, %s101
      %p107 = scmp.eq.s32.totalorder %s15, 0
      %p108 = por %p106, %p107
      %p109 = scmp.ne.s32.totalorder %s98, %s101
      %p110 = scmp.eq.s32.totalorder %s20, 2
      %p111 = por %p109, %p110
      %p112 = scmp.ne.s32.totalorder %s101, %s102
      %p113 = scmp.eq.s32.totalorder %s20, 0
      %p114 = por %p112, %p113
      %p115 = scmp.ne.s32.totalorder %s101, %s102
      %p116 = scmp.eq.s32.totalorder %s21, 2
      %p117 = por %p115, %p116
      %p119 = scmp.ne.s32.totalorder %s102, %s118
      %p120 = scmp.eq.s32.totalorder %s21, 0
      %p121 = por %p119, %p120
      %p122 = scmp.le.s32.totalorder 1, %s15
      %p123 = scmp.lt.s32.totalorder %s15, 4
      %p124 = pnand %p122, %p123
      %p125 = pneg %p124
      // Predicated region
      $region9: #{net_forward.3} parent=5 // pred_check
        _
      $region10: #{net_forward.3} parent=5 // pred_check_branch
        %127 = sbr.rel (%p124) target = $region12
      $region11: #{net_forward.3} parent=5 // pred_region
        %s128 = ssub.s32 %s15, 1
        // Predicated region
        $region13: #{net_forward.3} parent=11 // pred_check
          %p129 = pneg %p36
        $region14: #{net_forward.3} parent=11 // pred_check_branch
          %131 = sbr.rel (%p129) target = $region16
        $region15: #{net_forward.3} parent=11 // pred_region
          _
        $region16: #{net_forward.3} parent=11 // pred_fallthru
          _
      $region12: #{net_forward.3} parent=5 // pred_fallthru
        _
      %p132 = scmp.lt.s32.totalorder %s15, 3
      // Predicated region
      $region17: #{net_forward.3} parent=5 // pred_check
        %p133 = pneg %p132
      $region18: #{net_forward.3} parent=5 // pred_check_branch
        %135 = sbr.rel (%p133) target = $region20
      $region19: #{net_forward.3} parent=5 // pred_region
        // Predicated region
        $region21: #{net_forward.3} parent=19 // pred_check
          %p136 = pneg %p56
        $region22: #{net_forward.3} parent=19 // pred_check_branch
          %138 = sbr.rel (%p136) target = $region24
        $region23: #{net_forward.3} parent=19 // pred_region
          %s139 = sand.u32 %s46, 1
          %s140 = scalar_lea.sflag [#allocation3], %s139
          %s141 = sand.u32 %s46, 1
          %s142 = smul.addr %s141, 5888
          %s143 = scalar_lea.vmem [#allocation2], %s142
          %s144 = smul.u32 4, %s15
          %s146 = ssub.s32 94208, 94208
          %147 = vsyncadd %s140, %s146
          %s148 = smul.addr %s144, 64
          %s149 = scalar_lea.hbm %s1, %s148
          %s150 = sshll.u32 %s143, 4
          %s151 = int_to_ptr.vmem [resolvable:$true] %s150
          %156 = dma.hbm_to_vmem [thread:$0]  %s149, 94208, %s151, %s140, 768, 256, 16
        $region24: #{net_forward.3} parent=19 // pred_fallthru
          _
        // Predicated region
        $region25: #{net_forward.3} parent=19 // pred_check
          %p157 = pneg %p82
        $region26: #{net_forward.3} parent=19 // pred_check_branch
          %159 = sbr.rel (%p157) target = $region28
        $region27: #{net_forward.3} parent=19 // pred_region
          %s160 = sand.u32 %s72, 1
          %s161 = scalar_lea.sflag [#allocation5], %s160
          %s162 = sand.u32 %s72, 1
          %s163 = smul.addr %s162, 4
          %s164 = scalar_lea.vmem [#allocation4], %s163
          %s165 = smul.u32 4, %s15
          %s167 = ssub.s32 64, 64
          %168 = vsyncadd %s161, %s167
          %s169 = smul.addr %s165, 16
          %s170 = scalar_lea.hbm %s2, %s169
          %s172 = sshll.u32 %s164, 4
          %s173 = int_to_ptr.vmem [resolvable:$true] %s172
          %175 = dma.hbm_to_vmem [thread:$0]  %s170, 64, %s173, %s161
        $region28: #{net_forward.3} parent=19 // pred_fallthru
          _
      $region20: #{net_forward.3} parent=5 // pred_fallthru
        _
      %p176 = scmp.le.s32.totalorder 1, %s15
      %p177 = scmp.lt.s32.totalorder %s15, 4
      %p178 = pnand %p176, %p177
      %p179 = pneg %p178
      // Predicated region
      $region29: #{net_forward.3} parent=5 // pred_check
        _
      $region30: #{net_forward.3} parent=5 // pred_check_branch
        %181 = sbr.rel (%p178) target = $region32
      $region31: #{net_forward.3} parent=5 // pred_region
        %s182 = ssub.s32 %s15, 1
        %s183 = sand.u32 %s49, 1
        %s184 = scalar_lea.sflag [#allocation3], %s183
        %s185 = sand.u32 %s49, 1
        %s186 = smul.addr %s185, 5888
        %s187 = scalar_lea.vmem [#allocation2], %s186
        // Predicated region
        $region33: #{net_forward.3} parent=31 // pred_check
          %p188 = pneg %p62
        $region34: #{net_forward.3} parent=31 // pred_check_branch
          %190 = sbr.rel (%p188) target = $region36
        $region35: #{net_forward.3} parent=31 // pred_region
          %191 = dma.done %s184, 94208
        $region36: #{net_forward.3} parent=31 // pred_fallthru
          _
        %s192 = sand.u32 %s75, 1
        %s193 = scalar_lea.sflag [#allocation5], %s192
        %s194 = sand.u32 %s75, 1
        %s195 = smul.addr %s194, 4
        %s196 = scalar_lea.vmem [#allocation4], %s195
        // Predicated region
        $region37: #{net_forward.3} parent=31 // pred_check
          %p197 = pneg %p88
        $region38: #{net_forward.3} parent=31 // pred_check_branch
          %199 = sbr.rel (%p197) target = $region40
        $region39: #{net_forward.3} parent=31 // pred_region
          %200 = dma.done %s193, 64
        $region40: #{net_forward.3} parent=31 // pred_fallthru
          _
        %p201 = pneg %p36
        %p202 = pneg %p33
        %s203 = sand.u32 %s49, 1
        %s204 = scalar_lea.sflag [#allocation3], %s203
        %s205 = sand.u32 %s49, 1
        %s206 = smul.addr %s205, 5888
        %s207 = scalar_lea.vmem [#allocation2], %s206
        %p208 = pneg %p62
        %p209 = pneg %p59
        %s210 = sand.u32 %s75, 1
        %s211 = scalar_lea.sflag [#allocation5], %s210
        %s212 = sand.u32 %s75, 1
        %s213 = smul.addr %s212, 4
        %s214 = scalar_lea.vmem [#allocation4], %s213
        %p215 = pneg %p88
        %p216 = pneg %p85
        %p217 = pneg %p114
        %p218 = pneg %p111
        %s219 = smul.u32 4, %s20
        %p220 = scmp.lt.s32.totalorder %s219, 11
        %s221 = scalar_select %p220, %s219, 11
        %s222 = smul.addr %s221, 8
        %s223 = scalar_lea.vmem %s3, %s222
        %s224 = smul.u32 4, %s20
        %s225 = smul.u32 4, %s20
        %s226 = smul.u32 4, %s20
        %p227 = scmp.lt.s32.totalorder %s226, 11
        %s228 = scalar_select %p227, %s226, 11
        %s229 = smul.addr %s228, 8
        %s230 = scalar_lea.vmem %s3, %s229
        %s231 = smul.u32 4, %s20
        %v233 = vld [vmem:[%s0] sm:$0xff]
        %v234 = vld [vmem:[%s0 + $0x8] sm:$0xff]
        %v235 = vld [vmem:[%s0 + $0x10] sm:$0xff]
        %v236 = vld [vmem:[%s0 + $0x18] sm:$0xff]
        %v237 = vld [vmem:[%s0 + $0x20] sm:$0xff]
        %v238 = vld [vmem:[%s0 + $0x28] sm:$0xff]
        %v239 = vld [vmem:[%s0 + $0x30] sm:$0xff]
        %v240 = vld [vmem:[%s0 + $0x38] sm:$0xff]
        %v241 = vld [vmem:[%s0 + $0x40] sm:$0xff]
        %v242 = vld [vmem:[%s0 + $0x48] sm:$0xff]
        %v243 = vld [vmem:[%s0 + $0x50] sm:$0xff]
        %v244 = vld [vmem:[%s0 + $0x58] sm:$0xff]
        %v245 = vld [vmem:[%s0 + $0x60] sm:$0xff]
        %v246 = vld [vmem:[%s0 + $0x68] sm:$0xff]
        %v247 = vld [vmem:[%s0 + $0x70] sm:$0xff]
        %v248 = vld [vmem:[%s0 + $0x78] sm:$0xff]
        %v249 = vld [vmem:[%s0 + $0x80] sm:$0xff]
        %v250 = vld [vmem:[%s0 + $0x88] sm:$0xff]
        %v251 = vld [vmem:[%s0 + $0x90] sm:$0xff]
        %v252 = vld [vmem:[%s0 + $0x98] sm:$0xff]
        %v253 = vld [vmem:[%s0 + $0xa0] sm:$0xff]
        %v254 = vld [vmem:[%s0 + $0xa8] sm:$0xff]
        %v255 = vld [vmem:[%s0 + $0xb0] sm:$0xff]
        %v256 = vpack.c.bf16 %v233, %v233
        %v257 = vpack.c.bf16 %v234, %v234
        %v258 = vpack.c.bf16 %v235, %v235
        %v259 = vpack.c.bf16 %v236, %v236
        %v260 = vpack.c.bf16 %v237, %v237
        %v261 = vpack.c.bf16 %v238, %v238
        %v262 = vpack.c.bf16 %v239, %v239
        %v263 = vpack.c.bf16 %v240, %v240
        %v264 = vpack.c.bf16 %v241, %v241
        %v265 = vpack.c.bf16 %v242, %v242
        %v266 = vpack.c.bf16 %v243, %v243
        %v267 = vpack.c.bf16 %v244, %v244
        %v268 = vpack.c.bf16 %v245, %v245
        %v269 = vpack.c.bf16 %v246, %v246
        %v270 = vpack.c.bf16 %v247, %v247
        %v271 = vpack.c.bf16 %v248, %v248
        %v272 = vpack.c.bf16 %v249, %v249
        %v273 = vpack.c.bf16 %v250, %v250
        %v274 = vpack.c.bf16 %v251, %v251
        %v275 = vpack.c.bf16 %v252, %v252
        %v276 = vpack.c.bf16 %v253, %v253
        %v277 = vpack.c.bf16 %v254, %v254
        %v278 = vpack.c.bf16 %v255, %v255
        %v279 = vld [vmem:[%s187] sm:$0xff]
        %v280 = vld [vmem:[%s187 + $0x8] sm:$0xff]
        %v281 = vld [vmem:[%s187 + $0x10] sm:$0xff]
        %v282 = vld [vmem:[%s187 + $0x18] sm:$0xff]
        %v283 = vld [vmem:[%s187 + $0x20] sm:$0xff]
        %v284 = vld [vmem:[%s187 + $0x28] sm:$0xff]
        %v285 = vld [vmem:[%s187 + $0x30] sm:$0xff]
        %v286 = vld [vmem:[%s187 + $0x38] sm:$0xff]
        %v287 = vld [vmem:[%s187 + $0x40] sm:$0xff]
        %v288 = vld [vmem:[%s187 + $0x48] sm:$0xff]
        %v289 = vld [vmem:[%s187 + $0x50] sm:$0xff]
        %v290 = vld [vmem:[%s187 + $0x58] sm:$0xff]
        %v291 = vld [vmem:[%s187 + $0x60] sm:$0xff]
        %v292 = vld [vmem:[%s187 + $0x68] sm:$0xff]
        %v293 = vld [vmem:[%s187 + $0x70] sm:$0xff]
        %v294 = vld [vmem:[%s187 + $0x78] sm:$0xff]
        %v295 = vld [vmem:[%s187 + $0x80] sm:$0xff]
        %v296 = vld [vmem:[%s187 + $0x88] sm:$0xff]
        %v297 = vld [vmem:[%s187 + $0x90] sm:$0xff]
        %v298 = vld [vmem:[%s187 + $0x98] sm:$0xff]
        %v299 = vld [vmem:[%s187 + $0xa0] sm:$0xff]
        %v300 = vld [vmem:[%s187 + $0xa8] sm:$0xff]
        %v301 = vld [vmem:[%s187 + $0xb0] sm:$0xff]
        %v302 = vld [vmem:[%s187 + $0xb8] sm:$0xff]
        %v303 = vld [vmem:[%s187 + $0xc0] sm:$0xff]
        %v304 = vld [vmem:[%s187 + $0xc8] sm:$0xff]
        %v305 = vld [vmem:[%s187 + $0xd0] sm:$0xff]
        %v306 = vld [vmem:[%s187 + $0xd8] sm:$0xff]
        %v307 = vld [vmem:[%s187 + $0xe0] sm:$0xff]
        %v308 = vld [vmem:[%s187 + $0xe8] sm:$0xff]
        %v309 = vld [vmem:[%s187 + $0xf0] sm:$0xff]
        %v310 = vld [vmem:[%s187 + $0xf8] sm:$0xff]
        %v311 = vld [vmem:[%s187 + $0x100] sm:$0xff]
        %v312 = vld [vmem:[%s187 + $0x108] sm:$0xff]
        %v313 = vld [vmem:[%s187 + $0x110] sm:$0xff]
        %v314 = vld [vmem:[%s187 + $0x118] sm:$0xff]
        %v315 = vld [vmem:[%s187 + $0x120] sm:$0xff]
        %v316 = vld [vmem:[%s187 + $0x128] sm:$0xff]
        %v317 = vld [vmem:[%s187 + $0x130] sm:$0xff]
        %v318 = vld [vmem:[%s187 + $0x138] sm:$0xff]
        %v319 = vld [vmem:[%s187 + $0x140] sm:$0xff]
        %v320 = vld [vmem:[%s187 + $0x148] sm:$0xff]
        %v321 = vld [vmem:[%s187 + $0x150] sm:$0xff]
        %v322 = vld [vmem:[%s187 + $0x158] sm:$0xff]
        %v323 = vld [vmem:[%s187 + $0x160] sm:$0xff]
        %v324 = vld [vmem:[%s187 + $0x168] sm:$0xff]
        %v325 = vld [vmem:[%s187 + $0x170] sm:$0xff]
        %v326 = vld [vmem:[%s187 + $0x178] sm:$0xff]
        %v327 = vld [vmem:[%s187 + $0x180] sm:$0xff]
        %v328 = vld [vmem:[%s187 + $0x188] sm:$0xff]
        %v329 = vld [vmem:[%s187 + $0x190] sm:$0xff]
        %v330 = vld [vmem:[%s187 + $0x198] sm:$0xff]
        %v331 = vld [vmem:[%s187 + $0x1a0] sm:$0xff]
        %v332 = vld [vmem:[%s187 + $0x1a8] sm:$0xff]
        %v333 = vld [vmem:[%s187 + $0x1b0] sm:$0xff]
        %v334 = vld [vmem:[%s187 + $0x1b8] sm:$0xff]
        %v335 = vld [vmem:[%s187 + $0x1c0] sm:$0xff]
        %v336 = vld [vmem:[%s187 + $0x1c8] sm:$0xff]
        %v337 = vld [vmem:[%s187 + $0x1d0] sm:$0xff]
        %v338 = vld [vmem:[%s187 + $0x1d8] sm:$0xff]
        %v339 = vld [vmem:[%s187 + $0x1e0] sm:$0xff]
        %v340 = vld [vmem:[%s187 + $0x1e8] sm:$0xff]
        %v341 = vld [vmem:[%s187 + $0x1f0] sm:$0xff]
        %v342 = vld [vmem:[%s187 + $0x1f8] sm:$0xff]
        %v343 = vld [vmem:[%s187 + $0x200] sm:$0xff]
        %v344 = vld [vmem:[%s187 + $0x208] sm:$0xff]
        %v345 = vld [vmem:[%s187 + $0x210] sm:$0xff]
        %v346 = vld [vmem:[%s187 + $0x218] sm:$0xff]
        %v347 = vld [vmem:[%s187 + $0x220] sm:$0xff]
        %v348 = vld [vmem:[%s187 + $0x228] sm:$0xff]
        %v349 = vld [vmem:[%s187 + $0x230] sm:$0xff]
        %v350 = vld [vmem:[%s187 + $0x238] sm:$0xff]
        %v351 = vld [vmem:[%s187 + $0x240] sm:$0xff]
        %v352 = vld [vmem:[%s187 + $0x248] sm:$0xff]
        %v353 = vld [vmem:[%s187 + $0x250] sm:$0xff]
        %v354 = vld [vmem:[%s187 + $0x258] sm:$0xff]
        %v355 = vld [vmem:[%s187 + $0x260] sm:$0xff]
        %v356 = vld [vmem:[%s187 + $0x268] sm:$0xff]
        %v357 = vld [vmem:[%s187 + $0x270] sm:$0xff]
        %v358 = vld [vmem:[%s187 + $0x278] sm:$0xff]
        %v359 = vld [vmem:[%s187 + $0x280] sm:$0xff]
        %v360 = vld [vmem:[%s187 + $0x288] sm:$0xff]
        %v361 = vld [vmem:[%s187 + $0x290] sm:$0xff]
        %v362 = vld [vmem:[%s187 + $0x298] sm:$0xff]
        %v363 = vld [vmem:[%s187 + $0x2a0] sm:$0xff]
        %v364 = vld [vmem:[%s187 + $0x2a8] sm:$0xff]
        %v365 = vld [vmem:[%s187 + $0x2b0] sm:$0xff]
        %v366 = vld [vmem:[%s187 + $0x2b8] sm:$0xff]
        %v367 = vld [vmem:[%s187 + $0x2c0] sm:$0xff]
        %v368 = vld [vmem:[%s187 + $0x2c8] sm:$0xff]
        %v369 = vld [vmem:[%s187 + $0x2d0] sm:$0xff]
        %v370 = vld [vmem:[%s187 + $0x2d8] sm:$0xff]
        %v371 = vld [vmem:[%s187 + $0x2e0] sm:$0xff]
        %v372 = vld [vmem:[%s187 + $0x2e8] sm:$0xff]
        %v373 = vld [vmem:[%s187 + $0x2f0] sm:$0xff]
        %v374 = vld [vmem:[%s187 + $0x2f8] sm:$0xff]
        %v375 = vld [vmem:[%s187 + $0x300] sm:$0xff]
        %v376 = vld [vmem:[%s187 + $0x308] sm:$0xff]
        %v377 = vld [vmem:[%s187 + $0x310] sm:$0xff]
        %v378 = vld [vmem:[%s187 + $0x318] sm:$0xff]
        %v379 = vld [vmem:[%s187 + $0x320] sm:$0xff]
        %v380 = vld [vmem:[%s187 + $0x328] sm:$0xff]
        %v381 = vld [vmem:[%s187 + $0x330] sm:$0xff]
        %v382 = vld [vmem:[%s187 + $0x338] sm:$0xff]
        %v383 = vld [vmem:[%s187 + $0x340] sm:$0xff]
        %v384 = vld [vmem:[%s187 + $0x348] sm:$0xff]
        %v385 = vld [vmem:[%s187 + $0x350] sm:$0xff]
        %v386 = vld [vmem:[%s187 + $0x358] sm:$0xff]
        %v387 = vld [vmem:[%s187 + $0x360] sm:$0xff]
        %v388 = vld [vmem:[%s187 + $0x368] sm:$0xff]
        %v389 = vld [vmem:[%s187 + $0x370] sm:$0xff]
        %v390 = vld [vmem:[%s187 + $0x378] sm:$0xff]
        %v391 = vld [vmem:[%s187 + $0x380] sm:$0xff]
        %v392 = vld [vmem:[%s187 + $0x388] sm:$0xff]
        %v393 = vld [vmem:[%s187 + $0x390] sm:$0xff]
        %v394 = vld [vmem:[%s187 + $0x398] sm:$0xff]
        %v395 = vld [vmem:[%s187 + $0x3a0] sm:$0xff]
        %v396 = vld [vmem:[%s187 + $0x3a8] sm:$0xff]
        %v397 = vld [vmem:[%s187 + $0x3b0] sm:$0xff]
        %v398 = vld [vmem:[%s187 + $0x3b8] sm:$0xff]
        %v399 = vld [vmem:[%s187 + $0x3c0] sm:$0xff]
        %v400 = vld [vmem:[%s187 + $0x3c8] sm:$0xff]
        %v401 = vld [vmem:[%s187 + $0x3d0] sm:$0xff]
        %v402 = vld [vmem:[%s187 + $0x3d8] sm:$0xff]
        %v403 = vld [vmem:[%s187 + $0x3e0] sm:$0xff]
        %v404 = vld [vmem:[%s187 + $0x3e8] sm:$0xff]
        %v405 = vld [vmem:[%s187 + $0x3f0] sm:$0xff]
        %v406 = vld [vmem:[%s187 + $0x3f8] sm:$0xff]
        %v407 = vld [vmem:[%s187 + $0x400] sm:$0xff]
        %v408 = vld [vmem:[%s187 + $0x408] sm:$0xff]
        %v409 = vld [vmem:[%s187 + $0x410] sm:$0xff]
        %v410 = vld [vmem:[%s187 + $0x418] sm:$0xff]
        %v411 = vld [vmem:[%s187 + $0x420] sm:$0xff]
        %v412 = vld [vmem:[%s187 + $0x428] sm:$0xff]
        %v413 = vld [vmem:[%s187 + $0x430] sm:$0xff]
        %v414 = vld [vmem:[%s187 + $0x438] sm:$0xff]
        %v415 = vld [vmem:[%s187 + $0x440] sm:$0xff]
        %v416 = vld [vmem:[%s187 + $0x448] sm:$0xff]
        %v417 = vld [vmem:[%s187 + $0x450] sm:$0xff]
        %v418 = vld [vmem:[%s187 + $0x458] sm:$0xff]
        %v419 = vld [vmem:[%s187 + $0x460] sm:$0xff]
        %v420 = vld [vmem:[%s187 + $0x468] sm:$0xff]
        %v421 = vld [vmem:[%s187 + $0x470] sm:$0xff]
        %v422 = vld [vmem:[%s187 + $0x478] sm:$0xff]
        %v423 = vld [vmem:[%s187 + $0x480] sm:$0xff]
        %v424 = vld [vmem:[%s187 + $0x488] sm:$0xff]
        %v425 = vld [vmem:[%s187 + $0x490] sm:$0xff]
        %v426 = vld [vmem:[%s187 + $0x498] sm:$0xff]
        %v427 = vld [vmem:[%s187 + $0x4a0] sm:$0xff]
        %v428 = vld [vmem:[%s187 + $0x4a8] sm:$0xff]
        %v429 = vld [vmem:[%s187 + $0x4b0] sm:$0xff]
        %v430 = vld [vmem:[%s187 + $0x4b8] sm:$0xff]
        %v431 = vld [vmem:[%s187 + $0x4c0] sm:$0xff]
        %v432 = vld [vmem:[%s187 + $0x4c8] sm:$0xff]
        %v433 = vld [vmem:[%s187 + $0x4d0] sm:$0xff]
        %v434 = vld [vmem:[%s187 + $0x4d8] sm:$0xff]
        %v435 = vld [vmem:[%s187 + $0x4e0] sm:$0xff]
        %v436 = vld [vmem:[%s187 + $0x4e8] sm:$0xff]
        %v437 = vld [vmem:[%s187 + $0x4f0] sm:$0xff]
        %v438 = vld [vmem:[%s187 + $0x4f8] sm:$0xff]
        %v439 = vld [vmem:[%s187 + $0x500] sm:$0xff]
        %v440 = vld [vmem:[%s187 + $0x508] sm:$0xff]
        %v441 = vld [vmem:[%s187 + $0x510] sm:$0xff]
        %v442 = vld [vmem:[%s187 + $0x518] sm:$0xff]
        %v443 = vld [vmem:[%s187 + $0x520] sm:$0xff]
        %v444 = vld [vmem:[%s187 + $0x528] sm:$0xff]
        %v445 = vld [vmem:[%s187 + $0x530] sm:$0xff]
        %v446 = vld [vmem:[%s187 + $0x538] sm:$0xff]
        %v447 = vld [vmem:[%s187 + $0x540] sm:$0xff]
        %v448 = vld [vmem:[%s187 + $0x548] sm:$0xff]
        %v449 = vld [vmem:[%s187 + $0x550] sm:$0xff]
        %v450 = vld [vmem:[%s187 + $0x558] sm:$0xff]
        %v451 = vld [vmem:[%s187 + $0x560] sm:$0xff]
        %v452 = vld [vmem:[%s187 + $0x568] sm:$0xff]
        %v453 = vld [vmem:[%s187 + $0x570] sm:$0xff]
        %v454 = vld [vmem:[%s187 + $0x578] sm:$0xff]
        %v455 = vld [vmem:[%s187 + $0x580] sm:$0xff]
        %v456 = vld [vmem:[%s187 + $0x588] sm:$0xff]
        %v457 = vld [vmem:[%s187 + $0x590] sm:$0xff]
        %v458 = vld [vmem:[%s187 + $0x598] sm:$0xff]
        %v459 = vld [vmem:[%s187 + $0x5a0] sm:$0xff]
        %v460 = vld [vmem:[%s187 + $0x5a8] sm:$0xff]
        %v461 = vld [vmem:[%s187 + $0x5b0] sm:$0xff]
        %v462 = vld [vmem:[%s187 + $0x5b8] sm:$0xff]
        %v463 = vld [vmem:[%s187 + $0x5c0] sm:$0xff]
        %v464 = vld [vmem:[%s187 + $0x5c8] sm:$0xff]
        %v465 = vld [vmem:[%s187 + $0x5d0] sm:$0xff]
        %v466 = vld [vmem:[%s187 + $0x5d8] sm:$0xff]
        %v467 = vld [vmem:[%s187 + $0x5e0] sm:$0xff]
        %v468 = vld [vmem:[%s187 + $0x5e8] sm:$0xff]
        %v469 = vld [vmem:[%s187 + $0x5f0] sm:$0xff]
        %v470 = vld [vmem:[%s187 + $0x5f8] sm:$0xff]
        %v471 = vld [vmem:[%s187 + $0x600] sm:$0xff]
        %v472 = vld [vmem:[%s187 + $0x608] sm:$0xff]
        %v473 = vld [vmem:[%s187 + $0x610] sm:$0xff]
        %v474 = vld [vmem:[%s187 + $0x618] sm:$0xff]
        %v475 = vld [vmem:[%s187 + $0x620] sm:$0xff]
        %v476 = vld [vmem:[%s187 + $0x628] sm:$0xff]
        %v477 = vld [vmem:[%s187 + $0x630] sm:$0xff]
        %v478 = vld [vmem:[%s187 + $0x638] sm:$0xff]
        %v479 = vld [vmem:[%s187 + $0x640] sm:$0xff]
        %v480 = vld [vmem:[%s187 + $0x648] sm:$0xff]
        %v481 = vld [vmem:[%s187 + $0x650] sm:$0xff]
        %v482 = vld [vmem:[%s187 + $0x658] sm:$0xff]
        %v483 = vld [vmem:[%s187 + $0x660] sm:$0xff]
        %v484 = vld [vmem:[%s187 + $0x668] sm:$0xff]
        %v485 = vld [vmem:[%s187 + $0x670] sm:$0xff]
        %v486 = vld [vmem:[%s187 + $0x678] sm:$0xff]
        %v487 = vld [vmem:[%s187 + $0x680] sm:$0xff]
        %v488 = vld [vmem:[%s187 + $0x688] sm:$0xff]
        %v489 = vld [vmem:[%s187 + $0x690] sm:$0xff]
        %v490 = vld [vmem:[%s187 + $0x698] sm:$0xff]
        %v491 = vld [vmem:[%s187 + $0x6a0] sm:$0xff]
        %v492 = vld [vmem:[%s187 + $0x6a8] sm:$0xff]
        %v493 = vld [vmem:[%s187 + $0x6b0] sm:$0xff]
        %v494 = vld [vmem:[%s187 + $0x6b8] sm:$0xff]
        %v495 = vld [vmem:[%s187 + $0x6c0] sm:$0xff]
        %v496 = vld [vmem:[%s187 + $0x6c8] sm:$0xff]
        %v497 = vld [vmem:[%s187 + $0x6d0] sm:$0xff]
        %v498 = vld [vmem:[%s187 + $0x6d8] sm:$0xff]
        %v499 = vld [vmem:[%s187 + $0x6e0] sm:$0xff]
        %v500 = vld [vmem:[%s187 + $0x6e8] sm:$0xff]
        %v501 = vld [vmem:[%s187 + $0x6f0] sm:$0xff]
        %v502 = vld [vmem:[%s187 + $0x6f8] sm:$0xff]
        %v503 = vld [vmem:[%s187 + $0x700] sm:$0xff]
        %v504 = vld [vmem:[%s187 + $0x708] sm:$0xff]
        %v505 = vld [vmem:[%s187 + $0x710] sm:$0xff]
        %v506 = vld [vmem:[%s187 + $0x718] sm:$0xff]
        %v507 = vld [vmem:[%s187 + $0x720] sm:$0xff]
        %v508 = vld [vmem:[%s187 + $0x728] sm:$0xff]
        %v509 = vld [vmem:[%s187 + $0x730] sm:$0xff]
        %v510 = vld [vmem:[%s187 + $0x738] sm:$0xff]
        %v511 = vld [vmem:[%s187 + $0x740] sm:$0xff]
        %v512 = vld [vmem:[%s187 + $0x748] sm:$0xff]
        %v513 = vld [vmem:[%s187 + $0x750] sm:$0xff]
        %v514 = vld [vmem:[%s187 + $0x758] sm:$0xff]
        %v515 = vld [vmem:[%s187 + $0x760] sm:$0xff]
        %v516 = vld [vmem:[%s187 + $0x768] sm:$0xff]
        %v517 = vld [vmem:[%s187 + $0x770] sm:$0xff]
        %v518 = vld [vmem:[%s187 + $0x778] sm:$0xff]
        %v519 = vld [vmem:[%s187 + $0x780] sm:$0xff]
        %v520 = vld [vmem:[%s187 + $0x788] sm:$0xff]
        %v521 = vld [vmem:[%s187 + $0x790] sm:$0xff]
        %v522 = vld [vmem:[%s187 + $0x798] sm:$0xff]
        %v523 = vld [vmem:[%s187 + $0x7a0] sm:$0xff]
        %v524 = vld [vmem:[%s187 + $0x7a8] sm:$0xff]
        %v525 = vld [vmem:[%s187 + $0x7b0] sm:$0xff]
        %v526 = vld [vmem:[%s187 + $0x7b8] sm:$0xff]
        %v527 = vld [vmem:[%s187 + $0x7c0] sm:$0xff]
        %v528 = vld [vmem:[%s187 + $0x7c8] sm:$0xff]
        %v529 = vld [vmem:[%s187 + $0x7d0] sm:$0xff]
        %v530 = vld [vmem:[%s187 + $0x7d8] sm:$0xff]
        %v531 = vld [vmem:[%s187 + $0x7e0] sm:$0xff]
        %v532 = vld [vmem:[%s187 + $0x7e8] sm:$0xff]
        %v533 = vld [vmem:[%s187 + $0x7f0] sm:$0xff]
        %v534 = vld [vmem:[%s187 + $0x7f8] sm:$0xff]
        %v535 = vld [vmem:[%s187 + $0x800] sm:$0xff]
        %v536 = vld [vmem:[%s187 + $0x808] sm:$0xff]
        %v537 = vld [vmem:[%s187 + $0x810] sm:$0xff]
        %v538 = vld [vmem:[%s187 + $0x818] sm:$0xff]
        %v539 = vld [vmem:[%s187 + $0x820] sm:$0xff]
        %v540 = vld [vmem:[%s187 + $0x828] sm:$0xff]
        %v541 = vld [vmem:[%s187 + $0x830] sm:$0xff]
        %v542 = vld [vmem:[%s187 + $0x838] sm:$0xff]
        %v543 = vld [vmem:[%s187 + $0x840] sm:$0xff]
        %v544 = vld [vmem:[%s187 + $0x848] sm:$0xff]
        %v545 = vld [vmem:[%s187 + $0x850] sm:$0xff]
        %v546 = vld [vmem:[%s187 + $0x858] sm:$0xff]
        %v547 = vld [vmem:[%s187 + $0x860] sm:$0xff]
        %v548 = vld [vmem:[%s187 + $0x868] sm:$0xff]
        %v549 = vld [vmem:[%s187 + $0x870] sm:$0xff]
        %v550 = vld [vmem:[%s187 + $0x878] sm:$0xff]
        %v551 = vld [vmem:[%s187 + $0x880] sm:$0xff]
        %v552 = vld [vmem:[%s187 + $0x888] sm:$0xff]
        %v553 = vld [vmem:[%s187 + $0x890] sm:$0xff]
        %v554 = vld [vmem:[%s187 + $0x898] sm:$0xff]
        %v555 = vld [vmem:[%s187 + $0x8a0] sm:$0xff]
        %v556 = vld [vmem:[%s187 + $0x8a8] sm:$0xff]
        %v557 = vld [vmem:[%s187 + $0x8b0] sm:$0xff]
        %v558 = vld [vmem:[%s187 + $0x8b8] sm:$0xff]
        %v559 = vld [vmem:[%s187 + $0x8c0] sm:$0xff]
        %v560 = vld [vmem:[%s187 + $0x8c8] sm:$0xff]
        %v561 = vld [vmem:[%s187 + $0x8d0] sm:$0xff]
        %v562 = vld [vmem:[%s187 + $0x8d8] sm:$0xff]
        %v563 = vld [vmem:[%s187 + $0x8e0] sm:$0xff]
        %v564 = vld [vmem:[%s187 + $0x8e8] sm:$0xff]
        %v565 = vld [vmem:[%s187 + $0x8f0] sm:$0xff]
        %v566 = vld [vmem:[%s187 + $0x8f8] sm:$0xff]
        %v567 = vld [vmem:[%s187 + $0x900] sm:$0xff]
        %v568 = vld [vmem:[%s187 + $0x908] sm:$0xff]
        %v569 = vld [vmem:[%s187 + $0x910] sm:$0xff]
        %v570 = vld [vmem:[%s187 + $0x918] sm:$0xff]
        %v571 = vld [vmem:[%s187 + $0x920] sm:$0xff]
        %v572 = vld [vmem:[%s187 + $0x928] sm:$0xff]
        %v573 = vld [vmem:[%s187 + $0x930] sm:$0xff]
        %v574 = vld [vmem:[%s187 + $0x938] sm:$0xff]
        %v575 = vld [vmem:[%s187 + $0x940] sm:$0xff]
        %v576 = vld [vmem:[%s187 + $0x948] sm:$0xff]
        %v577 = vld [vmem:[%s187 + $0x950] sm:$0xff]
        %v578 = vld [vmem:[%s187 + $0x958] sm:$0xff]
        %v579 = vld [vmem:[%s187 + $0x960] sm:$0xff]
        %v580 = vld [vmem:[%s187 + $0x968] sm:$0xff]
        %v581 = vld [vmem:[%s187 + $0x970] sm:$0xff]
        %v582 = vld [vmem:[%s187 + $0x978] sm:$0xff]
        %v583 = vld [vmem:[%s187 + $0x980] sm:$0xff]
        %v584 = vld [vmem:[%s187 + $0x988] sm:$0xff]
        %v585 = vld [vmem:[%s187 + $0x990] sm:$0xff]
        %v586 = vld [vmem:[%s187 + $0x998] sm:$0xff]
        %v587 = vld [vmem:[%s187 + $0x9a0] sm:$0xff]
        %v588 = vld [vmem:[%s187 + $0x9a8] sm:$0xff]
        %v589 = vld [vmem:[%s187 + $0x9b0] sm:$0xff]
        %v590 = vld [vmem:[%s187 + $0x9b8] sm:$0xff]
        %v591 = vld [vmem:[%s187 + $0x9c0] sm:$0xff]
        %v592 = vld [vmem:[%s187 + $0x9c8] sm:$0xff]
        %v593 = vld [vmem:[%s187 + $0x9d0] sm:$0xff]
        %v594 = vld [vmem:[%s187 + $0x9d8] sm:$0xff]
        %v595 = vld [vmem:[%s187 + $0x9e0] sm:$0xff]
        %v596 = vld [vmem:[%s187 + $0x9e8] sm:$0xff]
        %v597 = vld [vmem:[%s187 + $0x9f0] sm:$0xff]
        %v598 = vld [vmem:[%s187 + $0x9f8] sm:$0xff]
        %v599 = vld [vmem:[%s187 + $0xa00] sm:$0xff]
        %v600 = vld [vmem:[%s187 + $0xa08] sm:$0xff]
        %v601 = vld [vmem:[%s187 + $0xa10] sm:$0xff]
        %v602 = vld [vmem:[%s187 + $0xa18] sm:$0xff]
        %v603 = vld [vmem:[%s187 + $0xa20] sm:$0xff]
        %v604 = vld [vmem:[%s187 + $0xa28] sm:$0xff]
        %v605 = vld [vmem:[%s187 + $0xa30] sm:$0xff]
        %v606 = vld [vmem:[%s187 + $0xa38] sm:$0xff]
        %v607 = vld [vmem:[%s187 + $0xa40] sm:$0xff]
        %v608 = vld [vmem:[%s187 + $0xa48] sm:$0xff]
        %v609 = vld [vmem:[%s187 + $0xa50] sm:$0xff]
        %v610 = vld [vmem:[%s187 + $0xa58] sm:$0xff]
        %v611 = vld [vmem:[%s187 + $0xa60] sm:$0xff]
        %v612 = vld [vmem:[%s187 + $0xa68] sm:$0xff]
        %v613 = vld [vmem:[%s187 + $0xa70] sm:$0xff]
        %v614 = vld [vmem:[%s187 + $0xa78] sm:$0xff]
        %v615 = vld [vmem:[%s187 + $0xa80] sm:$0xff]
        %v616 = vld [vmem:[%s187 + $0xa88] sm:$0xff]
        %v617 = vld [vmem:[%s187 + $0xa90] sm:$0xff]
        %v618 = vld [vmem:[%s187 + $0xa98] sm:$0xff]
        %v619 = vld [vmem:[%s187 + $0xaa0] sm:$0xff]
        %v620 = vld [vmem:[%s187 + $0xaa8] sm:$0xff]
        %v621 = vld [vmem:[%s187 + $0xab0] sm:$0xff]
        %v622 = vld [vmem:[%s187 + $0xab8] sm:$0xff]
        %v623 = vld [vmem:[%s187 + $0xac0] sm:$0xff]
        %v624 = vld [vmem:[%s187 + $0xac8] sm:$0xff]
        %v625 = vld [vmem:[%s187 + $0xad0] sm:$0xff]
        %v626 = vld [vmem:[%s187 + $0xad8] sm:$0xff]
        %v627 = vld [vmem:[%s187 + $0xae0] sm:$0xff]
        %v628 = vld [vmem:[%s187 + $0xae8] sm:$0xff]
        %v629 = vld [vmem:[%s187 + $0xaf0] sm:$0xff]
        %v630 = vld [vmem:[%s187 + $0xaf8] sm:$0xff]
        %v631 = vld [vmem:[%s187 + $0xb00] sm:$0xff]
        %v632 = vld [vmem:[%s187 + $0xb08] sm:$0xff]
        %v633 = vld [vmem:[%s187 + $0xb10] sm:$0xff]
        %v634 = vld [vmem:[%s187 + $0xb18] sm:$0xff]
        %v635 = vld [vmem:[%s187 + $0xb20] sm:$0xff]
        %v636 = vld [vmem:[%s187 + $0xb28] sm:$0xff]
        %v637 = vld [vmem:[%s187 + $0xb30] sm:$0xff]
        %v638 = vld [vmem:[%s187 + $0xb38] sm:$0xff]
        %v639 = vld [vmem:[%s187 + $0xb40] sm:$0xff]
        %v640 = vld [vmem:[%s187 + $0xb48] sm:$0xff]
        %v641 = vld [vmem:[%s187 + $0xb50] sm:$0xff]
        %v642 = vld [vmem:[%s187 + $0xb58] sm:$0xff]
        %v643 = vld [vmem:[%s187 + $0xb60] sm:$0xff]
        %v644 = vld [vmem:[%s187 + $0xb68] sm:$0xff]
        %v645 = vld [vmem:[%s187 + $0xb70] sm:$0xff]
        %v646 = vld [vmem:[%s187 + $0xb78] sm:$0xff]
        %v647 = vld [vmem:[%s187 + $0xb80] sm:$0xff]
        %v648 = vld [vmem:[%s187 + $0xb88] sm:$0xff]
        %v649 = vld [vmem:[%s187 + $0xb90] sm:$0xff]
        %v650 = vld [vmem:[%s187 + $0xb98] sm:$0xff]
        %v651 = vld [vmem:[%s187 + $0xba0] sm:$0xff]
        %v652 = vld [vmem:[%s187 + $0xba8] sm:$0xff]
        %v653 = vld [vmem:[%s187 + $0xbb0] sm:$0xff]
        %v654 = vld [vmem:[%s187 + $0xbb8] sm:$0xff]
        %v655 = vld [vmem:[%s187 + $0xbc0] sm:$0xff]
        %v656 = vld [vmem:[%s187 + $0xbc8] sm:$0xff]
        %v657 = vld [vmem:[%s187 + $0xbd0] sm:$0xff]
        %v658 = vld [vmem:[%s187 + $0xbd8] sm:$0xff]
        %v659 = vld [vmem:[%s187 + $0xbe0] sm:$0xff]
        %v660 = vld [vmem:[%s187 + $0xbe8] sm:$0xff]
        %v661 = vld [vmem:[%s187 + $0xbf0] sm:$0xff]
        %v662 = vld [vmem:[%s187 + $0xbf8] sm:$0xff]
        %v663 = vld [vmem:[%s187 + $0xc00] sm:$0xff]
        %v664 = vld [vmem:[%s187 + $0xc08] sm:$0xff]
        %v665 = vld [vmem:[%s187 + $0xc10] sm:$0xff]
        %v666 = vld [vmem:[%s187 + $0xc18] sm:$0xff]
        %v667 = vld [vmem:[%s187 + $0xc20] sm:$0xff]
        %v668 = vld [vmem:[%s187 + $0xc28] sm:$0xff]
        %v669 = vld [vmem:[%s187 + $0xc30] sm:$0xff]
        %v670 = vld [vmem:[%s187 + $0xc38] sm:$0xff]
        %v671 = vld [vmem:[%s187 + $0xc40] sm:$0xff]
        %v672 = vld [vmem:[%s187 + $0xc48] sm:$0xff]
        %v673 = vld [vmem:[%s187 + $0xc50] sm:$0xff]
        %v674 = vld [vmem:[%s187 + $0xc58] sm:$0xff]
        %v675 = vld [vmem:[%s187 + $0xc60] sm:$0xff]
        %v676 = vld [vmem:[%s187 + $0xc68] sm:$0xff]
        %v677 = vld [vmem:[%s187 + $0xc70] sm:$0xff]
        %v678 = vld [vmem:[%s187 + $0xc78] sm:$0xff]
        %v679 = vld [vmem:[%s187 + $0xc80] sm:$0xff]
        %v680 = vld [vmem:[%s187 + $0xc88] sm:$0xff]
        %v681 = vld [vmem:[%s187 + $0xc90] sm:$0xff]
        %v682 = vld [vmem:[%s187 + $0xc98] sm:$0xff]
        %v683 = vld [vmem:[%s187 + $0xca0] sm:$0xff]
        %v684 = vld [vmem:[%s187 + $0xca8] sm:$0xff]
        %v685 = vld [vmem:[%s187 + $0xcb0] sm:$0xff]
        %v686 = vld [vmem:[%s187 + $0xcb8] sm:$0xff]
        %v687 = vld [vmem:[%s187 + $0xcc0] sm:$0xff]
        %v688 = vld [vmem:[%s187 + $0xcc8] sm:$0xff]
        %v689 = vld [vmem:[%s187 + $0xcd0] sm:$0xff]
        %v690 = vld [vmem:[%s187 + $0xcd8] sm:$0xff]
        %v691 = vld [vmem:[%s187 + $0xce0] sm:$0xff]
        %v692 = vld [vmem:[%s187 + $0xce8] sm:$0xff]
        %v693 = vld [vmem:[%s187 + $0xcf0] sm:$0xff]
        %v694 = vld [vmem:[%s187 + $0xcf8] sm:$0xff]
        %v695 = vld [vmem:[%s187 + $0xd00] sm:$0xff]
        %v696 = vld [vmem:[%s187 + $0xd08] sm:$0xff]
        %v697 = vld [vmem:[%s187 + $0xd10] sm:$0xff]
        %v698 = vld [vmem:[%s187 + $0xd18] sm:$0xff]
        %v699 = vld [vmem:[%s187 + $0xd20] sm:$0xff]
        %v700 = vld [vmem:[%s187 + $0xd28] sm:$0xff]
        %v701 = vld [vmem:[%s187 + $0xd30] sm:$0xff]
        %v702 = vld [vmem:[%s187 + $0xd38] sm:$0xff]
        %v703 = vld [vmem:[%s187 + $0xd40] sm:$0xff]
        %v704 = vld [vmem:[%s187 + $0xd48] sm:$0xff]
        %v705 = vld [vmem:[%s187 + $0xd50] sm:$0xff]
        %v706 = vld [vmem:[%s187 + $0xd58] sm:$0xff]
        %v707 = vld [vmem:[%s187 + $0xd60] sm:$0xff]
        %v708 = vld [vmem:[%s187 + $0xd68] sm:$0xff]
        %v709 = vld [vmem:[%s187 + $0xd70] sm:$0xff]
        %v710 = vld [vmem:[%s187 + $0xd78] sm:$0xff]
        %v711 = vld [vmem:[%s187 + $0xd80] sm:$0xff]
        %v712 = vld [vmem:[%s187 + $0xd88] sm:$0xff]
        %v713 = vld [vmem:[%s187 + $0xd90] sm:$0xff]
        %v714 = vld [vmem:[%s187 + $0xd98] sm:$0xff]
        %v715 = vld [vmem:[%s187 + $0xda0] sm:$0xff]
        %v716 = vld [vmem:[%s187 + $0xda8] sm:$0xff]
        %v717 = vld [vmem:[%s187 + $0xdb0] sm:$0xff]
        %v718 = vld [vmem:[%s187 + $0xdb8] sm:$0xff]
        %v719 = vld [vmem:[%s187 + $0xdc0] sm:$0xff]
        %v720 = vld [vmem:[%s187 + $0xdc8] sm:$0xff]
        %v721 = vld [vmem:[%s187 + $0xdd0] sm:$0xff]
        %v722 = vld [vmem:[%s187 + $0xdd8] sm:$0xff]
        %v723 = vld [vmem:[%s187 + $0xde0] sm:$0xff]
        %v724 = vld [vmem:[%s187 + $0xde8] sm:$0xff]
        %v725 = vld [vmem:[%s187 + $0xdf0] sm:$0xff]
        %v726 = vld [vmem:[%s187 + $0xdf8] sm:$0xff]
        %v727 = vld [vmem:[%s187 + $0xe00] sm:$0xff]
        %v728 = vld [vmem:[%s187 + $0xe08] sm:$0xff]
        %v729 = vld [vmem:[%s187 + $0xe10] sm:$0xff]
        %v730 = vld [vmem:[%s187 + $0xe18] sm:$0xff]
        %v731 = vld [vmem:[%s187 + $0xe20] sm:$0xff]
        %v732 = vld [vmem:[%s187 + $0xe28] sm:$0xff]
        %v733 = vld [vmem:[%s187 + $0xe30] sm:$0xff]
        %v734 = vld [vmem:[%s187 + $0xe38] sm:$0xff]
        %v735 = vld [vmem:[%s187 + $0xe40] sm:$0xff]
        %v736 = vld [vmem:[%s187 + $0xe48] sm:$0xff]
        %v737 = vld [vmem:[%s187 + $0xe50] sm:$0xff]
        %v738 = vld [vmem:[%s187 + $0xe58] sm:$0xff]
        %v739 = vld [vmem:[%s187 + $0xe60] sm:$0xff]
        %v740 = vld [vmem:[%s187 + $0xe68] sm:$0xff]
        %v741 = vld [vmem:[%s187 + $0xe70] sm:$0xff]
        %v742 = vld [vmem:[%s187 + $0xe78] sm:$0xff]
        %v743 = vld [vmem:[%s187 + $0xe80] sm:$0xff]
        %v744 = vld [vmem:[%s187 + $0xe88] sm:$0xff]
        %v745 = vld [vmem:[%s187 + $0xe90] sm:$0xff]
        %v746 = vld [vmem:[%s187 + $0xe98] sm:$0xff]
        %v747 = vld [vmem:[%s187 + $0xea0] sm:$0xff]
        %v748 = vld [vmem:[%s187 + $0xea8] sm:$0xff]
        %v749 = vld [vmem:[%s187 + $0xeb0] sm:$0xff]
        %v750 = vld [vmem:[%s187 + $0xeb8] sm:$0xff]
        %v751 = vld [vmem:[%s187 + $0xec0] sm:$0xff]
        %v752 = vld [vmem:[%s187 + $0xec8] sm:$0xff]
        %v753 = vld [vmem:[%s187 + $0xed0] sm:$0xff]
        %v754 = vld [vmem:[%s187 + $0xed8] sm:$0xff]
        %v755 = vld [vmem:[%s187 + $0xee0] sm:$0xff]
        %v756 = vld [vmem:[%s187 + $0xee8] sm:$0xff]
        %v757 = vld [vmem:[%s187 + $0xef0] sm:$0xff]
        %v758 = vld [vmem:[%s187 + $0xef8] sm:$0xff]
        %v759 = vld [vmem:[%s187 + $0xf00] sm:$0xff]
        %v760 = vld [vmem:[%s187 + $0xf08] sm:$0xff]
        %v761 = vld [vmem:[%s187 + $0xf10] sm:$0xff]
        %v762 = vld [vmem:[%s187 + $0xf18] sm:$0xff]
        %v763 = vld [vmem:[%s187 + $0xf20] sm:$0xff]
        %v764 = vld [vmem:[%s187 + $0xf28] sm:$0xff]
        %v765 = vld [vmem:[%s187 + $0xf30] sm:$0xff]
        %v766 = vld [vmem:[%s187 + $0xf38] sm:$0xff]
        %v767 = vld [vmem:[%s187 + $0xf40] sm:$0xff]
        %v768 = vld [vmem:[%s187 + $0xf48] sm:$0xff]
        %v769 = vld [vmem:[%s187 + $0xf50] sm:$0xff]
        %v770 = vld [vmem:[%s187 + $0xf58] sm:$0xff]
        %v771 = vld [vmem:[%s187 + $0xf60] sm:$0xff]
        %v772 = vld [vmem:[%s187 + $0xf68] sm:$0xff]
        %v773 = vld [vmem:[%s187 + $0xf70] sm:$0xff]
        %v774 = vld [vmem:[%s187 + $0xf78] sm:$0xff]
        %v775 = vld [vmem:[%s187 + $0xf80] sm:$0xff]
        %v776 = vld [vmem:[%s187 + $0xf88] sm:$0xff]
        %v777 = vld [vmem:[%s187 + $0xf90] sm:$0xff]
        %v778 = vld [vmem:[%s187 + $0xf98] sm:$0xff]
        %v779 = vld [vmem:[%s187 + $0xfa0] sm:$0xff]
        %v780 = vld [vmem:[%s187 + $0xfa8] sm:$0xff]
        %v781 = vld [vmem:[%s187 + $0xfb0] sm:$0xff]
        %v782 = vld [vmem:[%s187 + $0xfb8] sm:$0xff]
        %v783 = vld [vmem:[%s187 + $0xfc0] sm:$0xff]
        %v784 = vld [vmem:[%s187 + $0xfc8] sm:$0xff]
        %v785 = vld [vmem:[%s187 + $0xfd0] sm:$0xff]
        %v786 = vld [vmem:[%s187 + $0xfd8] sm:$0xff]
        %v787 = vld [vmem:[%s187 + $0xfe0] sm:$0xff]
        %v788 = vld [vmem:[%s187 + $0xfe8] sm:$0xff]
        %v789 = vld [vmem:[%s187 + $0xff0] sm:$0xff]
        %v790 = vld [vmem:[%s187 + $0xff8] sm:$0xff]
        %v791 = vld [vmem:[%s187 + $0x1000] sm:$0xff]
        %v792 = vld [vmem:[%s187 + $0x1008] sm:$0xff]
        %v793 = vld [vmem:[%s187 + $0x1010] sm:$0xff]
        %v794 = vld [vmem:[%s187 + $0x1018] sm:$0xff]
        %v795 = vld [vmem:[%s187 + $0x1020] sm:$0xff]
        %v796 = vld [vmem:[%s187 + $0x1028] sm:$0xff]
        %v797 = vld [vmem:[%s187 + $0x1030] sm:$0xff]
        %v798 = vld [vmem:[%s187 + $0x1038] sm:$0xff]
        %v799 = vld [vmem:[%s187 + $0x1040] sm:$0xff]
        %v800 = vld [vmem:[%s187 + $0x1048] sm:$0xff]
        %v801 = vld [vmem:[%s187 + $0x1050] sm:$0xff]
        %v802 = vld [vmem:[%s187 + $0x1058] sm:$0xff]
        %v803 = vld [vmem:[%s187 + $0x1060] sm:$0xff]
        %v804 = vld [vmem:[%s187 + $0x1068] sm:$0xff]
        %v805 = vld [vmem:[%s187 + $0x1070] sm:$0xff]
        %v806 = vld [vmem:[%s187 + $0x1078] sm:$0xff]
        %v807 = vld [vmem:[%s187 + $0x1080] sm:$0xff]
        %v808 = vld [vmem:[%s187 + $0x1088] sm:$0xff]
        %v809 = vld [vmem:[%s187 + $0x1090] sm:$0xff]
        %v810 = vld [vmem:[%s187 + $0x1098] sm:$0xff]
        %v811 = vld [vmem:[%s187 + $0x10a0] sm:$0xff]
        %v812 = vld [vmem:[%s187 + $0x10a8] sm:$0xff]
        %v813 = vld [vmem:[%s187 + $0x10b0] sm:$0xff]
        %v814 = vld [vmem:[%s187 + $0x10b8] sm:$0xff]
        %v815 = vld [vmem:[%s187 + $0x10c0] sm:$0xff]
        %v816 = vld [vmem:[%s187 + $0x10c8] sm:$0xff]
        %v817 = vld [vmem:[%s187 + $0x10d0] sm:$0xff]
        %v818 = vld [vmem:[%s187 + $0x10d8] sm:$0xff]
        %v819 = vld [vmem:[%s187 + $0x10e0] sm:$0xff]
        %v820 = vld [vmem:[%s187 + $0x10e8] sm:$0xff]
        %v821 = vld [vmem:[%s187 + $0x10f0] sm:$0xff]
        %v822 = vld [vmem:[%s187 + $0x10f8] sm:$0xff]
        %v823 = vld [vmem:[%s187 + $0x1100] sm:$0xff]
        %v824 = vld [vmem:[%s187 + $0x1108] sm:$0xff]
        %v825 = vld [vmem:[%s187 + $0x1110] sm:$0xff]
        %v826 = vld [vmem:[%s187 + $0x1118] sm:$0xff]
        %v827 = vld [vmem:[%s187 + $0x1120] sm:$0xff]
        %v828 = vld [vmem:[%s187 + $0x1128] sm:$0xff]
        %v829 = vld [vmem:[%s187 + $0x1130] sm:$0xff]
        %v830 = vld [vmem:[%s187 + $0x1138] sm:$0xff]
        %v831 = vld [vmem:[%s187 + $0x1140] sm:$0xff]
        %v832 = vld [vmem:[%s187 + $0x1148] sm:$0xff]
        %v833 = vld [vmem:[%s187 + $0x1150] sm:$0xff]
        %v834 = vld [vmem:[%s187 + $0x1158] sm:$0xff]
        %v835 = vld [vmem:[%s187 + $0x1160] sm:$0xff]
        %v836 = vld [vmem:[%s187 + $0x1168] sm:$0xff]
        %v837 = vld [vmem:[%s187 + $0x1170] sm:$0xff]
        %v838 = vld [vmem:[%s187 + $0x1178] sm:$0xff]
        %v839 = vld [vmem:[%s187 + $0x1180] sm:$0xff]
        %v840 = vld [vmem:[%s187 + $0x1188] sm:$0xff]
        %v841 = vld [vmem:[%s187 + $0x1190] sm:$0xff]
        %v842 = vld [vmem:[%s187 + $0x1198] sm:$0xff]
        %v843 = vld [vmem:[%s187 + $0x11a0] sm:$0xff]
        %v844 = vld [vmem:[%s187 + $0x11a8] sm:$0xff]
        %v845 = vld [vmem:[%s187 + $0x11b0] sm:$0xff]
        %v846 = vld [vmem:[%s187 + $0x11b8] sm:$0xff]
        %v847 = vld [vmem:[%s187 + $0x11c0] sm:$0xff]
        %v848 = vld [vmem:[%s187 + $0x11c8] sm:$0xff]
        %v849 = vld [vmem:[%s187 + $0x11d0] sm:$0xff]
        %v850 = vld [vmem:[%s187 + $0x11d8] sm:$0xff]
        %v851 = vld [vmem:[%s187 + $0x11e0] sm:$0xff]
        %v852 = vld [vmem:[%s187 + $0x11e8] sm:$0xff]
        %v853 = vld [vmem:[%s187 + $0x11f0] sm:$0xff]
        %v854 = vld [vmem:[%s187 + $0x11f8] sm:$0xff]
        %v855 = vld [vmem:[%s187 + $0x1200] sm:$0xff]
        %v856 = vld [vmem:[%s187 + $0x1208] sm:$0xff]
        %v857 = vld [vmem:[%s187 + $0x1210] sm:$0xff]
        %v858 = vld [vmem:[%s187 + $0x1218] sm:$0xff]
        %v859 = vld [vmem:[%s187 + $0x1220] sm:$0xff]
        %v860 = vld [vmem:[%s187 + $0x1228] sm:$0xff]
        %v861 = vld [vmem:[%s187 + $0x1230] sm:$0xff]
        %v862 = vld [vmem:[%s187 + $0x1238] sm:$0xff]
        %v863 = vld [vmem:[%s187 + $0x1240] sm:$0xff]
        %v864 = vld [vmem:[%s187 + $0x1248] sm:$0xff]
        %v865 = vld [vmem:[%s187 + $0x1250] sm:$0xff]
        %v866 = vld [vmem:[%s187 + $0x1258] sm:$0xff]
        %v867 = vld [vmem:[%s187 + $0x1260] sm:$0xff]
        %v868 = vld [vmem:[%s187 + $0x1268] sm:$0xff]
        %v869 = vld [vmem:[%s187 + $0x1270] sm:$0xff]
        %v870 = vld [vmem:[%s187 + $0x1278] sm:$0xff]
        %v871 = vld [vmem:[%s187 + $0x1280] sm:$0xff]
        %v872 = vld [vmem:[%s187 + $0x1288] sm:$0xff]
        %v873 = vld [vmem:[%s187 + $0x1290] sm:$0xff]
        %v874 = vld [vmem:[%s187 + $0x1298] sm:$0xff]
        %v875 = vld [vmem:[%s187 + $0x12a0] sm:$0xff]
        %v876 = vld [vmem:[%s187 + $0x12a8] sm:$0xff]
        %v877 = vld [vmem:[%s187 + $0x12b0] sm:$0xff]
        %v878 = vld [vmem:[%s187 + $0x12b8] sm:$0xff]
        %v879 = vld [vmem:[%s187 + $0x12c0] sm:$0xff]
        %v880 = vld [vmem:[%s187 + $0x12c8] sm:$0xff]
        %v881 = vld [vmem:[%s187 + $0x12d0] sm:$0xff]
        %v882 = vld [vmem:[%s187 + $0x12d8] sm:$0xff]
        %v883 = vld [vmem:[%s187 + $0x12e0] sm:$0xff]
        %v884 = vld [vmem:[%s187 + $0x12e8] sm:$0xff]
        %v885 = vld [vmem:[%s187 + $0x12f0] sm:$0xff]
        %v886 = vld [vmem:[%s187 + $0x12f8] sm:$0xff]
        %v887 = vld [vmem:[%s187 + $0x1300] sm:$0xff]
        %v888 = vld [vmem:[%s187 + $0x1308] sm:$0xff]
        %v889 = vld [vmem:[%s187 + $0x1310] sm:$0xff]
        %v890 = vld [vmem:[%s187 + $0x1318] sm:$0xff]
        %v891 = vld [vmem:[%s187 + $0x1320] sm:$0xff]
        %v892 = vld [vmem:[%s187 + $0x1328] sm:$0xff]
        %v893 = vld [vmem:[%s187 + $0x1330] sm:$0xff]
        %v894 = vld [vmem:[%s187 + $0x1338] sm:$0xff]
        %v895 = vld [vmem:[%s187 + $0x1340] sm:$0xff]
        %v896 = vld [vmem:[%s187 + $0x1348] sm:$0xff]
        %v897 = vld [vmem:[%s187 + $0x1350] sm:$0xff]
        %v898 = vld [vmem:[%s187 + $0x1358] sm:$0xff]
        %v899 = vld [vmem:[%s187 + $0x1360] sm:$0xff]
        %v900 = vld [vmem:[%s187 + $0x1368] sm:$0xff]
        %v901 = vld [vmem:[%s187 + $0x1370] sm:$0xff]
        %v902 = vld [vmem:[%s187 + $0x1378] sm:$0xff]
        %v903 = vld [vmem:[%s187 + $0x1380] sm:$0xff]
        %v904 = vld [vmem:[%s187 + $0x1388] sm:$0xff]
        %v905 = vld [vmem:[%s187 + $0x1390] sm:$0xff]
        %v906 = vld [vmem:[%s187 + $0x1398] sm:$0xff]
        %v907 = vld [vmem:[%s187 + $0x13a0] sm:$0xff]
        %v908 = vld [vmem:[%s187 + $0x13a8] sm:$0xff]
        %v909 = vld [vmem:[%s187 + $0x13b0] sm:$0xff]
        %v910 = vld [vmem:[%s187 + $0x13b8] sm:$0xff]
        %v911 = vld [vmem:[%s187 + $0x13c0] sm:$0xff]
        %v912 = vld [vmem:[%s187 + $0x13c8] sm:$0xff]
        %v913 = vld [vmem:[%s187 + $0x13d0] sm:$0xff]
        %v914 = vld [vmem:[%s187 + $0x13d8] sm:$0xff]
        %v915 = vld [vmem:[%s187 + $0x13e0] sm:$0xff]
        %v916 = vld [vmem:[%s187 + $0x13e8] sm:$0xff]
        %v917 = vld [vmem:[%s187 + $0x13f0] sm:$0xff]
        %v918 = vld [vmem:[%s187 + $0x13f8] sm:$0xff]
        %v919 = vld [vmem:[%s187 + $0x1400] sm:$0xff]
        %v920 = vld [vmem:[%s187 + $0x1408] sm:$0xff]
        %v921 = vld [vmem:[%s187 + $0x1410] sm:$0xff]
        %v922 = vld [vmem:[%s187 + $0x1418] sm:$0xff]
        %v923 = vld [vmem:[%s187 + $0x1420] sm:$0xff]
        %v924 = vld [vmem:[%s187 + $0x1428] sm:$0xff]
        %v925 = vld [vmem:[%s187 + $0x1430] sm:$0xff]
        %v926 = vld [vmem:[%s187 + $0x1438] sm:$0xff]
        %v927 = vld [vmem:[%s187 + $0x1440] sm:$0xff]
        %v928 = vld [vmem:[%s187 + $0x1448] sm:$0xff]
        %v929 = vld [vmem:[%s187 + $0x1450] sm:$0xff]
        %v930 = vld [vmem:[%s187 + $0x1458] sm:$0xff]
        %v931 = vld [vmem:[%s187 + $0x1460] sm:$0xff]
        %v932 = vld [vmem:[%s187 + $0x1468] sm:$0xff]
        %v933 = vld [vmem:[%s187 + $0x1470] sm:$0xff]
        %v934 = vld [vmem:[%s187 + $0x1478] sm:$0xff]
        %v935 = vld [vmem:[%s187 + $0x1480] sm:$0xff]
        %v936 = vld [vmem:[%s187 + $0x1488] sm:$0xff]
        %v937 = vld [vmem:[%s187 + $0x1490] sm:$0xff]
        %v938 = vld [vmem:[%s187 + $0x1498] sm:$0xff]
        %v939 = vld [vmem:[%s187 + $0x14a0] sm:$0xff]
        %v940 = vld [vmem:[%s187 + $0x14a8] sm:$0xff]
        %v941 = vld [vmem:[%s187 + $0x14b0] sm:$0xff]
        %v942 = vld [vmem:[%s187 + $0x14b8] sm:$0xff]
        %v943 = vld [vmem:[%s187 + $0x14c0] sm:$0xff]
        %v944 = vld [vmem:[%s187 + $0x14c8] sm:$0xff]
        %v945 = vld [vmem:[%s187 + $0x14d0] sm:$0xff]
        %v946 = vld [vmem:[%s187 + $0x14d8] sm:$0xff]
        %v947 = vld [vmem:[%s187 + $0x14e0] sm:$0xff]
        %v948 = vld [vmem:[%s187 + $0x14e8] sm:$0xff]
        %v949 = vld [vmem:[%s187 + $0x14f0] sm:$0xff]
        %v950 = vld [vmem:[%s187 + $0x14f8] sm:$0xff]
        %v951 = vld [vmem:[%s187 + $0x1500] sm:$0xff]
        %v952 = vld [vmem:[%s187 + $0x1508] sm:$0xff]
        %v953 = vld [vmem:[%s187 + $0x1510] sm:$0xff]
        %v954 = vld [vmem:[%s187 + $0x1518] sm:$0xff]
        %v955 = vld [vmem:[%s187 + $0x1520] sm:$0xff]
        %v956 = vld [vmem:[%s187 + $0x1528] sm:$0xff]
        %v957 = vld [vmem:[%s187 + $0x1530] sm:$0xff]
        %v958 = vld [vmem:[%s187 + $0x1538] sm:$0xff]
        %v959 = vld [vmem:[%s187 + $0x1540] sm:$0xff]
        %v960 = vld [vmem:[%s187 + $0x1548] sm:$0xff]
        %v961 = vld [vmem:[%s187 + $0x1550] sm:$0xff]
        %v962 = vld [vmem:[%s187 + $0x1558] sm:$0xff]
        %v963 = vld [vmem:[%s187 + $0x1560] sm:$0xff]
        %v964 = vld [vmem:[%s187 + $0x1568] sm:$0xff]
        %v965 = vld [vmem:[%s187 + $0x1570] sm:$0xff]
        %v966 = vld [vmem:[%s187 + $0x1578] sm:$0xff]
        %v967 = vld [vmem:[%s187 + $0x1580] sm:$0xff]
        %v968 = vld [vmem:[%s187 + $0x1588] sm:$0xff]
        %v969 = vld [vmem:[%s187 + $0x1590] sm:$0xff]
        %v970 = vld [vmem:[%s187 + $0x1598] sm:$0xff]
        %v971 = vld [vmem:[%s187 + $0x15a0] sm:$0xff]
        %v972 = vld [vmem:[%s187 + $0x15a8] sm:$0xff]
        %v973 = vld [vmem:[%s187 + $0x15b0] sm:$0xff]
        %v974 = vld [vmem:[%s187 + $0x15b8] sm:$0xff]
        %v975 = vld [vmem:[%s187 + $0x15c0] sm:$0xff]
        %v976 = vld [vmem:[%s187 + $0x15c8] sm:$0xff]
        %v977 = vld [vmem:[%s187 + $0x15d0] sm:$0xff]
        %v978 = vld [vmem:[%s187 + $0x15d8] sm:$0xff]
        %v979 = vld [vmem:[%s187 + $0x15e0] sm:$0xff]
        %v980 = vld [vmem:[%s187 + $0x15e8] sm:$0xff]
        %v981 = vld [vmem:[%s187 + $0x15f0] sm:$0xff]
        %v982 = vld [vmem:[%s187 + $0x15f8] sm:$0xff]
        %v983 = vld [vmem:[%s187 + $0x1600] sm:$0xff]
        %v984 = vld [vmem:[%s187 + $0x1608] sm:$0xff]
        %v985 = vld [vmem:[%s187 + $0x1610] sm:$0xff]
        %v986 = vld [vmem:[%s187 + $0x1618] sm:$0xff]
        %v987 = vld [vmem:[%s187 + $0x1620] sm:$0xff]
        %v988 = vld [vmem:[%s187 + $0x1628] sm:$0xff]
        %v989 = vld [vmem:[%s187 + $0x1630] sm:$0xff]
        %v990 = vld [vmem:[%s187 + $0x1638] sm:$0xff]
        %v991 = vld [vmem:[%s187 + $0x1640] sm:$0xff]
        %v992 = vld [vmem:[%s187 + $0x1648] sm:$0xff]
        %v993 = vld [vmem:[%s187 + $0x1650] sm:$0xff]
        %v994 = vld [vmem:[%s187 + $0x1658] sm:$0xff]
        %v995 = vld [vmem:[%s187 + $0x1660] sm:$0xff]
        %v996 = vld [vmem:[%s187 + $0x1668] sm:$0xff]
        %v997 = vld [vmem:[%s187 + $0x1670] sm:$0xff]
        %v998 = vld [vmem:[%s187 + $0x1678] sm:$0xff]
        %v999 = vld [vmem:[%s187 + $0x1680] sm:$0xff]
        %v1000 = vld [vmem:[%s187 + $0x1688] sm:$0xff]
        %v1001 = vld [vmem:[%s187 + $0x1690] sm:$0xff]
        %v1002 = vld [vmem:[%s187 + $0x1698] sm:$0xff]
        %v1003 = vld [vmem:[%s187 + $0x16a0] sm:$0xff]
        %v1004 = vld [vmem:[%s187 + $0x16a8] sm:$0xff]
        %v1005 = vld [vmem:[%s187 + $0x16b0] sm:$0xff]
        %v1006 = vld [vmem:[%s187 + $0x16b8] sm:$0xff]
        %v1007 = vld [vmem:[%s187 + $0x16c0] sm:$0xff]
        %v1008 = vld [vmem:[%s187 + $0x16c8] sm:$0xff]
        %v1009 = vld [vmem:[%s187 + $0x16d0] sm:$0xff]
        %v1010 = vld [vmem:[%s187 + $0x16d8] sm:$0xff]
        %v1011 = vld [vmem:[%s187 + $0x16e0] sm:$0xff]
        %v1012 = vld [vmem:[%s187 + $0x16e8] sm:$0xff]
        %v1013 = vld [vmem:[%s187 + $0x16f0] sm:$0xff]
        %v1014 = vld [vmem:[%s187 + $0x16f8] sm:$0xff]
        %v1015 = vld [vmem:[%s196] sm:$0xf]
        %v1017 = vlaneseq
        %v1018 = vshrl.u32 %v1017, 7
        %v1019 = vsub.s32 0, %v1018
        %v1020 = vrot.slane %v1015, %v1019
        %v1021 = vlaneseq
        %v1022 = vshrl.u32 %v1021, 7
        %v1023 = vsub.s32 1, %v1022
        %v1024 = vrot.slane %v1015, %v1023
        %v1025 = vlaneseq
        %v1026 = vshrl.u32 %v1025, 7
        %v1027 = vsub.s32 2, %v1026
        %v1028 = vrot.slane %v1015, %v1027
        %v1029 = vlaneseq
        %v1030 = vshrl.u32 %v1029, 7
        %v1031 = vsub.s32 3, %v1030
        %v1032 = vrot.slane %v1015, %v1031
        %v1773 = vunpack.c.l.b16 %v279
        %v1774 = vunpack.c.h.b16 %v279
        %v1775 = vunpack.c.l.b16 %v280
        %v1776 = vunpack.c.h.b16 %v280
        %v1777 = vunpack.c.l.b16 %v281
        %v1778 = vunpack.c.h.b16 %v281
        %v1779 = vunpack.c.l.b16 %v282
        %v1780 = vunpack.c.h.b16 %v282
        %v1781 = vunpack.c.l.b16 %v283
        %v1782 = vunpack.c.h.b16 %v283
        %v1783 = vunpack.c.l.b16 %v284
        %v1784 = vunpack.c.h.b16 %v284
        %v1785 = vunpack.c.l.b16 %v285
        %v1786 = vunpack.c.h.b16 %v285
        %v1787 = vunpack.c.l.b16 %v286
        %v1788 = vunpack.c.h.b16 %v286
        %v1789 = vunpack.c.l.b16 %v287
        %v1790 = vunpack.c.h.b16 %v287
        %v1791 = vunpack.c.l.b16 %v288
        %v1792 = vunpack.c.h.b16 %v288
        %v1793 = vunpack.c.l.b16 %v289
        %v1794 = vunpack.c.h.b16 %v289
        %v1795 = vunpack.c.l.b16 %v290
        %v1796 = vunpack.c.h.b16 %v290
        %v1797 = vunpack.c.l.b16 %v291
        %v1798 = vunpack.c.h.b16 %v291
        %v1799 = vunpack.c.l.b16 %v292
        %v1800 = vunpack.c.h.b16 %v292
        %v1801 = vunpack.c.l.b16 %v293
        %v1802 = vunpack.c.h.b16 %v293
        %v1803 = vunpack.c.l.b16 %v294
        %v1804 = vunpack.c.h.b16 %v294
        %v1805 = vunpack.c.l.b16 %v295
        %v1806 = vunpack.c.h.b16 %v295
        %v1807 = vunpack.c.l.b16 %v296
        %v1808 = vunpack.c.h.b16 %v296
        %v1809 = vunpack.c.l.b16 %v297
        %v1810 = vunpack.c.h.b16 %v297
        %v1811 = vunpack.c.l.b16 %v298
        %v1812 = vunpack.c.h.b16 %v298
        %v1813 = vunpack.c.l.b16 %v299
        %v1814 = vunpack.c.h.b16 %v299
        %v1815 = vunpack.c.l.b16 %v300
        %v1816 = vunpack.c.h.b16 %v300
        %v1817 = vunpack.c.l.b16 %v301
        %v1818 = vunpack.c.h.b16 %v301
        %v1819 = vunpack.c.l.b16 %v302
        %v1820 = vunpack.c.h.b16 %v302
        %v1821 = vunpack.c.l.b16 %v303
        %v1822 = vunpack.c.h.b16 %v303
        %v1823 = vunpack.c.l.b16 %v304
        %v1824 = vunpack.c.h.b16 %v304
        %v1825 = vunpack.c.l.b16 %v305
        %v1826 = vunpack.c.h.b16 %v305
        %v1827 = vunpack.c.l.b16 %v306
        %v1828 = vunpack.c.h.b16 %v306
        %v1829 = vunpack.c.l.b16 %v307
        %v1830 = vunpack.c.h.b16 %v307
        %v1831 = vunpack.c.l.b16 %v308
        %v1832 = vunpack.c.h.b16 %v308
        %v1833 = vunpack.c.l.b16 %v309
        %v1834 = vunpack.c.h.b16 %v309
        %v1835 = vunpack.c.l.b16 %v310
        %v1836 = vunpack.c.h.b16 %v310
        %v1837 = vunpack.c.l.b16 %v311
        %v1838 = vunpack.c.h.b16 %v311
        %v1839 = vunpack.c.l.b16 %v312
        %v1840 = vunpack.c.h.b16 %v312
        %v1841 = vunpack.c.l.b16 %v313
        %v1842 = vunpack.c.h.b16 %v313
        %v1843 = vunpack.c.l.b16 %v314
        %v1844 = vunpack.c.h.b16 %v314
        %v1845 = vunpack.c.l.b16 %v315
        %v1846 = vunpack.c.h.b16 %v315
        %v1847 = vunpack.c.l.b16 %v316
        %v1848 = vunpack.c.h.b16 %v316
        %v1849 = vunpack.c.l.b16 %v317
        %v1850 = vunpack.c.h.b16 %v317
        %v1851 = vunpack.c.l.b16 %v318
        %v1852 = vunpack.c.h.b16 %v318
        %v1853 = vunpack.c.l.b16 %v319
        %v1854 = vunpack.c.h.b16 %v319
        %v1855 = vunpack.c.l.b16 %v320
        %v1856 = vunpack.c.h.b16 %v320
        %v1857 = vunpack.c.l.b16 %v321
        %v1858 = vunpack.c.h.b16 %v321
        %v1859 = vunpack.c.l.b16 %v322
        %v1860 = vunpack.c.h.b16 %v322
        %v1861 = vunpack.c.l.b16 %v323
        %v1862 = vunpack.c.h.b16 %v323
        %v1863 = vunpack.c.l.b16 %v324
        %v1864 = vunpack.c.h.b16 %v324
        %v1865 = vunpack.c.l.b16 %v325
        %v1866 = vunpack.c.h.b16 %v325
        %v1867 = vunpack.c.l.b16 %v326
        %v1868 = vunpack.c.h.b16 %v326
        %v1869 = vunpack.c.l.b16 %v327
        %v1870 = vunpack.c.h.b16 %v327
        %v1871 = vunpack.c.l.b16 %v328
        %v1872 = vunpack.c.h.b16 %v328
        %v1873 = vunpack.c.l.b16 %v329
        %v1874 = vunpack.c.h.b16 %v329
        %v1875 = vunpack.c.l.b16 %v330
        %v1876 = vunpack.c.h.b16 %v330
        %v1877 = vunpack.c.l.b16 %v331
        %v1878 = vunpack.c.h.b16 %v331
        %v1879 = vunpack.c.l.b16 %v332
        %v1880 = vunpack.c.h.b16 %v332
        %v1881 = vunpack.c.l.b16 %v333
        %v1882 = vunpack.c.h.b16 %v333
        %v1883 = vunpack.c.l.b16 %v334
        %v1884 = vunpack.c.h.b16 %v334
        %v1885 = vunpack.c.l.b16 %v335
        %v1886 = vunpack.c.h.b16 %v335
        %v1887 = vunpack.c.l.b16 %v336
        %v1888 = vunpack.c.h.b16 %v336
        %v1889 = vunpack.c.l.b16 %v337
        %v1890 = vunpack.c.h.b16 %v337
        %v1891 = vunpack.c.l.b16 %v338
        %v1892 = vunpack.c.h.b16 %v338
        %v1893 = vunpack.c.l.b16 %v339
        %v1894 = vunpack.c.h.b16 %v339
        %v1895 = vunpack.c.l.b16 %v340
        %v1896 = vunpack.c.h.b16 %v340
        %v1897 = vunpack.c.l.b16 %v341
        %v1898 = vunpack.c.h.b16 %v341
        %v1899 = vunpack.c.l.b16 %v342
        %v1900 = vunpack.c.h.b16 %v342
        %v1901 = vunpack.c.l.b16 %v343
        %v1902 = vunpack.c.h.b16 %v343
        %v1903 = vunpack.c.l.b16 %v344
        %v1904 = vunpack.c.h.b16 %v344
        %v1905 = vunpack.c.l.b16 %v345
        %v1906 = vunpack.c.h.b16 %v345
        %v1907 = vunpack.c.l.b16 %v346
        %v1908 = vunpack.c.h.b16 %v346
        %v1909 = vunpack.c.l.b16 %v347
        %v1910 = vunpack.c.h.b16 %v347
        %v1911 = vunpack.c.l.b16 %v348
        %v1912 = vunpack.c.h.b16 %v348
        %v1913 = vunpack.c.l.b16 %v349
        %v1914 = vunpack.c.h.b16 %v349
        %v1915 = vunpack.c.l.b16 %v350
        %v1916 = vunpack.c.h.b16 %v350
        %v1917 = vunpack.c.l.b16 %v351
        %v1918 = vunpack.c.h.b16 %v351
        %v1919 = vunpack.c.l.b16 %v352
        %v1920 = vunpack.c.h.b16 %v352
        %v1921 = vunpack.c.l.b16 %v353
        %v1922 = vunpack.c.h.b16 %v353
        %v1923 = vunpack.c.l.b16 %v354
        %v1924 = vunpack.c.h.b16 %v354
        %v1925 = vunpack.c.l.b16 %v355
        %v1926 = vunpack.c.h.b16 %v355
        %v1927 = vunpack.c.l.b16 %v356
        %v1928 = vunpack.c.h.b16 %v356
        %v1929 = vunpack.c.l.b16 %v357
        %v1930 = vunpack.c.h.b16 %v357
        %v1931 = vunpack.c.l.b16 %v358
        %v1932 = vunpack.c.h.b16 %v358
        %v1933 = vunpack.c.l.b16 %v359
        %v1934 = vunpack.c.h.b16 %v359
        %v1935 = vunpack.c.l.b16 %v360
        %v1936 = vunpack.c.h.b16 %v360
        %v1937 = vunpack.c.l.b16 %v361
        %v1938 = vunpack.c.h.b16 %v361
        %v1939 = vunpack.c.l.b16 %v362
        %v1940 = vunpack.c.h.b16 %v362
        %v1941 = vunpack.c.l.b16 %v363
        %v1942 = vunpack.c.h.b16 %v363
        %v1943 = vunpack.c.l.b16 %v364
        %v1944 = vunpack.c.h.b16 %v364
        %v1945 = vunpack.c.l.b16 %v365
        %v1946 = vunpack.c.h.b16 %v365
        %v1947 = vunpack.c.l.b16 %v366
        %v1948 = vunpack.c.h.b16 %v366
        %v1949 = vunpack.c.l.b16 %v367
        %v1950 = vunpack.c.h.b16 %v367
        %v1951 = vunpack.c.l.b16 %v368
        %v1952 = vunpack.c.h.b16 %v368
        %v1953 = vunpack.c.l.b16 %v369
        %v1954 = vunpack.c.h.b16 %v369
        %v1955 = vunpack.c.l.b16 %v370
        %v1956 = vunpack.c.h.b16 %v370
        %v1957 = vunpack.c.l.b16 %v371
        %v1958 = vunpack.c.h.b16 %v371
        %v1959 = vunpack.c.l.b16 %v372
        %v1960 = vunpack.c.h.b16 %v372
        %v1961 = vunpack.c.l.b16 %v373
        %v1962 = vunpack.c.h.b16 %v373
        %v1963 = vunpack.c.l.b16 %v374
        %v1964 = vunpack.c.h.b16 %v374
        %v1965 = vunpack.c.l.b16 %v375
        %v1966 = vunpack.c.h.b16 %v375
        %v1967 = vunpack.c.l.b16 %v376
        %v1968 = vunpack.c.h.b16 %v376
        %v1969 = vunpack.c.l.b16 %v377
        %v1970 = vunpack.c.h.b16 %v377
        %v1971 = vunpack.c.l.b16 %v378
        %v1972 = vunpack.c.h.b16 %v378
        %v1973 = vunpack.c.l.b16 %v379
        %v1974 = vunpack.c.h.b16 %v379
        %v1975 = vunpack.c.l.b16 %v380
        %v1976 = vunpack.c.h.b16 %v380
        %v1977 = vunpack.c.l.b16 %v381
        %v1978 = vunpack.c.h.b16 %v381
        %v1979 = vunpack.c.l.b16 %v382
        %v1980 = vunpack.c.h.b16 %v382
        %v1981 = vunpack.c.l.b16 %v383
        %v1982 = vunpack.c.h.b16 %v383
        %v1983 = vunpack.c.l.b16 %v384
        %v1984 = vunpack.c.h.b16 %v384
        %v1985 = vunpack.c.l.b16 %v385
        %v1986 = vunpack.c.h.b16 %v385
        %v1987 = vunpack.c.l.b16 %v386
        %v1988 = vunpack.c.h.b16 %v386
        %v1989 = vunpack.c.l.b16 %v387
        %v1990 = vunpack.c.h.b16 %v387
        %v1991 = vunpack.c.l.b16 %v388
        %v1992 = vunpack.c.h.b16 %v388
        %v1993 = vunpack.c.l.b16 %v389
        %v1994 = vunpack.c.h.b16 %v389
        %v1995 = vunpack.c.l.b16 %v390
        %v1996 = vunpack.c.h.b16 %v390
        %v1997 = vunpack.c.l.b16 %v391
        %v1998 = vunpack.c.h.b16 %v391
        %v1999 = vunpack.c.l.b16 %v392
        %v2000 = vunpack.c.h.b16 %v392
        %v2001 = vunpack.c.l.b16 %v393
        %v2002 = vunpack.c.h.b16 %v393
        %v2003 = vunpack.c.l.b16 %v394
        %v2004 = vunpack.c.h.b16 %v394
        %v2005 = vunpack.c.l.b16 %v395
        %v2006 = vunpack.c.h.b16 %v395
        %v2007 = vunpack.c.l.b16 %v396
        %v2008 = vunpack.c.h.b16 %v396
        %v2009 = vunpack.c.l.b16 %v397
        %v2010 = vunpack.c.h.b16 %v397
        %v2011 = vunpack.c.l.b16 %v398
        %v2012 = vunpack.c.h.b16 %v398
        %v2013 = vunpack.c.l.b16 %v399
        %v2014 = vunpack.c.h.b16 %v399
        %v2015 = vunpack.c.l.b16 %v400
        %v2016 = vunpack.c.h.b16 %v400
        %v2017 = vunpack.c.l.b16 %v401
        %v2018 = vunpack.c.h.b16 %v401
        %v2019 = vunpack.c.l.b16 %v402
        %v2020 = vunpack.c.h.b16 %v402
        %v2021 = vunpack.c.l.b16 %v403
        %v2022 = vunpack.c.h.b16 %v403
        %v2023 = vunpack.c.l.b16 %v404
        %v2024 = vunpack.c.h.b16 %v404
        %v2025 = vunpack.c.l.b16 %v405
        %v2026 = vunpack.c.h.b16 %v405
        %v2027 = vunpack.c.l.b16 %v406
        %v2028 = vunpack.c.h.b16 %v406
        %v2029 = vunpack.c.l.b16 %v407
        %v2030 = vunpack.c.h.b16 %v407
        %v2031 = vunpack.c.l.b16 %v408
        %v2032 = vunpack.c.h.b16 %v408
        %v2033 = vunpack.c.l.b16 %v409
        %v2034 = vunpack.c.h.b16 %v409
        %v2035 = vunpack.c.l.b16 %v410
        %v2036 = vunpack.c.h.b16 %v410
        %v2037 = vunpack.c.l.b16 %v411
        %v2038 = vunpack.c.h.b16 %v411
        %v2039 = vunpack.c.l.b16 %v412
        %v2040 = vunpack.c.h.b16 %v412
        %v2041 = vunpack.c.l.b16 %v413
        %v2042 = vunpack.c.h.b16 %v413
        %v2043 = vunpack.c.l.b16 %v414
        %v2044 = vunpack.c.h.b16 %v414
        %v2045 = vunpack.c.l.b16 %v415
        %v2046 = vunpack.c.h.b16 %v415
        %v2047 = vunpack.c.l.b16 %v416
        %v2048 = vunpack.c.h.b16 %v416
        %v2049 = vunpack.c.l.b16 %v417
        %v2050 = vunpack.c.h.b16 %v417
        %v2051 = vunpack.c.l.b16 %v418
        %v2052 = vunpack.c.h.b16 %v418
        %v2053 = vunpack.c.l.b16 %v419
        %v2054 = vunpack.c.h.b16 %v419
        %v2055 = vunpack.c.l.b16 %v420
        %v2056 = vunpack.c.h.b16 %v420
        %v2057 = vunpack.c.l.b16 %v421
        %v2058 = vunpack.c.h.b16 %v421
        %v2059 = vunpack.c.l.b16 %v422
        %v2060 = vunpack.c.h.b16 %v422
        %v2061 = vunpack.c.l.b16 %v423
        %v2062 = vunpack.c.h.b16 %v423
        %v2063 = vunpack.c.l.b16 %v424
        %v2064 = vunpack.c.h.b16 %v424
        %v2065 = vunpack.c.l.b16 %v425
        %v2066 = vunpack.c.h.b16 %v425
        %v2067 = vunpack.c.l.b16 %v426
        %v2068 = vunpack.c.h.b16 %v426
        %v2069 = vunpack.c.l.b16 %v427
        %v2070 = vunpack.c.h.b16 %v427
        %v2071 = vunpack.c.l.b16 %v428
        %v2072 = vunpack.c.h.b16 %v428
        %v2073 = vunpack.c.l.b16 %v429
        %v2074 = vunpack.c.h.b16 %v429
        %v2075 = vunpack.c.l.b16 %v430
        %v2076 = vunpack.c.h.b16 %v430
        %v2077 = vunpack.c.l.b16 %v431
        %v2078 = vunpack.c.h.b16 %v431
        %v2079 = vunpack.c.l.b16 %v432
        %v2080 = vunpack.c.h.b16 %v432
        %v2081 = vunpack.c.l.b16 %v433
        %v2082 = vunpack.c.h.b16 %v433
        %v2083 = vunpack.c.l.b16 %v434
        %v2084 = vunpack.c.h.b16 %v434
        %v2085 = vunpack.c.l.b16 %v435
        %v2086 = vunpack.c.h.b16 %v435
        %v2087 = vunpack.c.l.b16 %v436
        %v2088 = vunpack.c.h.b16 %v436
        %v2089 = vunpack.c.l.b16 %v437
        %v2090 = vunpack.c.h.b16 %v437
        %v2091 = vunpack.c.l.b16 %v438
        %v2092 = vunpack.c.h.b16 %v438
        %v2093 = vunpack.c.l.b16 %v439
        %v2094 = vunpack.c.h.b16 %v439
        %v2095 = vunpack.c.l.b16 %v440
        %v2096 = vunpack.c.h.b16 %v440
        %v2097 = vunpack.c.l.b16 %v441
        %v2098 = vunpack.c.h.b16 %v441
        %v2099 = vunpack.c.l.b16 %v442
        %v2100 = vunpack.c.h.b16 %v442
        %v2101 = vunpack.c.l.b16 %v443
        %v2102 = vunpack.c.h.b16 %v443
        %v2103 = vunpack.c.l.b16 %v444
        %v2104 = vunpack.c.h.b16 %v444
        %v2105 = vunpack.c.l.b16 %v445
        %v2106 = vunpack.c.h.b16 %v445
        %v2107 = vunpack.c.l.b16 %v446
        %v2108 = vunpack.c.h.b16 %v446
        %v2109 = vunpack.c.l.b16 %v447
        %v2110 = vunpack.c.h.b16 %v447
        %v2111 = vunpack.c.l.b16 %v448
        %v2112 = vunpack.c.h.b16 %v448
        %v2113 = vunpack.c.l.b16 %v449
        %v2114 = vunpack.c.h.b16 %v449
        %v2115 = vunpack.c.l.b16 %v450
        %v2116 = vunpack.c.h.b16 %v450
        %v2117 = vunpack.c.l.b16 %v451
        %v2118 = vunpack.c.h.b16 %v451
        %v2119 = vunpack.c.l.b16 %v452
        %v2120 = vunpack.c.h.b16 %v452
        %v2121 = vunpack.c.l.b16 %v453
        %v2122 = vunpack.c.h.b16 %v453
        %v2123 = vunpack.c.l.b16 %v454
        %v2124 = vunpack.c.h.b16 %v454
        %v2125 = vunpack.c.l.b16 %v455
        %v2126 = vunpack.c.h.b16 %v455
        %v2127 = vunpack.c.l.b16 %v456
        %v2128 = vunpack.c.h.b16 %v456
        %v2129 = vunpack.c.l.b16 %v457
        %v2130 = vunpack.c.h.b16 %v457
        %v2131 = vunpack.c.l.b16 %v458
        %v2132 = vunpack.c.h.b16 %v458
        %v2133 = vunpack.c.l.b16 %v459
        %v2134 = vunpack.c.h.b16 %v459
        %v2135 = vunpack.c.l.b16 %v460
        %v2136 = vunpack.c.h.b16 %v460
        %v2137 = vunpack.c.l.b16 %v461
        %v2138 = vunpack.c.h.b16 %v461
        %v2139 = vunpack.c.l.b16 %v462
        %v2140 = vunpack.c.h.b16 %v462
        %v2141 = vunpack.c.l.b16 %v463
        %v2142 = vunpack.c.h.b16 %v463
        %v2143 = vunpack.c.l.b16 %v464
        %v2144 = vunpack.c.h.b16 %v464
        %v2145 = vunpack.c.l.b16 %v465
        %v2146 = vunpack.c.h.b16 %v465
        %v2147 = vunpack.c.l.b16 %v466
        %v2148 = vunpack.c.h.b16 %v466
        %v2149 = vunpack.c.l.b16 %v467
        %v2150 = vunpack.c.h.b16 %v467
        %v2151 = vunpack.c.l.b16 %v468
        %v2152 = vunpack.c.h.b16 %v468
        %v2153 = vunpack.c.l.b16 %v469
        %v2154 = vunpack.c.h.b16 %v469
        %v2155 = vunpack.c.l.b16 %v470
        %v2156 = vunpack.c.h.b16 %v470
        %v2157 = vunpack.c.l.b16 %v471
        %v2158 = vunpack.c.h.b16 %v471
        %v2159 = vunpack.c.l.b16 %v472
        %v2160 = vunpack.c.h.b16 %v472
        %v2161 = vunpack.c.l.b16 %v473
        %v2162 = vunpack.c.h.b16 %v473
        %v2163 = vunpack.c.l.b16 %v474
        %v2164 = vunpack.c.h.b16 %v474
        %v2165 = vunpack.c.l.b16 %v475
        %v2166 = vunpack.c.h.b16 %v475
        %v2167 = vunpack.c.l.b16 %v476
        %v2168 = vunpack.c.h.b16 %v476
        %v2169 = vunpack.c.l.b16 %v477
        %v2170 = vunpack.c.h.b16 %v477
        %v2171 = vunpack.c.l.b16 %v478
        %v2172 = vunpack.c.h.b16 %v478
        %v2173 = vunpack.c.l.b16 %v479
        %v2174 = vunpack.c.h.b16 %v479
        %v2175 = vunpack.c.l.b16 %v480
        %v2176 = vunpack.c.h.b16 %v480
        %v2177 = vunpack.c.l.b16 %v481
        %v2178 = vunpack.c.h.b16 %v481
        %v2179 = vunpack.c.l.b16 %v482
        %v2180 = vunpack.c.h.b16 %v482
        %v2181 = vunpack.c.l.b16 %v483
        %v2182 = vunpack.c.h.b16 %v483
        %v2183 = vunpack.c.l.b16 %v484
        %v2184 = vunpack.c.h.b16 %v484
        %v2185 = vunpack.c.l.b16 %v485
        %v2186 = vunpack.c.h.b16 %v485
        %v2187 = vunpack.c.l.b16 %v486
        %v2188 = vunpack.c.h.b16 %v486
        %v2189 = vunpack.c.l.b16 %v487
        %v2190 = vunpack.c.h.b16 %v487
        %v2191 = vunpack.c.l.b16 %v488
        %v2192 = vunpack.c.h.b16 %v488
        %v2193 = vunpack.c.l.b16 %v489
        %v2194 = vunpack.c.h.b16 %v489
        %v2195 = vunpack.c.l.b16 %v490
        %v2196 = vunpack.c.h.b16 %v490
        %v2197 = vunpack.c.l.b16 %v491
        %v2198 = vunpack.c.h.b16 %v491
        %v2199 = vunpack.c.l.b16 %v492
        %v2200 = vunpack.c.h.b16 %v492
        %v2201 = vunpack.c.l.b16 %v493
        %v2202 = vunpack.c.h.b16 %v493
        %v2203 = vunpack.c.l.b16 %v494
        %v2204 = vunpack.c.h.b16 %v494
        %v2205 = vunpack.c.l.b16 %v495
        %v2206 = vunpack.c.h.b16 %v495
        %v2207 = vunpack.c.l.b16 %v496
        %v2208 = vunpack.c.h.b16 %v496
        %v2209 = vunpack.c.l.b16 %v497
        %v2210 = vunpack.c.h.b16 %v497
        %v2211 = vunpack.c.l.b16 %v498
        %v2212 = vunpack.c.h.b16 %v498
        %v2213 = vunpack.c.l.b16 %v499
        %v2214 = vunpack.c.h.b16 %v499
        %v2215 = vunpack.c.l.b16 %v500
        %v2216 = vunpack.c.h.b16 %v500
        %v2217 = vunpack.c.l.b16 %v501
        %v2218 = vunpack.c.h.b16 %v501
        %v2219 = vunpack.c.l.b16 %v502
        %v2220 = vunpack.c.h.b16 %v502
        %v2221 = vunpack.c.l.b16 %v503
        %v2222 = vunpack.c.h.b16 %v503
        %v2223 = vunpack.c.l.b16 %v504
        %v2224 = vunpack.c.h.b16 %v504
        %v2225 = vunpack.c.l.b16 %v505
        %v2226 = vunpack.c.h.b16 %v505
        %v2227 = vunpack.c.l.b16 %v506
        %v2228 = vunpack.c.h.b16 %v506
        %v2229 = vunpack.c.l.b16 %v507
        %v2230 = vunpack.c.h.b16 %v507
        %v2231 = vunpack.c.l.b16 %v508
        %v2232 = vunpack.c.h.b16 %v508
        %v2233 = vunpack.c.l.b16 %v509
        %v2234 = vunpack.c.h.b16 %v509
        %v2235 = vunpack.c.l.b16 %v510
        %v2236 = vunpack.c.h.b16 %v510
        %v2237 = vunpack.c.l.b16 %v511
        %v2238 = vunpack.c.h.b16 %v511
        %v2239 = vunpack.c.l.b16 %v512
        %v2240 = vunpack.c.h.b16 %v512
        %v2241 = vunpack.c.l.b16 %v513
        %v2242 = vunpack.c.h.b16 %v513
        %v2243 = vunpack.c.l.b16 %v514
        %v2244 = vunpack.c.h.b16 %v514
        %v2245 = vunpack.c.l.b16 %v515
        %v2246 = vunpack.c.h.b16 %v515
        %v2247 = vunpack.c.l.b16 %v516
        %v2248 = vunpack.c.h.b16 %v516
        %v2249 = vunpack.c.l.b16 %v517
        %v2250 = vunpack.c.h.b16 %v517
        %v2251 = vunpack.c.l.b16 %v518
        %v2252 = vunpack.c.h.b16 %v518
        %v2253 = vunpack.c.l.b16 %v519
        %v2254 = vunpack.c.h.b16 %v519
        %v2255 = vunpack.c.l.b16 %v520
        %v2256 = vunpack.c.h.b16 %v520
        %v2257 = vunpack.c.l.b16 %v521
        %v2258 = vunpack.c.h.b16 %v521
        %v2259 = vunpack.c.l.b16 %v522
        %v2260 = vunpack.c.h.b16 %v522
        %v2261 = vunpack.c.l.b16 %v523
        %v2262 = vunpack.c.h.b16 %v523
        %v2263 = vunpack.c.l.b16 %v524
        %v2264 = vunpack.c.h.b16 %v524
        %v2265 = vunpack.c.l.b16 %v525
        %v2266 = vunpack.c.h.b16 %v525
        %v2267 = vunpack.c.l.b16 %v526
        %v2268 = vunpack.c.h.b16 %v526
        %v2269 = vunpack.c.l.b16 %v527
        %v2270 = vunpack.c.h.b16 %v527
        %v2271 = vunpack.c.l.b16 %v528
        %v2272 = vunpack.c.h.b16 %v528
        %v2273 = vunpack.c.l.b16 %v529
        %v2274 = vunpack.c.h.b16 %v529
        %v2275 = vunpack.c.l.b16 %v530
        %v2276 = vunpack.c.h.b16 %v530
        %v2277 = vunpack.c.l.b16 %v531
        %v2278 = vunpack.c.h.b16 %v531
        %v2279 = vunpack.c.l.b16 %v532
        %v2280 = vunpack.c.h.b16 %v532
        %v2281 = vunpack.c.l.b16 %v533
        %v2282 = vunpack.c.h.b16 %v533
        %v2283 = vunpack.c.l.b16 %v534
        %v2284 = vunpack.c.h.b16 %v534
        %v2285 = vunpack.c.l.b16 %v535
        %v2286 = vunpack.c.h.b16 %v535
        %v2287 = vunpack.c.l.b16 %v536
        %v2288 = vunpack.c.h.b16 %v536
        %v2289 = vunpack.c.l.b16 %v537
        %v2290 = vunpack.c.h.b16 %v537
        %v2291 = vunpack.c.l.b16 %v538
        %v2292 = vunpack.c.h.b16 %v538
        %v2293 = vunpack.c.l.b16 %v539
        %v2294 = vunpack.c.h.b16 %v539
        %v2295 = vunpack.c.l.b16 %v540
        %v2296 = vunpack.c.h.b16 %v540
        %v2297 = vunpack.c.l.b16 %v541
        %v2298 = vunpack.c.h.b16 %v541
        %v2299 = vunpack.c.l.b16 %v542
        %v2300 = vunpack.c.h.b16 %v542
        %v2301 = vunpack.c.l.b16 %v543
        %v2302 = vunpack.c.h.b16 %v543
        %v2303 = vunpack.c.l.b16 %v544
        %v2304 = vunpack.c.h.b16 %v544
        %v2305 = vunpack.c.l.b16 %v545
        %v2306 = vunpack.c.h.b16 %v545
        %v2307 = vunpack.c.l.b16 %v546
        %v2308 = vunpack.c.h.b16 %v546
        %v2309 = vunpack.c.l.b16 %v547
        %v2310 = vunpack.c.h.b16 %v547
        %v2311 = vunpack.c.l.b16 %v548
        %v2312 = vunpack.c.h.b16 %v548
        %v2313 = vunpack.c.l.b16 %v549
        %v2314 = vunpack.c.h.b16 %v549
        %v2315 = vunpack.c.l.b16 %v550
        %v2316 = vunpack.c.h.b16 %v550
        %v2317 = vunpack.c.l.b16 %v551
        %v2318 = vunpack.c.h.b16 %v551
        %v2319 = vunpack.c.l.b16 %v552
        %v2320 = vunpack.c.h.b16 %v552
        %v2321 = vunpack.c.l.b16 %v553
        %v2322 = vunpack.c.h.b16 %v553
        %v2323 = vunpack.c.l.b16 %v554
        %v2324 = vunpack.c.h.b16 %v554
        %v2325 = vunpack.c.l.b16 %v555
        %v2326 = vunpack.c.h.b16 %v555
        %v2327 = vunpack.c.l.b16 %v556
        %v2328 = vunpack.c.h.b16 %v556
        %v2329 = vunpack.c.l.b16 %v557
        %v2330 = vunpack.c.h.b16 %v557
        %v2331 = vunpack.c.l.b16 %v558
        %v2332 = vunpack.c.h.b16 %v558
        %v2333 = vunpack.c.l.b16 %v559
        %v2334 = vunpack.c.h.b16 %v559
        %v2335 = vunpack.c.l.b16 %v560
        %v2336 = vunpack.c.h.b16 %v560
        %v2337 = vunpack.c.l.b16 %v561
        %v2338 = vunpack.c.h.b16 %v561
        %v2339 = vunpack.c.l.b16 %v562
        %v2340 = vunpack.c.h.b16 %v562
        %v2341 = vunpack.c.l.b16 %v563
        %v2342 = vunpack.c.h.b16 %v563
        %v2343 = vunpack.c.l.b16 %v564
        %v2344 = vunpack.c.h.b16 %v564
        %v2345 = vunpack.c.l.b16 %v565
        %v2346 = vunpack.c.h.b16 %v565
        %v2347 = vunpack.c.l.b16 %v566
        %v2348 = vunpack.c.h.b16 %v566
        %v2349 = vunpack.c.l.b16 %v567
        %v2350 = vunpack.c.h.b16 %v567
        %v2351 = vunpack.c.l.b16 %v568
        %v2352 = vunpack.c.h.b16 %v568
        %v2353 = vunpack.c.l.b16 %v569
        %v2354 = vunpack.c.h.b16 %v569
        %v2355 = vunpack.c.l.b16 %v570
        %v2356 = vunpack.c.h.b16 %v570
        %v2357 = vunpack.c.l.b16 %v571
        %v2358 = vunpack.c.h.b16 %v571
        %v2359 = vunpack.c.l.b16 %v572
        %v2360 = vunpack.c.h.b16 %v572
        %v2361 = vunpack.c.l.b16 %v573
        %v2362 = vunpack.c.h.b16 %v573
        %v2363 = vunpack.c.l.b16 %v574
        %v2364 = vunpack.c.h.b16 %v574
        %v2365 = vunpack.c.l.b16 %v575
        %v2366 = vunpack.c.h.b16 %v575
        %v2367 = vunpack.c.l.b16 %v576
        %v2368 = vunpack.c.h.b16 %v576
        %v2369 = vunpack.c.l.b16 %v577
        %v2370 = vunpack.c.h.b16 %v577
        %v2371 = vunpack.c.l.b16 %v578
        %v2372 = vunpack.c.h.b16 %v578
        %v2373 = vunpack.c.l.b16 %v579
        %v2374 = vunpack.c.h.b16 %v579
        %v2375 = vunpack.c.l.b16 %v580
        %v2376 = vunpack.c.h.b16 %v580
        %v2377 = vunpack.c.l.b16 %v581
        %v2378 = vunpack.c.h.b16 %v581
        %v2379 = vunpack.c.l.b16 %v582
        %v2380 = vunpack.c.h.b16 %v582
        %v2381 = vunpack.c.l.b16 %v583
        %v2382 = vunpack.c.h.b16 %v583
        %v2383 = vunpack.c.l.b16 %v584
        %v2384 = vunpack.c.h.b16 %v584
        %v2385 = vunpack.c.l.b16 %v585
        %v2386 = vunpack.c.h.b16 %v585
        %v2387 = vunpack.c.l.b16 %v586
        %v2388 = vunpack.c.h.b16 %v586
        %v2389 = vunpack.c.l.b16 %v587
        %v2390 = vunpack.c.h.b16 %v587
        %v2391 = vunpack.c.l.b16 %v588
        %v2392 = vunpack.c.h.b16 %v588
        %v2393 = vunpack.c.l.b16 %v589
        %v2394 = vunpack.c.h.b16 %v589
        %v2395 = vunpack.c.l.b16 %v590
        %v2396 = vunpack.c.h.b16 %v590
        %v2397 = vunpack.c.l.b16 %v591
        %v2398 = vunpack.c.h.b16 %v591
        %v2399 = vunpack.c.l.b16 %v592
        %v2400 = vunpack.c.h.b16 %v592
        %v2401 = vunpack.c.l.b16 %v593
        %v2402 = vunpack.c.h.b16 %v593
        %v2403 = vunpack.c.l.b16 %v594
        %v2404 = vunpack.c.h.b16 %v594
        %v2405 = vunpack.c.l.b16 %v595
        %v2406 = vunpack.c.h.b16 %v595
        %v2407 = vunpack.c.l.b16 %v596
        %v2408 = vunpack.c.h.b16 %v596
        %v2409 = vunpack.c.l.b16 %v597
        %v2410 = vunpack.c.h.b16 %v597
        %v2411 = vunpack.c.l.b16 %v598
        %v2412 = vunpack.c.h.b16 %v598
        %v2413 = vunpack.c.l.b16 %v599
        %v2414 = vunpack.c.h.b16 %v599
        %v2415 = vunpack.c.l.b16 %v600
        %v2416 = vunpack.c.h.b16 %v600
        %v2417 = vunpack.c.l.b16 %v601
        %v2418 = vunpack.c.h.b16 %v601
        %v2419 = vunpack.c.l.b16 %v602
        %v2420 = vunpack.c.h.b16 %v602
        %v2421 = vunpack.c.l.b16 %v603
        %v2422 = vunpack.c.h.b16 %v603
        %v2423 = vunpack.c.l.b16 %v604
        %v2424 = vunpack.c.h.b16 %v604
        %v2425 = vunpack.c.l.b16 %v605
        %v2426 = vunpack.c.h.b16 %v605
        %v2427 = vunpack.c.l.b16 %v606
        %v2428 = vunpack.c.h.b16 %v606
        %v2429 = vunpack.c.l.b16 %v607
        %v2430 = vunpack.c.h.b16 %v607
        %v2431 = vunpack.c.l.b16 %v608
        %v2432 = vunpack.c.h.b16 %v608
        %v2433 = vunpack.c.l.b16 %v609
        %v2434 = vunpack.c.h.b16 %v609
        %v2435 = vunpack.c.l.b16 %v610
        %v2436 = vunpack.c.h.b16 %v610
        %v2437 = vunpack.c.l.b16 %v611
        %v2438 = vunpack.c.h.b16 %v611
        %v2439 = vunpack.c.l.b16 %v612
        %v2440 = vunpack.c.h.b16 %v612
        %v2441 = vunpack.c.l.b16 %v613
        %v2442 = vunpack.c.h.b16 %v613
        %v2443 = vunpack.c.l.b16 %v614
        %v2444 = vunpack.c.h.b16 %v614
        %v2445 = vunpack.c.l.b16 %v615
        %v2446 = vunpack.c.h.b16 %v615
        %v2447 = vunpack.c.l.b16 %v616
        %v2448 = vunpack.c.h.b16 %v616
        %v2449 = vunpack.c.l.b16 %v617
        %v2450 = vunpack.c.h.b16 %v617
        %v2451 = vunpack.c.l.b16 %v618
        %v2452 = vunpack.c.h.b16 %v618
        %v2453 = vunpack.c.l.b16 %v619
        %v2454 = vunpack.c.h.b16 %v619
        %v2455 = vunpack.c.l.b16 %v620
        %v2456 = vunpack.c.h.b16 %v620
        %v2457 = vunpack.c.l.b16 %v621
        %v2458 = vunpack.c.h.b16 %v621
        %v2459 = vunpack.c.l.b16 %v622
        %v2460 = vunpack.c.h.b16 %v622
        %v2461 = vunpack.c.l.b16 %v623
        %v2462 = vunpack.c.h.b16 %v623
        %v2463 = vunpack.c.l.b16 %v624
        %v2464 = vunpack.c.h.b16 %v624
        %v2465 = vunpack.c.l.b16 %v625
        %v2466 = vunpack.c.h.b16 %v625
        %v2467 = vunpack.c.l.b16 %v626
        %v2468 = vunpack.c.h.b16 %v626
        %v2469 = vunpack.c.l.b16 %v627
        %v2470 = vunpack.c.h.b16 %v627
        %v2471 = vunpack.c.l.b16 %v628
        %v2472 = vunpack.c.h.b16 %v628
        %v2473 = vunpack.c.l.b16 %v629
        %v2474 = vunpack.c.h.b16 %v629
        %v2475 = vunpack.c.l.b16 %v630
        %v2476 = vunpack.c.h.b16 %v630
        %v2477 = vunpack.c.l.b16 %v631
        %v2478 = vunpack.c.h.b16 %v631
        %v2479 = vunpack.c.l.b16 %v632
        %v2480 = vunpack.c.h.b16 %v632
        %v2481 = vunpack.c.l.b16 %v633
        %v2482 = vunpack.c.h.b16 %v633
        %v2483 = vunpack.c.l.b16 %v634
        %v2484 = vunpack.c.h.b16 %v634
        %v2485 = vunpack.c.l.b16 %v635
        %v2486 = vunpack.c.h.b16 %v635
        %v2487 = vunpack.c.l.b16 %v636
        %v2488 = vunpack.c.h.b16 %v636
        %v2489 = vunpack.c.l.b16 %v637
        %v2490 = vunpack.c.h.b16 %v637
        %v2491 = vunpack.c.l.b16 %v638
        %v2492 = vunpack.c.h.b16 %v638
        %v2493 = vunpack.c.l.b16 %v639
        %v2494 = vunpack.c.h.b16 %v639
        %v2495 = vunpack.c.l.b16 %v640
        %v2496 = vunpack.c.h.b16 %v640
        %v2497 = vunpack.c.l.b16 %v641
        %v2498 = vunpack.c.h.b16 %v641
        %v2499 = vunpack.c.l.b16 %v642
        %v2500 = vunpack.c.h.b16 %v642
        %v2501 = vunpack.c.l.b16 %v643
        %v2502 = vunpack.c.h.b16 %v643
        %v2503 = vunpack.c.l.b16 %v644
        %v2504 = vunpack.c.h.b16 %v644
        %v2505 = vunpack.c.l.b16 %v645
        %v2506 = vunpack.c.h.b16 %v645
        %v2507 = vunpack.c.l.b16 %v646
        %v2508 = vunpack.c.h.b16 %v646
        %v2509 = vunpack.c.l.b16 %v647
        %v2510 = vunpack.c.h.b16 %v647
        %v2511 = vunpack.c.l.b16 %v648
        %v2512 = vunpack.c.h.b16 %v648
        %v2513 = vunpack.c.l.b16 %v649
        %v2514 = vunpack.c.h.b16 %v649
        %v2515 = vunpack.c.l.b16 %v650
        %v2516 = vunpack.c.h.b16 %v650
        %v2517 = vunpack.c.l.b16 %v651
        %v2518 = vunpack.c.h.b16 %v651
        %v2519 = vunpack.c.l.b16 %v652
        %v2520 = vunpack.c.h.b16 %v652
        %v2521 = vunpack.c.l.b16 %v653
        %v2522 = vunpack.c.h.b16 %v653
        %v2523 = vunpack.c.l.b16 %v654
        %v2524 = vunpack.c.h.b16 %v654
        %v2525 = vunpack.c.l.b16 %v655
        %v2526 = vunpack.c.h.b16 %v655
        %v2527 = vunpack.c.l.b16 %v656
        %v2528 = vunpack.c.h.b16 %v656
        %v2529 = vunpack.c.l.b16 %v657
        %v2530 = vunpack.c.h.b16 %v657
        %v2531 = vunpack.c.l.b16 %v658
        %v2532 = vunpack.c.h.b16 %v658
        %v2533 = vunpack.c.l.b16 %v659
        %v2534 = vunpack.c.h.b16 %v659
        %v2535 = vunpack.c.l.b16 %v660
        %v2536 = vunpack.c.h.b16 %v660
        %v2537 = vunpack.c.l.b16 %v661
        %v2538 = vunpack.c.h.b16 %v661
        %v2539 = vunpack.c.l.b16 %v662
        %v2540 = vunpack.c.h.b16 %v662
        %v2541 = vunpack.c.l.b16 %v663
        %v2542 = vunpack.c.h.b16 %v663
        %v2543 = vunpack.c.l.b16 %v664
        %v2544 = vunpack.c.h.b16 %v664
        %v2545 = vunpack.c.l.b16 %v665
        %v2546 = vunpack.c.h.b16 %v665
        %v2547 = vunpack.c.l.b16 %v666
        %v2548 = vunpack.c.h.b16 %v666
        %v2549 = vunpack.c.l.b16 %v667
        %v2550 = vunpack.c.h.b16 %v667
        %v2551 = vunpack.c.l.b16 %v668
        %v2552 = vunpack.c.h.b16 %v668
        %v2553 = vunpack.c.l.b16 %v669
        %v2554 = vunpack.c.h.b16 %v669
        %v2555 = vunpack.c.l.b16 %v670
        %v2556 = vunpack.c.h.b16 %v670
        %v2557 = vunpack.c.l.b16 %v671
        %v2558 = vunpack.c.h.b16 %v671
        %v2559 = vunpack.c.l.b16 %v672
        %v2560 = vunpack.c.h.b16 %v672
        %v2561 = vunpack.c.l.b16 %v673
        %v2562 = vunpack.c.h.b16 %v673
        %v2563 = vunpack.c.l.b16 %v674
        %v2564 = vunpack.c.h.b16 %v674
        %v2565 = vunpack.c.l.b16 %v675
        %v2566 = vunpack.c.h.b16 %v675
        %v2567 = vunpack.c.l.b16 %v676
        %v2568 = vunpack.c.h.b16 %v676
        %v2569 = vunpack.c.l.b16 %v677
        %v2570 = vunpack.c.h.b16 %v677
        %v2571 = vunpack.c.l.b16 %v678
        %v2572 = vunpack.c.h.b16 %v678
        %v2573 = vunpack.c.l.b16 %v679
        %v2574 = vunpack.c.h.b16 %v679
        %v2575 = vunpack.c.l.b16 %v680
        %v2576 = vunpack.c.h.b16 %v680
        %v2577 = vunpack.c.l.b16 %v681
        %v2578 = vunpack.c.h.b16 %v681
        %v2579 = vunpack.c.l.b16 %v682
        %v2580 = vunpack.c.h.b16 %v682
        %v2581 = vunpack.c.l.b16 %v683
        %v2582 = vunpack.c.h.b16 %v683
        %v2583 = vunpack.c.l.b16 %v684
        %v2584 = vunpack.c.h.b16 %v684
        %v2585 = vunpack.c.l.b16 %v685
        %v2586 = vunpack.c.h.b16 %v685
        %v2587 = vunpack.c.l.b16 %v686
        %v2588 = vunpack.c.h.b16 %v686
        %v2589 = vunpack.c.l.b16 %v687
        %v2590 = vunpack.c.h.b16 %v687
        %v2591 = vunpack.c.l.b16 %v688
        %v2592 = vunpack.c.h.b16 %v688
        %v2593 = vunpack.c.l.b16 %v689
        %v2594 = vunpack.c.h.b16 %v689
        %v2595 = vunpack.c.l.b16 %v690
        %v2596 = vunpack.c.h.b16 %v690
        %v2597 = vunpack.c.l.b16 %v691
        %v2598 = vunpack.c.h.b16 %v691
        %v2599 = vunpack.c.l.b16 %v692
        %v2600 = vunpack.c.h.b16 %v692
        %v2601 = vunpack.c.l.b16 %v693
        %v2602 = vunpack.c.h.b16 %v693
        %v2603 = vunpack.c.l.b16 %v694
        %v2604 = vunpack.c.h.b16 %v694
        %v2605 = vunpack.c.l.b16 %v695
        %v2606 = vunpack.c.h.b16 %v695
        %v2607 = vunpack.c.l.b16 %v696
        %v2608 = vunpack.c.h.b16 %v696
        %v2609 = vunpack.c.l.b16 %v697
        %v2610 = vunpack.c.h.b16 %v697
        %v2611 = vunpack.c.l.b16 %v698
        %v2612 = vunpack.c.h.b16 %v698
        %v2613 = vunpack.c.l.b16 %v699
        %v2614 = vunpack.c.h.b16 %v699
        %v2615 = vunpack.c.l.b16 %v700
        %v2616 = vunpack.c.h.b16 %v700
        %v2617 = vunpack.c.l.b16 %v701
        %v2618 = vunpack.c.h.b16 %v701
        %v2619 = vunpack.c.l.b16 %v702
        %v2620 = vunpack.c.h.b16 %v702
        %v2621 = vunpack.c.l.b16 %v703
        %v2622 = vunpack.c.h.b16 %v703
        %v2623 = vunpack.c.l.b16 %v704
        %v2624 = vunpack.c.h.b16 %v704
        %v2625 = vunpack.c.l.b16 %v705
        %v2626 = vunpack.c.h.b16 %v705
        %v2627 = vunpack.c.l.b16 %v706
        %v2628 = vunpack.c.h.b16 %v706
        %v2629 = vunpack.c.l.b16 %v707
        %v2630 = vunpack.c.h.b16 %v707
        %v2631 = vunpack.c.l.b16 %v708
        %v2632 = vunpack.c.h.b16 %v708
        %v2633 = vunpack.c.l.b16 %v709
        %v2634 = vunpack.c.h.b16 %v709
        %v2635 = vunpack.c.l.b16 %v710
        %v2636 = vunpack.c.h.b16 %v710
        %v2637 = vunpack.c.l.b16 %v711
        %v2638 = vunpack.c.h.b16 %v711
        %v2639 = vunpack.c.l.b16 %v712
        %v2640 = vunpack.c.h.b16 %v712
        %v2641 = vunpack.c.l.b16 %v713
        %v2642 = vunpack.c.h.b16 %v713
        %v2643 = vunpack.c.l.b16 %v714
        %v2644 = vunpack.c.h.b16 %v714
        %v2645 = vunpack.c.l.b16 %v715
        %v2646 = vunpack.c.h.b16 %v715
        %v2647 = vunpack.c.l.b16 %v716
        %v2648 = vunpack.c.h.b16 %v716
        %v2649 = vunpack.c.l.b16 %v717
        %v2650 = vunpack.c.h.b16 %v717
        %v2651 = vunpack.c.l.b16 %v718
        %v2652 = vunpack.c.h.b16 %v718
        %v2653 = vunpack.c.l.b16 %v719
        %v2654 = vunpack.c.h.b16 %v719
        %v2655 = vunpack.c.l.b16 %v720
        %v2656 = vunpack.c.h.b16 %v720
        %v2657 = vunpack.c.l.b16 %v721
        %v2658 = vunpack.c.h.b16 %v721
        %v2659 = vunpack.c.l.b16 %v722
        %v2660 = vunpack.c.h.b16 %v722
        %v2661 = vunpack.c.l.b16 %v723
        %v2662 = vunpack.c.h.b16 %v723
        %v2663 = vunpack.c.l.b16 %v724
        %v2664 = vunpack.c.h.b16 %v724
        %v2665 = vunpack.c.l.b16 %v725
        %v2666 = vunpack.c.h.b16 %v725
        %v2667 = vunpack.c.l.b16 %v726
        %v2668 = vunpack.c.h.b16 %v726
        %v2669 = vunpack.c.l.b16 %v727
        %v2670 = vunpack.c.h.b16 %v727
        %v2671 = vunpack.c.l.b16 %v728
        %v2672 = vunpack.c.h.b16 %v728
        %v2673 = vunpack.c.l.b16 %v729
        %v2674 = vunpack.c.h.b16 %v729
        %v2675 = vunpack.c.l.b16 %v730
        %v2676 = vunpack.c.h.b16 %v730
        %v2677 = vunpack.c.l.b16 %v731
        %v2678 = vunpack.c.h.b16 %v731
        %v2679 = vunpack.c.l.b16 %v732
        %v2680 = vunpack.c.h.b16 %v732
        %v2681 = vunpack.c.l.b16 %v733
        %v2682 = vunpack.c.h.b16 %v733
        %v2683 = vunpack.c.l.b16 %v734
        %v2684 = vunpack.c.h.b16 %v734
        %v2685 = vunpack.c.l.b16 %v735
        %v2686 = vunpack.c.h.b16 %v735
        %v2687 = vunpack.c.l.b16 %v736
        %v2688 = vunpack.c.h.b16 %v736
        %v2689 = vunpack.c.l.b16 %v737
        %v2690 = vunpack.c.h.b16 %v737
        %v2691 = vunpack.c.l.b16 %v738
        %v2692 = vunpack.c.h.b16 %v738
        %v2693 = vunpack.c.l.b16 %v739
        %v2694 = vunpack.c.h.b16 %v739
        %v2695 = vunpack.c.l.b16 %v740
        %v2696 = vunpack.c.h.b16 %v740
        %v2697 = vunpack.c.l.b16 %v741
        %v2698 = vunpack.c.h.b16 %v741
        %v2699 = vunpack.c.l.b16 %v742
        %v2700 = vunpack.c.h.b16 %v742
        %v2701 = vunpack.c.l.b16 %v743
        %v2702 = vunpack.c.h.b16 %v743
        %v2703 = vunpack.c.l.b16 %v744
        %v2704 = vunpack.c.h.b16 %v744
        %v2705 = vunpack.c.l.b16 %v745
        %v2706 = vunpack.c.h.b16 %v745
        %v2707 = vunpack.c.l.b16 %v746
        %v2708 = vunpack.c.h.b16 %v746
        %v2709 = vunpack.c.l.b16 %v747
        %v2710 = vunpack.c.h.b16 %v747
        %v2711 = vunpack.c.l.b16 %v748
        %v2712 = vunpack.c.h.b16 %v748
        %v2713 = vunpack.c.l.b16 %v749
        %v2714 = vunpack.c.h.b16 %v749
        %v2715 = vunpack.c.l.b16 %v750
        %v2716 = vunpack.c.h.b16 %v750
        %v2717 = vunpack.c.l.b16 %v751
        %v2718 = vunpack.c.h.b16 %v751
        %v2719 = vunpack.c.l.b16 %v752
        %v2720 = vunpack.c.h.b16 %v752
        %v2721 = vunpack.c.l.b16 %v753
        %v2722 = vunpack.c.h.b16 %v753
        %v2723 = vunpack.c.l.b16 %v754
        %v2724 = vunpack.c.h.b16 %v754
        %v2725 = vunpack.c.l.b16 %v755
        %v2726 = vunpack.c.h.b16 %v755
        %v2727 = vunpack.c.l.b16 %v756
        %v2728 = vunpack.c.h.b16 %v756
        %v2729 = vunpack.c.l.b16 %v757
        %v2730 = vunpack.c.h.b16 %v757
        %v2731 = vunpack.c.l.b16 %v758
        %v2732 = vunpack.c.h.b16 %v758
        %v2733 = vunpack.c.l.b16 %v759
        %v2734 = vunpack.c.h.b16 %v759
        %v2735 = vunpack.c.l.b16 %v760
        %v2736 = vunpack.c.h.b16 %v760
        %v2737 = vunpack.c.l.b16 %v761
        %v2738 = vunpack.c.h.b16 %v761
        %v2739 = vunpack.c.l.b16 %v762
        %v2740 = vunpack.c.h.b16 %v762
        %v2741 = vunpack.c.l.b16 %v763
        %v2742 = vunpack.c.h.b16 %v763
        %v2743 = vunpack.c.l.b16 %v764
        %v2744 = vunpack.c.h.b16 %v764
        %v2745 = vunpack.c.l.b16 %v765
        %v2746 = vunpack.c.h.b16 %v765
        %v2747 = vunpack.c.l.b16 %v766
        %v2748 = vunpack.c.h.b16 %v766
        %v2749 = vunpack.c.l.b16 %v767
        %v2750 = vunpack.c.h.b16 %v767
        %v2751 = vunpack.c.l.b16 %v768
        %v2752 = vunpack.c.h.b16 %v768
        %v2753 = vunpack.c.l.b16 %v769
        %v2754 = vunpack.c.h.b16 %v769
        %v2755 = vunpack.c.l.b16 %v770
        %v2756 = vunpack.c.h.b16 %v770
        %v2757 = vunpack.c.l.b16 %v771
        %v2758 = vunpack.c.h.b16 %v771
        %v2759 = vunpack.c.l.b16 %v772
        %v2760 = vunpack.c.h.b16 %v772
        %v2761 = vunpack.c.l.b16 %v773
        %v2762 = vunpack.c.h.b16 %v773
        %v2763 = vunpack.c.l.b16 %v774
        %v2764 = vunpack.c.h.b16 %v774
        %v2765 = vunpack.c.l.b16 %v775
        %v2766 = vunpack.c.h.b16 %v775
        %v2767 = vunpack.c.l.b16 %v776
        %v2768 = vunpack.c.h.b16 %v776
        %v2769 = vunpack.c.l.b16 %v777
        %v2770 = vunpack.c.h.b16 %v777
        %v2771 = vunpack.c.l.b16 %v778
        %v2772 = vunpack.c.h.b16 %v778
        %v2773 = vunpack.c.l.b16 %v779
        %v2774 = vunpack.c.h.b16 %v779
        %v2775 = vunpack.c.l.b16 %v780
        %v2776 = vunpack.c.h.b16 %v780
        %v2777 = vunpack.c.l.b16 %v781
        %v2778 = vunpack.c.h.b16 %v781
        %v2779 = vunpack.c.l.b16 %v782
        %v2780 = vunpack.c.h.b16 %v782
        %v2781 = vunpack.c.l.b16 %v783
        %v2782 = vunpack.c.h.b16 %v783
        %v2783 = vunpack.c.l.b16 %v784
        %v2784 = vunpack.c.h.b16 %v784
        %v2785 = vunpack.c.l.b16 %v785
        %v2786 = vunpack.c.h.b16 %v785
        %v2787 = vunpack.c.l.b16 %v786
        %v2788 = vunpack.c.h.b16 %v786
        %v2789 = vunpack.c.l.b16 %v787
        %v2790 = vunpack.c.h.b16 %v787
        %v2791 = vunpack.c.l.b16 %v788
        %v2792 = vunpack.c.h.b16 %v788
        %v2793 = vunpack.c.l.b16 %v789
        %v2794 = vunpack.c.h.b16 %v789
        %v2795 = vunpack.c.l.b16 %v790
        %v2796 = vunpack.c.h.b16 %v790
        %v2797 = vunpack.c.l.b16 %v791
        %v2798 = vunpack.c.h.b16 %v791
        %v2799 = vunpack.c.l.b16 %v792
        %v2800 = vunpack.c.h.b16 %v792
        %v2801 = vunpack.c.l.b16 %v793
        %v2802 = vunpack.c.h.b16 %v793
        %v2803 = vunpack.c.l.b16 %v794
        %v2804 = vunpack.c.h.b16 %v794
        %v2805 = vunpack.c.l.b16 %v795
        %v2806 = vunpack.c.h.b16 %v795
        %v2807 = vunpack.c.l.b16 %v796
        %v2808 = vunpack.c.h.b16 %v796
        %v2809 = vunpack.c.l.b16 %v797
        %v2810 = vunpack.c.h.b16 %v797
        %v2811 = vunpack.c.l.b16 %v798
        %v2812 = vunpack.c.h.b16 %v798
        %v2813 = vunpack.c.l.b16 %v799
        %v2814 = vunpack.c.h.b16 %v799
        %v2815 = vunpack.c.l.b16 %v800
        %v2816 = vunpack.c.h.b16 %v800
        %v2817 = vunpack.c.l.b16 %v801
        %v2818 = vunpack.c.h.b16 %v801
        %v2819 = vunpack.c.l.b16 %v802
        %v2820 = vunpack.c.h.b16 %v802
        %v2821 = vunpack.c.l.b16 %v803
        %v2822 = vunpack.c.h.b16 %v803
        %v2823 = vunpack.c.l.b16 %v804
        %v2824 = vunpack.c.h.b16 %v804
        %v2825 = vunpack.c.l.b16 %v805
        %v2826 = vunpack.c.h.b16 %v805
        %v2827 = vunpack.c.l.b16 %v806
        %v2828 = vunpack.c.h.b16 %v806
        %v2829 = vunpack.c.l.b16 %v807
        %v2830 = vunpack.c.h.b16 %v807
        %v2831 = vunpack.c.l.b16 %v808
        %v2832 = vunpack.c.h.b16 %v808
        %v2833 = vunpack.c.l.b16 %v809
        %v2834 = vunpack.c.h.b16 %v809
        %v2835 = vunpack.c.l.b16 %v810
        %v2836 = vunpack.c.h.b16 %v810
        %v2837 = vunpack.c.l.b16 %v811
        %v2838 = vunpack.c.h.b16 %v811
        %v2839 = vunpack.c.l.b16 %v812
        %v2840 = vunpack.c.h.b16 %v812
        %v2841 = vunpack.c.l.b16 %v813
        %v2842 = vunpack.c.h.b16 %v813
        %v2843 = vunpack.c.l.b16 %v814
        %v2844 = vunpack.c.h.b16 %v814
        %v2845 = vunpack.c.l.b16 %v815
        %v2846 = vunpack.c.h.b16 %v815
        %v2847 = vunpack.c.l.b16 %v816
        %v2848 = vunpack.c.h.b16 %v816
        %v2849 = vunpack.c.l.b16 %v817
        %v2850 = vunpack.c.h.b16 %v817
        %v2851 = vunpack.c.l.b16 %v818
        %v2852 = vunpack.c.h.b16 %v818
        %v2853 = vunpack.c.l.b16 %v819
        %v2854 = vunpack.c.h.b16 %v819
        %v2855 = vunpack.c.l.b16 %v820
        %v2856 = vunpack.c.h.b16 %v820
        %v2857 = vunpack.c.l.b16 %v821
        %v2858 = vunpack.c.h.b16 %v821
        %v2859 = vunpack.c.l.b16 %v822
        %v2860 = vunpack.c.h.b16 %v822
        %v2861 = vunpack.c.l.b16 %v823
        %v2862 = vunpack.c.h.b16 %v823
        %v2863 = vunpack.c.l.b16 %v824
        %v2864 = vunpack.c.h.b16 %v824
        %v2865 = vunpack.c.l.b16 %v825
        %v2866 = vunpack.c.h.b16 %v825
        %v2867 = vunpack.c.l.b16 %v826
        %v2868 = vunpack.c.h.b16 %v826
        %v2869 = vunpack.c.l.b16 %v827
        %v2870 = vunpack.c.h.b16 %v827
        %v2871 = vunpack.c.l.b16 %v828
        %v2872 = vunpack.c.h.b16 %v828
        %v2873 = vunpack.c.l.b16 %v829
        %v2874 = vunpack.c.h.b16 %v829
        %v2875 = vunpack.c.l.b16 %v830
        %v2876 = vunpack.c.h.b16 %v830
        %v2877 = vunpack.c.l.b16 %v831
        %v2878 = vunpack.c.h.b16 %v831
        %v2879 = vunpack.c.l.b16 %v832
        %v2880 = vunpack.c.h.b16 %v832
        %v2881 = vunpack.c.l.b16 %v833
        %v2882 = vunpack.c.h.b16 %v833
        %v2883 = vunpack.c.l.b16 %v834
        %v2884 = vunpack.c.h.b16 %v834
        %v2885 = vunpack.c.l.b16 %v835
        %v2886 = vunpack.c.h.b16 %v835
        %v2887 = vunpack.c.l.b16 %v836
        %v2888 = vunpack.c.h.b16 %v836
        %v2889 = vunpack.c.l.b16 %v837
        %v2890 = vunpack.c.h.b16 %v837
        %v2891 = vunpack.c.l.b16 %v838
        %v2892 = vunpack.c.h.b16 %v838
        %v2893 = vunpack.c.l.b16 %v839
        %v2894 = vunpack.c.h.b16 %v839
        %v2895 = vunpack.c.l.b16 %v840
        %v2896 = vunpack.c.h.b16 %v840
        %v2897 = vunpack.c.l.b16 %v841
        %v2898 = vunpack.c.h.b16 %v841
        %v2899 = vunpack.c.l.b16 %v842
        %v2900 = vunpack.c.h.b16 %v842
        %v2901 = vunpack.c.l.b16 %v843
        %v2902 = vunpack.c.h.b16 %v843
        %v2903 = vunpack.c.l.b16 %v844
        %v2904 = vunpack.c.h.b16 %v844
        %v2905 = vunpack.c.l.b16 %v845
        %v2906 = vunpack.c.h.b16 %v845
        %v2907 = vunpack.c.l.b16 %v846
        %v2908 = vunpack.c.h.b16 %v846
        %v2909 = vunpack.c.l.b16 %v847
        %v2910 = vunpack.c.h.b16 %v847
        %v2911 = vunpack.c.l.b16 %v848
        %v2912 = vunpack.c.h.b16 %v848
        %v2913 = vunpack.c.l.b16 %v849
        %v2914 = vunpack.c.h.b16 %v849
        %v2915 = vunpack.c.l.b16 %v850
        %v2916 = vunpack.c.h.b16 %v850
        %v2917 = vunpack.c.l.b16 %v851
        %v2918 = vunpack.c.h.b16 %v851
        %v2919 = vunpack.c.l.b16 %v852
        %v2920 = vunpack.c.h.b16 %v852
        %v2921 = vunpack.c.l.b16 %v853
        %v2922 = vunpack.c.h.b16 %v853
        %v2923 = vunpack.c.l.b16 %v854
        %v2924 = vunpack.c.h.b16 %v854
        %v2925 = vunpack.c.l.b16 %v855
        %v2926 = vunpack.c.h.b16 %v855
        %v2927 = vunpack.c.l.b16 %v856
        %v2928 = vunpack.c.h.b16 %v856
        %v2929 = vunpack.c.l.b16 %v857
        %v2930 = vunpack.c.h.b16 %v857
        %v2931 = vunpack.c.l.b16 %v858
        %v2932 = vunpack.c.h.b16 %v858
        %v2933 = vunpack.c.l.b16 %v859
        %v2934 = vunpack.c.h.b16 %v859
        %v2935 = vunpack.c.l.b16 %v860
        %v2936 = vunpack.c.h.b16 %v860
        %v2937 = vunpack.c.l.b16 %v861
        %v2938 = vunpack.c.h.b16 %v861
        %v2939 = vunpack.c.l.b16 %v862
        %v2940 = vunpack.c.h.b16 %v862
        %v2941 = vunpack.c.l.b16 %v863
        %v2942 = vunpack.c.h.b16 %v863
        %v2943 = vunpack.c.l.b16 %v864
        %v2944 = vunpack.c.h.b16 %v864
        %v2945 = vunpack.c.l.b16 %v865
        %v2946 = vunpack.c.h.b16 %v865
        %v2947 = vunpack.c.l.b16 %v866
        %v2948 = vunpack.c.h.b16 %v866
        %v2949 = vunpack.c.l.b16 %v867
        %v2950 = vunpack.c.h.b16 %v867
        %v2951 = vunpack.c.l.b16 %v868
        %v2952 = vunpack.c.h.b16 %v868
        %v2953 = vunpack.c.l.b16 %v869
        %v2954 = vunpack.c.h.b16 %v869
        %v2955 = vunpack.c.l.b16 %v870
        %v2956 = vunpack.c.h.b16 %v870
        %v2957 = vunpack.c.l.b16 %v871
        %v2958 = vunpack.c.h.b16 %v871
        %v2959 = vunpack.c.l.b16 %v872
        %v2960 = vunpack.c.h.b16 %v872
        %v2961 = vunpack.c.l.b16 %v873
        %v2962 = vunpack.c.h.b16 %v873
        %v2963 = vunpack.c.l.b16 %v874
        %v2964 = vunpack.c.h.b16 %v874
        %v2965 = vunpack.c.l.b16 %v875
        %v2966 = vunpack.c.h.b16 %v875
        %v2967 = vunpack.c.l.b16 %v876
        %v2968 = vunpack.c.h.b16 %v876
        %v2969 = vunpack.c.l.b16 %v877
        %v2970 = vunpack.c.h.b16 %v877
        %v2971 = vunpack.c.l.b16 %v878
        %v2972 = vunpack.c.h.b16 %v878
        %v2973 = vunpack.c.l.b16 %v879
        %v2974 = vunpack.c.h.b16 %v879
        %v2975 = vunpack.c.l.b16 %v880
        %v2976 = vunpack.c.h.b16 %v880
        %v2977 = vunpack.c.l.b16 %v881
        %v2978 = vunpack.c.h.b16 %v881
        %v2979 = vunpack.c.l.b16 %v882
        %v2980 = vunpack.c.h.b16 %v882
        %v2981 = vunpack.c.l.b16 %v883
        %v2982 = vunpack.c.h.b16 %v883
        %v2983 = vunpack.c.l.b16 %v884
        %v2984 = vunpack.c.h.b16 %v884
        %v2985 = vunpack.c.l.b16 %v885
        %v2986 = vunpack.c.h.b16 %v885
        %v2987 = vunpack.c.l.b16 %v886
        %v2988 = vunpack.c.h.b16 %v886
        %v2989 = vunpack.c.l.b16 %v887
        %v2990 = vunpack.c.h.b16 %v887
        %v2991 = vunpack.c.l.b16 %v888
        %v2992 = vunpack.c.h.b16 %v888
        %v2993 = vunpack.c.l.b16 %v889
        %v2994 = vunpack.c.h.b16 %v889
        %v2995 = vunpack.c.l.b16 %v890
        %v2996 = vunpack.c.h.b16 %v890
        %v2997 = vunpack.c.l.b16 %v891
        %v2998 = vunpack.c.h.b16 %v891
        %v2999 = vunpack.c.l.b16 %v892
        %v3000 = vunpack.c.h.b16 %v892
        %v3001 = vunpack.c.l.b16 %v893
        %v3002 = vunpack.c.h.b16 %v893
        %v3003 = vunpack.c.l.b16 %v894
        %v3004 = vunpack.c.h.b16 %v894
        %v3005 = vunpack.c.l.b16 %v895
        %v3006 = vunpack.c.h.b16 %v895
        %v3007 = vunpack.c.l.b16 %v896
        %v3008 = vunpack.c.h.b16 %v896
        %v3009 = vunpack.c.l.b16 %v897
        %v3010 = vunpack.c.h.b16 %v897
        %v3011 = vunpack.c.l.b16 %v898
        %v3012 = vunpack.c.h.b16 %v898
        %v3013 = vunpack.c.l.b16 %v899
        %v3014 = vunpack.c.h.b16 %v899
        %v3015 = vunpack.c.l.b16 %v900
        %v3016 = vunpack.c.h.b16 %v900
        %v3017 = vunpack.c.l.b16 %v901
        %v3018 = vunpack.c.h.b16 %v901
        %v3019 = vunpack.c.l.b16 %v902
        %v3020 = vunpack.c.h.b16 %v902
        %v3021 = vunpack.c.l.b16 %v903
        %v3022 = vunpack.c.h.b16 %v903
        %v3023 = vunpack.c.l.b16 %v904
        %v3024 = vunpack.c.h.b16 %v904
        %v3025 = vunpack.c.l.b16 %v905
        %v3026 = vunpack.c.h.b16 %v905
        %v3027 = vunpack.c.l.b16 %v906
        %v3028 = vunpack.c.h.b16 %v906
        %v3029 = vunpack.c.l.b16 %v907
        %v3030 = vunpack.c.h.b16 %v907
        %v3031 = vunpack.c.l.b16 %v908
        %v3032 = vunpack.c.h.b16 %v908
        %v3033 = vunpack.c.l.b16 %v909
        %v3034 = vunpack.c.h.b16 %v909
        %v3035 = vunpack.c.l.b16 %v910
        %v3036 = vunpack.c.h.b16 %v910
        %v3037 = vunpack.c.l.b16 %v911
        %v3038 = vunpack.c.h.b16 %v911
        %v3039 = vunpack.c.l.b16 %v912
        %v3040 = vunpack.c.h.b16 %v912
        %v3041 = vunpack.c.l.b16 %v913
        %v3042 = vunpack.c.h.b16 %v913
        %v3043 = vunpack.c.l.b16 %v914
        %v3044 = vunpack.c.h.b16 %v914
        %v3045 = vunpack.c.l.b16 %v915
        %v3046 = vunpack.c.h.b16 %v915
        %v3047 = vunpack.c.l.b16 %v916
        %v3048 = vunpack.c.h.b16 %v916
        %v3049 = vunpack.c.l.b16 %v917
        %v3050 = vunpack.c.h.b16 %v917
        %v3051 = vunpack.c.l.b16 %v918
        %v3052 = vunpack.c.h.b16 %v918
        %v3053 = vunpack.c.l.b16 %v919
        %v3054 = vunpack.c.h.b16 %v919
        %v3055 = vunpack.c.l.b16 %v920
        %v3056 = vunpack.c.h.b16 %v920
        %v3057 = vunpack.c.l.b16 %v921
        %v3058 = vunpack.c.h.b16 %v921
        %v3059 = vunpack.c.l.b16 %v922
        %v3060 = vunpack.c.h.b16 %v922
        %v3061 = vunpack.c.l.b16 %v923
        %v3062 = vunpack.c.h.b16 %v923
        %v3063 = vunpack.c.l.b16 %v924
        %v3064 = vunpack.c.h.b16 %v924
        %v3065 = vunpack.c.l.b16 %v925
        %v3066 = vunpack.c.h.b16 %v925
        %v3067 = vunpack.c.l.b16 %v926
        %v3068 = vunpack.c.h.b16 %v926
        %v3069 = vunpack.c.l.b16 %v927
        %v3070 = vunpack.c.h.b16 %v927
        %v3071 = vunpack.c.l.b16 %v928
        %v3072 = vunpack.c.h.b16 %v928
        %v3073 = vunpack.c.l.b16 %v929
        %v3074 = vunpack.c.h.b16 %v929
        %v3075 = vunpack.c.l.b16 %v930
        %v3076 = vunpack.c.h.b16 %v930
        %v3077 = vunpack.c.l.b16 %v931
        %v3078 = vunpack.c.h.b16 %v931
        %v3079 = vunpack.c.l.b16 %v932
        %v3080 = vunpack.c.h.b16 %v932
        %v3081 = vunpack.c.l.b16 %v933
        %v3082 = vunpack.c.h.b16 %v933
        %v3083 = vunpack.c.l.b16 %v934
        %v3084 = vunpack.c.h.b16 %v934
        %v3085 = vunpack.c.l.b16 %v935
        %v3086 = vunpack.c.h.b16 %v935
        %v3087 = vunpack.c.l.b16 %v936
        %v3088 = vunpack.c.h.b16 %v936
        %v3089 = vunpack.c.l.b16 %v937
        %v3090 = vunpack.c.h.b16 %v937
        %v3091 = vunpack.c.l.b16 %v938
        %v3092 = vunpack.c.h.b16 %v938
        %v3093 = vunpack.c.l.b16 %v939
        %v3094 = vunpack.c.h.b16 %v939
        %v3095 = vunpack.c.l.b16 %v940
        %v3096 = vunpack.c.h.b16 %v940
        %v3097 = vunpack.c.l.b16 %v941
        %v3098 = vunpack.c.h.b16 %v941
        %v3099 = vunpack.c.l.b16 %v942
        %v3100 = vunpack.c.h.b16 %v942
        %v3101 = vunpack.c.l.b16 %v943
        %v3102 = vunpack.c.h.b16 %v943
        %v3103 = vunpack.c.l.b16 %v944
        %v3104 = vunpack.c.h.b16 %v944
        %v3105 = vunpack.c.l.b16 %v945
        %v3106 = vunpack.c.h.b16 %v945
        %v3107 = vunpack.c.l.b16 %v946
        %v3108 = vunpack.c.h.b16 %v946
        %v3109 = vunpack.c.l.b16 %v947
        %v3110 = vunpack.c.h.b16 %v947
        %v3111 = vunpack.c.l.b16 %v948
        %v3112 = vunpack.c.h.b16 %v948
        %v3113 = vunpack.c.l.b16 %v949
        %v3114 = vunpack.c.h.b16 %v949
        %v3115 = vunpack.c.l.b16 %v950
        %v3116 = vunpack.c.h.b16 %v950
        %v3117 = vunpack.c.l.b16 %v951
        %v3118 = vunpack.c.h.b16 %v951
        %v3119 = vunpack.c.l.b16 %v952
        %v3120 = vunpack.c.h.b16 %v952
        %v3121 = vunpack.c.l.b16 %v953
        %v3122 = vunpack.c.h.b16 %v953
        %v3123 = vunpack.c.l.b16 %v954
        %v3124 = vunpack.c.h.b16 %v954
        %v3125 = vunpack.c.l.b16 %v955
        %v3126 = vunpack.c.h.b16 %v955
        %v3127 = vunpack.c.l.b16 %v956
        %v3128 = vunpack.c.h.b16 %v956
        %v3129 = vunpack.c.l.b16 %v957
        %v3130 = vunpack.c.h.b16 %v957
        %v3131 = vunpack.c.l.b16 %v958
        %v3132 = vunpack.c.h.b16 %v958
        %v3133 = vunpack.c.l.b16 %v959
        %v3134 = vunpack.c.h.b16 %v959
        %v3135 = vunpack.c.l.b16 %v960
        %v3136 = vunpack.c.h.b16 %v960
        %v3137 = vunpack.c.l.b16 %v961
        %v3138 = vunpack.c.h.b16 %v961
        %v3139 = vunpack.c.l.b16 %v962
        %v3140 = vunpack.c.h.b16 %v962
        %v3141 = vunpack.c.l.b16 %v963
        %v3142 = vunpack.c.h.b16 %v963
        %v3143 = vunpack.c.l.b16 %v964
        %v3144 = vunpack.c.h.b16 %v964
        %v3145 = vunpack.c.l.b16 %v965
        %v3146 = vunpack.c.h.b16 %v965
        %v3147 = vunpack.c.l.b16 %v966
        %v3148 = vunpack.c.h.b16 %v966
        %v3149 = vunpack.c.l.b16 %v967
        %v3150 = vunpack.c.h.b16 %v967
        %v3151 = vunpack.c.l.b16 %v968
        %v3152 = vunpack.c.h.b16 %v968
        %v3153 = vunpack.c.l.b16 %v969
        %v3154 = vunpack.c.h.b16 %v969
        %v3155 = vunpack.c.l.b16 %v970
        %v3156 = vunpack.c.h.b16 %v970
        %v3157 = vunpack.c.l.b16 %v971
        %v3158 = vunpack.c.h.b16 %v971
        %v3159 = vunpack.c.l.b16 %v972
        %v3160 = vunpack.c.h.b16 %v972
        %v3161 = vunpack.c.l.b16 %v973
        %v3162 = vunpack.c.h.b16 %v973
        %v3163 = vunpack.c.l.b16 %v974
        %v3164 = vunpack.c.h.b16 %v974
        %v3165 = vunpack.c.l.b16 %v975
        %v3166 = vunpack.c.h.b16 %v975
        %v3167 = vunpack.c.l.b16 %v976
        %v3168 = vunpack.c.h.b16 %v976
        %v3169 = vunpack.c.l.b16 %v977
        %v3170 = vunpack.c.h.b16 %v977
        %v3171 = vunpack.c.l.b16 %v978
        %v3172 = vunpack.c.h.b16 %v978
        %v3173 = vunpack.c.l.b16 %v979
        %v3174 = vunpack.c.h.b16 %v979
        %v3175 = vunpack.c.l.b16 %v980
        %v3176 = vunpack.c.h.b16 %v980
        %v3177 = vunpack.c.l.b16 %v981
        %v3178 = vunpack.c.h.b16 %v981
        %v3179 = vunpack.c.l.b16 %v982
        %v3180 = vunpack.c.h.b16 %v982
        %v3181 = vunpack.c.l.b16 %v983
        %v3182 = vunpack.c.h.b16 %v983
        %v3183 = vunpack.c.l.b16 %v984
        %v3184 = vunpack.c.h.b16 %v984
        %v3185 = vunpack.c.l.b16 %v985
        %v3186 = vunpack.c.h.b16 %v985
        %v3187 = vunpack.c.l.b16 %v986
        %v3188 = vunpack.c.h.b16 %v986
        %v3189 = vunpack.c.l.b16 %v987
        %v3190 = vunpack.c.h.b16 %v987
        %v3191 = vunpack.c.l.b16 %v988
        %v3192 = vunpack.c.h.b16 %v988
        %v3193 = vunpack.c.l.b16 %v989
        %v3194 = vunpack.c.h.b16 %v989
        %v3195 = vunpack.c.l.b16 %v990
        %v3196 = vunpack.c.h.b16 %v990
        %v3197 = vunpack.c.l.b16 %v991
        %v3198 = vunpack.c.h.b16 %v991
        %v3199 = vunpack.c.l.b16 %v992
        %v3200 = vunpack.c.h.b16 %v992
        %v3201 = vunpack.c.l.b16 %v993
        %v3202 = vunpack.c.h.b16 %v993
        %v3203 = vunpack.c.l.b16 %v994
        %v3204 = vunpack.c.h.b16 %v994
        %v3205 = vunpack.c.l.b16 %v995
        %v3206 = vunpack.c.h.b16 %v995
        %v3207 = vunpack.c.l.b16 %v996
        %v3208 = vunpack.c.h.b16 %v996
        %v3209 = vunpack.c.l.b16 %v997
        %v3210 = vunpack.c.h.b16 %v997
        %v3211 = vunpack.c.l.b16 %v998
        %v3212 = vunpack.c.h.b16 %v998
        %v3213 = vunpack.c.l.b16 %v999
        %v3214 = vunpack.c.h.b16 %v999
        %v3215 = vunpack.c.l.b16 %v1000
        %v3216 = vunpack.c.h.b16 %v1000
        %v3217 = vunpack.c.l.b16 %v1001
        %v3218 = vunpack.c.h.b16 %v1001
        %v3219 = vunpack.c.l.b16 %v1002
        %v3220 = vunpack.c.h.b16 %v1002
        %v3221 = vunpack.c.l.b16 %v1003
        %v3222 = vunpack.c.h.b16 %v1003
        %v3223 = vunpack.c.l.b16 %v1004
        %v3224 = vunpack.c.h.b16 %v1004
        %v3225 = vunpack.c.l.b16 %v1005
        %v3226 = vunpack.c.h.b16 %v1005
        %v3227 = vunpack.c.l.b16 %v1006
        %v3228 = vunpack.c.h.b16 %v1006
        %v3229 = vunpack.c.l.b16 %v1007
        %v3230 = vunpack.c.h.b16 %v1007
        %v3231 = vunpack.c.l.b16 %v1008
        %v3232 = vunpack.c.h.b16 %v1008
        %v3233 = vunpack.c.l.b16 %v1009
        %v3234 = vunpack.c.h.b16 %v1009
        %v3235 = vunpack.c.l.b16 %v1010
        %v3236 = vunpack.c.h.b16 %v1010
        %v3237 = vunpack.c.l.b16 %v1011
        %v3238 = vunpack.c.h.b16 %v1011
        %v3239 = vunpack.c.l.b16 %v1012
        %v3240 = vunpack.c.h.b16 %v1012
        %v3241 = vunpack.c.l.b16 %v1013
        %v3242 = vunpack.c.h.b16 %v1013
        %v3243 = vunpack.c.l.b16 %v1014
        %v3244 = vunpack.c.h.b16 %v1014
        %v3245 = vpack.c.b16 %v1777, %v1773
        %v3246 = vpack.c.b16 %v1778, %v1774
        %v3247 = vpack.c.b16 %v1779, %v1775
        %v3248 = vpack.c.b16 %v1780, %v1776
        %v3249 = vpack.c.b16 %v1785, %v1781
        %v3250 = vpack.c.b16 %v1786, %v1782
        %v3251 = vpack.c.b16 %v1787, %v1783
        %v3252 = vpack.c.b16 %v1788, %v1784
        %v3253 = vpack.c.b16 %v1793, %v1789
        %v3254 = vpack.c.b16 %v1794, %v1790
        %v3255 = vpack.c.b16 %v1795, %v1791
        %v3256 = vpack.c.b16 %v1796, %v1792
        %v3257 = vpack.c.b16 %v1801, %v1797
        %v3258 = vpack.c.b16 %v1802, %v1798
        %v3259 = vpack.c.b16 %v1803, %v1799
        %v3260 = vpack.c.b16 %v1804, %v1800
        %v3261 = vpack.c.b16 %v1809, %v1805
        %v3262 = vpack.c.b16 %v1810, %v1806
        %v3263 = vpack.c.b16 %v1811, %v1807
        %v3264 = vpack.c.b16 %v1812, %v1808
        %v3265 = vpack.c.b16 %v1817, %v1813
        %v3266 = vpack.c.b16 %v1818, %v1814
        %v3267 = vpack.c.b16 %v1819, %v1815
        %v3268 = vpack.c.b16 %v1820, %v1816
        %v3269 = vpack.c.b16 %v1825, %v1821
        %v3270 = vpack.c.b16 %v1826, %v1822
        %v3271 = vpack.c.b16 %v1827, %v1823
        %v3272 = vpack.c.b16 %v1828, %v1824
        %v3273 = vpack.c.b16 %v1833, %v1829
        %v3274 = vpack.c.b16 %v1834, %v1830
        %v3275 = vpack.c.b16 %v1835, %v1831
        %v3276 = vpack.c.b16 %v1836, %v1832
        %v3277 = vpack.c.b16 %v1841, %v1837
        %v3278 = vpack.c.b16 %v1842, %v1838
        %v3279 = vpack.c.b16 %v1843, %v1839
        %v3280 = vpack.c.b16 %v1844, %v1840
        %v3281 = vpack.c.b16 %v1849, %v1845
        %v3282 = vpack.c.b16 %v1850, %v1846
        %v3283 = vpack.c.b16 %v1851, %v1847
        %v3284 = vpack.c.b16 %v1852, %v1848
        %v3285 = vpack.c.b16 %v1857, %v1853
        %v3286 = vpack.c.b16 %v1858, %v1854
        %v3287 = vpack.c.b16 %v1859, %v1855
        %v3288 = vpack.c.b16 %v1860, %v1856
        %v3289 = vpack.c.b16 %v1865, %v1861
        %v3290 = vpack.c.b16 %v1866, %v1862
        %v3291 = vpack.c.b16 %v1867, %v1863
        %v3292 = vpack.c.b16 %v1868, %v1864
        %v3293 = vpack.c.b16 %v1873, %v1869
        %v3294 = vpack.c.b16 %v1874, %v1870
        %v3295 = vpack.c.b16 %v1875, %v1871
        %v3296 = vpack.c.b16 %v1876, %v1872
        %v3297 = vpack.c.b16 %v1881, %v1877
        %v3298 = vpack.c.b16 %v1882, %v1878
        %v3299 = vpack.c.b16 %v1883, %v1879
        %v3300 = vpack.c.b16 %v1884, %v1880
        %v3301 = vpack.c.b16 %v1889, %v1885
        %v3302 = vpack.c.b16 %v1890, %v1886
        %v3303 = vpack.c.b16 %v1891, %v1887
        %v3304 = vpack.c.b16 %v1892, %v1888
        %v3305 = vpack.c.b16 %v1897, %v1893
        %v3306 = vpack.c.b16 %v1898, %v1894
        %v3307 = vpack.c.b16 %v1899, %v1895
        %v3308 = vpack.c.b16 %v1900, %v1896
        %v3309 = vpack.c.b16 %v1905, %v1901
        %v3310 = vpack.c.b16 %v1906, %v1902
        %v3311 = vpack.c.b16 %v1907, %v1903
        %v3312 = vpack.c.b16 %v1908, %v1904
        %v3313 = vpack.c.b16 %v1913, %v1909
        %v3314 = vpack.c.b16 %v1914, %v1910
        %v3315 = vpack.c.b16 %v1915, %v1911
        %v3316 = vpack.c.b16 %v1916, %v1912
        %v3317 = vpack.c.b16 %v1921, %v1917
        %v3318 = vpack.c.b16 %v1922, %v1918
        %v3319 = vpack.c.b16 %v1923, %v1919
        %v3320 = vpack.c.b16 %v1924, %v1920
        %v3321 = vpack.c.b16 %v1929, %v1925
        %v3322 = vpack.c.b16 %v1930, %v1926
        %v3323 = vpack.c.b16 %v1931, %v1927
        %v3324 = vpack.c.b16 %v1932, %v1928
        %v3325 = vpack.c.b16 %v1937, %v1933
        %v3326 = vpack.c.b16 %v1938, %v1934
        %v3327 = vpack.c.b16 %v1939, %v1935
        %v3328 = vpack.c.b16 %v1940, %v1936
        %v3329 = vpack.c.b16 %v1945, %v1941
        %v3330 = vpack.c.b16 %v1946, %v1942
        %v3331 = vpack.c.b16 %v1947, %v1943
        %v3332 = vpack.c.b16 %v1948, %v1944
        %v3333 = vpack.c.b16 %v1953, %v1949
        %v3334 = vpack.c.b16 %v1954, %v1950
        %v3335 = vpack.c.b16 %v1955, %v1951
        %v3336 = vpack.c.b16 %v1956, %v1952
        %v3337 = vpack.c.b16 %v1961, %v1957
        %v3338 = vpack.c.b16 %v1962, %v1958
        %v3339 = vpack.c.b16 %v1963, %v1959
        %v3340 = vpack.c.b16 %v1964, %v1960
        %v3341 = vpack.c.b16 %v1969, %v1965
        %v3342 = vpack.c.b16 %v1970, %v1966
        %v3343 = vpack.c.b16 %v1971, %v1967
        %v3344 = vpack.c.b16 %v1972, %v1968
        %v3345 = vpack.c.b16 %v1977, %v1973
        %v3346 = vpack.c.b16 %v1978, %v1974
        %v3347 = vpack.c.b16 %v1979, %v1975
        %v3348 = vpack.c.b16 %v1980, %v1976
        %v3349 = vpack.c.b16 %v1985, %v1981
        %v3350 = vpack.c.b16 %v1986, %v1982
        %v3351 = vpack.c.b16 %v1987, %v1983
        %v3352 = vpack.c.b16 %v1988, %v1984
        %v3353 = vpack.c.b16 %v1993, %v1989
        %v3354 = vpack.c.b16 %v1994, %v1990
        %v3355 = vpack.c.b16 %v1995, %v1991
        %v3356 = vpack.c.b16 %v1996, %v1992
        %v3357 = vpack.c.b16 %v2001, %v1997
        %v3358 = vpack.c.b16 %v2002, %v1998
        %v3359 = vpack.c.b16 %v2003, %v1999
        %v3360 = vpack.c.b16 %v2004, %v2000
        %v3361 = vpack.c.b16 %v2009, %v2005
        %v3362 = vpack.c.b16 %v2010, %v2006
        %v3363 = vpack.c.b16 %v2011, %v2007
        %v3364 = vpack.c.b16 %v2012, %v2008
        %v3365 = vpack.c.b16 %v2017, %v2013
        %v3366 = vpack.c.b16 %v2018, %v2014
        %v3367 = vpack.c.b16 %v2019, %v2015
        %v3368 = vpack.c.b16 %v2020, %v2016
        %v3369 = vpack.c.b16 %v2025, %v2021
        %v3370 = vpack.c.b16 %v2026, %v2022
        %v3371 = vpack.c.b16 %v2027, %v2023
        %v3372 = vpack.c.b16 %v2028, %v2024
        %v3373 = vpack.c.b16 %v2033, %v2029
        %v3374 = vpack.c.b16 %v2034, %v2030
        %v3375 = vpack.c.b16 %v2035, %v2031
        %v3376 = vpack.c.b16 %v2036, %v2032
        %v3377 = vpack.c.b16 %v2041, %v2037
        %v3378 = vpack.c.b16 %v2042, %v2038
        %v3379 = vpack.c.b16 %v2043, %v2039
        %v3380 = vpack.c.b16 %v2044, %v2040
        %v3381 = vpack.c.b16 %v2049, %v2045
        %v3382 = vpack.c.b16 %v2050, %v2046
        %v3383 = vpack.c.b16 %v2051, %v2047
        %v3384 = vpack.c.b16 %v2052, %v2048
        %v3385 = vpack.c.b16 %v2057, %v2053
        %v3386 = vpack.c.b16 %v2058, %v2054
        %v3387 = vpack.c.b16 %v2059, %v2055
        %v3388 = vpack.c.b16 %v2060, %v2056
        %v3389 = vpack.c.b16 %v2065, %v2061
        %v3390 = vpack.c.b16 %v2066, %v2062
        %v3391 = vpack.c.b16 %v2067, %v2063
        %v3392 = vpack.c.b16 %v2068, %v2064
        %v3393 = vpack.c.b16 %v2073, %v2069
        %v3394 = vpack.c.b16 %v2074, %v2070
        %v3395 = vpack.c.b16 %v2075, %v2071
        %v3396 = vpack.c.b16 %v2076, %v2072
        %v3397 = vpack.c.b16 %v2081, %v2077
        %v3398 = vpack.c.b16 %v2082, %v2078
        %v3399 = vpack.c.b16 %v2083, %v2079
        %v3400 = vpack.c.b16 %v2084, %v2080
        %v3401 = vpack.c.b16 %v2089, %v2085
        %v3402 = vpack.c.b16 %v2090, %v2086
        %v3403 = vpack.c.b16 %v2091, %v2087
        %v3404 = vpack.c.b16 %v2092, %v2088
        %v3405 = vpack.c.b16 %v2097, %v2093
        %v3406 = vpack.c.b16 %v2098, %v2094
        %v3407 = vpack.c.b16 %v2099, %v2095
        %v3408 = vpack.c.b16 %v2100, %v2096
        %v3409 = vpack.c.b16 %v2105, %v2101
        %v3410 = vpack.c.b16 %v2106, %v2102
        %v3411 = vpack.c.b16 %v2107, %v2103
        %v3412 = vpack.c.b16 %v2108, %v2104
        %v3413 = vpack.c.b16 %v2113, %v2109
        %v3414 = vpack.c.b16 %v2114, %v2110
        %v3415 = vpack.c.b16 %v2115, %v2111
        %v3416 = vpack.c.b16 %v2116, %v2112
        %v3417 = vpack.c.b16 %v2121, %v2117
        %v3418 = vpack.c.b16 %v2122, %v2118
        %v3419 = vpack.c.b16 %v2123, %v2119
        %v3420 = vpack.c.b16 %v2124, %v2120
        %v3421 = vpack.c.b16 %v2129, %v2125
        %v3422 = vpack.c.b16 %v2130, %v2126
        %v3423 = vpack.c.b16 %v2131, %v2127
        %v3424 = vpack.c.b16 %v2132, %v2128
        %v3425 = vpack.c.b16 %v2137, %v2133
        %v3426 = vpack.c.b16 %v2138, %v2134
        %v3427 = vpack.c.b16 %v2139, %v2135
        %v3428 = vpack.c.b16 %v2140, %v2136
        %v3429 = vpack.c.b16 %v2145, %v2141
        %v3430 = vpack.c.b16 %v2146, %v2142
        %v3431 = vpack.c.b16 %v2147, %v2143
        %v3432 = vpack.c.b16 %v2148, %v2144
        %v3433 = vpack.c.b16 %v2153, %v2149
        %v3434 = vpack.c.b16 %v2154, %v2150
        %v3435 = vpack.c.b16 %v2155, %v2151
        %v3436 = vpack.c.b16 %v2156, %v2152
        %v3437 = vpack.c.b16 %v2161, %v2157
        %v3438 = vpack.c.b16 %v2162, %v2158
        %v3439 = vpack.c.b16 %v2163, %v2159
        %v3440 = vpack.c.b16 %v2164, %v2160
        %v3441 = vpack.c.b16 %v2169, %v2165
        %v3442 = vpack.c.b16 %v2170, %v2166
        %v3443 = vpack.c.b16 %v2171, %v2167
        %v3444 = vpack.c.b16 %v2172, %v2168
        %v3445 = vpack.c.b16 %v2177, %v2173
        %v3446 = vpack.c.b16 %v2178, %v2174
        %v3447 = vpack.c.b16 %v2179, %v2175
        %v3448 = vpack.c.b16 %v2180, %v2176
        %v3449 = vpack.c.b16 %v2185, %v2181
        %v3450 = vpack.c.b16 %v2186, %v2182
        %v3451 = vpack.c.b16 %v2187, %v2183
        %v3452 = vpack.c.b16 %v2188, %v2184
        %v3453 = vpack.c.b16 %v2193, %v2189
        %v3454 = vpack.c.b16 %v2194, %v2190
        %v3455 = vpack.c.b16 %v2195, %v2191
        %v3456 = vpack.c.b16 %v2196, %v2192
        %v3457 = vpack.c.b16 %v2201, %v2197
        %v3458 = vpack.c.b16 %v2202, %v2198
        %v3459 = vpack.c.b16 %v2203, %v2199
        %v3460 = vpack.c.b16 %v2204, %v2200
        %v3461 = vpack.c.b16 %v2209, %v2205
        %v3462 = vpack.c.b16 %v2210, %v2206
        %v3463 = vpack.c.b16 %v2211, %v2207
        %v3464 = vpack.c.b16 %v2212, %v2208
        %v3465 = vpack.c.b16 %v2217, %v2213
        %v3466 = vpack.c.b16 %v2218, %v2214
        %v3467 = vpack.c.b16 %v2219, %v2215
        %v3468 = vpack.c.b16 %v2220, %v2216
        %v3469 = vpack.c.b16 %v2225, %v2221
        %v3470 = vpack.c.b16 %v2226, %v2222
        %v3471 = vpack.c.b16 %v2227, %v2223
        %v3472 = vpack.c.b16 %v2228, %v2224
        %v3473 = vpack.c.b16 %v2233, %v2229
        %v3474 = vpack.c.b16 %v2234, %v2230
        %v3475 = vpack.c.b16 %v2235, %v2231
        %v3476 = vpack.c.b16 %v2236, %v2232
        %v3477 = vpack.c.b16 %v2241, %v2237
        %v3478 = vpack.c.b16 %v2242, %v2238
        %v3479 = vpack.c.b16 %v2243, %v2239
        %v3480 = vpack.c.b16 %v2244, %v2240
        %v3481 = vpack.c.b16 %v2249, %v2245
        %v3482 = vpack.c.b16 %v2250, %v2246
        %v3483 = vpack.c.b16 %v2251, %v2247
        %v3484 = vpack.c.b16 %v2252, %v2248
        %v3485 = vpack.c.b16 %v2257, %v2253
        %v3486 = vpack.c.b16 %v2258, %v2254
        %v3487 = vpack.c.b16 %v2259, %v2255
        %v3488 = vpack.c.b16 %v2260, %v2256
        %v3489 = vpack.c.b16 %v2265, %v2261
        %v3490 = vpack.c.b16 %v2266, %v2262
        %v3491 = vpack.c.b16 %v2267, %v2263
        %v3492 = vpack.c.b16 %v2268, %v2264
        %v3493 = vpack.c.b16 %v2273, %v2269
        %v3494 = vpack.c.b16 %v2274, %v2270
        %v3495 = vpack.c.b16 %v2275, %v2271
        %v3496 = vpack.c.b16 %v2276, %v2272
        %v3497 = vpack.c.b16 %v2281, %v2277
        %v3498 = vpack.c.b16 %v2282, %v2278
        %v3499 = vpack.c.b16 %v2283, %v2279
        %v3500 = vpack.c.b16 %v2284, %v2280
        %v3501 = vpack.c.b16 %v2289, %v2285
        %v3502 = vpack.c.b16 %v2290, %v2286
        %v3503 = vpack.c.b16 %v2291, %v2287
        %v3504 = vpack.c.b16 %v2292, %v2288
        %v3505 = vpack.c.b16 %v2297, %v2293
        %v3506 = vpack.c.b16 %v2298, %v2294
        %v3507 = vpack.c.b16 %v2299, %v2295
        %v3508 = vpack.c.b16 %v2300, %v2296
        %v3509 = vpack.c.b16 %v2305, %v2301
        %v3510 = vpack.c.b16 %v2306, %v2302
        %v3511 = vpack.c.b16 %v2307, %v2303
        %v3512 = vpack.c.b16 %v2308, %v2304
        %v3513 = vpack.c.b16 %v2313, %v2309
        %v3514 = vpack.c.b16 %v2314, %v2310
        %v3515 = vpack.c.b16 %v2315, %v2311
        %v3516 = vpack.c.b16 %v2316, %v2312
        %v3517 = vpack.c.b16 %v2321, %v2317
        %v3518 = vpack.c.b16 %v2322, %v2318
        %v3519 = vpack.c.b16 %v2323, %v2319
        %v3520 = vpack.c.b16 %v2324, %v2320
        %v3521 = vpack.c.b16 %v2329, %v2325
        %v3522 = vpack.c.b16 %v2330, %v2326
        %v3523 = vpack.c.b16 %v2331, %v2327
        %v3524 = vpack.c.b16 %v2332, %v2328
        %v3525 = vpack.c.b16 %v2337, %v2333
        %v3526 = vpack.c.b16 %v2338, %v2334
        %v3527 = vpack.c.b16 %v2339, %v2335
        %v3528 = vpack.c.b16 %v2340, %v2336
        %v3529 = vpack.c.b16 %v2345, %v2341
        %v3530 = vpack.c.b16 %v2346, %v2342
        %v3531 = vpack.c.b16 %v2347, %v2343
        %v3532 = vpack.c.b16 %v2348, %v2344
        %v3533 = vpack.c.b16 %v2353, %v2349
        %v3534 = vpack.c.b16 %v2354, %v2350
        %v3535 = vpack.c.b16 %v2355, %v2351
        %v3536 = vpack.c.b16 %v2356, %v2352
        %v3537 = vpack.c.b16 %v2361, %v2357
        %v3538 = vpack.c.b16 %v2362, %v2358
        %v3539 = vpack.c.b16 %v2363, %v2359
        %v3540 = vpack.c.b16 %v2364, %v2360
        %v3541 = vpack.c.b16 %v2369, %v2365
        %v3542 = vpack.c.b16 %v2370, %v2366
        %v3543 = vpack.c.b16 %v2371, %v2367
        %v3544 = vpack.c.b16 %v2372, %v2368
        %v3545 = vpack.c.b16 %v2377, %v2373
        %v3546 = vpack.c.b16 %v2378, %v2374
        %v3547 = vpack.c.b16 %v2379, %v2375
        %v3548 = vpack.c.b16 %v2380, %v2376
        %v3549 = vpack.c.b16 %v2385, %v2381
        %v3550 = vpack.c.b16 %v2386, %v2382
        %v3551 = vpack.c.b16 %v2387, %v2383
        %v3552 = vpack.c.b16 %v2388, %v2384
        %v3553 = vpack.c.b16 %v2393, %v2389
        %v3554 = vpack.c.b16 %v2394, %v2390
        %v3555 = vpack.c.b16 %v2395, %v2391
        %v3556 = vpack.c.b16 %v2396, %v2392
        %v3557 = vpack.c.b16 %v2401, %v2397
        %v3558 = vpack.c.b16 %v2402, %v2398
        %v3559 = vpack.c.b16 %v2403, %v2399
        %v3560 = vpack.c.b16 %v2404, %v2400
        %v3561 = vpack.c.b16 %v2409, %v2405
        %v3562 = vpack.c.b16 %v2410, %v2406
        %v3563 = vpack.c.b16 %v2411, %v2407
        %v3564 = vpack.c.b16 %v2412, %v2408
        %v3565 = vpack.c.b16 %v2417, %v2413
        %v3566 = vpack.c.b16 %v2418, %v2414
        %v3567 = vpack.c.b16 %v2419, %v2415
        %v3568 = vpack.c.b16 %v2420, %v2416
        %v3569 = vpack.c.b16 %v2425, %v2421
        %v3570 = vpack.c.b16 %v2426, %v2422
        %v3571 = vpack.c.b16 %v2427, %v2423
        %v3572 = vpack.c.b16 %v2428, %v2424
        %v3573 = vpack.c.b16 %v2433, %v2429
        %v3574 = vpack.c.b16 %v2434, %v2430
        %v3575 = vpack.c.b16 %v2435, %v2431
        %v3576 = vpack.c.b16 %v2436, %v2432
        %v3577 = vpack.c.b16 %v2441, %v2437
        %v3578 = vpack.c.b16 %v2442, %v2438
        %v3579 = vpack.c.b16 %v2443, %v2439
        %v3580 = vpack.c.b16 %v2444, %v2440
        %v3581 = vpack.c.b16 %v2449, %v2445
        %v3582 = vpack.c.b16 %v2450, %v2446
        %v3583 = vpack.c.b16 %v2451, %v2447
        %v3584 = vpack.c.b16 %v2452, %v2448
        %v3585 = vpack.c.b16 %v2457, %v2453
        %v3586 = vpack.c.b16 %v2458, %v2454
        %v3587 = vpack.c.b16 %v2459, %v2455
        %v3588 = vpack.c.b16 %v2460, %v2456
        %v3589 = vpack.c.b16 %v2465, %v2461
        %v3590 = vpack.c.b16 %v2466, %v2462
        %v3591 = vpack.c.b16 %v2467, %v2463
        %v3592 = vpack.c.b16 %v2468, %v2464
        %v3593 = vpack.c.b16 %v2473, %v2469
        %v3594 = vpack.c.b16 %v2474, %v2470
        %v3595 = vpack.c.b16 %v2475, %v2471
        %v3596 = vpack.c.b16 %v2476, %v2472
        %v3597 = vpack.c.b16 %v2481, %v2477
        %v3598 = vpack.c.b16 %v2482, %v2478
        %v3599 = vpack.c.b16 %v2483, %v2479
        %v3600 = vpack.c.b16 %v2484, %v2480
        %v3601 = vpack.c.b16 %v2489, %v2485
        %v3602 = vpack.c.b16 %v2490, %v2486
        %v3603 = vpack.c.b16 %v2491, %v2487
        %v3604 = vpack.c.b16 %v2492, %v2488
        %v3605 = vpack.c.b16 %v2497, %v2493
        %v3606 = vpack.c.b16 %v2498, %v2494
        %v3607 = vpack.c.b16 %v2499, %v2495
        %v3608 = vpack.c.b16 %v2500, %v2496
        %v3609 = vpack.c.b16 %v2505, %v2501
        %v3610 = vpack.c.b16 %v2506, %v2502
        %v3611 = vpack.c.b16 %v2507, %v2503
        %v3612 = vpack.c.b16 %v2508, %v2504
        %v3613 = vpack.c.b16 %v2513, %v2509
        %v3614 = vpack.c.b16 %v2514, %v2510
        %v3615 = vpack.c.b16 %v2515, %v2511
        %v3616 = vpack.c.b16 %v2516, %v2512
        %v3617 = vpack.c.b16 %v2521, %v2517
        %v3618 = vpack.c.b16 %v2522, %v2518
        %v3619 = vpack.c.b16 %v2523, %v2519
        %v3620 = vpack.c.b16 %v2524, %v2520
        %v3621 = vpack.c.b16 %v2529, %v2525
        %v3622 = vpack.c.b16 %v2530, %v2526
        %v3623 = vpack.c.b16 %v2531, %v2527
        %v3624 = vpack.c.b16 %v2532, %v2528
        %v3625 = vpack.c.b16 %v2537, %v2533
        %v3626 = vpack.c.b16 %v2538, %v2534
        %v3627 = vpack.c.b16 %v2539, %v2535
        %v3628 = vpack.c.b16 %v2540, %v2536
        %v3629 = vpack.c.b16 %v2545, %v2541
        %v3630 = vpack.c.b16 %v2546, %v2542
        %v3631 = vpack.c.b16 %v2547, %v2543
        %v3632 = vpack.c.b16 %v2548, %v2544
        %v3633 = vpack.c.b16 %v2553, %v2549
        %v3634 = vpack.c.b16 %v2554, %v2550
        %v3635 = vpack.c.b16 %v2555, %v2551
        %v3636 = vpack.c.b16 %v2556, %v2552
        %v3637 = vpack.c.b16 %v2561, %v2557
        %v3638 = vpack.c.b16 %v2562, %v2558
        %v3639 = vpack.c.b16 %v2563, %v2559
        %v3640 = vpack.c.b16 %v2564, %v2560
        %v3641 = vpack.c.b16 %v2569, %v2565
        %v3642 = vpack.c.b16 %v2570, %v2566
        %v3643 = vpack.c.b16 %v2571, %v2567
        %v3644 = vpack.c.b16 %v2572, %v2568
        %v3645 = vpack.c.b16 %v2577, %v2573
        %v3646 = vpack.c.b16 %v2578, %v2574
        %v3647 = vpack.c.b16 %v2579, %v2575
        %v3648 = vpack.c.b16 %v2580, %v2576
        %v3649 = vpack.c.b16 %v2585, %v2581
        %v3650 = vpack.c.b16 %v2586, %v2582
        %v3651 = vpack.c.b16 %v2587, %v2583
        %v3652 = vpack.c.b16 %v2588, %v2584
        %v3653 = vpack.c.b16 %v2593, %v2589
        %v3654 = vpack.c.b16 %v2594, %v2590
        %v3655 = vpack.c.b16 %v2595, %v2591
        %v3656 = vpack.c.b16 %v2596, %v2592
        %v3657 = vpack.c.b16 %v2601, %v2597
        %v3658 = vpack.c.b16 %v2602, %v2598
        %v3659 = vpack.c.b16 %v2603, %v2599
        %v3660 = vpack.c.b16 %v2604, %v2600
        %v3661 = vpack.c.b16 %v2609, %v2605
        %v3662 = vpack.c.b16 %v2610, %v2606
        %v3663 = vpack.c.b16 %v2611, %v2607
        %v3664 = vpack.c.b16 %v2612, %v2608
        %v3665 = vpack.c.b16 %v2617, %v2613
        %v3666 = vpack.c.b16 %v2618, %v2614
        %v3667 = vpack.c.b16 %v2619, %v2615
        %v3668 = vpack.c.b16 %v2620, %v2616
        %v3669 = vpack.c.b16 %v2625, %v2621
        %v3670 = vpack.c.b16 %v2626, %v2622
        %v3671 = vpack.c.b16 %v2627, %v2623
        %v3672 = vpack.c.b16 %v2628, %v2624
        %v3673 = vpack.c.b16 %v2633, %v2629
        %v3674 = vpack.c.b16 %v2634, %v2630
        %v3675 = vpack.c.b16 %v2635, %v2631
        %v3676 = vpack.c.b16 %v2636, %v2632
        %v3677 = vpack.c.b16 %v2641, %v2637
        %v3678 = vpack.c.b16 %v2642, %v2638
        %v3679 = vpack.c.b16 %v2643, %v2639
        %v3680 = vpack.c.b16 %v2644, %v2640
        %v3681 = vpack.c.b16 %v2649, %v2645
        %v3682 = vpack.c.b16 %v2650, %v2646
        %v3683 = vpack.c.b16 %v2651, %v2647
        %v3684 = vpack.c.b16 %v2652, %v2648
        %v3685 = vpack.c.b16 %v2657, %v2653
        %v3686 = vpack.c.b16 %v2658, %v2654
        %v3687 = vpack.c.b16 %v2659, %v2655
        %v3688 = vpack.c.b16 %v2660, %v2656
        %v3689 = vpack.c.b16 %v2665, %v2661
        %v3690 = vpack.c.b16 %v2666, %v2662
        %v3691 = vpack.c.b16 %v2667, %v2663
        %v3692 = vpack.c.b16 %v2668, %v2664
        %v3693 = vpack.c.b16 %v2673, %v2669
        %v3694 = vpack.c.b16 %v2674, %v2670
        %v3695 = vpack.c.b16 %v2675, %v2671
        %v3696 = vpack.c.b16 %v2676, %v2672
        %v3697 = vpack.c.b16 %v2681, %v2677
        %v3698 = vpack.c.b16 %v2682, %v2678
        %v3699 = vpack.c.b16 %v2683, %v2679
        %v3700 = vpack.c.b16 %v2684, %v2680
        %v3701 = vpack.c.b16 %v2689, %v2685
        %v3702 = vpack.c.b16 %v2690, %v2686
        %v3703 = vpack.c.b16 %v2691, %v2687
        %v3704 = vpack.c.b16 %v2692, %v2688
        %v3705 = vpack.c.b16 %v2697, %v2693
        %v3706 = vpack.c.b16 %v2698, %v2694
        %v3707 = vpack.c.b16 %v2699, %v2695
        %v3708 = vpack.c.b16 %v2700, %v2696
        %v3709 = vpack.c.b16 %v2705, %v2701
        %v3710 = vpack.c.b16 %v2706, %v2702
        %v3711 = vpack.c.b16 %v2707, %v2703
        %v3712 = vpack.c.b16 %v2708, %v2704
        %v3713 = vpack.c.b16 %v2713, %v2709
        %v3714 = vpack.c.b16 %v2714, %v2710
        %v3715 = vpack.c.b16 %v2715, %v2711
        %v3716 = vpack.c.b16 %v2716, %v2712
        %v3717 = vpack.c.b16 %v2721, %v2717
        %v3718 = vpack.c.b16 %v2722, %v2718
        %v3719 = vpack.c.b16 %v2723, %v2719
        %v3720 = vpack.c.b16 %v2724, %v2720
        %v3721 = vpack.c.b16 %v2729, %v2725
        %v3722 = vpack.c.b16 %v2730, %v2726
        %v3723 = vpack.c.b16 %v2731, %v2727
        %v3724 = vpack.c.b16 %v2732, %v2728
        %v3725 = vpack.c.b16 %v2737, %v2733
        %v3726 = vpack.c.b16 %v2738, %v2734
        %v3727 = vpack.c.b16 %v2739, %v2735
        %v3728 = vpack.c.b16 %v2740, %v2736
        %v3729 = vpack.c.b16 %v2745, %v2741
        %v3730 = vpack.c.b16 %v2746, %v2742
        %v3731 = vpack.c.b16 %v2747, %v2743
        %v3732 = vpack.c.b16 %v2748, %v2744
        %v3733 = vpack.c.b16 %v2753, %v2749
        %v3734 = vpack.c.b16 %v2754, %v2750
        %v3735 = vpack.c.b16 %v2755, %v2751
        %v3736 = vpack.c.b16 %v2756, %v2752
        %v3737 = vpack.c.b16 %v2761, %v2757
        %v3738 = vpack.c.b16 %v2762, %v2758
        %v3739 = vpack.c.b16 %v2763, %v2759
        %v3740 = vpack.c.b16 %v2764, %v2760
        %v3741 = vpack.c.b16 %v2769, %v2765
        %v3742 = vpack.c.b16 %v2770, %v2766
        %v3743 = vpack.c.b16 %v2771, %v2767
        %v3744 = vpack.c.b16 %v2772, %v2768
        %v3745 = vpack.c.b16 %v2777, %v2773
        %v3746 = vpack.c.b16 %v2778, %v2774
        %v3747 = vpack.c.b16 %v2779, %v2775
        %v3748 = vpack.c.b16 %v2780, %v2776
        %v3749 = vpack.c.b16 %v2785, %v2781
        %v3750 = vpack.c.b16 %v2786, %v2782
        %v3751 = vpack.c.b16 %v2787, %v2783
        %v3752 = vpack.c.b16 %v2788, %v2784
        %v3753 = vpack.c.b16 %v2793, %v2789
        %v3754 = vpack.c.b16 %v2794, %v2790
        %v3755 = vpack.c.b16 %v2795, %v2791
        %v3756 = vpack.c.b16 %v2796, %v2792
        %v3757 = vpack.c.b16 %v2801, %v2797
        %v3758 = vpack.c.b16 %v2802, %v2798
        %v3759 = vpack.c.b16 %v2803, %v2799
        %v3760 = vpack.c.b16 %v2804, %v2800
        %v3761 = vpack.c.b16 %v2809, %v2805
        %v3762 = vpack.c.b16 %v2810, %v2806
        %v3763 = vpack.c.b16 %v2811, %v2807
        %v3764 = vpack.c.b16 %v2812, %v2808
        %v3765 = vpack.c.b16 %v2817, %v2813
        %v3766 = vpack.c.b16 %v2818, %v2814
        %v3767 = vpack.c.b16 %v2819, %v2815
        %v3768 = vpack.c.b16 %v2820, %v2816
        %v3769 = vpack.c.b16 %v2825, %v2821
        %v3770 = vpack.c.b16 %v2826, %v2822
        %v3771 = vpack.c.b16 %v2827, %v2823
        %v3772 = vpack.c.b16 %v2828, %v2824
        %v3773 = vpack.c.b16 %v2833, %v2829
        %v3774 = vpack.c.b16 %v2834, %v2830
        %v3775 = vpack.c.b16 %v2835, %v2831
        %v3776 = vpack.c.b16 %v2836, %v2832
        %v3777 = vpack.c.b16 %v2841, %v2837
        %v3778 = vpack.c.b16 %v2842, %v2838
        %v3779 = vpack.c.b16 %v2843, %v2839
        %v3780 = vpack.c.b16 %v2844, %v2840
        %v3781 = vpack.c.b16 %v2849, %v2845
        %v3782 = vpack.c.b16 %v2850, %v2846
        %v3783 = vpack.c.b16 %v2851, %v2847
        %v3784 = vpack.c.b16 %v2852, %v2848
        %v3785 = vpack.c.b16 %v2857, %v2853
        %v3786 = vpack.c.b16 %v2858, %v2854
        %v3787 = vpack.c.b16 %v2859, %v2855
        %v3788 = vpack.c.b16 %v2860, %v2856
        %v3789 = vpack.c.b16 %v2865, %v2861
        %v3790 = vpack.c.b16 %v2866, %v2862
        %v3791 = vpack.c.b16 %v2867, %v2863
        %v3792 = vpack.c.b16 %v2868, %v2864
        %v3793 = vpack.c.b16 %v2873, %v2869
        %v3794 = vpack.c.b16 %v2874, %v2870
        %v3795 = vpack.c.b16 %v2875, %v2871
        %v3796 = vpack.c.b16 %v2876, %v2872
        %v3797 = vpack.c.b16 %v2881, %v2877
        %v3798 = vpack.c.b16 %v2882, %v2878
        %v3799 = vpack.c.b16 %v2883, %v2879
        %v3800 = vpack.c.b16 %v2884, %v2880
        %v3801 = vpack.c.b16 %v2889, %v2885
        %v3802 = vpack.c.b16 %v2890, %v2886
        %v3803 = vpack.c.b16 %v2891, %v2887
        %v3804 = vpack.c.b16 %v2892, %v2888
        %v3805 = vpack.c.b16 %v2897, %v2893
        %v3806 = vpack.c.b16 %v2898, %v2894
        %v3807 = vpack.c.b16 %v2899, %v2895
        %v3808 = vpack.c.b16 %v2900, %v2896
        %v3809 = vpack.c.b16 %v2905, %v2901
        %v3810 = vpack.c.b16 %v2906, %v2902
        %v3811 = vpack.c.b16 %v2907, %v2903
        %v3812 = vpack.c.b16 %v2908, %v2904
        %v3813 = vpack.c.b16 %v2913, %v2909
        %v3814 = vpack.c.b16 %v2914, %v2910
        %v3815 = vpack.c.b16 %v2915, %v2911
        %v3816 = vpack.c.b16 %v2916, %v2912
        %v3817 = vpack.c.b16 %v2921, %v2917
        %v3818 = vpack.c.b16 %v2922, %v2918
        %v3819 = vpack.c.b16 %v2923, %v2919
        %v3820 = vpack.c.b16 %v2924, %v2920
        %v3821 = vpack.c.b16 %v2929, %v2925
        %v3822 = vpack.c.b16 %v2930, %v2926
        %v3823 = vpack.c.b16 %v2931, %v2927
        %v3824 = vpack.c.b16 %v2932, %v2928
        %v3825 = vpack.c.b16 %v2937, %v2933
        %v3826 = vpack.c.b16 %v2938, %v2934
        %v3827 = vpack.c.b16 %v2939, %v2935
        %v3828 = vpack.c.b16 %v2940, %v2936
        %v3829 = vpack.c.b16 %v2945, %v2941
        %v3830 = vpack.c.b16 %v2946, %v2942
        %v3831 = vpack.c.b16 %v2947, %v2943
        %v3832 = vpack.c.b16 %v2948, %v2944
        %v3833 = vpack.c.b16 %v2953, %v2949
        %v3834 = vpack.c.b16 %v2954, %v2950
        %v3835 = vpack.c.b16 %v2955, %v2951
        %v3836 = vpack.c.b16 %v2956, %v2952
        %v3837 = vpack.c.b16 %v2961, %v2957
        %v3838 = vpack.c.b16 %v2962, %v2958
        %v3839 = vpack.c.b16 %v2963, %v2959
        %v3840 = vpack.c.b16 %v2964, %v2960
        %v3841 = vpack.c.b16 %v2969, %v2965
        %v3842 = vpack.c.b16 %v2970, %v2966
        %v3843 = vpack.c.b16 %v2971, %v2967
        %v3844 = vpack.c.b16 %v2972, %v2968
        %v3845 = vpack.c.b16 %v2977, %v2973
        %v3846 = vpack.c.b16 %v2978, %v2974
        %v3847 = vpack.c.b16 %v2979, %v2975
        %v3848 = vpack.c.b16 %v2980, %v2976
        %v3849 = vpack.c.b16 %v2985, %v2981
        %v3850 = vpack.c.b16 %v2986, %v2982
        %v3851 = vpack.c.b16 %v2987, %v2983
        %v3852 = vpack.c.b16 %v2988, %v2984
        %v3853 = vpack.c.b16 %v2993, %v2989
        %v3854 = vpack.c.b16 %v2994, %v2990
        %v3855 = vpack.c.b16 %v2995, %v2991
        %v3856 = vpack.c.b16 %v2996, %v2992
        %v3857 = vpack.c.b16 %v3001, %v2997
        %v3858 = vpack.c.b16 %v3002, %v2998
        %v3859 = vpack.c.b16 %v3003, %v2999
        %v3860 = vpack.c.b16 %v3004, %v3000
        %v3861 = vpack.c.b16 %v3009, %v3005
        %v3862 = vpack.c.b16 %v3010, %v3006
        %v3863 = vpack.c.b16 %v3011, %v3007
        %v3864 = vpack.c.b16 %v3012, %v3008
        %v3865 = vpack.c.b16 %v3017, %v3013
        %v3866 = vpack.c.b16 %v3018, %v3014
        %v3867 = vpack.c.b16 %v3019, %v3015
        %v3868 = vpack.c.b16 %v3020, %v3016
        %v3869 = vpack.c.b16 %v3025, %v3021
        %v3870 = vpack.c.b16 %v3026, %v3022
        %v3871 = vpack.c.b16 %v3027, %v3023
        %v3872 = vpack.c.b16 %v3028, %v3024
        %v3873 = vpack.c.b16 %v3033, %v3029
        %v3874 = vpack.c.b16 %v3034, %v3030
        %v3875 = vpack.c.b16 %v3035, %v3031
        %v3876 = vpack.c.b16 %v3036, %v3032
        %v3877 = vpack.c.b16 %v3041, %v3037
        %v3878 = vpack.c.b16 %v3042, %v3038
        %v3879 = vpack.c.b16 %v3043, %v3039
        %v3880 = vpack.c.b16 %v3044, %v3040
        %v3881 = vpack.c.b16 %v3049, %v3045
        %v3882 = vpack.c.b16 %v3050, %v3046
        %v3883 = vpack.c.b16 %v3051, %v3047
        %v3884 = vpack.c.b16 %v3052, %v3048
        %v3885 = vpack.c.b16 %v3057, %v3053
        %v3886 = vpack.c.b16 %v3058, %v3054
        %v3887 = vpack.c.b16 %v3059, %v3055
        %v3888 = vpack.c.b16 %v3060, %v3056
        %v3889 = vpack.c.b16 %v3065, %v3061
        %v3890 = vpack.c.b16 %v3066, %v3062
        %v3891 = vpack.c.b16 %v3067, %v3063
        %v3892 = vpack.c.b16 %v3068, %v3064
        %v3893 = vpack.c.b16 %v3073, %v3069
        %v3894 = vpack.c.b16 %v3074, %v3070
        %v3895 = vpack.c.b16 %v3075, %v3071
        %v3896 = vpack.c.b16 %v3076, %v3072
        %v3897 = vpack.c.b16 %v3081, %v3077
        %v3898 = vpack.c.b16 %v3082, %v3078
        %v3899 = vpack.c.b16 %v3083, %v3079
        %v3900 = vpack.c.b16 %v3084, %v3080
        %v3901 = vpack.c.b16 %v3089, %v3085
        %v3902 = vpack.c.b16 %v3090, %v3086
        %v3903 = vpack.c.b16 %v3091, %v3087
        %v3904 = vpack.c.b16 %v3092, %v3088
        %v3905 = vpack.c.b16 %v3097, %v3093
        %v3906 = vpack.c.b16 %v3098, %v3094
        %v3907 = vpack.c.b16 %v3099, %v3095
        %v3908 = vpack.c.b16 %v3100, %v3096
        %v3909 = vpack.c.b16 %v3105, %v3101
        %v3910 = vpack.c.b16 %v3106, %v3102
        %v3911 = vpack.c.b16 %v3107, %v3103
        %v3912 = vpack.c.b16 %v3108, %v3104
        %v3913 = vpack.c.b16 %v3113, %v3109
        %v3914 = vpack.c.b16 %v3114, %v3110
        %v3915 = vpack.c.b16 %v3115, %v3111
        %v3916 = vpack.c.b16 %v3116, %v3112
        %v3917 = vpack.c.b16 %v3121, %v3117
        %v3918 = vpack.c.b16 %v3122, %v3118
        %v3919 = vpack.c.b16 %v3123, %v3119
        %v3920 = vpack.c.b16 %v3124, %v3120
        %v3921 = vpack.c.b16 %v3129, %v3125
        %v3922 = vpack.c.b16 %v3130, %v3126
        %v3923 = vpack.c.b16 %v3131, %v3127
        %v3924 = vpack.c.b16 %v3132, %v3128
        %v3925 = vpack.c.b16 %v3137, %v3133
        %v3926 = vpack.c.b16 %v3138, %v3134
        %v3927 = vpack.c.b16 %v3139, %v3135
        %v3928 = vpack.c.b16 %v3140, %v3136
        %v3929 = vpack.c.b16 %v3145, %v3141
        %v3930 = vpack.c.b16 %v3146, %v3142
        %v3931 = vpack.c.b16 %v3147, %v3143
        %v3932 = vpack.c.b16 %v3148, %v3144
        %v3933 = vpack.c.b16 %v3153, %v3149
        %v3934 = vpack.c.b16 %v3154, %v3150
        %v3935 = vpack.c.b16 %v3155, %v3151
        %v3936 = vpack.c.b16 %v3156, %v3152
        %v3937 = vpack.c.b16 %v3161, %v3157
        %v3938 = vpack.c.b16 %v3162, %v3158
        %v3939 = vpack.c.b16 %v3163, %v3159
        %v3940 = vpack.c.b16 %v3164, %v3160
        %v3941 = vpack.c.b16 %v3169, %v3165
        %v3942 = vpack.c.b16 %v3170, %v3166
        %v3943 = vpack.c.b16 %v3171, %v3167
        %v3944 = vpack.c.b16 %v3172, %v3168
        %v3945 = vpack.c.b16 %v3177, %v3173
        %v3946 = vpack.c.b16 %v3178, %v3174
        %v3947 = vpack.c.b16 %v3179, %v3175
        %v3948 = vpack.c.b16 %v3180, %v3176
        %v3949 = vpack.c.b16 %v3185, %v3181
        %v3950 = vpack.c.b16 %v3186, %v3182
        %v3951 = vpack.c.b16 %v3187, %v3183
        %v3952 = vpack.c.b16 %v3188, %v3184
        %v3953 = vpack.c.b16 %v3193, %v3189
        %v3954 = vpack.c.b16 %v3194, %v3190
        %v3955 = vpack.c.b16 %v3195, %v3191
        %v3956 = vpack.c.b16 %v3196, %v3192
        %v3957 = vpack.c.b16 %v3201, %v3197
        %v3958 = vpack.c.b16 %v3202, %v3198
        %v3959 = vpack.c.b16 %v3203, %v3199
        %v3960 = vpack.c.b16 %v3204, %v3200
        %v3961 = vpack.c.b16 %v3209, %v3205
        %v3962 = vpack.c.b16 %v3210, %v3206
        %v3963 = vpack.c.b16 %v3211, %v3207
        %v3964 = vpack.c.b16 %v3212, %v3208
        %v3965 = vpack.c.b16 %v3217, %v3213
        %v3966 = vpack.c.b16 %v3218, %v3214
        %v3967 = vpack.c.b16 %v3219, %v3215
        %v3968 = vpack.c.b16 %v3220, %v3216
        %v3969 = vpack.c.b16 %v3225, %v3221
        %v3970 = vpack.c.b16 %v3226, %v3222
        %v3971 = vpack.c.b16 %v3227, %v3223
        %v3972 = vpack.c.b16 %v3228, %v3224
        %v3973 = vpack.c.b16 %v3233, %v3229
        %v3974 = vpack.c.b16 %v3234, %v3230
        %v3975 = vpack.c.b16 %v3235, %v3231
        %v3976 = vpack.c.b16 %v3236, %v3232
        %v3977 = vpack.c.b16 %v3241, %v3237
        %v3978 = vpack.c.b16 %v3242, %v3238
        %v3979 = vpack.c.b16 %v3243, %v3239
        %v3980 = vpack.c.b16 %v3244, %v3240
        %4717 = vmatprep.subr.bf16.mxu0 %v3246
        %4718 = vmatpush1.bf16.msra.mxu0 %v3245
        %4719 = vmatprep.subr.bf16.mxu0 %v3250
        %4720 = vmatpush1.bf16.msra.mxu0 %v3249
        %4721 = vmatprep.subr.bf16.mxu0 %v3254
        %4722 = vmatpush1.bf16.msra.mxu0 %v3253
        %4723 = vmatprep.subr.bf16.mxu0 %v3258
        %4724 = vmatpush1.bf16.msra.mxu0 %v3257
        %4725 = vmatprep.subr.bf16.mxu0 %v3262
        %4726 = vmatpush1.bf16.msra.mxu0 %v3261
        %4727 = vmatprep.subr.bf16.mxu0 %v3266
        %4728 = vmatpush1.bf16.msra.mxu0 %v3265
        %4729 = vmatprep.subr.bf16.mxu0 %v3270
        %4730 = vmatpush1.bf16.msra.mxu0 %v3269
        %4731 = vmatprep.subr.bf16.mxu0 %v3274
        %4732 = vmatpush1.bf16.msra.mxu0 %v3273
        %4733 = vmatprep.subr.bf16.mxu0 %v3278
        %4734 = vmatpush1.bf16.msra.mxu0 %v3277
        %4735 = vmatprep.subr.bf16.mxu0 %v3282
        %4736 = vmatpush1.bf16.msra.mxu0 %v3281
        %4737 = vmatprep.subr.bf16.mxu0 %v3286
        %4738 = vmatpush1.bf16.msra.mxu0 %v3285
        %4739 = vmatprep.subr.bf16.mxu0 %v3290
        %4740 = vmatpush1.bf16.msra.mxu0 %v3289
        %4741 = vmatprep.subr.bf16.mxu0 %v3294
        %4742 = vmatpush1.bf16.msra.mxu0 %v3293
        %4743 = vmatprep.subr.bf16.mxu0 %v3298
        %4744 = vmatpush1.bf16.msra.mxu0 %v3297
        %4745 = vmatprep.subr.bf16.mxu0 %v3302
        %4746 = vmatpush1.bf16.msra.mxu0 %v3301
        %4747 = vmatprep.subr.bf16.mxu0 %v3306
        %4748 = vmatpush1.bf16.msra.mxu0 %v3305
        %4749 = vmatprep.mubr.bf16.mxu0 %v257
        %4750 = vmatmul.mubr.bf16.gmra.mrb[0].mxu0 %v256
        %v4751 = vpop.f32.mrb[0].mxu0
        %v4752 = vadd.f32 %v1020, %v4751
        %v4753 = vpop.f32.mrb[0].mxu0
        %v4754 = vadd.f32 %v1024, %v4753
        %v4755 = vpop.f32.mrb[0].mxu0
        %v4756 = vpop.f32.mrb[0].mxu0
        %4757 = vdwg.mxu0
        %4758 = vmatprep.subr.bf16.mxu0 %v3310
        %4759 = vmatpush1.bf16.msra.mxu0 %v3309
        %4760 = vmatprep.subr.bf16.mxu0 %v3314
        %4761 = vmatpush1.bf16.msra.mxu0 %v3313
        %4762 = vmatprep.subr.bf16.mxu0 %v3318
        %4763 = vmatpush1.bf16.msra.mxu0 %v3317
        %4764 = vmatprep.subr.bf16.mxu0 %v3322
        %4765 = vmatpush1.bf16.msra.mxu0 %v3321
        %4766 = vmatprep.subr.bf16.mxu0 %v3326
        %4767 = vmatpush1.bf16.msra.mxu0 %v3325
        %4768 = vmatprep.subr.bf16.mxu0 %v3330
        %4769 = vmatpush1.bf16.msra.mxu0 %v3329
        %4770 = vmatprep.subr.bf16.mxu0 %v3334
        %4771 = vmatpush1.bf16.msra.mxu0 %v3333
        %4772 = vmatprep.subr.bf16.mxu0 %v3338
        %4773 = vmatpush1.bf16.msra.mxu0 %v3337
        %4774 = vmatprep.subr.bf16.mxu0 %v3342
        %4775 = vmatpush1.bf16.msra.mxu0 %v3341
        %4776 = vmatprep.subr.bf16.mxu0 %v3346
        %4777 = vmatpush1.bf16.msra.mxu0 %v3345
        %4778 = vmatprep.subr.bf16.mxu0 %v3350
        %4779 = vmatpush1.bf16.msra.mxu0 %v3349
        %4780 = vmatprep.subr.bf16.mxu0 %v3354
        %4781 = vmatpush1.bf16.msra.mxu0 %v3353
        %4782 = vmatprep.subr.bf16.mxu0 %v3358
        %4783 = vmatpush1.bf16.msra.mxu0 %v3357
        %4784 = vmatprep.subr.bf16.mxu0 %v3362
        %4785 = vmatpush1.bf16.msra.mxu0 %v3361
        %4786 = vmatprep.subr.bf16.mxu0 %v3366
        %4787 = vmatpush1.bf16.msra.mxu0 %v3365
        %4788 = vmatprep.subr.bf16.mxu0 %v3370
        %4789 = vmatpush1.bf16.msra.mxu0 %v3369
        %4790 = vmatprep.mubr.bf16.mxu0 %v259
        %4791 = vmatmul.mubr.bf16.gmra.mrb[0].mxu0 %v258
        %v4792 = vpop.f32.mrb[0].mxu0
        %v4793 = vadd.f32 %v4752, %v4792
        %v4794 = vpop.f32.mrb[0].mxu0
        %v4795 = vadd.f32 %v4754, %v4794
        %v4796 = vpop.f32.mrb[0].mxu0
        %v4797 = vpop.f32.mrb[0].mxu0
        %4798 = vdwg.mxu0
        %4799 = vmatprep.subr.bf16.mxu0 %v3374
        %4800 = vmatpush1.bf16.msra.mxu0 %v3373
        %4801 = vmatprep.subr.bf16.mxu0 %v3378
        %4802 = vmatpush1.bf16.msra.mxu0 %v3377
        %4803 = vmatprep.subr.bf16.mxu0 %v3382
        %4804 = vmatpush1.bf16.msra.mxu0 %v3381
        %4805 = vmatprep.subr.bf16.mxu0 %v3386
        %4806 = vmatpush1.bf16.msra.mxu0 %v3385
        %4807 = vmatprep.subr.bf16.mxu0 %v3390
        %4808 = vmatpush1.bf16.msra.mxu0 %v3389
        %4809 = vmatprep.subr.bf16.mxu0 %v3394
        %4810 = vmatpush1.bf16.msra.mxu0 %v3393
        %4811 = vmatprep.subr.bf16.mxu0 %v3398
        %4812 = vmatpush1.bf16.msra.mxu0 %v3397
        %4813 = vmatprep.subr.bf16.mxu0 %v3402
        %4814 = vmatpush1.bf16.msra.mxu0 %v3401
        %4815 = vmatprep.subr.bf16.mxu0 %v3406
        %4816 = vmatpush1.bf16.msra.mxu0 %v3405
        %4817 = vmatprep.subr.bf16.mxu0 %v3410
        %4818 = vmatpush1.bf16.msra.mxu0 %v3409
        %4819 = vmatprep.subr.bf16.mxu0 %v3414
        %4820 = vmatpush1.bf16.msra.mxu0 %v3413
        %4821 = vmatprep.subr.bf16.mxu0 %v3418
        %4822 = vmatpush1.bf16.msra.mxu0 %v3417
        %4823 = vmatprep.subr.bf16.mxu0 %v3422
        %4824 = vmatpush1.bf16.msra.mxu0 %v3421
        %4825 = vmatprep.subr.bf16.mxu0 %v3426
        %4826 = vmatpush1.bf16.msra.mxu0 %v3425
        %4827 = vmatprep.subr.bf16.mxu0 %v3430
        %4828 = vmatpush1.bf16.msra.mxu0 %v3429
        %4829 = vmatprep.subr.bf16.mxu0 %v3434
        %4830 = vmatpush1.bf16.msra.mxu0 %v3433
        %4831 = vmatprep.mubr.bf16.mxu0 %v261
        %4832 = vmatmul.mubr.bf16.gmra.mrb[0].mxu0 %v260
        %v4833 = vpop.f32.mrb[0].mxu0
        %v4834 = vadd.f32 %v4793, %v4833
        %v4835 = vpop.f32.mrb[0].mxu0
        %v4836 = vadd.f32 %v4795, %v4835
        %v4837 = vpop.f32.mrb[0].mxu0
        %v4838 = vpop.f32.mrb[0].mxu0
        %4839 = vdwg.mxu0
        %4840 = vmatprep.subr.bf16.mxu0 %v3438
        %4841 = vmatpush1.bf16.msra.mxu0 %v3437
        %4842 = vmatprep.subr.bf16.mxu0 %v3442
        %4843 = vmatpush1.bf16.msra.mxu0 %v3441
        %4844 = vmatprep.subr.bf16.mxu0 %v3446
        %4845 = vmatpush1.bf16.msra.mxu0 %v3445
        %4846 = vmatprep.subr.bf16.mxu0 %v3450
        %4847 = vmatpush1.bf16.msra.mxu0 %v3449
        %4848 = vmatprep.subr.bf16.mxu0 %v3454
        %4849 = vmatpush1.bf16.msra.mxu0 %v3453
        %4850 = vmatprep.subr.bf16.mxu0 %v3458
        %4851 = vmatpush1.bf16.msra.mxu0 %v3457
        %4852 = vmatprep.subr.bf16.mxu0 %v3462
        %4853 = vmatpush1.bf16.msra.mxu0 %v3461
        %4854 = vmatprep.subr.bf16.mxu0 %v3466
        %4855 = vmatpush1.bf16.msra.mxu0 %v3465
        %4856 = vmatprep.subr.bf16.mxu0 %v3470
        %4857 = vmatpush1.bf16.msra.mxu0 %v3469
        %4858 = vmatprep.subr.bf16.mxu0 %v3474
        %4859 = vmatpush1.bf16.msra.mxu0 %v3473
        %4860 = vmatprep.subr.bf16.mxu0 %v3478
        %4861 = vmatpush1.bf16.msra.mxu0 %v3477
        %4862 = vmatprep.subr.bf16.mxu0 %v3482
        %4863 = vmatpush1.bf16.msra.mxu0 %v3481
        %4864 = vmatprep.subr.bf16.mxu0 %v3486
        %4865 = vmatpush1.bf16.msra.mxu0 %v3485
        %4866 = vmatprep.subr.bf16.mxu0 %v3490
        %4867 = vmatpush1.bf16.msra.mxu0 %v3489
        %4868 = vmatprep.subr.bf16.mxu0 %v3494
        %4869 = vmatpush1.bf16.msra.mxu0 %v3493
        %4870 = vmatprep.subr.bf16.mxu0 %v3498
        %4871 = vmatpush1.bf16.msra.mxu0 %v3497
        %4872 = vmatprep.mubr.bf16.mxu0 %v263
        %4873 = vmatmul.mubr.bf16.gmra.mrb[0].mxu0 %v262
        %v4874 = vpop.f32.mrb[0].mxu0
        %v4875 = vadd.f32 %v4834, %v4874
        %v4876 = vpop.f32.mrb[0].mxu0
        %v4877 = vadd.f32 %v4836, %v4876
        %v4878 = vpop.f32.mrb[0].mxu0
        %v4879 = vpop.f32.mrb[0].mxu0
        %4880 = vdwg.mxu0
        %4881 = vmatprep.subr.bf16.mxu0 %v3502
        %4882 = vmatpush1.bf16.msra.mxu0 %v3501
        %4883 = vmatprep.subr.bf16.mxu0 %v3506
        %4884 = vmatpush1.bf16.msra.mxu0 %v3505
        %4885 = vmatprep.subr.bf16.mxu0 %v3510
        %4886 = vmatpush1.bf16.msra.mxu0 %v3509
        %4887 = vmatprep.subr.bf16.mxu0 %v3514
        %4888 = vmatpush1.bf16.msra.mxu0 %v3513
        %4889 = vmatprep.subr.bf16.mxu0 %v3518
        %4890 = vmatpush1.bf16.msra.mxu0 %v3517
        %4891 = vmatprep.subr.bf16.mxu0 %v3522
        %4892 = vmatpush1.bf16.msra.mxu0 %v3521
        %4893 = vmatprep.subr.bf16.mxu0 %v3526
        %4894 = vmatpush1.bf16.msra.mxu0 %v3525
        %4895 = vmatprep.subr.bf16.mxu0 %v3530
        %4896 = vmatpush1.bf16.msra.mxu0 %v3529
        %4897 = vmatprep.subr.bf16.mxu0 %v3534
        %4898 = vmatpush1.bf16.msra.mxu0 %v3533
        %4899 = vmatprep.subr.bf16.mxu0 %v3538
        %4900 = vmatpush1.bf16.msra.mxu0 %v3537
        %4901 = vmatprep.subr.bf16.mxu0 %v3542
        %4902 = vmatpush1.bf16.msra.mxu0 %v3541
        %4903 = vmatprep.subr.bf16.mxu0 %v3546
        %4904 = vmatpush1.bf16.msra.mxu0 %v3545
        %4905 = vmatprep.subr.bf16.mxu0 %v3550
        %4906 = vmatpush1.bf16.msra.mxu0 %v3549
        %4907 = vmatprep.subr.bf16.mxu0 %v3554
        %4908 = vmatpush1.bf16.msra.mxu0 %v3553
        %4909 = vmatprep.subr.bf16.mxu0 %v3558
        %4910 = vmatpush1.bf16.msra.mxu0 %v3557
        %4911 = vmatprep.subr.bf16.mxu0 %v3562
        %4912 = vmatpush1.bf16.msra.mxu0 %v3561
        %4913 = vmatprep.mubr.bf16.mxu0 %v265
        %4914 = vmatmul.mubr.bf16.gmra.mrb[0].mxu0 %v264
        %v4915 = vpop.f32.mrb[0].mxu0
        %v4916 = vadd.f32 %v4875, %v4915
        %v4917 = vpop.f32.mrb[0].mxu0
        %v4918 = vadd.f32 %v4877, %v4917
        %v4919 = vpop.f32.mrb[0].mxu0
        %v4920 = vpop.f32.mrb[0].mxu0
        %4921 = vdwg.mxu0
        %4922 = vmatprep.subr.bf16.mxu0 %v3566
        %4923 = vmatpush1.bf16.msra.mxu0 %v3565
        %4924 = vmatprep.subr.bf16.mxu0 %v3570
        %4925 = vmatpush1.bf16.msra.mxu0 %v3569
        %4926 = vmatprep.subr.bf16.mxu0 %v3574
        %4927 = vmatpush1.bf16.msra.mxu0 %v3573
        %4928 = vmatprep.subr.bf16.mxu0 %v3578
        %4929 = vmatpush1.bf16.msra.mxu0 %v3577
        %4930 = vmatprep.subr.bf16.mxu0 %v3582
        %4931 = vmatpush1.bf16.msra.mxu0 %v3581
        %4932 = vmatprep.subr.bf16.mxu0 %v3586
        %4933 = vmatpush1.bf16.msra.mxu0 %v3585
        %4934 = vmatprep.subr.bf16.mxu0 %v3590
        %4935 = vmatpush1.bf16.msra.mxu0 %v3589
        %4936 = vmatprep.subr.bf16.mxu0 %v3594
        %4937 = vmatpush1.bf16.msra.mxu0 %v3593
        %4938 = vmatprep.subr.bf16.mxu0 %v3598
        %4939 = vmatpush1.bf16.msra.mxu0 %v3597
        %4940 = vmatprep.subr.bf16.mxu0 %v3602
        %4941 = vmatpush1.bf16.msra.mxu0 %v3601
        %4942 = vmatprep.subr.bf16.mxu0 %v3606
        %4943 = vmatpush1.bf16.msra.mxu0 %v3605
        %4944 = vmatprep.subr.bf16.mxu0 %v3610
        %4945 = vmatpush1.bf16.msra.mxu0 %v3609
        %4946 = vmatprep.subr.bf16.mxu0 %v3614
        %4947 = vmatpush1.bf16.msra.mxu0 %v3613
        %4948 = vmatprep.subr.bf16.mxu0 %v3618
        %4949 = vmatpush1.bf16.msra.mxu0 %v3617
        %4950 = vmatprep.subr.bf16.mxu0 %v3622
        %4951 = vmatpush1.bf16.msra.mxu0 %v3621
        %4952 = vmatprep.subr.bf16.mxu0 %v3626
        %4953 = vmatpush1.bf16.msra.mxu0 %v3625
        %4954 = vmatprep.mubr.bf16.mxu0 %v267
        %4955 = vmatmul.mubr.bf16.gmra.mrb[0].mxu0 %v266
        %v4956 = vpop.f32.mrb[0].mxu0
        %v4957 = vadd.f32 %v4916, %v4956
        %v4958 = vpop.f32.mrb[0].mxu0
        %v4959 = vadd.f32 %v4918, %v4958
        %v4960 = vpop.f32.mrb[0].mxu0
        %v4961 = vpop.f32.mrb[0].mxu0
        %4962 = vdwg.mxu0
        %4963 = vmatprep.subr.bf16.mxu0 %v3630
        %4964 = vmatpush1.bf16.msra.mxu0 %v3629
        %4965 = vmatprep.subr.bf16.mxu0 %v3634
        %4966 = vmatpush1.bf16.msra.mxu0 %v3633
        %4967 = vmatprep.subr.bf16.mxu0 %v3638
        %4968 = vmatpush1.bf16.msra.mxu0 %v3637
        %4969 = vmatprep.subr.bf16.mxu0 %v3642
        %4970 = vmatpush1.bf16.msra.mxu0 %v3641
        %4971 = vmatprep.subr.bf16.mxu0 %v3646
        %4972 = vmatpush1.bf16.msra.mxu0 %v3645
        %4973 = vmatprep.subr.bf16.mxu0 %v3650
        %4974 = vmatpush1.bf16.msra.mxu0 %v3649
        %4975 = vmatprep.subr.bf16.mxu0 %v3654
        %4976 = vmatpush1.bf16.msra.mxu0 %v3653
        %4977 = vmatprep.subr.bf16.mxu0 %v3658
        %4978 = vmatpush1.bf16.msra.mxu0 %v3657
        %4979 = vmatprep.subr.bf16.mxu0 %v3662
        %4980 = vmatpush1.bf16.msra.mxu0 %v3661
        %4981 = vmatprep.subr.bf16.mxu0 %v3666
        %4982 = vmatpush1.bf16.msra.mxu0 %v3665
        %4983 = vmatprep.subr.bf16.mxu0 %v3670
        %4984 = vmatpush1.bf16.msra.mxu0 %v3669
        %4985 = vmatprep.subr.bf16.mxu0 %v3674
        %4986 = vmatpush1.bf16.msra.mxu0 %v3673
        %4987 = vmatprep.subr.bf16.mxu0 %v3678
        %4988 = vmatpush1.bf16.msra.mxu0 %v3677
        %4989 = vmatprep.subr.bf16.mxu0 %v3682
        %4990 = vmatpush1.bf16.msra.mxu0 %v3681
        %4991 = vmatprep.subr.bf16.mxu0 %v3686
        %4992 = vmatpush1.bf16.msra.mxu0 %v3685
        %4993 = vmatprep.subr.bf16.mxu0 %v3690
        %4994 = vmatpush1.bf16.msra.mxu0 %v3689
        %4995 = vmatprep.mubr.bf16.mxu0 %v269
        %4996 = vmatmul.mubr.bf16.gmra.mrb[0].mxu0 %v268
        %v4997 = vpop.f32.mrb[0].mxu0
        %v4998 = vadd.f32 %v4957, %v4997
        %v4999 = vpop.f32.mrb[0].mxu0
        %v5000 = vadd.f32 %v4959, %v4999
        %v5001 = vpop.f32.mrb[0].mxu0
        %v5002 = vpop.f32.mrb[0].mxu0
        %5003 = vdwg.mxu0
        %5004 = vmatprep.subr.bf16.mxu0 %v3694
        %5005 = vmatpush1.bf16.msra.mxu0 %v3693
        %5006 = vmatprep.subr.bf16.mxu0 %v3698
        %5007 = vmatpush1.bf16.msra.mxu0 %v3697
        %5008 = vmatprep.subr.bf16.mxu0 %v3702
        %5009 = vmatpush1.bf16.msra.mxu0 %v3701
        %5010 = vmatprep.subr.bf16.mxu0 %v3706
        %5011 = vmatpush1.bf16.msra.mxu0 %v3705
        %5012 = vmatprep.subr.bf16.mxu0 %v3710
        %5013 = vmatpush1.bf16.msra.mxu0 %v3709
        %5014 = vmatprep.subr.bf16.mxu0 %v3714
        %5015 = vmatpush1.bf16.msra.mxu0 %v3713
        %5016 = vmatprep.subr.bf16.mxu0 %v3718
        %5017 = vmatpush1.bf16.msra.mxu0 %v3717
        %5018 = vmatprep.subr.bf16.mxu0 %v3722
        %5019 = vmatpush1.bf16.msra.mxu0 %v3721
        %5020 = vmatprep.subr.bf16.mxu0 %v3726
        %5021 = vmatpush1.bf16.msra.mxu0 %v3725
        %5022 = vmatprep.subr.bf16.mxu0 %v3730
        %5023 = vmatpush1.bf16.msra.mxu0 %v3729
        %5024 = vmatprep.subr.bf16.mxu0 %v3734
        %5025 = vmatpush1.bf16.msra.mxu0 %v3733
        %5026 = vmatprep.subr.bf16.mxu0 %v3738
        %5027 = vmatpush1.bf16.msra.mxu0 %v3737
        %5028 = vmatprep.subr.bf16.mxu0 %v3742
        %5029 = vmatpush1.bf16.msra.mxu0 %v3741
        %5030 = vmatprep.subr.bf16.mxu0 %v3746
        %5031 = vmatpush1.bf16.msra.mxu0 %v3745
        %5032 = vmatprep.subr.bf16.mxu0 %v3750
        %5033 = vmatpush1.bf16.msra.mxu0 %v3749
        %5034 = vmatprep.subr.bf16.mxu0 %v3754
        %5035 = vmatpush1.bf16.msra.mxu0 %v3753
        %5036 = vmatprep.mubr.bf16.mxu0 %v271
        %5037 = vmatmul.mubr.bf16.gmra.mrb[0].mxu0 %v270
        %v5038 = vpop.f32.mrb[0].mxu0
        %v5039 = vadd.f32 %v4998, %v5038
        %v5040 = vpop.f32.mrb[0].mxu0
        %v5041 = vadd.f32 %v5000, %v5040
        %v5042 = vpop.f32.mrb[0].mxu0
        %v5043 = vpop.f32.mrb[0].mxu0
        %5044 = vdwg.mxu0
        %5045 = vmatprep.subr.bf16.mxu0 %v3758
        %5046 = vmatpush1.bf16.msra.mxu0 %v3757
        %5047 = vmatprep.subr.bf16.mxu0 %v3762
        %5048 = vmatpush1.bf16.msra.mxu0 %v3761
        %5049 = vmatprep.subr.bf16.mxu0 %v3766
        %5050 = vmatpush1.bf16.msra.mxu0 %v3765
        %5051 = vmatprep.subr.bf16.mxu0 %v3770
        %5052 = vmatpush1.bf16.msra.mxu0 %v3769
        %5053 = vmatprep.subr.bf16.mxu0 %v3774
        %5054 = vmatpush1.bf16.msra.mxu0 %v3773
        %5055 = vmatprep.subr.bf16.mxu0 %v3778
        %5056 = vmatpush1.bf16.msra.mxu0 %v3777
        %5057 = vmatprep.subr.bf16.mxu0 %v3782
        %5058 = vmatpush1.bf16.msra.mxu0 %v3781
        %5059 = vmatprep.subr.bf16.mxu0 %v3786
        %5060 = vmatpush1.bf16.msra.mxu0 %v3785
        %5061 = vmatprep.subr.bf16.mxu0 %v3790
        %5062 = vmatpush1.bf16.msra.mxu0 %v3789
        %5063 = vmatprep.subr.bf16.mxu0 %v3794
        %5064 = vmatpush1.bf16.msra.mxu0 %v3793
        %5065 = vmatprep.subr.bf16.mxu0 %v3798
        %5066 = vmatpush1.bf16.msra.mxu0 %v3797
        %5067 = vmatprep.subr.bf16.mxu0 %v3802
        %5068 = vmatpush1.bf16.msra.mxu0 %v3801
        %5069 = vmatprep.subr.bf16.mxu0 %v3806
        %5070 = vmatpush1.bf16.msra.mxu0 %v3805
        %5071 = vmatprep.subr.bf16.mxu0 %v3810
        %5072 = vmatpush1.bf16.msra.mxu0 %v3809
        %5073 = vmatprep.subr.bf16.mxu0 %v3814
        %5074 = vmatpush1.bf16.msra.mxu0 %v3813
        %5075 = vmatprep.subr.bf16.mxu0 %v3818
        %5076 = vmatpush1.bf16.msra.mxu0 %v3817
        %5077 = vmatprep.mubr.bf16.mxu0 %v273
        %5078 = vmatmul.mubr.bf16.gmra.mrb[0].mxu0 %v272
        %v5079 = vpop.f32.mrb[0].mxu0
        %v5080 = vadd.f32 %v5039, %v5079
        %v5081 = vpop.f32.mrb[0].mxu0
        %v5082 = vadd.f32 %v5041, %v5081
        %v5083 = vpop.f32.mrb[0].mxu0
        %v5084 = vpop.f32.mrb[0].mxu0
        %5085 = vdwg.mxu0
        %5086 = vmatprep.subr.bf16.mxu0 %v3822
        %5087 = vmatpush1.bf16.msra.mxu0 %v3821
        %5088 = vmatprep.subr.bf16.mxu0 %v3826
        %5089 = vmatpush1.bf16.msra.mxu0 %v3825
        %5090 = vmatprep.subr.bf16.mxu0 %v3830
        %5091 = vmatpush1.bf16.msra.mxu0 %v3829
        %5092 = vmatprep.subr.bf16.mxu0 %v3834
        %5093 = vmatpush1.bf16.msra.mxu0 %v3833
        %5094 = vmatprep.subr.bf16.mxu0 %v3838
        %5095 = vmatpush1.bf16.msra.mxu0 %v3837
        %5096 = vmatprep.subr.bf16.mxu0 %v3842
        %5097 = vmatpush1.bf16.msra.mxu0 %v3841
        %5098 = vmatprep.subr.bf16.mxu0 %v3846
        %5099 = vmatpush1.bf16.msra.mxu0 %v3845
        %5100 = vmatprep.subr.bf16.mxu0 %v3850
        %5101 = vmatpush1.bf16.msra.mxu0 %v3849
        %5102 = vmatprep.subr.bf16.mxu0 %v3854
        %5103 = vmatpush1.bf16.msra.mxu0 %v3853
        %5104 = vmatprep.subr.bf16.mxu0 %v3858
        %5105 = vmatpush1.bf16.msra.mxu0 %v3857
        %5106 = vmatprep.subr.bf16.mxu0 %v3862
        %5107 = vmatpush1.bf16.msra.mxu0 %v3861
        %5108 = vmatprep.subr.bf16.mxu0 %v3866
        %5109 = vmatpush1.bf16.msra.mxu0 %v3865
        %5110 = vmatprep.subr.bf16.mxu0 %v3870
        %5111 = vmatpush1.bf16.msra.mxu0 %v3869
        %5112 = vmatprep.subr.bf16.mxu0 %v3874
        %5113 = vmatpush1.bf16.msra.mxu0 %v3873
        %5114 = vmatprep.subr.bf16.mxu0 %v3878
        %5115 = vmatpush1.bf16.msra.mxu0 %v3877
        %5116 = vmatprep.subr.bf16.mxu0 %v3882
        %5117 = vmatpush1.bf16.msra.mxu0 %v3881
        %5118 = vmatprep.mubr.bf16.mxu0 %v275
        %5119 = vmatmul.mubr.bf16.gmra.mrb[0].mxu0 %v274
        %v5120 = vpop.f32.mrb[0].mxu0
        %v5121 = vadd.f32 %v5080, %v5120
        %v5122 = vpop.f32.mrb[0].mxu0
        %v5123 = vadd.f32 %v5082, %v5122
        %v5124 = vpop.f32.mrb[0].mxu0
        %v5125 = vpop.f32.mrb[0].mxu0
        %5126 = vdwg.mxu0
        %5127 = vmatprep.subr.bf16.mxu0 %v3886
        %5128 = vmatpush1.bf16.msra.mxu0 %v3885
        %5129 = vmatprep.subr.bf16.mxu0 %v3890
        %5130 = vmatpush1.bf16.msra.mxu0 %v3889
        %5131 = vmatprep.subr.bf16.mxu0 %v3894
        %5132 = vmatpush1.bf16.msra.mxu0 %v3893
        %5133 = vmatprep.subr.bf16.mxu0 %v3898
        %5134 = vmatpush1.bf16.msra.mxu0 %v3897
        %5135 = vmatprep.subr.bf16.mxu0 %v3902
        %5136 = vmatpush1.bf16.msra.mxu0 %v3901
        %5137 = vmatprep.subr.bf16.mxu0 %v3906
        %5138 = vmatpush1.bf16.msra.mxu0 %v3905
        %5139 = vmatprep.subr.bf16.mxu0 %v3910
        %5140 = vmatpush1.bf16.msra.mxu0 %v3909
        %5141 = vmatprep.subr.bf16.mxu0 %v3914
        %5142 = vmatpush1.bf16.msra.mxu0 %v3913
        %5143 = vmatprep.subr.bf16.mxu0 %v3918
        %5144 = vmatpush1.bf16.msra.mxu0 %v3917
        %5145 = vmatprep.subr.bf16.mxu0 %v3922
        %5146 = vmatpush1.bf16.msra.mxu0 %v3921
        %5147 = vmatprep.subr.bf16.mxu0 %v3926
        %5148 = vmatpush1.bf16.msra.mxu0 %v3925
        %5149 = vmatprep.subr.bf16.mxu0 %v3930
        %5150 = vmatpush1.bf16.msra.mxu0 %v3929
        %5151 = vmatprep.subr.bf16.mxu0 %v3934
        %5152 = vmatpush1.bf16.msra.mxu0 %v3933
        %5153 = vmatprep.subr.bf16.mxu0 %v3938
        %5154 = vmatpush1.bf16.msra.mxu0 %v3937
        %5155 = vmatprep.subr.bf16.mxu0 %v3942
        %5156 = vmatpush1.bf16.msra.mxu0 %v3941
        %5157 = vmatprep.subr.bf16.mxu0 %v3946
        %5158 = vmatpush1.bf16.msra.mxu0 %v3945
        %5159 = vmatprep.mubr.bf16.mxu0 %v277
        %5160 = vmatmul.mubr.bf16.gmra.mrb[0].mxu0 %v276
        %v5161 = vpop.f32.mrb[0].mxu0
        %v5162 = vadd.f32 %v5121, %v5161
        %v5163 = vpop.f32.mrb[0].mxu0
        %v5164 = vadd.f32 %v5123, %v5163
        %v5165 = vpop.f32.mrb[0].mxu0
        %v5166 = vpop.f32.mrb[0].mxu0
        %5167 = vdwg.mxu0
        %5168 = vmatprep.subr.bf16.mxu0 %v3950
        %5169 = vmatpush1.bf16.msra.mxu0 %v3949
        %5170 = vmatprep.subr.bf16.mxu0 %v3954
        %5171 = vmatpush1.bf16.msra.mxu0 %v3953
        %5172 = vmatprep.subr.bf16.mxu0 %v3958
        %5173 = vmatpush1.bf16.msra.mxu0 %v3957
        %5174 = vmatprep.subr.bf16.mxu0 %v3962
        %5175 = vmatpush1.bf16.msra.mxu0 %v3961
        %5176 = vmatprep.subr.bf16.mxu0 %v3966
        %5177 = vmatpush1.bf16.msra.mxu0 %v3965
        %5178 = vmatprep.subr.bf16.mxu0 %v3970
        %5179 = vmatpush1.bf16.msra.mxu0 %v3969
        %5180 = vmatprep.subr.bf16.mxu0 %v3974
        %5181 = vmatpush1.bf16.msra.mxu0 %v3973
        %5182 = vmatprep.subr.bf16.mxu0 %v3978
        %5183 = vmatpush1.bf16.msra.mxu0 %v3977
        %5184 = vmatprep.subr.bf16.mxu0 0
        %5185 = vmatpush1.bf16.msra.mxu0 0
        %5186 = vmatprep.subr.bf16.mxu0 0
        %5187 = vmatpush1.bf16.msra.mxu0 0
        %5188 = vmatprep.subr.bf16.mxu0 0
        %5189 = vmatpush1.bf16.msra.mxu0 0
        %5190 = vmatprep.subr.bf16.mxu0 0
        %5191 = vmatpush1.bf16.msra.mxu0 0
        %5192 = vmatprep.subr.bf16.mxu0 0
        %5193 = vmatpush1.bf16.msra.mxu0 0
        %5194 = vmatprep.subr.bf16.mxu0 0
        %5195 = vmatpush1.bf16.msra.mxu0 0
        %5196 = vmatprep.subr.bf16.mxu0 0
        %5197 = vmatpush1.bf16.msra.mxu0 0
        %5198 = vmatprep.subr.bf16.mxu0 0
        %5199 = vmatpush1.bf16.msra.mxu0 0
        %5200 = vmatprep.mubr.bf16.mxu0 0
        %5201 = vmatmul.mubr.bf16.gmra.mrb[0].mxu0 %v278
        %v5202 = vpop.f32.mrb[0].mxu0
        %v5203 = vadd.f32 %v5162, %v5202
        %v5204 = vpop.f32.mrb[0].mxu0
        %v5205 = vadd.f32 %v5164, %v5204
        %v5206 = vpop.f32.mrb[0].mxu0
        %v5207 = vpop.f32.mrb[0].mxu0
        %5208 = vdwg.mxu0
        %5209 = vmatprep.subr.bf16.mxu0 %v3248
        %5210 = vmatpush1.bf16.msra.mxu0 %v3247
        %5211 = vmatprep.subr.bf16.mxu0 %v3252
        %5212 = vmatpush1.bf16.msra.mxu0 %v3251
        %5213 = vmatprep.subr.bf16.mxu0 %v3256
        %5214 = vmatpush1.bf16.msra.mxu0 %v3255
        %5215 = vmatprep.subr.bf16.mxu0 %v3260
        %5216 = vmatpush1.bf16.msra.mxu0 %v3259
        %5217 = vmatprep.subr.bf16.mxu0 %v3264
        %5218 = vmatpush1.bf16.msra.mxu0 %v3263
        %5219 = vmatprep.subr.bf16.mxu0 %v3268
        %5220 = vmatpush1.bf16.msra.mxu0 %v3267
        %5221 = vmatprep.subr.bf16.mxu0 %v3272
        %5222 = vmatpush1.bf16.msra.mxu0 %v3271
        %5223 = vmatprep.subr.bf16.mxu0 %v3276
        %5224 = vmatpush1.bf16.msra.mxu0 %v3275
        %5225 = vmatprep.subr.bf16.mxu0 %v3280
        %5226 = vmatpush1.bf16.msra.mxu0 %v3279
        %5227 = vmatprep.subr.bf16.mxu0 %v3284
        %5228 = vmatpush1.bf16.msra.mxu0 %v3283
        %5229 = vmatprep.subr.bf16.mxu0 %v3288
        %5230 = vmatpush1.bf16.msra.mxu0 %v3287
        %5231 = vmatprep.subr.bf16.mxu0 %v3292
        %5232 = vmatpush1.bf16.msra.mxu0 %v3291
        %5233 = vmatprep.subr.bf16.mxu0 %v3296
        %5234 = vmatpush1.bf16.msra.mxu0 %v3295
        %5235 = vmatprep.subr.bf16.mxu0 %v3300
        %5236 = vmatpush1.bf16.msra.mxu0 %v3299
        %5237 = vmatprep.subr.bf16.mxu0 %v3304
        %5238 = vmatpush1.bf16.msra.mxu0 %v3303
        %5239 = vmatprep.subr.bf16.mxu0 %v3308
        %5240 = vmatpush1.bf16.msra.mxu0 %v3307
        %5241 = vmatprep.mubr.bf16.mxu0 %v257
        %5242 = vmatmul.mubr.bf16.gmra.mrb[0].mxu0 %v256
        %v5243 = vpop.f32.mrb[0].mxu0
        %v5244 = vadd.f32 %v1028, %v5243
        %v5245 = vpop.f32.mrb[0].mxu0
        %v5246 = vadd.f32 %v1032, %v5245
        %v5247 = vpop.f32.mrb[0].mxu0
        %v5248 = vpop.f32.mrb[0].mxu0
        %5249 = vdwg.mxu0
        %5250 = vmatprep.subr.bf16.mxu0 %v3312
        %5251 = vmatpush1.bf16.msra.mxu0 %v3311
        %5252 = vmatprep.subr.bf16.mxu0 %v3316
        %5253 = vmatpush1.bf16.msra.mxu0 %v3315
        %5254 = vmatprep.subr.bf16.mxu0 %v3320
        %5255 = vmatpush1.bf16.msra.mxu0 %v3319
        %5256 = vmatprep.subr.bf16.mxu0 %v3324
        %5257 = vmatpush1.bf16.msra.mxu0 %v3323
        %5258 = vmatprep.subr.bf16.mxu0 %v3328
        %5259 = vmatpush1.bf16.msra.mxu0 %v3327
        %5260 = vmatprep.subr.bf16.mxu0 %v3332
        %5261 = vmatpush1.bf16.msra.mxu0 %v3331
        %5262 = vmatprep.subr.bf16.mxu0 %v3336
        %5263 = vmatpush1.bf16.msra.mxu0 %v3335
        %5264 = vmatprep.subr.bf16.mxu0 %v3340
        %5265 = vmatpush1.bf16.msra.mxu0 %v3339
        %5266 = vmatprep.subr.bf16.mxu0 %v3344
        %5267 = vmatpush1.bf16.msra.mxu0 %v3343
        %5268 = vmatprep.subr.bf16.mxu0 %v3348
        %5269 = vmatpush1.bf16.msra.mxu0 %v3347
        %5270 = vmatprep.subr.bf16.mxu0 %v3352
        %5271 = vmatpush1.bf16.msra.mxu0 %v3351
        %5272 = vmatprep.subr.bf16.mxu0 %v3356
        %5273 = vmatpush1.bf16.msra.mxu0 %v3355
        %5274 = vmatprep.subr.bf16.mxu0 %v3360
        %5275 = vmatpush1.bf16.msra.mxu0 %v3359
        %5276 = vmatprep.subr.bf16.mxu0 %v3364
        %5277 = vmatpush1.bf16.msra.mxu0 %v3363
        %5278 = vmatprep.subr.bf16.mxu0 %v3368
        %5279 = vmatpush1.bf16.msra.mxu0 %v3367
        %5280 = vmatprep.subr.bf16.mxu0 %v3372
        %5281 = vmatpush1.bf16.msra.mxu0 %v3371
        %5282 = vmatprep.mubr.bf16.mxu0 %v259
        %5283 = vmatmul.mubr.bf16.gmra.mrb[0].mxu0 %v258
        %v5284 = vpop.f32.mrb[0].mxu0
        %v5285 = vadd.f32 %v5244, %v5284
        %v5286 = vpop.f32.mrb[0].mxu0
        %v5287 = vadd.f32 %v5246, %v5286
        %v5288 = vpop.f32.mrb[0].mxu0
        %v5289 = vpop.f32.mrb[0].mxu0
        %5290 = vdwg.mxu0
        %5291 = vmatprep.subr.bf16.mxu0 %v3376
        %5292 = vmatpush1.bf16.msra.mxu0 %v3375
        %5293 = vmatprep.subr.bf16.mxu0 %v3380
        %5294 = vmatpush1.bf16.msra.mxu0 %v3379
        %5295 = vmatprep.subr.bf16.mxu0 %v3384
        %5296 = vmatpush1.bf16.msra.mxu0 %v3383
        %5297 = vmatprep.subr.bf16.mxu0 %v3388
        %5298 = vmatpush1.bf16.msra.mxu0 %v3387
        %5299 = vmatprep.subr.bf16.mxu0 %v3392
        %5300 = vmatpush1.bf16.msra.mxu0 %v3391
        %5301 = vmatprep.subr.bf16.mxu0 %v3396
        %5302 = vmatpush1.bf16.msra.mxu0 %v3395
        %5303 = vmatprep.subr.bf16.mxu0 %v3400
        %5304 = vmatpush1.bf16.msra.mxu0 %v3399
        %5305 = vmatprep.subr.bf16.mxu0 %v3404
        %5306 = vmatpush1.bf16.msra.mxu0 %v3403
        %5307 = vmatprep.subr.bf16.mxu0 %v3408
        %5308 = vmatpush1.bf16.msra.mxu0 %v3407
        %5309 = vmatprep.subr.bf16.mxu0 %v3412
        %5310 = vmatpush1.bf16.msra.mxu0 %v3411
        %5311 = vmatprep.subr.bf16.mxu0 %v3416
        %5312 = vmatpush1.bf16.msra.mxu0 %v3415
        %5313 = vmatprep.subr.bf16.mxu0 %v3420
        %5314 = vmatpush1.bf16.msra.mxu0 %v3419
        %5315 = vmatprep.subr.bf16.mxu0 %v3424
        %5316 = vmatpush1.bf16.msra.mxu0 %v3423
        %5317 = vmatprep.subr.bf16.mxu0 %v3428
        %5318 = vmatpush1.bf16.msra.mxu0 %v3427
        %5319 = vmatprep.subr.bf16.mxu0 %v3432
        %5320 = vmatpush1.bf16.msra.mxu0 %v3431
        %5321 = vmatprep.subr.bf16.mxu0 %v3436
        %5322 = vmatpush1.bf16.msra.mxu0 %v3435
        %5323 = vmatprep.mubr.bf16.mxu0 %v261
        %5324 = vmatmul.mubr.bf16.gmra.mrb[0].mxu0 %v260
        %v5325 = vpop.f32.mrb[0].mxu0
        %v5326 = vadd.f32 %v5285, %v5325
        %v5327 = vpop.f32.mrb[0].mxu0
        %v5328 = vadd.f32 %v5287, %v5327
        %v5329 = vpop.f32.mrb[0].mxu0
        %v5330 = vpop.f32.mrb[0].mxu0
        %5331 = vdwg.mxu0
        %5332 = vmatprep.subr.bf16.mxu0 %v3440
        %5333 = vmatpush1.bf16.msra.mxu0 %v3439
        %5334 = vmatprep.subr.bf16.mxu0 %v3444
        %5335 = vmatpush1.bf16.msra.mxu0 %v3443
        %5336 = vmatprep.subr.bf16.mxu0 %v3448
        %5337 = vmatpush1.bf16.msra.mxu0 %v3447
        %5338 = vmatprep.subr.bf16.mxu0 %v3452
        %5339 = vmatpush1.bf16.msra.mxu0 %v3451
        %5340 = vmatprep.subr.bf16.mxu0 %v3456
        %5341 = vmatpush1.bf16.msra.mxu0 %v3455
        %5342 = vmatprep.subr.bf16.mxu0 %v3460
        %5343 = vmatpush1.bf16.msra.mxu0 %v3459
        %5344 = vmatprep.subr.bf16.mxu0 %v3464
        %5345 = vmatpush1.bf16.msra.mxu0 %v3463
        %5346 = vmatprep.subr.bf16.mxu0 %v3468
        %5347 = vmatpush1.bf16.msra.mxu0 %v3467
        %5348 = vmatprep.subr.bf16.mxu0 %v3472
        %5349 = vmatpush1.bf16.msra.mxu0 %v3471
        %5350 = vmatprep.subr.bf16.mxu0 %v3476
        %5351 = vmatpush1.bf16.msra.mxu0 %v3475
        %5352 = vmatprep.subr.bf16.mxu0 %v3480
        %5353 = vmatpush1.bf16.msra.mxu0 %v3479
        %5354 = vmatprep.subr.bf16.mxu0 %v3484
        %5355 = vmatpush1.bf16.msra.mxu0 %v3483
        %5356 = vmatprep.subr.bf16.mxu0 %v3488
        %5357 = vmatpush1.bf16.msra.mxu0 %v3487
        %5358 = vmatprep.subr.bf16.mxu0 %v3492
        %5359 = vmatpush1.bf16.msra.mxu0 %v3491
        %5360 = vmatprep.subr.bf16.mxu0 %v3496
        %5361 = vmatpush1.bf16.msra.mxu0 %v3495
        %5362 = vmatprep.subr.bf16.mxu0 %v3500
        %5363 = vmatpush1.bf16.msra.mxu0 %v3499
        %5364 = vmatprep.mubr.bf16.mxu0 %v263
        %5365 = vmatmul.mubr.bf16.gmra.mrb[0].mxu0 %v262
        %v5366 = vpop.f32.mrb[0].mxu0
        %v5367 = vadd.f32 %v5326, %v5366
        %v5368 = vpop.f32.mrb[0].mxu0
        %v5369 = vadd.f32 %v5328, %v5368
        %v5370 = vpop.f32.mrb[0].mxu0
        %v5371 = vpop.f32.mrb[0].mxu0
        %5372 = vdwg.mxu0
        %5373 = vmatprep.subr.bf16.mxu0 %v3504
        %5374 = vmatpush1.bf16.msra.mxu0 %v3503
        %5375 = vmatprep.subr.bf16.mxu0 %v3508
        %5376 = vmatpush1.bf16.msra.mxu0 %v3507
        %5377 = vmatprep.subr.bf16.mxu0 %v3512
        %5378 = vmatpush1.bf16.msra.mxu0 %v3511
        %5379 = vmatprep.subr.bf16.mxu0 %v3516
        %5380 = vmatpush1.bf16.msra.mxu0 %v3515
        %5381 = vmatprep.subr.bf16.mxu0 %v3520
        %5382 = vmatpush1.bf16.msra.mxu0 %v3519
        %5383 = vmatprep.subr.bf16.mxu0 %v3524
        %5384 = vmatpush1.bf16.msra.mxu0 %v3523
        %5385 = vmatprep.subr.bf16.mxu0 %v3528
        %5386 = vmatpush1.bf16.msra.mxu0 %v3527
        %5387 = vmatprep.subr.bf16.mxu0 %v3532
        %5388 = vmatpush1.bf16.msra.mxu0 %v3531
        %5389 = vmatprep.subr.bf16.mxu0 %v3536
        %5390 = vmatpush1.bf16.msra.mxu0 %v3535
        %5391 = vmatprep.subr.bf16.mxu0 %v3540
        %5392 = vmatpush1.bf16.msra.mxu0 %v3539
        %5393 = vmatprep.subr.bf16.mxu0 %v3544
        %5394 = vmatpush1.bf16.msra.mxu0 %v3543
        %5395 = vmatprep.subr.bf16.mxu0 %v3548
        %5396 = vmatpush1.bf16.msra.mxu0 %v3547
        %5397 = vmatprep.subr.bf16.mxu0 %v3552
        %5398 = vmatpush1.bf16.msra.mxu0 %v3551
        %5399 = vmatprep.subr.bf16.mxu0 %v3556
        %5400 = vmatpush1.bf16.msra.mxu0 %v3555
        %5401 = vmatprep.subr.bf16.mxu0 %v3560
        %5402 = vmatpush1.bf16.msra.mxu0 %v3559
        %5403 = vmatprep.subr.bf16.mxu0 %v3564
        %5404 = vmatpush1.bf16.msra.mxu0 %v3563
        %5405 = vmatprep.mubr.bf16.mxu0 %v265
        %5406 = vmatmul.mubr.bf16.gmra.mrb[0].mxu0 %v264
        %v5407 = vpop.f32.mrb[0].mxu0
        %v5408 = vadd.f32 %v5367, %v5407
        %v5409 = vpop.f32.mrb[0].mxu0
        %v5410 = vadd.f32 %v5369, %v5409
        %v5411 = vpop.f32.mrb[0].mxu0
        %v5412 = vpop.f32.mrb[0].mxu0
        %5413 = vdwg.mxu0
        %5414 = vmatprep.subr.bf16.mxu0 %v3568
        %5415 = vmatpush1.bf16.msra.mxu0 %v3567
        %5416 = vmatprep.subr.bf16.mxu0 %v3572
        %5417 = vmatpush1.bf16.msra.mxu0 %v3571
        %5418 = vmatprep.subr.bf16.mxu0 %v3576
        %5419 = vmatpush1.bf16.msra.mxu0 %v3575
        %5420 = vmatprep.subr.bf16.mxu0 %v3580
        %5421 = vmatpush1.bf16.msra.mxu0 %v3579
        %5422 = vmatprep.subr.bf16.mxu0 %v3584
        %5423 = vmatpush1.bf16.msra.mxu0 %v3583
        %5424 = vmatprep.subr.bf16.mxu0 %v3588
        %5425 = vmatpush1.bf16.msra.mxu0 %v3587
        %5426 = vmatprep.subr.bf16.mxu0 %v3592
        %5427 = vmatpush1.bf16.msra.mxu0 %v3591
        %5428 = vmatprep.subr.bf16.mxu0 %v3596
        %5429 = vmatpush1.bf16.msra.mxu0 %v3595
        %5430 = vmatprep.subr.bf16.mxu0 %v3600
        %5431 = vmatpush1.bf16.msra.mxu0 %v3599
        %5432 = vmatprep.subr.bf16.mxu0 %v3604
        %5433 = vmatpush1.bf16.msra.mxu0 %v3603
        %5434 = vmatprep.subr.bf16.mxu0 %v3608
        %5435 = vmatpush1.bf16.msra.mxu0 %v3607
        %5436 = vmatprep.subr.bf16.mxu0 %v3612
        %5437 = vmatpush1.bf16.msra.mxu0 %v3611
        %5438 = vmatprep.subr.bf16.mxu0 %v3616
        %5439 = vmatpush1.bf16.msra.mxu0 %v3615
        %5440 = vmatprep.subr.bf16.mxu0 %v3620
        %5441 = vmatpush1.bf16.msra.mxu0 %v3619
        %5442 = vmatprep.subr.bf16.mxu0 %v3624
        %5443 = vmatpush1.bf16.msra.mxu0 %v3623
        %5444 = vmatprep.subr.bf16.mxu0 %v3628
        %5445 = vmatpush1.bf16.msra.mxu0 %v3627
        %5446 = vmatprep.mubr.bf16.mxu0 %v267
        %5447 = vmatmul.mubr.bf16.gmra.mrb[0].mxu0 %v266
        %v5448 = vpop.f32.mrb[0].mxu0
        %v5449 = vadd.f32 %v5408, %v5448
        %v5450 = vpop.f32.mrb[0].mxu0
        %v5451 = vadd.f32 %v5410, %v5450
        %v5452 = vpop.f32.mrb[0].mxu0
        %v5453 = vpop.f32.mrb[0].mxu0
        %5454 = vdwg.mxu0
        %5455 = vmatprep.subr.bf16.mxu0 %v3632
        %5456 = vmatpush1.bf16.msra.mxu0 %v3631
        %5457 = vmatprep.subr.bf16.mxu0 %v3636
        %5458 = vmatpush1.bf16.msra.mxu0 %v3635
        %5459 = vmatprep.subr.bf16.mxu0 %v3640
        %5460 = vmatpush1.bf16.msra.mxu0 %v3639
        %5461 = vmatprep.subr.bf16.mxu0 %v3644
        %5462 = vmatpush1.bf16.msra.mxu0 %v3643
        %5463 = vmatprep.subr.bf16.mxu0 %v3648
        %5464 = vmatpush1.bf16.msra.mxu0 %v3647
        %5465 = vmatprep.subr.bf16.mxu0 %v3652
        %5466 = vmatpush1.bf16.msra.mxu0 %v3651
        %5467 = vmatprep.subr.bf16.mxu0 %v3656
        %5468 = vmatpush1.bf16.msra.mxu0 %v3655
        %5469 = vmatprep.subr.bf16.mxu0 %v3660
        %5470 = vmatpush1.bf16.msra.mxu0 %v3659
        %5471 = vmatprep.subr.bf16.mxu0 %v3664
        %5472 = vmatpush1.bf16.msra.mxu0 %v3663
        %5473 = vmatprep.subr.bf16.mxu0 %v3668
        %5474 = vmatpush1.bf16.msra.mxu0 %v3667
        %5475 = vmatprep.subr.bf16.mxu0 %v3672
        %5476 = vmatpush1.bf16.msra.mxu0 %v3671
        %5477 = vmatprep.subr.bf16.mxu0 %v3676
        %5478 = vmatpush1.bf16.msra.mxu0 %v3675
        %5479 = vmatprep.subr.bf16.mxu0 %v3680
        %5480 = vmatpush1.bf16.msra.mxu0 %v3679
        %5481 = vmatprep.subr.bf16.mxu0 %v3684
        %5482 = vmatpush1.bf16.msra.mxu0 %v3683
        %5483 = vmatprep.subr.bf16.mxu0 %v3688
        %5484 = vmatpush1.bf16.msra.mxu0 %v3687
        %5485 = vmatprep.subr.bf16.mxu0 %v3692
        %5486 = vmatpush1.bf16.msra.mxu0 %v3691
        %5487 = vmatprep.mubr.bf16.mxu0 %v269
        %5488 = vmatmul.mubr.bf16.gmra.mrb[0].mxu0 %v268
        %v5489 = vpop.f32.mrb[0].mxu0
        %v5490 = vadd.f32 %v5449, %v5489
        %v5491 = vpop.f32.mrb[0].mxu0
        %v5492 = vadd.f32 %v5451, %v5491
        %v5493 = vpop.f32.mrb[0].mxu0
        %v5494 = vpop.f32.mrb[0].mxu0
        %5495 = vdwg.mxu0
        %5496 = vmatprep.subr.bf16.mxu0 %v3696
        %5497 = vmatpush1.bf16.msra.mxu0 %v3695
        %5498 = vmatprep.subr.bf16.mxu0 %v3700
        %5499 = vmatpush1.bf16.msra.mxu0 %v3699
        %5500 = vmatprep.subr.bf16.mxu0 %v3704
        %5501 = vmatpush1.bf16.msra.mxu0 %v3703
        %5502 = vmatprep.subr.bf16.mxu0 %v3708
        %5503 = vmatpush1.bf16.msra.mxu0 %v3707
        %5504 = vmatprep.subr.bf16.mxu0 %v3712
        %5505 = vmatpush1.bf16.msra.mxu0 %v3711
        %5506 = vmatprep.subr.bf16.mxu0 %v3716
        %5507 = vmatpush1.bf16.msra.mxu0 %v3715
        %5508 = vmatprep.subr.bf16.mxu0 %v3720
        %5509 = vmatpush1.bf16.msra.mxu0 %v3719
        %5510 = vmatprep.subr.bf16.mxu0 %v3724
        %5511 = vmatpush1.bf16.msra.mxu0 %v3723
        %5512 = vmatprep.subr.bf16.mxu0 %v3728
        %5513 = vmatpush1.bf16.msra.mxu0 %v3727
        %5514 = vmatprep.subr.bf16.mxu0 %v3732
        %5515 = vmatpush1.bf16.msra.mxu0 %v3731
        %5516 = vmatprep.subr.bf16.mxu0 %v3736
        %5517 = vmatpush1.bf16.msra.mxu0 %v3735
        %5518 = vmatprep.subr.bf16.mxu0 %v3740
        %5519 = vmatpush1.bf16.msra.mxu0 %v3739
        %5520 = vmatprep.subr.bf16.mxu0 %v3744
        %5521 = vmatpush1.bf16.msra.mxu0 %v3743
        %5522 = vmatprep.subr.bf16.mxu0 %v3748
        %5523 = vmatpush1.bf16.msra.mxu0 %v3747
        %5524 = vmatprep.subr.bf16.mxu0 %v3752
        %5525 = vmatpush1.bf16.msra.mxu0 %v3751
        %5526 = vmatprep.subr.bf16.mxu0 %v3756
        %5527 = vmatpush1.bf16.msra.mxu0 %v3755
        %5528 = vmatprep.mubr.bf16.mxu0 %v271
        %5529 = vmatmul.mubr.bf16.gmra.mrb[0].mxu0 %v270
        %v5530 = vpop.f32.mrb[0].mxu0
        %v5531 = vadd.f32 %v5490, %v5530
        %v5532 = vpop.f32.mrb[0].mxu0
        %v5533 = vadd.f32 %v5492, %v5532
        %v5534 = vpop.f32.mrb[0].mxu0
        %v5535 = vpop.f32.mrb[0].mxu0
        %5536 = vdwg.mxu0
        %5537 = vmatprep.subr.bf16.mxu0 %v3760
        %5538 = vmatpush1.bf16.msra.mxu0 %v3759
        %5539 = vmatprep.subr.bf16.mxu0 %v3764
        %5540 = vmatpush1.bf16.msra.mxu0 %v3763
        %5541 = vmatprep.subr.bf16.mxu0 %v3768
        %5542 = vmatpush1.bf16.msra.mxu0 %v3767
        %5543 = vmatprep.subr.bf16.mxu0 %v3772
        %5544 = vmatpush1.bf16.msra.mxu0 %v3771
        %5545 = vmatprep.subr.bf16.mxu0 %v3776
        %5546 = vmatpush1.bf16.msra.mxu0 %v3775
        %5547 = vmatprep.subr.bf16.mxu0 %v3780
        %5548 = vmatpush1.bf16.msra.mxu0 %v3779
        %5549 = vmatprep.subr.bf16.mxu0 %v3784
        %5550 = vmatpush1.bf16.msra.mxu0 %v3783
        %5551 = vmatprep.subr.bf16.mxu0 %v3788
        %5552 = vmatpush1.bf16.msra.mxu0 %v3787
        %5553 = vmatprep.subr.bf16.mxu0 %v3792
        %5554 = vmatpush1.bf16.msra.mxu0 %v3791
        %5555 = vmatprep.subr.bf16.mxu0 %v3796
        %5556 = vmatpush1.bf16.msra.mxu0 %v3795
        %5557 = vmatprep.subr.bf16.mxu0 %v3800
        %5558 = vmatpush1.bf16.msra.mxu0 %v3799
        %5559 = vmatprep.subr.bf16.mxu0 %v3804
        %5560 = vmatpush1.bf16.msra.mxu0 %v3803
        %5561 = vmatprep.subr.bf16.mxu0 %v3808
        %5562 = vmatpush1.bf16.msra.mxu0 %v3807
        %5563 = vmatprep.subr.bf16.mxu0 %v3812
        %5564 = vmatpush1.bf16.msra.mxu0 %v3811
        %5565 = vmatprep.subr.bf16.mxu0 %v3816
        %5566 = vmatpush1.bf16.msra.mxu0 %v3815
        %5567 = vmatprep.subr.bf16.mxu0 %v3820
        %5568 = vmatpush1.bf16.msra.mxu0 %v3819
        %5569 = vmatprep.mubr.bf16.mxu0 %v273
        %5570 = vmatmul.mubr.bf16.gmra.mrb[0].mxu0 %v272
        %v5571 = vpop.f32.mrb[0].mxu0
        %v5572 = vadd.f32 %v5531, %v5571
        %v5573 = vpop.f32.mrb[0].mxu0
        %v5574 = vadd.f32 %v5533, %v5573
        %v5575 = vpop.f32.mrb[0].mxu0
        %v5576 = vpop.f32.mrb[0].mxu0
        %5577 = vdwg.mxu0
        %5578 = vmatprep.subr.bf16.mxu0 %v3824
        %5579 = vmatpush1.bf16.msra.mxu0 %v3823
        %5580 = vmatprep.subr.bf16.mxu0 %v3828
        %5581 = vmatpush1.bf16.msra.mxu0 %v3827
        %5582 = vmatprep.subr.bf16.mxu0 %v3832
        %5583 = vmatpush1.bf16.msra.mxu0 %v3831
        %5584 = vmatprep.subr.bf16.mxu0 %v3836
        %5585 = vmatpush1.bf16.msra.mxu0 %v3835
        %5586 = vmatprep.subr.bf16.mxu0 %v3840
        %5587 = vmatpush1.bf16.msra.mxu0 %v3839
        %5588 = vmatprep.subr.bf16.mxu0 %v3844
        %5589 = vmatpush1.bf16.msra.mxu0 %v3843
        %5590 = vmatprep.subr.bf16.mxu0 %v3848
        %5591 = vmatpush1.bf16.msra.mxu0 %v3847
        %5592 = vmatprep.subr.bf16.mxu0 %v3852
        %5593 = vmatpush1.bf16.msra.mxu0 %v3851
        %5594 = vmatprep.subr.bf16.mxu0 %v3856
        %5595 = vmatpush1.bf16.msra.mxu0 %v3855
        %5596 = vmatprep.subr.bf16.mxu0 %v3860
        %5597 = vmatpush1.bf16.msra.mxu0 %v3859
        %5598 = vmatprep.subr.bf16.mxu0 %v3864
        %5599 = vmatpush1.bf16.msra.mxu0 %v3863
        %5600 = vmatprep.subr.bf16.mxu0 %v3868
        %5601 = vmatpush1.bf16.msra.mxu0 %v3867
        %5602 = vmatprep.subr.bf16.mxu0 %v3872
        %5603 = vmatpush1.bf16.msra.mxu0 %v3871
        %5604 = vmatprep.subr.bf16.mxu0 %v3876
        %5605 = vmatpush1.bf16.msra.mxu0 %v3875
        %5606 = vmatprep.subr.bf16.mxu0 %v3880
        %5607 = vmatpush1.bf16.msra.mxu0 %v3879
        %5608 = vmatprep.subr.bf16.mxu0 %v3884
        %5609 = vmatpush1.bf16.msra.mxu0 %v3883
        %5610 = vmatprep.mubr.bf16.mxu0 %v275
        %5611 = vmatmul.mubr.bf16.gmra.mrb[0].mxu0 %v274
        %v5612 = vpop.f32.mrb[0].mxu0
        %v5613 = vadd.f32 %v5572, %v5612
        %v5614 = vpop.f32.mrb[0].mxu0
        %v5615 = vadd.f32 %v5574, %v5614
        %v5616 = vpop.f32.mrb[0].mxu0
        %v5617 = vpop.f32.mrb[0].mxu0
        %5618 = vdwg.mxu0
        %5619 = vmatprep.subr.bf16.mxu0 %v3888
        %5620 = vmatpush1.bf16.msra.mxu0 %v3887
        %5621 = vmatprep.subr.bf16.mxu0 %v3892
        %5622 = vmatpush1.bf16.msra.mxu0 %v3891
        %5623 = vmatprep.subr.bf16.mxu0 %v3896
        %5624 = vmatpush1.bf16.msra.mxu0 %v3895
        %5625 = vmatprep.subr.bf16.mxu0 %v3900
        %5626 = vmatpush1.bf16.msra.mxu0 %v3899
        %5627 = vmatprep.subr.bf16.mxu0 %v3904
        %5628 = vmatpush1.bf16.msra.mxu0 %v3903
        %5629 = vmatprep.subr.bf16.mxu0 %v3908
        %5630 = vmatpush1.bf16.msra.mxu0 %v3907
        %5631 = vmatprep.subr.bf16.mxu0 %v3912
        %5632 = vmatpush1.bf16.msra.mxu0 %v3911
        %5633 = vmatprep.subr.bf16.mxu0 %v3916
        %5634 = vmatpush1.bf16.msra.mxu0 %v3915
        %5635 = vmatprep.subr.bf16.mxu0 %v3920
        %5636 = vmatpush1.bf16.msra.mxu0 %v3919
        %5637 = vmatprep.subr.bf16.mxu0 %v3924
        %5638 = vmatpush1.bf16.msra.mxu0 %v3923
        %5639 = vmatprep.subr.bf16.mxu0 %v3928
        %5640 = vmatpush1.bf16.msra.mxu0 %v3927
        %5641 = vmatprep.subr.bf16.mxu0 %v3932
        %5642 = vmatpush1.bf16.msra.mxu0 %v3931
        %5643 = vmatprep.subr.bf16.mxu0 %v3936
        %5644 = vmatpush1.bf16.msra.mxu0 %v3935
        %5645 = vmatprep.subr.bf16.mxu0 %v3940
        %5646 = vmatpush1.bf16.msra.mxu0 %v3939
        %5647 = vmatprep.subr.bf16.mxu0 %v3944
        %5648 = vmatpush1.bf16.msra.mxu0 %v3943
        %5649 = vmatprep.subr.bf16.mxu0 %v3948
        %5650 = vmatpush1.bf16.msra.mxu0 %v3947
        %5651 = vmatprep.mubr.bf16.mxu0 %v277
        %5652 = vmatmul.mubr.bf16.gmra.mrb[0].mxu0 %v276
        %v5653 = vpop.f32.mrb[0].mxu0
        %v5654 = vadd.f32 %v5613, %v5653
        %v5655 = vpop.f32.mrb[0].mxu0
        %v5656 = vadd.f32 %v5615, %v5655
        %v5657 = vpop.f32.mrb[0].mxu0
        %v5658 = vpop.f32.mrb[0].mxu0
        %5659 = vdwg.mxu0
        %5660 = vmatprep.subr.bf16.mxu0 %v3952
        %5661 = vmatpush1.bf16.msra.mxu0 %v3951
        %5662 = vmatprep.subr.bf16.mxu0 %v3956
        %5663 = vmatpush1.bf16.msra.mxu0 %v3955
        %5664 = vmatprep.subr.bf16.mxu0 %v3960
        %5665 = vmatpush1.bf16.msra.mxu0 %v3959
        %5666 = vmatprep.subr.bf16.mxu0 %v3964
        %5667 = vmatpush1.bf16.msra.mxu0 %v3963
        %5668 = vmatprep.subr.bf16.mxu0 %v3968
        %5669 = vmatpush1.bf16.msra.mxu0 %v3967
        %5670 = vmatprep.subr.bf16.mxu0 %v3972
        %5671 = vmatpush1.bf16.msra.mxu0 %v3971
        %5672 = vmatprep.subr.bf16.mxu0 %v3976
        %5673 = vmatpush1.bf16.msra.mxu0 %v3975
        %5674 = vmatprep.subr.bf16.mxu0 %v3980
        %5675 = vmatpush1.bf16.msra.mxu0 %v3979
        %5676 = vmatprep.subr.bf16.mxu0 0
        %5677 = vmatpush1.bf16.msra.mxu0 0
        %5678 = vmatprep.subr.bf16.mxu0 0
        %5679 = vmatpush1.bf16.msra.mxu0 0
        %5680 = vmatprep.subr.bf16.mxu0 0
        %5681 = vmatpush1.bf16.msra.mxu0 0
        %5682 = vmatprep.subr.bf16.mxu0 0
        %5683 = vmatpush1.bf16.msra.mxu0 0
        %5684 = vmatprep.subr.bf16.mxu0 0
        %5685 = vmatpush1.bf16.msra.mxu0 0
        %5686 = vmatprep.subr.bf16.mxu0 0
        %5687 = vmatpush1.bf16.msra.mxu0 0
        %5688 = vmatprep.subr.bf16.mxu0 0
        %5689 = vmatpush1.bf16.msra.mxu0 0
        %5690 = vmatprep.subr.bf16.mxu0 0
        %5691 = vmatpush1.bf16.msra.mxu0 0
        %5692 = vmatprep.mubr.bf16.mxu0 0
        %5693 = vmatmul.mubr.bf16.gmra.mrb[0].mxu0 %v278
        %v5694 = vpop.f32.mrb[0].mxu0
        %v5695 = vadd.f32 %v5654, %v5694
        %v5696 = vpop.f32.mrb[0].mxu0
        %v5697 = vadd.f32 %v5656, %v5696
        %v5698 = vpop.f32.mrb[0].mxu0
        %v5699 = vpop.f32.mrb[0].mxu0
        %5700 = vdwg.mxu0
        %v5701 = vmax.f32 %v5203, 0.0
        %v5702 = vmax.f32 %v5205, 0.0
        %v5703 = vmax.f32 %v5695, 0.0
        %v5704 = vmax.f32 %v5697, 0.0
        %5705 = vst [vmem:[%s230] sm:$0xff] %v5701
        %5706 = vst [vmem:[%s230 + $0x8] sm:$0xff] %v5702
        %5707 = vst [vmem:[%s230 + $0x10] sm:$0xff] %v5703
        %5708 = vst [vmem:[%s230 + $0x18] sm:$0xff] %v5704
        %s5709 = smul.u32 4, %s20
        %p5710 = scmp.lt.s32.totalorder %s5709, 11
        %s5711 = scalar_select %p5710, %s5709, 11
        %s5712 = smul.addr %s5711, 8
        %s5713 = scalar_lea.vmem %s3, %s5712
        // Predicated region
        $region41: #{net_forward.3} parent=31 // pred_check
          %p5714 = pneg %p111
        $region42: #{net_forward.3} parent=31 // pred_check_branch
          %5716 = sbr.rel (%p5714) target = $region44
        $region43: #{net_forward.3} parent=31 // pred_region
          %s5717 = smul.u32 4, %s20
        $region44: #{net_forward.3} parent=31 // pred_fallthru
          _
      $region32: #{net_forward.3} parent=5 // pred_fallthru
        _
      %p5718 = scmp.le.s32.totalorder 2, %s15
      // Predicated region
      $region45: #{net_forward.3} parent=5 // pred_check
        %p5719 = pneg %p5718
      $region46: #{net_forward.3} parent=5 // pred_check_branch
        %5721 = sbr.rel (%p5719) target = $region48
      $region47: #{net_forward.3} parent=5 // pred_region
        %s5722 = ssub.s32 %s15, 2
        // Predicated region
        $region49: #{net_forward.3} parent=47 // pred_check
          %p5723 = pneg %p117
        $region50: #{net_forward.3} parent=47 // pred_check_branch
          %5725 = sbr.rel (%p5723) target = $region52
        $region51: #{net_forward.3} parent=47 // pred_region
          %s5726 = smul.u32 4, %s21
          %p5727 = scmp.lt.s32.totalorder %s5726, 11
          %s5728 = scalar_select %p5727, %s5726, 11
          %s5729 = smul.addr %s5728, 8
          %s5730 = scalar_lea.vmem %s3, %s5729
        $region52: #{net_forward.3} parent=47 // pred_fallthru
          _
      $region48: #{net_forward.3} parent=5 // pred_fallthru
        _
    $region6: #{net_forward.3} parent=1 // loop_footer
      %s19 = sadd.s32 1, %s15
    $region7: #{net_forward.3} parent=1 // loop_footer_branch
      %14 = sbr.rel target = $region3
    $region8: #{net_forward.3} parent=1 // loop_exit
      _
    %5731 = vsyncpa [#allocation3], 1
    %s5732 = scalar_lea.sflag [#allocation3], 1
    %5733 = vsyncpa %s5732, 1
    %5734 = vsyncpa [#allocation5], 1
    %s5735 = scalar_lea.sflag [#allocation5], 1
    %5736 = vsyncpa %s5735, 1

</llo_original>
